<compile_context>
chip_gen: v6e
topology: v6e:2x2x1
jax: 0.10.0
libtpu: 0.0.40
codegen_flags: <defaults>
</compile_context>

<pallas_src>
import functools

import jax
import jax.numpy as jnp
from jax import lax
from jax.experimental import pallas as pl
from jax.experimental.pallas import tpu as pltpu

NUM_CLASSES = 6
NC_PAD = 8            # classes padded to 8 lanes for the FC head / output
H = W = 28            # input spatial size implied by fc.in_features = 55*7*7
C1, C2 = 45, 55       # conv1 / conv2 output channels (logical)
CP = 64               # padded channel width (TPU lane dim)
FLAT = C2 * 7 * 7     # 2695
M2 = 104              # FC rows per image: 16*u + v, u,v in [0,7)
XSEG = 256            # per-image stride of the padded-flat conv2 input (16x16)


def _hand_kernel(patch_ref, w1_ref, post1_ref, w2_ref, post2_ref, wfc_ref,
                 fcb_ref, out_ref, z_ref, xp2_ref, im2_ref, y2_ref, *, bt):
    f32 = jnp.float32
    n1 = bt * 224                              # rows per pool-phase chunk

    b1f = post1_ref[0:1, :]                    # s1 * b1  (BN1 scale folded)
    t1 = post1_ref[1:2, :]
    sgn1 = post1_ref[2:3, :]                   # 1.0 where s1 >= 0 else 0.0
    b2 = post2_ref[0:1, :]
    s2 = post2_ref[1:2, :]
    t2 = post2_ref[2:3, :]

    # ---- conv1: ONE MXU matmul for all 4 pool phases of all bt images -------
    z_ref[...] = jnp.dot(patch_ref[0, :, :], w1_ref[...],
                         preferred_element_type=f32)

    # ---- zero conv2 padding rows of xp2 (every step: scratch is per-core) ---
    xp2_ref[0:17, :] = jnp.zeros((17, CP), f32)
    zpad = jnp.zeros((32, CP), f32)
    for b in range(bt):
        xp2_ref[b * XSEG + 241:b * XSEG + 273, :] = zpad

    # ---- per image: 2x2 maxpool-1 + folded (bias, ReLU, BN1) + staging ------
    # pool(relu(z+b1)*s1+t1) == t1 + [max(U,0) if s1>=0 else min(U,0)],
    # with U = max over the 4 pool-phase chunks of (s1*z + s1*b1).
    colmask = (lax.broadcasted_iota(jnp.int32, (224, 1), 0) % 16) < 14
    for b in range(bt):
        u = z_ref[b * 224:(b + 1) * 224, :]
        for q in range(1, 4):
            u = jnp.maximum(u, z_ref[q * n1 + b * 224:q * n1 + (b + 1) * 224, :])
        uc = u + b1f
        pv = jnp.where(sgn1 > 0.5, jnp.maximum(uc, 0.0),
                       jnp.minimum(uc, 0.0)) + t1
        # phantom columns (jp in {14,15}) must be zero: they are conv2 padding
        xp2_ref[b * XSEG + 17:b * XSEG + 241, :] = jnp.where(colmask, pv, 0.0)

    # ---- conv2 im2col: 9 shifted copies per image -> (bt*224, 576) LHS ------
    for b in range(bt):
        for t in range(9):
            off = (t // 3) * 16 + (t % 3)
            im2_ref[b * 224:(b + 1) * 224, t * CP:(t + 1) * CP] = (
                xp2_ref[b * XSEG + off:b * XSEG + off + 224, :])

    # ---- conv2 (3x3, 45->55) as one matmul + ReLU + BN2 ---------------------
    # TODO(synk): nn.Dropout(p=0.2) is the identity in eval mode; training-mode
    # stochastic dropout and batch-stat BatchNorm are not implemented.
    acc2 = jnp.dot(im2_ref[...], w2_ref[...], preferred_element_type=f32)
    y2_ref[...] = jnp.maximum(acc2 + b2, 0.0) * s2 + t2

    # ---- maxpool-2 (14x14 -> 7x7) + fused fully-connected head, per image ---
    row = lax.broadcasted_iota(jnp.int32, (bt, NC_PAD), 0)
    logits = jnp.zeros((bt, NC_PAD), f32) + fcb_ref[...]
    for b in range(bt):
        base = b * 224
        hA = jnp.maximum(y2_ref[pl.ds(base, 112, stride=2), :],
                         y2_ref[pl.ds(base + 1, 112, stride=2), :])
        hB = jnp.maximum(hA[0:M2, :], hA[8:112, :])            # rows = 16u + v
        prod = hB[None, :, :] * wfc_ref[...]                   # (8, 104, 64)
        s8 = jnp.sum(jnp.sum(prod, axis=2), axis=1)            # (8,)
        logits = logits + jnp.where(row == b, s8[None, :], 0.0)
    out_ref[0, :, :] = logits


def _prep_patches(x_nchw, bt, nblk):
    """conv1 im2col; rows ordered (pool-phase, image, i, jp), taps in lanes."""
    x = x_nchw.astype(jnp.float32)[:, 0]                       # (Bpad, 28, 28)
    xp = jnp.pad(x, ((0, 0), (1, 1), (1, 1)))                  # (Bpad, 30, 30)
    taps = [xp[:, dh:dh + H, dw:dw + W] for dh in range(3) for dw in range(3)]
    pt = jnp.stack(taps, axis=-1)                               # (Bpad, 28, 28, 9)
    pt = pt.reshape(-1, 14, 2, 14, 2, 9)                        # (b, i, hp, j, wp, t)
    pt = jnp.pad(pt, ((0, 0), (0, 0), (0, 0), (0, 2), (0, 0), (0, 0)))
    pt = pt.reshape(nblk, bt, 14, 2, 16, 2, 9)                  # (g,b,i,hp,jp,wp,t)
    pt = jnp.transpose(pt, (0, 5, 3, 1, 2, 4, 6))               # (g,wp,hp,b,i,jp,t)
    pt = pt.reshape(nblk, 4 * bt * 224, 9)
    return jnp.pad(pt, ((0, 0), (0, 0), (0, 7)))                # taps 9 -> 16


def _prep_params(p):
    f32 = jnp.float32

    def bn_affine(g, b, m, v, eps=1e-5):
        s = g / jnp.sqrt(v + eps)
        return s, b - m * s

    s1, t1 = bn_affine(p['bn1_gamma'], p['bn1_beta'], p['bn1_mean'], p['bn1_var'])
    w1k = jnp.transpose(p['w1'], (2, 3, 1, 0)).reshape(9, C1) * s1[None, :]
    w1k = jnp.pad(w1k, ((0, 7), (0, CP - C1))).astype(f32)      # (16, 64)
    post1 = jnp.stack([jnp.pad(s1 * p['b1'], (0, CP - C1)),
                       jnp.pad(t1, (0, CP - C1)),
                       jnp.pad((s1 >= 0).astype(f32), (0, CP - C1))]).astype(f32)

    w2k = jnp.transpose(p['w2'], (2, 3, 1, 0))                  # (3,3,45,55)
    w2k = jnp.pad(w2k, ((0, 0), (0, 0), (0, CP - C1), (0, CP - C2)))
    w2k = w2k.reshape(9 * CP, CP).astype(f32)                   # (576, 64)

    s2, t2 = bn_affine(p['bn2_gamma'], p['bn2_beta'], p['bn2_mean'], p['bn2_var'])
    post2 = jnp.stack([jnp.pad(p['b2'], (0, CP - C2)),
                       jnp.pad(s2, (0, CP - C2)),
                       jnp.pad(t2, (0, CP - C2))]).astype(f32)  # (3, 64)

    wf = p['fcw'].reshape(NUM_CLASSES, C2, 7, 7)
    wf = jnp.transpose(wf, (0, 2, 3, 1))                        # (6, 7, 7, 55)
    wf = jnp.pad(wf, ((0, NC_PAD - NUM_CLASSES), (0, 0), (0, 9), (0, CP - C2)))
    wf = wf.reshape(NC_PAD, 112, CP)[:, :M2, :].astype(f32)     # (8, 104, 64)

    fcb = jnp.pad(p['fcb'], (0, NC_PAD - NUM_CLASSES)).reshape(1, NC_PAD)
    return w1k, post1, w2k, post2, wf, fcb.astype(f32)


def hand_classifier_forward(x_nchw, p, block_b=8):
    B = x_nchw.shape[0]
    if B >= 2 * block_b:
        bt = block_b                     # images per grid step
    else:
        bt = max(1, B // 2)              # keep >= 2 grid steps when possible
    nblk = -(-B // bt)
    b_pad = nblk * bt
    if b_pad != B:
        x_nchw = jnp.pad(x_nchw, ((0, b_pad - B), (0, 0), (0, 0), (0, 0)))

    patches = _prep_patches(x_nchw, bt, nblk)
    w1k, post1, w2k, post2, wfck, fcb = _prep_params(p)
    r1b = 4 * bt * 224

    out = pl.pallas_call(
        functools.partial(_hand_kernel, bt=bt),
        out_shape=jax.ShapeDtypeStruct((nblk, bt, NC_PAD), jnp.float32),
        grid=(nblk,),
        in_specs=[
            pl.BlockSpec((1, r1b, 16), lambda g: (g, 0, 0)),
            pl.BlockSpec((16, CP), lambda g: (0, 0)),
            pl.BlockSpec((3, CP), lambda g: (0, 0)),
            pl.BlockSpec((9 * CP, CP), lambda g: (0, 0)),
            pl.BlockSpec((3, CP), lambda g: (0, 0)),
            pl.BlockSpec((NC_PAD, M2, CP), lambda g: (0, 0, 0)),
            pl.BlockSpec((1, NC_PAD), lambda g: (0, 0)),
        ],
        out_specs=pl.BlockSpec((1, bt, NC_PAD), lambda g: (g, 0, 0)),
        scratch_shapes=[
            pltpu.VMEM((r1b, CP), jnp.float32),              # conv1 pre-pool staging
            pltpu.VMEM((bt * XSEG + 24, CP), jnp.float32),   # padded-flat conv2 input
            pltpu.VMEM((bt * 224, 9 * CP), jnp.float32),     # conv2 im2col LHS
            pltpu.VMEM((bt * 224, CP), jnp.float32),         # conv2 output staging
        ],
        compiler_params=pltpu.CompilerParams(
            dimension_semantics=("parallel",),
            vmem_limit_bytes=32 * 1024 * 1024),
    )(patches, w1k, post1, w2k, post2, wfck, fcb)
    return out.reshape(b_pad, NC_PAD)[:B, :NUM_CLASSES]


def init_params(key):
    ks = jax.random.split(key, 14)
    f32 = jnp.float32
    return {
        'w1': 0.20 * jax.random.normal(ks[0], (C1, 1, 3, 3), f32),
        'b1': 0.05 * jax.random.normal(ks[1], (C1,), f32),
        'bn1_gamma': 1.0 + 0.1 * jax.random.normal(ks[2], (C1,), f32),
        'bn1_beta': 0.1 * jax.random.normal(ks[3], (C1,), f32),
        'bn1_mean': 0.1 * jax.random.normal(ks[4], (C1,), f32),
        'bn1_var': 1.0 + 0.5 * jax.random.uniform(ks[5], (C1,), f32),
        'w2': 0.05 * jax.random.normal(ks[6], (C2, C1, 3, 3), f32),
        'b2': 0.05 * jax.random.normal(ks[7], (C2,), f32),
        'bn2_gamma': 1.0 + 0.1 * jax.random.normal(ks[8], (C2,), f32),
        'bn2_beta': 0.1 * jax.random.normal(ks[9], (C2,), f32),
        'bn2_mean': 0.1 * jax.random.normal(ks[10], (C2,), f32),
        'bn2_var': 1.0 + 0.5 * jax.random.uniform(ks[11], (C2,), f32),
        'fcw': 0.02 * jax.random.normal(ks[12], (NUM_CLASSES, FLAT), f32),
        'fcb': 0.05 * jax.random.normal(ks[13], (NUM_CLASSES,), f32),
    }


def reference_forward(x_nchw, p):
    dn = ('NCHW', 'OIHW', 'NCHW')
    prec = lax.Precision.HIGHEST

    def bn(y, g, b, m, v, eps=1e-5):
        s = g / jnp.sqrt(v + eps)
        return y * s[None, :, None, None] + (b - m * s)[None, :, None, None]

    def pool(y):
        return lax.reduce_window(y, -jnp.inf, lax.max,
                                 (1, 1, 2, 2), (1, 1, 2, 2), 'VALID')

    y = lax.conv_general_dilated(x_nchw, p['w1'], (1, 1), ((1, 1), (1, 1)),
                                 dimension_numbers=dn, precision=prec)
    y = jnp.maximum(y + p['b1'][None, :, None, None], 0.0)
    y = bn(y, p['bn1_gamma'], p['bn1_beta'], p['bn1_mean'], p['bn1_var'])
    y = pool(y)
    y = lax.conv_general_dilated(y, p['w2'], (1, 1), ((1, 1), (1, 1)),
                                 dimension_numbers=dn, precision=prec)
    y = jnp.maximum(y + p['b2'][None, :, None, None], 0.0)
    y = bn(y, p['bn2_gamma'], p['bn2_beta'], p['bn2_mean'], p['bn2_var'])
    y = pool(y)
    flat = y.reshape(y.shape[0], -1)
    return jnp.dot(flat, p['fcw'].T, precision=prec) + p['fcb'][None, :]


if __name__ == "__main__":
    key = jax.random.PRNGKey(0)
    kx, kp = jax.random.split(key)
    params = init_params(kp)
    x = jax.random.normal(kx, (4, 1, H, W), jnp.float32)    # NCHW, like PyTorch

    fwd = jax.jit(hand_classifier_forward)
    out = jax.block_until_ready(fwd(x, params))

    ref = reference_forward(x, params)
    assert out.shape == (4, NUM_CLASSES)
    if not jnp.allclose(out, ref, atol=1e-3, rtol=1e-3):
        err = float(jnp.max(jnp.abs(out - ref)))
        raise AssertionError(
            f"Pallas output does not match JAX reference (max abs err = {err})")
    print("KERNEL_OK")
</pallas_src>

<mosaic_0001>
module attributes {stable_mosaic.version = 11 : i64} {
  func.func @_hand_kernel(%arg0: i32, %arg1: memref<1x1792x16xf32, #tpu.memory_space<vmem>>, %arg2: memref<16x64xf32, #tpu.memory_space<vmem>>, %arg3: memref<3x64xf32, #tpu.memory_space<vmem>>, %arg4: memref<576x64xf32, #tpu.memory_space<vmem>>, %arg5: memref<3x64xf32, #tpu.memory_space<vmem>>, %arg6: memref<8x104x64xf32, #tpu.memory_space<vmem>>, %arg7: memref<1x8xf32, #tpu.memory_space<vmem>>, %arg8: memref<1x2x8xf32, #tpu.memory_space<vmem>>, %arg9: memref<1792x64xf32, #tpu.memory_space<vmem>>, %arg10: memref<536x64xf32, #tpu.memory_space<vmem>>, %arg11: memref<448x576xf32, #tpu.memory_space<vmem>>, %arg12: memref<448x64xf32, #tpu.memory_space<vmem>>) attributes {dimension_semantics = [#tpu.dimension_semantics<parallel>], iteration_bounds = array<i64: 2>, scalar_prefetch = 0 : i64, scratch_operands = 4 : i64, tpu.core_type = #tpu.core_type<tc>, window_params = [{transform_indices = @transform_0, window_bounds = array<i64: 1, 1792, 16>}, {pipeline_mode = #tpu.pipeline_mode<synchronous>, transform_indices = @transform_1, window_bounds = array<i64: 16, 64>}, {pipeline_mode = #tpu.pipeline_mode<synchronous>, transform_indices = @transform_2, window_bounds = array<i64: 3, 64>}, {pipeline_mode = #tpu.pipeline_mode<synchronous>, transform_indices = @transform_3, window_bounds = array<i64: 576, 64>}, {pipeline_mode = #tpu.pipeline_mode<synchronous>, transform_indices = @transform_4, window_bounds = array<i64: 3, 64>}, {pipeline_mode = #tpu.pipeline_mode<synchronous>, transform_indices = @transform_5, window_bounds = array<i64: 8, 104, 64>}, {pipeline_mode = #tpu.pipeline_mode<synchronous>, transform_indices = @transform_6, window_bounds = array<i64: 1, 8>}, {transform_indices = @transform_7, window_bounds = array<i64: 1, 2, 8>}]} {
    %c0 = arith.constant 0 : index
    %c0_0 = arith.constant 0 : index
    %0 = vector.load %arg3[%c0, %c0_0] : memref<3x64xf32, #tpu.memory_space<vmem>>, vector<1x64xf32>
    %c1 = arith.constant 1 : index
    %c0_1 = arith.constant 0 : index
    %1 = vector.load %arg3[%c1, %c0_1] : memref<3x64xf32, #tpu.memory_space<vmem>>, vector<1x64xf32>
    %c2 = arith.constant 2 : index
    %c0_2 = arith.constant 0 : index
    %2 = vector.load %arg3[%c2, %c0_2] : memref<3x64xf32, #tpu.memory_space<vmem>>, vector<1x64xf32>
    %c0_3 = arith.constant 0 : index
    %c0_4 = arith.constant 0 : index
    %3 = vector.load %arg5[%c0_3, %c0_4] : memref<3x64xf32, #tpu.memory_space<vmem>>, vector<1x64xf32>
    %c1_5 = arith.constant 1 : index
    %c0_6 = arith.constant 0 : index
    %4 = vector.load %arg5[%c1_5, %c0_6] : memref<3x64xf32, #tpu.memory_space<vmem>>, vector<1x64xf32>
    %c2_7 = arith.constant 2 : index
    %c0_8 = arith.constant 0 : index
    %5 = vector.load %arg5[%c2_7, %c0_8] : memref<3x64xf32, #tpu.memory_space<vmem>>, vector<1x64xf32>
    %c0_9 = arith.constant 0 : index
    %c0_10 = arith.constant 0 : index
    %c0_11 = arith.constant 0 : index
    %6 = vector.load %arg1[%c0_9, %c0_10, %c0_11] : memref<1x1792x16xf32, #tpu.memory_space<vmem>>, vector<1x1792x16xf32>
    %7 = vector.shape_cast %6 : vector<1x1792x16xf32> to vector<1792x16xf32>
    %c0_12 = arith.constant 0 : index
    %c0_13 = arith.constant 0 : index
    %8 = vector.load %arg2[%c0_12, %c0_13] : memref<16x64xf32, #tpu.memory_space<vmem>>, vector<16x64xf32>
    %cst = arith.constant dense<0.000000e+00> : vector<1792x64xf32>
    %9 = tpu.matmul %7, %8, %cst {dimension_numbers = #tpu.dot_dimension_numbers<[1], [0], [0], [1], [0, 0, 1, 1], [], []>} : vector<1792x16xf32>, vector<16x64xf32>, vector<1792x64xf32> -> vector<1792x64xf32>
    %c0_14 = arith.constant 0 : index
    %c0_15 = arith.constant 0 : index
    %10 = vector.load %arg9[%c0_14, %c0_15] : memref<1792x64xf32, #tpu.memory_space<vmem>>, vector<1792x64xf32>
    tpu.vector_store %arg9[%c0_14, %c0_15], %9 {strides = array<i32>} : memref<1792x64xf32, #tpu.memory_space<vmem>>, vector<1792x64xf32>,
    %cst_16 = arith.constant 0.000000e+00 : f32
    %11 = vector.broadcast %cst_16 : f32 to vector<17x64xf32>
    %c0_17 = arith.constant 0 : index
    %c0_18 = arith.constant 0 : index
    %12 = vector.load %arg10[%c0_17, %c0_18] : memref<536x64xf32, #tpu.memory_space<vmem>>, vector<17x64xf32>
    tpu.vector_store %arg10[%c0_17, %c0_18], %11 {strides = array<i32>} : memref<536x64xf32, #tpu.memory_space<vmem>>, vector<17x64xf32>,
    %cst_19 = arith.constant 0.000000e+00 : f32
    %13 = vector.broadcast %cst_19 : f32 to vector<32x64xf32>
    %c241 = arith.constant 241 : index
    %c0_20 = arith.constant 0 : index
    %14 = vector.load %arg10[%c241, %c0_20] : memref<536x64xf32, #tpu.memory_space<vmem>>, vector<32x64xf32>
    tpu.vector_store %arg10[%c241, %c0_20], %13 {strides = array<i32>} : memref<536x64xf32, #tpu.memory_space<vmem>>, vector<32x64xf32>,
    %c497 = arith.constant 497 : index
    %c0_21 = arith.constant 0 : index
    %15 = vector.load %arg10[%c497, %c0_21] : memref<536x64xf32, #tpu.memory_space<vmem>>, vector<32x64xf32>
    tpu.vector_store %arg10[%c497, %c0_21], %13 {strides = array<i32>} : memref<536x64xf32, #tpu.memory_space<vmem>>, vector<32x64xf32>,
    %16 = tpu.iota {dimensions = array<i32: 0>} : vector<224x1xi32>
    %c16_i32 = arith.constant 16 : i32
    %c0_i32 = arith.constant 0 : i32
    %17 = arith.cmpi eq, %c16_i32, %c0_i32 : i32
    %c1_i32 = arith.constant 1 : i32
    %18 = arith.select %17, %c1_i32, %c16_i32 : i32
    %19 = vector.broadcast %18 : i32 to vector<224x1xi32>
    %20 = arith.remsi %16, %19 : vector<224x1xi32>
    %c0_i32_22 = arith.constant 0 : i32
    %21 = vector.broadcast %c0_i32_22 : i32 to vector<224x1xi32>
    %22 = arith.cmpi ne, %20, %21 : vector<224x1xi32>
    %c0_i32_23 = arith.constant 0 : i32
    %23 = vector.broadcast %c0_i32_23 : i32 to vector<224x1xi32>
    %24 = arith.cmpi slt, %20, %23 : vector<224x1xi32>
    %c0_i32_24 = arith.constant 0 : i32
    %25 = arith.cmpi slt, %18, %c0_i32_24 : i32
    %26 = vector.broadcast %25 : i1 to vector<224x1xi1>
    %27 = vector.broadcast %26 : vector<224x1xi1> to vector<224x1xi1>
    %28 = arith.xori %24, %27 : vector<224x1xi1>
    %29 = arith.andi %28, %22 : vector<224x1xi1>
    %30 = vector.broadcast %18 : i32 to vector<224x1xi32>
    %31 = arith.addi %20, %30 : vector<224x1xi32>
    %32 = arith.select %29, %31, %20 : vector<224x1xi1>, vector<224x1xi32>
    %c14_i32 = arith.constant 14 : i32
    %33 = vector.broadcast %c14_i32 : i32 to vector<224x1xi32>
    %34 = arith.cmpi slt, %32, %33 : vector<224x1xi32>
    %c0_25 = arith.constant 0 : index
    %c0_26 = arith.constant 0 : index
    %35 = vector.load %arg9[%c0_25, %c0_26] : memref<1792x64xf32, #tpu.memory_space<vmem>>, vector<224x64xf32>
    %c448 = arith.constant 448 : index
    %c0_27 = arith.constant 0 : index
    %36 = vector.load %arg9[%c448, %c0_27] : memref<1792x64xf32, #tpu.memory_space<vmem>>, vector<224x64xf32>
    %37 = arith.maximumf %35, %36 : vector<224x64xf32>
    %c896 = arith.constant 896 : index
    %c0_28 = arith.constant 0 : index
    %38 = vector.load %arg9[%c896, %c0_28] : memref<1792x64xf32, #tpu.memory_space<vmem>>, vector<224x64xf32>
    %39 = arith.maximumf %37, %38 : vector<224x64xf32>
    %c1344 = arith.constant 1344 : index
    %c0_29 = arith.constant 0 : index
    %40 = vector.load %arg9[%c1344, %c0_29] : memref<1792x64xf32, #tpu.memory_space<vmem>>, vector<224x64xf32>
    %41 = arith.maximumf %39, %40 : vector<224x64xf32>
    %42 = vector.broadcast %0 : vector<1x64xf32> to vector<224x64xf32>
    %43 = arith.addf %41, %42 : vector<224x64xf32>
    %cst_30 = arith.constant 5.000000e-01 : f32
    %44 = vector.broadcast %cst_30 : f32 to vector<1x64xf32>
    %45 = arith.cmpf ogt, %2, %44 : vector<1x64xf32>
    %cst_31 = arith.constant 0.000000e+00 : f32
    %46 = vector.broadcast %cst_31 : f32 to vector<224x64xf32>
    %47 = arith.maximumf %43, %46 : vector<224x64xf32>
    %cst_32 = arith.constant 0.000000e+00 : f32
    %48 = vector.broadcast %cst_32 : f32 to vector<224x64xf32>
    %49 = arith.minimumf %43, %48 : vector<224x64xf32>
    %50 = vector.shape_cast %45 : vector<1x64xi1> to vector<1x64xi1>
    %51 = vector.broadcast %50 : vector<1x64xi1> to vector<224x64xi1>
    %52 = arith.select %51, %47, %49 : vector<224x64xi1>, vector<224x64xf32>
    %53 = vector.broadcast %1 : vector<1x64xf32> to vector<224x64xf32>
    %54 = arith.addf %52, %53 : vector<224x64xf32>
    %cst_33 = arith.constant 0.000000e+00 : f32
    %55 = vector.shape_cast %34 : vector<224x1xi1> to vector<224x1xi1>
    %56 = vector.broadcast %55 : vector<224x1xi1> to vector<224x64xi1>
    %57 = vector.broadcast %cst_33 : f32 to vector<224x64xf32>
    %58 = arith.select %56, %54, %57 : vector<224x64xi1>, vector<224x64xf32>
    %c17 = arith.constant 17 : index
    %c0_34 = arith.constant 0 : index
    %59 = vector.load %arg10[%c17, %c0_34] : memref<536x64xf32, #tpu.memory_space<vmem>>, vector<224x64xf32>
    tpu.vector_store %arg10[%c17, %c0_34], %58 {strides = array<i32>} : memref<536x64xf32, #tpu.memory_space<vmem>>, vector<224x64xf32>,
    %c224 = arith.constant 224 : index
    %c0_35 = arith.constant 0 : index
    %60 = vector.load %arg9[%c224, %c0_35] : memref<1792x64xf32, #tpu.memory_space<vmem>>, vector<224x64xf32>
    %c672 = arith.constant 672 : index
    %c0_36 = arith.constant 0 : index
    %61 = vector.load %arg9[%c672, %c0_36] : memref<1792x64xf32, #tpu.memory_space<vmem>>, vector<224x64xf32>
    %62 = arith.maximumf %60, %61 : vector<224x64xf32>
    %c1120 = arith.constant 1120 : index
    %c0_37 = arith.constant 0 : index
    %63 = vector.load %arg9[%c1120, %c0_37] : memref<1792x64xf32, #tpu.memory_space<vmem>>, vector<224x64xf32>
    %64 = arith.maximumf %62, %63 : vector<224x64xf32>
    %c1568 = arith.constant 1568 : index
    %c0_38 = arith.constant 0 : index
    %65 = vector.load %arg9[%c1568, %c0_38] : memref<1792x64xf32, #tpu.memory_space<vmem>>, vector<224x64xf32>
    %66 = arith.maximumf %64, %65 : vector<224x64xf32>
    %67 = vector.broadcast %0 : vector<1x64xf32> to vector<224x64xf32>
    %68 = arith.addf %66, %67 : vector<224x64xf32>
    %cst_39 = arith.constant 5.000000e-01 : f32
    %69 = vector.broadcast %cst_39 : f32 to vector<1x64xf32>
    %70 = arith.cmpf ogt, %2, %69 : vector<1x64xf32>
    %cst_40 = arith.constant 0.000000e+00 : f32
    %71 = vector.broadcast %cst_40 : f32 to vector<224x64xf32>
    %72 = arith.maximumf %68, %71 : vector<224x64xf32>
    %cst_41 = arith.constant 0.000000e+00 : f32
    %73 = vector.broadcast %cst_41 : f32 to vector<224x64xf32>
    %74 = arith.minimumf %68, %73 : vector<224x64xf32>
    %75 = vector.shape_cast %70 : vector<1x64xi1> to vector<1x64xi1>
    %76 = vector.broadcast %75 : vector<1x64xi1> to vector<224x64xi1>
    %77 = arith.select %76, %72, %74 : vector<224x64xi1>, vector<224x64xf32>
    %78 = vector.broadcast %1 : vector<1x64xf32> to vector<224x64xf32>
    %79 = arith.addf %77, %78 : vector<224x64xf32>
    %cst_42 = arith.constant 0.000000e+00 : f32
    %80 = vector.shape_cast %34 : vector<224x1xi1> to vector<224x1xi1>
    %81 = vector.broadcast %80 : vector<224x1xi1> to vector<224x64xi1>
    %82 = vector.broadcast %cst_42 : f32 to vector<224x64xf32>
    %83 = arith.select %81, %79, %82 : vector<224x64xi1>, vector<224x64xf32>
    %c273 = arith.constant 273 : index
    %c0_43 = arith.constant 0 : index
    %84 = vector.load %arg10[%c273, %c0_43] : memref<536x64xf32, #tpu.memory_space<vmem>>, vector<224x64xf32>
    tpu.vector_store %arg10[%c273, %c0_43], %83 {strides = array<i32>} : memref<536x64xf32, #tpu.memory_space<vmem>>, vector<224x64xf32>,
    %c0_44 = arith.constant 0 : index
    %c0_45 = arith.constant 0 : index
    %85 = vector.load %arg10[%c0_44, %c0_45] : memref<536x64xf32, #tpu.memory_space<vmem>>, vector<224x64xf32>
    %c0_46 = arith.constant 0 : index
    %c0_47 = arith.constant 0 : index
    %86 = vector.load %arg11[%c0_46, %c0_47] : memref<448x576xf32, #tpu.memory_space<vmem>>, vector<224x64xf32>
    tpu.vector_store %arg11[%c0_46, %c0_47], %85 {strides = array<i32>} : memref<448x576xf32, #tpu.memory_space<vmem>>, vector<224x64xf32>,
    %c1_48 = arith.constant 1 : index
    %c0_49 = arith.constant 0 : index
    %87 = vector.load %arg10[%c1_48, %c0_49] : memref<536x64xf32, #tpu.memory_space<vmem>>, vector<224x64xf32>
    %c0_50 = arith.constant 0 : index
    %c64 = arith.constant 64 : index
    %88 = vector.load %arg11[%c0_50, %c64] : memref<448x576xf32, #tpu.memory_space<vmem>>, vector<224x64xf32>
    tpu.vector_store %arg11[%c0_50, %c64], %87 {strides = array<i32>} : memref<448x576xf32, #tpu.memory_space<vmem>>, vector<224x64xf32>,
    %c2_51 = arith.constant 2 : index
    %c0_52 = arith.constant 0 : index
    %89 = vector.load %arg10[%c2_51, %c0_52] : memref<536x64xf32, #tpu.memory_space<vmem>>, vector<224x64xf32>
    %c0_53 = arith.constant 0 : index
    %c128 = arith.constant 128 : index
    %90 = vector.load %arg11[%c0_53, %c128] : memref<448x576xf32, #tpu.memory_space<vmem>>, vector<224x64xf32>
    tpu.vector_store %arg11[%c0_53, %c128], %89 {strides = array<i32>} : memref<448x576xf32, #tpu.memory_space<vmem>>, vector<224x64xf32>,
    %c16 = arith.constant 16 : index
    %c0_54 = arith.constant 0 : index
    %91 = vector.load %arg10[%c16, %c0_54] : memref<536x64xf32, #tpu.memory_space<vmem>>, vector<224x64xf32>
    %c0_55 = arith.constant 0 : index
    %c192 = arith.constant 192 : index
    %92 = vector.load %arg11[%c0_55, %c192] : memref<448x576xf32, #tpu.memory_space<vmem>>, vector<224x64xf32>
    tpu.vector_store %arg11[%c0_55, %c192], %91 {strides = array<i32>} : memref<448x576xf32, #tpu.memory_space<vmem>>, vector<224x64xf32>,
    %c17_56 = arith.constant 17 : index
    %c0_57 = arith.constant 0 : index
    %93 = vector.load %arg10[%c17_56, %c0_57] : memref<536x64xf32, #tpu.memory_space<vmem>>, vector<224x64xf32>
    %c0_58 = arith.constant 0 : index
    %c256 = arith.constant 256 : index
    %94 = vector.load %arg11[%c0_58, %c256] : memref<448x576xf32, #tpu.memory_space<vmem>>, vector<224x64xf32>
    tpu.vector_store %arg11[%c0_58, %c256], %93 {strides = array<i32>} : memref<448x576xf32, #tpu.memory_space<vmem>>, vector<224x64xf32>,
    %c18 = arith.constant 18 : index
    %c0_59 = arith.constant 0 : index
    %95 = vector.load %arg10[%c18, %c0_59] : memref<536x64xf32, #tpu.memory_space<vmem>>, vector<224x64xf32>
    %c0_60 = arith.constant 0 : index
    %c320 = arith.constant 320 : index
    %96 = vector.load %arg11[%c0_60, %c320] : memref<448x576xf32, #tpu.memory_space<vmem>>, vector<224x64xf32>
    tpu.vector_store %arg11[%c0_60, %c320], %95 {strides = array<i32>} : memref<448x576xf32, #tpu.memory_space<vmem>>, vector<224x64xf32>,
    %c32 = arith.constant 32 : index
    %c0_61 = arith.constant 0 : index
    %97 = vector.load %arg10[%c32, %c0_61] : memref<536x64xf32, #tpu.memory_space<vmem>>, vector<224x64xf32>
    %c0_62 = arith.constant 0 : index
    %c384 = arith.constant 384 : index
    %98 = vector.load %arg11[%c0_62, %c384] : memref<448x576xf32, #tpu.memory_space<vmem>>, vector<224x64xf32>
    tpu.vector_store %arg11[%c0_62, %c384], %97 {strides = array<i32>} : memref<448x576xf32, #tpu.memory_space<vmem>>, vector<224x64xf32>,
    %c33 = arith.constant 33 : index
    %c0_63 = arith.constant 0 : index
    %99 = vector.load %arg10[%c33, %c0_63] : memref<536x64xf32, #tpu.memory_space<vmem>>, vector<224x64xf32>
    %c0_64 = arith.constant 0 : index
    %c448_65 = arith.constant 448 : index
    %100 = vector.load %arg11[%c0_64, %c448_65] : memref<448x576xf32, #tpu.memory_space<vmem>>, vector<224x64xf32>
    tpu.vector_store %arg11[%c0_64, %c448_65], %99 {strides = array<i32>} : memref<448x576xf32, #tpu.memory_space<vmem>>, vector<224x64xf32>,
    %c34 = arith.constant 34 : index
    %c0_66 = arith.constant 0 : index
    %101 = vector.load %arg10[%c34, %c0_66] : memref<536x64xf32, #tpu.memory_space<vmem>>, vector<224x64xf32>
    %c0_67 = arith.constant 0 : index
    %c512 = arith.constant 512 : index
    %102 = vector.load %arg11[%c0_67, %c512] : memref<448x576xf32, #tpu.memory_space<vmem>>, vector<224x64xf32>
    tpu.vector_store %arg11[%c0_67, %c512], %101 {strides = array<i32>} : memref<448x576xf32, #tpu.memory_space<vmem>>, vector<224x64xf32>,
    %c256_68 = arith.constant 256 : index
    %c0_69 = arith.constant 0 : index
    %103 = vector.load %arg10[%c256_68, %c0_69] : memref<536x64xf32, #tpu.memory_space<vmem>>, vector<224x64xf32>
    %c224_70 = arith.constant 224 : index
    %c0_71 = arith.constant 0 : index
    %104 = vector.load %arg11[%c224_70, %c0_71] : memref<448x576xf32, #tpu.memory_space<vmem>>, vector<224x64xf32>
    tpu.vector_store %arg11[%c224_70, %c0_71], %103 {strides = array<i32>} : memref<448x576xf32, #tpu.memory_space<vmem>>, vector<224x64xf32>,
    %c257 = arith.constant 257 : index
    %c0_72 = arith.constant 0 : index
    %105 = vector.load %arg10[%c257, %c0_72] : memref<536x64xf32, #tpu.memory_space<vmem>>, vector<224x64xf32>
    %c224_73 = arith.constant 224 : index
    %c64_74 = arith.constant 64 : index
    %106 = vector.load %arg11[%c224_73, %c64_74] : memref<448x576xf32, #tpu.memory_space<vmem>>, vector<224x64xf32>
    tpu.vector_store %arg11[%c224_73, %c64_74], %105 {strides = array<i32>} : memref<448x576xf32, #tpu.memory_space<vmem>>, vector<224x64xf32>,
    %c258 = arith.constant 258 : index
    %c0_75 = arith.constant 0 : index
    %107 = vector.load %arg10[%c258, %c0_75] : memref<536x64xf32, #tpu.memory_space<vmem>>, vector<224x64xf32>
    %c224_76 = arith.constant 224 : index
    %c128_77 = arith.constant 128 : index
    %108 = vector.load %arg11[%c224_76, %c128_77] : memref<448x576xf32, #tpu.memory_space<vmem>>, vector<224x64xf32>
    tpu.vector_store %arg11[%c224_76, %c128_77], %107 {strides = array<i32>} : memref<448x576xf32, #tpu.memory_space<vmem>>, vector<224x64xf32>,
    %c272 = arith.constant 272 : index
    %c0_78 = arith.constant 0 : index
    %109 = vector.load %arg10[%c272, %c0_78] : memref<536x64xf32, #tpu.memory_space<vmem>>, vector<224x64xf32>
    %c224_79 = arith.constant 224 : index
    %c192_80 = arith.constant 192 : index
    %110 = vector.load %arg11[%c224_79, %c192_80] : memref<448x576xf32, #tpu.memory_space<vmem>>, vector<224x64xf32>
    tpu.vector_store %arg11[%c224_79, %c192_80], %109 {strides = array<i32>} : memref<448x576xf32, #tpu.memory_space<vmem>>, vector<224x64xf32>,
    %c273_81 = arith.constant 273 : index
    %c0_82 = arith.constant 0 : index
    %111 = vector.load %arg10[%c273_81, %c0_82] : memref<536x64xf32, #tpu.memory_space<vmem>>, vector<224x64xf32>
    %c224_83 = arith.constant 224 : index
    %c256_84 = arith.constant 256 : index
    %112 = vector.load %arg11[%c224_83, %c256_84] : memref<448x576xf32, #tpu.memory_space<vmem>>, vector<224x64xf32>
    tpu.vector_store %arg11[%c224_83, %c256_84], %111 {strides = array<i32>} : memref<448x576xf32, #tpu.memory_space<vmem>>, vector<224x64xf32>,
    %c274 = arith.constant 274 : index
    %c0_85 = arith.constant 0 : index
    %113 = vector.load %arg10[%c274, %c0_85] : memref<536x64xf32, #tpu.memory_space<vmem>>, vector<224x64xf32>
    %c224_86 = arith.constant 224 : index
    %c320_87 = arith.constant 320 : index
    %114 = vector.load %arg11[%c224_86, %c320_87] : memref<448x576xf32, #tpu.memory_space<vmem>>, vector<224x64xf32>
    tpu.vector_store %arg11[%c224_86, %c320_87], %113 {strides = array<i32>} : memref<448x576xf32, #tpu.memory_space<vmem>>, vector<224x64xf32>,
    %c288 = arith.constant 288 : index
    %c0_88 = arith.constant 0 : index
    %115 = vector.load %arg10[%c288, %c0_88] : memref<536x64xf32, #tpu.memory_space<vmem>>, vector<224x64xf32>
    %c224_89 = arith.constant 224 : index
    %c384_90 = arith.constant 384 : index
    %116 = vector.load %arg11[%c224_89, %c384_90] : memref<448x576xf32, #tpu.memory_space<vmem>>, vector<224x64xf32>
    tpu.vector_store %arg11[%c224_89, %c384_90], %115 {strides = array<i32>} : memref<448x576xf32, #tpu.memory_space<vmem>>, vector<224x64xf32>,
    %c289 = arith.constant 289 : index
    %c0_91 = arith.constant 0 : index
    %117 = vector.load %arg10[%c289, %c0_91] : memref<536x64xf32, #tpu.memory_space<vmem>>, vector<224x64xf32>
    %c224_92 = arith.constant 224 : index
    %c448_93 = arith.constant 448 : index
    %118 = vector.load %arg11[%c224_92, %c448_93] : memref<448x576xf32, #tpu.memory_space<vmem>>, vector<224x64xf32>
    tpu.vector_store %arg11[%c224_92, %c448_93], %117 {strides = array<i32>} : memref<448x576xf32, #tpu.memory_space<vmem>>, vector<224x64xf32>,
    %c290 = arith.constant 290 : index
    %c0_94 = arith.constant 0 : index
    %119 = vector.load %arg10[%c290, %c0_94] : memref<536x64xf32, #tpu.memory_space<vmem>>, vector<224x64xf32>
    %c224_95 = arith.constant 224 : index
    %c512_96 = arith.constant 512 : index
    %120 = vector.load %arg11[%c224_95, %c512_96] : memref<448x576xf32, #tpu.memory_space<vmem>>, vector<224x64xf32>
    tpu.vector_store %arg11[%c224_95, %c512_96], %119 {strides = array<i32>} : memref<448x576xf32, #tpu.memory_space<vmem>>, vector<224x64xf32>,
    %c0_97 = arith.constant 0 : index
    %c0_98 = arith.constant 0 : index
    %121 = vector.load %arg11[%c0_97, %c0_98] : memref<448x576xf32, #tpu.memory_space<vmem>>, vector<448x576xf32>
    %c0_99 = arith.constant 0 : index
    %c0_100 = arith.constant 0 : index
    %122 = vector.load %arg4[%c0_99, %c0_100] : memref<576x64xf32, #tpu.memory_space<vmem>>, vector<576x64xf32>
    %cst_101 = arith.constant dense<0.000000e+00> : vector<448x64xf32>
    %123 = tpu.matmul %121, %122, %cst_101 {dimension_numbers = #tpu.dot_dimension_numbers<[1], [0], [0], [1], [0, 0, 1, 1], [], []>} : vector<448x576xf32>, vector<576x64xf32>, vector<448x64xf32> -> vector<448x64xf32>
    %124 = vector.broadcast %3 : vector<1x64xf32> to vector<448x64xf32>
    %125 = arith.addf %123, %124 : vector<448x64xf32>
    %cst_102 = arith.constant 0.000000e+00 : f32
    %126 = vector.broadcast %cst_102 : f32 to vector<448x64xf32>
    %127 = arith.maximumf %125, %126 : vector<448x64xf32>
    %128 = vector.broadcast %4 : vector<1x64xf32> to vector<448x64xf32>
    %129 = arith.mulf %127, %128 : vector<448x64xf32>
    %130 = vector.broadcast %5 : vector<1x64xf32> to vector<448x64xf32>
    %131 = arith.addf %129, %130 : vector<448x64xf32>
    %c0_103 = arith.constant 0 : index
    %c0_104 = arith.constant 0 : index
    %132 = vector.load %arg12[%c0_103, %c0_104] : memref<448x64xf32, #tpu.memory_space<vmem>>, vector<448x64xf32>
    tpu.vector_store %arg12[%c0_103, %c0_104], %131 {strides = array<i32>} : memref<448x64xf32, #tpu.memory_space<vmem>>, vector<448x64xf32>,
    %133 = tpu.iota {dimensions = array<i32: 0>} : vector<2x8xi32>
    %cst_105 = arith.constant 0.000000e+00 : f32
    %134 = vector.broadcast %cst_105 : f32 to vector<2x8xf32>
    %c0_106 = arith.constant 0 : index
    %c0_107 = arith.constant 0 : index
    %135 = vector.load %arg7[%c0_106, %c0_107] : memref<1x8xf32, #tpu.memory_space<vmem>>, vector<1x8xf32>
    %136 = vector.broadcast %135 : vector<1x8xf32> to vector<2x8xf32>
    %137 = arith.addf %134, %136 : vector<2x8xf32>
    %c0_108 = arith.constant 0 : index
    %c0_109 = arith.constant 0 : index
    %138 = tpu.strided_load %arg12[%c0_108, %c0_109] {strides = array<i32: 2, 1>} : memref<448x64xf32, #tpu.memory_space<vmem>>, vector<112x64xf32>
    %c1_110 = arith.constant 1 : index
    %c0_111 = arith.constant 0 : index
    %139 = tpu.strided_load %arg12[%c1_110, %c0_111] {strides = array<i32: 2, 1>} : memref<448x64xf32, #tpu.memory_space<vmem>>, vector<112x64xf32>
    %140 = arith.maximumf %138, %139 : vector<112x64xf32>
    %141 = vector.extract_strided_slice %140 {offsets = [0, 0], sizes = [104, 64], strides = [1, 1]} : vector<112x64xf32> to vector<104x64xf32>
    %142 = vector.extract_strided_slice %140 {offsets = [8, 0], sizes = [104, 64], strides = [1, 1]} : vector<112x64xf32> to vector<104x64xf32>
    %143 = arith.maximumf %141, %142 : vector<104x64xf32>
    %144 = vector.shape_cast %143 : vector<104x64xf32> to vector<1x104x64xf32>
    %c0_112 = arith.constant 0 : index
    %c0_113 = arith.constant 0 : index
    %c0_114 = arith.constant 0 : index
    %145 = vector.load %arg6[%c0_112, %c0_113, %c0_114] : memref<8x104x64xf32, #tpu.memory_space<vmem>>, vector<8x104x64xf32>
    %146 = vector.broadcast %144 : vector<1x104x64xf32> to vector<8x104x64xf32>
    %147 = arith.mulf %146, %145 : vector<8x104x64xf32>
    %cst_115 = arith.constant dense<0.000000e+00> : vector<8x104xf32>
    %148 = vector.multi_reduction <add>, %147, %cst_115 [2] : vector<8x104x64xf32> to vector<8x104xf32>
    %cst_116 = arith.constant dense<0.000000e+00> : vector<8xf32>
    %149 = vector.multi_reduction <add>, %148, %cst_116 [1] : vector<8x104xf32> to vector<8xf32>
    %c0_i32_117 = arith.constant 0 : i32
    %150 = vector.broadcast %c0_i32_117 : i32 to vector<2x8xi32>
    %151 = arith.cmpi eq, %133, %150 : vector<2x8xi32>
    %152 = vector.shape_cast %149 : vector<8xf32> to vector<1x8xf32>
    %cst_118 = arith.constant 0.000000e+00 : f32
    %153 = vector.shape_cast %152 : vector<1x8xf32> to vector<1x8xf32>
    %154 = vector.broadcast %153 : vector<1x8xf32> to vector<2x8xf32>
    %155 = vector.broadcast %cst_118 : f32 to vector<2x8xf32>
    %156 = arith.select %151, %154, %155 : vector<2x8xi1>, vector<2x8xf32>
    %157 = arith.addf %137, %156 : vector<2x8xf32>
    %c224_119 = arith.constant 224 : index
    %c0_120 = arith.constant 0 : index
    %158 = tpu.strided_load %arg12[%c224_119, %c0_120] {strides = array<i32: 2, 1>} : memref<448x64xf32, #tpu.memory_space<vmem>>, vector<112x64xf32>
    %c225 = arith.constant 225 : index
    %c0_121 = arith.constant 0 : index
    %159 = tpu.strided_load %arg12[%c225, %c0_121] {strides = array<i32: 2, 1>} : memref<448x64xf32, #tpu.memory_space<vmem>>, vector<112x64xf32>
    %160 = arith.maximumf %158, %159 : vector<112x64xf32>
    %161 = vector.extract_strided_slice %160 {offsets = [0, 0], sizes = [104, 64], strides = [1, 1]} : vector<112x64xf32> to vector<104x64xf32>
    %162 = vector.extract_strided_slice %160 {offsets = [8, 0], sizes = [104, 64], strides = [1, 1]} : vector<112x64xf32> to vector<104x64xf32>
    %163 = arith.maximumf %161, %162 : vector<104x64xf32>
    %164 = vector.shape_cast %163 : vector<104x64xf32> to vector<1x104x64xf32>
    %c0_122 = arith.constant 0 : index
    %c0_123 = arith.constant 0 : index
    %c0_124 = arith.constant 0 : index
    %165 = vector.load %arg6[%c0_122, %c0_123, %c0_124] : memref<8x104x64xf32, #tpu.memory_space<vmem>>, vector<8x104x64xf32>
    %166 = vector.broadcast %164 : vector<1x104x64xf32> to vector<8x104x64xf32>
    %167 = arith.mulf %166, %165 : vector<8x104x64xf32>
    %cst_125 = arith.constant dense<0.000000e+00> : vector<8x104xf32>
    %168 = vector.multi_reduction <add>, %167, %cst_125 [2] : vector<8x104x64xf32> to vector<8x104xf32>
    %cst_126 = arith.constant dense<0.000000e+00> : vector<8xf32>
    %169 = vector.multi_reduction <add>, %168, %cst_126 [1] : vector<8x104xf32> to vector<8xf32>
    %c1_i32_127 = arith.constant 1 : i32
    %170 = vector.broadcast %c1_i32_127 : i32 to vector<2x8xi32>
    %171 = arith.cmpi eq, %133, %170 : vector<2x8xi32>
    %172 = vector.shape_cast %169 : vector<8xf32> to vector<1x8xf32>
    %cst_128 = arith.constant 0.000000e+00 : f32
    %173 = vector.shape_cast %172 : vector<1x8xf32> to vector<1x8xf32>
    %174 = vector.broadcast %173 : vector<1x8xf32> to vector<2x8xf32>
    %175 = vector.broadcast %cst_128 : f32 to vector<2x8xf32>
    %176 = arith.select %171, %174, %175 : vector<2x8xi1>, vector<2x8xf32>
    %177 = arith.addf %157, %176 : vector<2x8xf32>
    %c0_129 = arith.constant 0 : index
    %c0_130 = arith.constant 0 : index
    %c0_131 = arith.constant 0 : index
    %178 = vector.load %arg8[%c0_129, %c0_130, %c0_131] : memref<1x2x8xf32, #tpu.memory_space<vmem>>, vector<1x2x8xf32>
    %179 = vector.shape_cast %178 : vector<1x2x8xf32> to vector<2x8xf32>
    %180 = vector.shape_cast %177 : vector<2x8xf32> to vector<1x2x8xf32>
    tpu.vector_store %arg8[%c0_129, %c0_130, %c0_131], %180 {strides = array<i32>} : memref<1x2x8xf32, #tpu.memory_space<vmem>>, vector<1x2x8xf32>,
    return
  }
  func.func @transform_0(%arg0: i32) -> (i32, i32, i32) {
    %c0_i32 = arith.constant 0 : i32
    %c0_i32_0 = arith.constant 0 : i32
    %c0_i32_1 = arith.constant 0 : i32
    return %arg0, %c0_i32, %c0_i32_0 : i32, i32, i32
  }
  func.func @transform_1(%arg0: i32) -> (i32, i32) {
    %c0_i32 = arith.constant 0 : i32
    %c0_i32_0 = arith.constant 0 : i32
    %c0_i32_1 = arith.constant 0 : i32
    return %c0_i32, %c0_i32_0 : i32, i32
  }
  func.func @transform_2(%arg0: i32) -> (i32, i32) {
    %c0_i32 = arith.constant 0 : i32
    %c0_i32_0 = arith.constant 0 : i32
    %c0_i32_1 = arith.constant 0 : i32
    return %c0_i32, %c0_i32_0 : i32, i32
  }
  func.func @transform_3(%arg0: i32) -> (i32, i32) {
    %c0_i32 = arith.constant 0 : i32
    %c0_i32_0 = arith.constant 0 : i32
    %c0_i32_1 = arith.constant 0 : i32
    return %c0_i32, %c0_i32_0 : i32, i32
  }
  func.func @transform_4(%arg0: i32) -> (i32, i32) {
    %c0_i32 = arith.constant 0 : i32
    %c0_i32_0 = arith.constant 0 : i32
    %c0_i32_1 = arith.constant 0 : i32
    return %c0_i32, %c0_i32_0 : i32, i32
  }
  func.func @transform_5(%arg0: i32) -> (i32, i32, i32) {
    %c0_i32 = arith.constant 0 : i32
    %c0_i32_0 = arith.constant 0 : i32
    %c0_i32_1 = arith.constant 0 : i32
    %c0_i32_2 = arith.constant 0 : i32
    return %c0_i32, %c0_i32_0, %c0_i32_1 : i32, i32, i32
  }
  func.func @transform_6(%arg0: i32) -> (i32, i32) {
    %c0_i32 = arith.constant 0 : i32
    %c0_i32_0 = arith.constant 0 : i32
    %c0_i32_1 = arith.constant 0 : i32
    return %c0_i32, %c0_i32_0 : i32, i32
  }
  func.func @transform_7(%arg0: i32) -> (i32, i32, i32) {
    %c0_i32 = arith.constant 0 : i32
    %c0_i32_0 = arith.constant 0 : i32
    %c0_i32_1 = arith.constant 0 : i32
    return %arg0, %c0_i32, %c0_i32_0 : i32, i32, i32
  }
}

</mosaic_0001>

<llo_original>
// kernel: hand_classifier_forward.1
$region0: #{hand_classifier_forward.1}
  #allocation0 [shape = 'u32[]', space=smem, size = 0x4, offset = 0x4, fixed_abs, tag = 'smem constant byte address 0x4 - core index']
  #allocation1 [shape = 'u32[144,128]{1,0:T(1,128)}', space=vmem, size = 0x12000, scoped, tag = 'internal scratch']
  #allocation2 [shape = 'f32[1792,64]{1,0:T(8,128)}', space=vmem, size = 0xe0000, scoped, tag = 'scratch operand']
  #allocation3 [shape = 'f32[536,64]{1,0:T(8,128)}', space=vmem, size = 0x43000, scoped, tag = 'scratch operand']
  #allocation4 [shape = 'f32[448,576]{1,0:T(8,128)}', space=vmem, size = 0x118000, scoped, tag = 'scratch operand']
  #allocation5 [shape = 'f32[448,64]{1,0:T(8,128)}', space=vmem, size = 0x38000, scoped, tag = 'scratch operand']
  %s0 = inlined_call_operand.vmem [shape: f32[2,1792,16], index: 0, kind: input, shape index: {}]
  %s1 = inlined_call_operand.vmem [shape: f32[16,64], index: 1, kind: input, shape index: {}]
  %s2 = inlined_call_operand.vmem [shape: f32[3,64], index: 2, kind: input, shape index: {}]
  %s3 = inlined_call_operand.vmem [shape: f32[576,64], index: 3, kind: input, shape index: {}]
  %s4 = inlined_call_operand.vmem [shape: f32[3,64], index: 4, kind: input, shape index: {}]
  %s5 = inlined_call_operand.vmem [shape: f32[8,104,64], index: 5, kind: input, shape index: {}]
  %s6 = inlined_call_operand.vmem [shape: f32[1,8], index: 6, kind: input, shape index: {}]
  %s7 = inlined_call_operand.hbm [shape: f32[2,2,8], index: 7, kind: output, shape index: {}]
  %s8 = sld [smem:[#allocation0]]
  $region61: #{hand_classifier_forward.1} parent=0
    _
  %s10 = ssub.s32 1, %s8
  %s11 = scalar_select 0, %s10, %s8
  $region1: #{hand_classifier_forward.1} parent=0
    #allocation6 [shape = 'u8[2048]{0}', space=vmem, size = 0x800, scoped, tag = 'output window, operand 0']
    #allocation7 [shape = 's32[2]{0}', space=sflag, size = 0x8, scoped, tag = 'scoped memory for hand_classifier_forward.1']
    %12 = vsyncpa [#allocation7], 0
    %s13 = scalar_lea.sflag [#allocation7], 1
    %14 = vsyncpa %s13, 0
    loop: start=0, step=1, limit=4
    $region2: #{hand_classifier_forward.1} parent=1 // loop_pre_header
      _
    $region3: #{hand_classifier_forward.1} parent=1 // loop_header
      %s16 = sphi 0, %s20
      %p17 = scmp.ge.s32.totalorder %s16, 4
      %s26 = sphi 0, %s28
      %s29 = sphi 0, %s26
      %s30 = sphi 0, %s29
      %s46 = sphi 0, %s30
      %s50 = sphi 0, %s50
      %s52 = sphi 0, %s50
      %s53 = sphi 0, %s52
      %s67 = sphi 0, %s53
      %s71 = sphi 0, %s71
      %s73 = sphi 0, %s71
      %s74 = sphi 0, %s73
      %s88 = sphi 0, %s74
      %s92 = sphi 0, %s92
      %s94 = sphi 0, %s92
      %s95 = sphi 0, %s94
      %s109 = sphi 0, %s95
      %s113 = sphi 0, %s113
      %s115 = sphi 0, %s113
      %s116 = sphi 0, %s115
      %s130 = sphi 0, %s116
      %s134 = sphi 0, %s134
      %s136 = sphi 0, %s134
      %s137 = sphi 0, %s136
      %s151 = sphi 0, %s137
      %s155 = sphi 0, %s155
      %s157 = sphi 0, %s155
      %s158 = sphi 0, %s157
      %s172 = sphi 0, %s158
      %s178 = sphi 0, %s180
      %s181 = sphi 0, %s178
      %s182 = sphi 0, %s181
      %s198 = sphi 0, %s182
    $region4: #{hand_classifier_forward.1} parent=1 // loop_header_branch
      %19 = sbr.rel (%p17) target = $region8
    $region5: #{hand_classifier_forward.1} parent=1 // loop_body
      %s21 = ssub.s32 %s16, 1
      %s22 = ssub.s32 %s16, 2
      %s23 = sadd.s32 %s16, 1
      %s24 = ssub.s32 %s16, %s23
      %p25 = scmp.eq.s32.totalorder %s24, 0
      %s27 = sadd.s32 %s26, 1
      %s28 = scalar_select %p25, %s26, %s27
      %p31 = pneg %p25
      %p32 = scmp.eq.s32.totalorder %s16, 1
      %p33 = por %p31, %p32
      %p34 = scmp.ne.s32.totalorder %s26, %s29
      %p35 = scmp.eq.s32.totalorder %s16, 0
      %p36 = por %p34, %p35
      %p37 = scmp.ne.s32.totalorder %s26, %s29
      %p38 = scmp.eq.s32.totalorder %s21, 1
      %p39 = por %p37, %p38
      %p40 = scmp.ne.s32.totalorder %s29, %s30
      %p41 = scmp.eq.s32.totalorder %s21, 0
      %p42 = por %p40, %p41
      %p43 = scmp.ne.s32.totalorder %s29, %s30
      %p44 = scmp.eq.s32.totalorder %s22, 1
      %p45 = por %p43, %p44
      %p47 = scmp.ne.s32.totalorder %s30, %s46
      %p48 = scmp.eq.s32.totalorder %s22, 0
      %p49 = por %p47, %p48
      %s51 = sadd.s32 %s50, 1
      %p54 = scmp.eq.s32.totalorder %s16, 1
      %p55 = scmp.ne.s32.totalorder %s50, %s52
      %p56 = scmp.eq.s32.totalorder %s16, 0
      %p57 = por %p55, %p56
      %p58 = scmp.ne.s32.totalorder %s50, %s52
      %p59 = scmp.eq.s32.totalorder %s21, 1
      %p60 = por %p58, %p59
      %p61 = scmp.ne.s32.totalorder %s52, %s53
      %p62 = scmp.eq.s32.totalorder %s21, 0
      %p63 = por %p61, %p62
      %p64 = scmp.ne.s32.totalorder %s52, %s53
      %p65 = scmp.eq.s32.totalorder %s22, 1
      %p66 = por %p64, %p65
      %p68 = scmp.ne.s32.totalorder %s53, %s67
      %p69 = scmp.eq.s32.totalorder %s22, 0
      %p70 = por %p68, %p69
      %s72 = sadd.s32 %s71, 1
      %p75 = scmp.eq.s32.totalorder %s16, 1
      %p76 = scmp.ne.s32.totalorder %s71, %s73
      %p77 = scmp.eq.s32.totalorder %s16, 0
      %p78 = por %p76, %p77
      %p79 = scmp.ne.s32.totalorder %s71, %s73
      %p80 = scmp.eq.s32.totalorder %s21, 1
      %p81 = por %p79, %p80
      %p82 = scmp.ne.s32.totalorder %s73, %s74
      %p83 = scmp.eq.s32.totalorder %s21, 0
      %p84 = por %p82, %p83
      %p85 = scmp.ne.s32.totalorder %s73, %s74
      %p86 = scmp.eq.s32.totalorder %s22, 1
      %p87 = por %p85, %p86
      %p89 = scmp.ne.s32.totalorder %s74, %s88
      %p90 = scmp.eq.s32.totalorder %s22, 0
      %p91 = por %p89, %p90
      %s93 = sadd.s32 %s92, 1
      %p96 = scmp.eq.s32.totalorder %s16, 1
      %p97 = scmp.ne.s32.totalorder %s92, %s94
      %p98 = scmp.eq.s32.totalorder %s16, 0
      %p99 = por %p97, %p98
      %p100 = scmp.ne.s32.totalorder %s92, %s94
      %p101 = scmp.eq.s32.totalorder %s21, 1
      %p102 = por %p100, %p101
      %p103 = scmp.ne.s32.totalorder %s94, %s95
      %p104 = scmp.eq.s32.totalorder %s21, 0
      %p105 = por %p103, %p104
      %p106 = scmp.ne.s32.totalorder %s94, %s95
      %p107 = scmp.eq.s32.totalorder %s22, 1
      %p108 = por %p106, %p107
      %p110 = scmp.ne.s32.totalorder %s95, %s109
      %p111 = scmp.eq.s32.totalorder %s22, 0
      %p112 = por %p110, %p111
      %s114 = sadd.s32 %s113, 1
      %p117 = scmp.eq.s32.totalorder %s16, 1
      %p118 = scmp.ne.s32.totalorder %s113, %s115
      %p119 = scmp.eq.s32.totalorder %s16, 0
      %p120 = por %p118, %p119
      %p121 = scmp.ne.s32.totalorder %s113, %s115
      %p122 = scmp.eq.s32.totalorder %s21, 1
      %p123 = por %p121, %p122
      %p124 = scmp.ne.s32.totalorder %s115, %s116
      %p125 = scmp.eq.s32.totalorder %s21, 0
      %p126 = por %p124, %p125
      %p127 = scmp.ne.s32.totalorder %s115, %s116
      %p128 = scmp.eq.s32.totalorder %s22, 1
      %p129 = por %p127, %p128
      %p131 = scmp.ne.s32.totalorder %s116, %s130
      %p132 = scmp.eq.s32.totalorder %s22, 0
      %p133 = por %p131, %p132
      %s135 = sadd.s32 %s134, 1
      %p138 = scmp.eq.s32.totalorder %s16, 1
      %p139 = scmp.ne.s32.totalorder %s134, %s136
      %p140 = scmp.eq.s32.totalorder %s16, 0
      %p141 = por %p139, %p140
      %p142 = scmp.ne.s32.totalorder %s134, %s136
      %p143 = scmp.eq.s32.totalorder %s21, 1
      %p144 = por %p142, %p143
      %p145 = scmp.ne.s32.totalorder %s136, %s137
      %p146 = scmp.eq.s32.totalorder %s21, 0
      %p147 = por %p145, %p146
      %p148 = scmp.ne.s32.totalorder %s136, %s137
      %p149 = scmp.eq.s32.totalorder %s22, 1
      %p150 = por %p148, %p149
      %p152 = scmp.ne.s32.totalorder %s137, %s151
      %p153 = scmp.eq.s32.totalorder %s22, 0
      %p154 = por %p152, %p153
      %s156 = sadd.s32 %s155, 1
      %p159 = scmp.eq.s32.totalorder %s16, 1
      %p160 = scmp.ne.s32.totalorder %s155, %s157
      %p161 = scmp.eq.s32.totalorder %s16, 0
      %p162 = por %p160, %p161
      %p163 = scmp.ne.s32.totalorder %s155, %s157
      %p164 = scmp.eq.s32.totalorder %s21, 1
      %p165 = por %p163, %p164
      %p166 = scmp.ne.s32.totalorder %s157, %s158
      %p167 = scmp.eq.s32.totalorder %s21, 0
      %p168 = por %p166, %p167
      %p169 = scmp.ne.s32.totalorder %s157, %s158
      %p170 = scmp.eq.s32.totalorder %s22, 1
      %p171 = por %p169, %p170
      %p173 = scmp.ne.s32.totalorder %s158, %s172
      %p174 = scmp.eq.s32.totalorder %s22, 0
      %p175 = por %p173, %p174
      %s176 = ssub.s32 %s16, %s23
      %p177 = scmp.eq.s32.totalorder %s176, 0
      %s179 = sadd.s32 %s178, 1
      %s180 = scalar_select %p177, %s178, %s179
      %p183 = pneg %p177
      %p184 = scmp.eq.s32.totalorder %s16, 1
      %p185 = por %p183, %p184
      %p186 = scmp.ne.s32.totalorder %s178, %s181
      %p187 = scmp.eq.s32.totalorder %s16, 0
      %p188 = por %p186, %p187
      %p189 = scmp.ne.s32.totalorder %s178, %s181
      %p190 = scmp.eq.s32.totalorder %s21, 1
      %p191 = por %p189, %p190
      %p192 = scmp.ne.s32.totalorder %s181, %s182
      %p193 = scmp.eq.s32.totalorder %s21, 0
      %p194 = por %p192, %p193
      %p195 = scmp.ne.s32.totalorder %s181, %s182
      %p196 = scmp.eq.s32.totalorder %s22, 1
      %p197 = por %p195, %p196
      %p199 = scmp.ne.s32.totalorder %s182, %s198
      %p200 = scmp.eq.s32.totalorder %s22, 0
      %p201 = por %p199, %p200
      %p202 = scmp.le.s32.totalorder 1, %s16
      %p203 = scmp.lt.s32.totalorder %s16, 3
      %p204 = pnand %p202, %p203
      %p205 = pneg %p204
      // Predicated region
      $region9: #{hand_classifier_forward.1} parent=5 // pred_check
        _
      $region10: #{hand_classifier_forward.1} parent=5 // pred_check_branch
        %207 = sbr.rel (%p204) target = $region12
      $region11: #{hand_classifier_forward.1} parent=5 // pred_region
        %s208 = ssub.s32 %s16, 1
        // Predicated region
        $region13: #{hand_classifier_forward.1} parent=11 // pred_check
          %p209 = pneg %p63
        $region14: #{hand_classifier_forward.1} parent=11 // pred_check_branch
          %211 = sbr.rel (%p209) target = $region16
        $region15: #{hand_classifier_forward.1} parent=11 // pred_region
          _
        $region16: #{hand_classifier_forward.1} parent=11 // pred_fallthru
          _
        // Predicated region
        $region17: #{hand_classifier_forward.1} parent=11 // pred_check
          %p212 = pneg %p84
        $region18: #{hand_classifier_forward.1} parent=11 // pred_check_branch
          %214 = sbr.rel (%p212) target = $region20
        $region19: #{hand_classifier_forward.1} parent=11 // pred_region
          _
        $region20: #{hand_classifier_forward.1} parent=11 // pred_fallthru
          _
        // Predicated region
        $region21: #{hand_classifier_forward.1} parent=11 // pred_check
          %p215 = pneg %p105
        $region22: #{hand_classifier_forward.1} parent=11 // pred_check_branch
          %217 = sbr.rel (%p215) target = $region24
        $region23: #{hand_classifier_forward.1} parent=11 // pred_region
          _
        $region24: #{hand_classifier_forward.1} parent=11 // pred_fallthru
          _
        // Predicated region
        $region25: #{hand_classifier_forward.1} parent=11 // pred_check
          %p218 = pneg %p126
        $region26: #{hand_classifier_forward.1} parent=11 // pred_check_branch
          %220 = sbr.rel (%p218) target = $region28
        $region27: #{hand_classifier_forward.1} parent=11 // pred_region
          _
        $region28: #{hand_classifier_forward.1} parent=11 // pred_fallthru
          _
        // Predicated region
        $region29: #{hand_classifier_forward.1} parent=11 // pred_check
          %p221 = pneg %p147
        $region30: #{hand_classifier_forward.1} parent=11 // pred_check_branch
          %223 = sbr.rel (%p221) target = $region32
        $region31: #{hand_classifier_forward.1} parent=11 // pred_region
          _
        $region32: #{hand_classifier_forward.1} parent=11 // pred_fallthru
          _
        // Predicated region
        $region33: #{hand_classifier_forward.1} parent=11 // pred_check
          %p224 = pneg %p168
        $region34: #{hand_classifier_forward.1} parent=11 // pred_check_branch
          %226 = sbr.rel (%p224) target = $region36
        $region35: #{hand_classifier_forward.1} parent=11 // pred_region
          _
        $region36: #{hand_classifier_forward.1} parent=11 // pred_fallthru
          _
      $region12: #{hand_classifier_forward.1} parent=5 // pred_fallthru
        _
      %p227 = scmp.lt.s32.totalorder %s16, 2
      // Predicated region
      $region37: #{hand_classifier_forward.1} parent=5 // pred_check
        %p228 = pneg %p227
      $region38: #{hand_classifier_forward.1} parent=5 // pred_check_branch
        %230 = sbr.rel (%p228) target = $region40
      $region39: #{hand_classifier_forward.1} parent=5 // pred_region
        // Predicated region
        $region41: #{hand_classifier_forward.1} parent=39 // pred_check
          %p231 = pneg %p36
        $region42: #{hand_classifier_forward.1} parent=39 // pred_check_branch
          %233 = sbr.rel (%p231) target = $region44
        $region43: #{hand_classifier_forward.1} parent=39 // pred_region
          %p234 = scmp.lt.s32.totalorder %s16, 1
          %s235 = scalar_select %p234, %s16, 1
          %s236 = smul.addr %s235, 224
          %s237 = smul.addr %s236, 8
          %s238 = scalar_lea.vmem %s0, %s237
        $region44: #{hand_classifier_forward.1} parent=39 // pred_fallthru
          _
      $region40: #{hand_classifier_forward.1} parent=5 // pred_fallthru
        _
      %p239 = scmp.le.s32.totalorder 1, %s16
      %p240 = scmp.lt.s32.totalorder %s16, 3
      %p241 = pnand %p239, %p240
      %p242 = pneg %p241
      // Predicated region
      $region45: #{hand_classifier_forward.1} parent=5 // pred_check
        _
      $region46: #{hand_classifier_forward.1} parent=5 // pred_check_branch
        %244 = sbr.rel (%p241) target = $region48
      $region47: #{hand_classifier_forward.1} parent=5 // pred_region
        %s245 = ssub.s32 %s16, 1
        %p246 = scmp.lt.s32.totalorder %s21, 1
        %s247 = scalar_select %p246, %s21, 1
        %s248 = smul.addr %s247, 224
        %s249 = smul.addr %s248, 8
        %s250 = scalar_lea.vmem %s0, %s249
        %p251 = pneg %p42
        %p252 = pneg %p39
        %p253 = pneg %p63
        %p254 = pneg %p60
        %p255 = pneg %p84
        %p256 = pneg %p81
        %p257 = pneg %p105
        %p258 = pneg %p102
        %p259 = pneg %p126
        %p260 = pneg %p123
        %p261 = pneg %p147
        %p262 = pneg %p144
        %p263 = pneg %p168
        %p264 = pneg %p165
        %p265 = pneg %p194
        %p266 = pneg %p191
        %s267 = sand.u32 %s181, 1
        %s268 = scalar_lea.sflag [#allocation7], %s267
        %s269 = sand.u32 %s181, 1
        %s270 = smul.addr %s269, 2
        %s271 = scalar_lea.vmem [#allocation6], %s270
        %p272 = scmp.lt.s32.totalorder %s21, 1
        %s273 = scalar_select %p272, %s21, 1
        %s274 = smul.addr %s273, 224
        %s275 = smul.addr %s274, 8
        %s276 = scalar_lea.vmem %s0, %s275
        %v277 = vld [vmem:[%s2] sm:$0x1]
        %v278 = vld [vmem:[%s2 + $0x1] sm:$0x1]
        %v279 = vld [vmem:[%s2 + $0x2] sm:$0x1]
        %v280 = vld [vmem:[%s4] sm:$0x1]
        %v281 = vld [vmem:[%s4 + $0x1] sm:$0x1]
        %v282 = vld [vmem:[%s4 + $0x2] sm:$0x1]
        %v283 = vld [vmem:[%s276] sm:$0xff]
        %v284 = vld [vmem:[%s276 + $0x8] sm:$0xff]
        %v285 = vld [vmem:[%s276 + $0x10] sm:$0xff]
        %v286 = vld [vmem:[%s276 + $0x18] sm:$0xff]
        %v287 = vld [vmem:[%s276 + $0x20] sm:$0xff]
        %v288 = vld [vmem:[%s276 + $0x28] sm:$0xff]
        %v289 = vld [vmem:[%s276 + $0x30] sm:$0xff]
        %v290 = vld [vmem:[%s276 + $0x38] sm:$0xff]
        %v291 = vld [vmem:[%s276 + $0x40] sm:$0xff]
        %v292 = vld [vmem:[%s276 + $0x48] sm:$0xff]
        %v293 = vld [vmem:[%s276 + $0x50] sm:$0xff]
        %v294 = vld [vmem:[%s276 + $0x58] sm:$0xff]
        %v295 = vld [vmem:[%s276 + $0x60] sm:$0xff]
        %v296 = vld [vmem:[%s276 + $0x68] sm:$0xff]
        %v297 = vld [vmem:[%s276 + $0x70] sm:$0xff]
        %v298 = vld [vmem:[%s276 + $0x78] sm:$0xff]
        %v299 = vld [vmem:[%s276 + $0x80] sm:$0xff]
        %v300 = vld [vmem:[%s276 + $0x88] sm:$0xff]
        %v301 = vld [vmem:[%s276 + $0x90] sm:$0xff]
        %v302 = vld [vmem:[%s276 + $0x98] sm:$0xff]
        %v303 = vld [vmem:[%s276 + $0xa0] sm:$0xff]
        %v304 = vld [vmem:[%s276 + $0xa8] sm:$0xff]
        %v305 = vld [vmem:[%s276 + $0xb0] sm:$0xff]
        %v306 = vld [vmem:[%s276 + $0xb8] sm:$0xff]
        %v307 = vld [vmem:[%s276 + $0xc0] sm:$0xff]
        %v308 = vld [vmem:[%s276 + $0xc8] sm:$0xff]
        %v309 = vld [vmem:[%s276 + $0xd0] sm:$0xff]
        %v310 = vld [vmem:[%s276 + $0xd8] sm:$0xff]
        %v311 = vld [vmem:[%s276 + $0xe0] sm:$0xff]
        %v312 = vld [vmem:[%s276 + $0xe8] sm:$0xff]
        %v313 = vld [vmem:[%s276 + $0xf0] sm:$0xff]
        %v314 = vld [vmem:[%s276 + $0xf8] sm:$0xff]
        %v315 = vld [vmem:[%s276 + $0x100] sm:$0xff]
        %v316 = vld [vmem:[%s276 + $0x108] sm:$0xff]
        %v317 = vld [vmem:[%s276 + $0x110] sm:$0xff]
        %v318 = vld [vmem:[%s276 + $0x118] sm:$0xff]
        %v319 = vld [vmem:[%s276 + $0x120] sm:$0xff]
        %v320 = vld [vmem:[%s276 + $0x128] sm:$0xff]
        %v321 = vld [vmem:[%s276 + $0x130] sm:$0xff]
        %v322 = vld [vmem:[%s276 + $0x138] sm:$0xff]
        %v323 = vld [vmem:[%s276 + $0x140] sm:$0xff]
        %v324 = vld [vmem:[%s276 + $0x148] sm:$0xff]
        %v325 = vld [vmem:[%s276 + $0x150] sm:$0xff]
        %v326 = vld [vmem:[%s276 + $0x158] sm:$0xff]
        %v327 = vld [vmem:[%s276 + $0x160] sm:$0xff]
        %v328 = vld [vmem:[%s276 + $0x168] sm:$0xff]
        %v329 = vld [vmem:[%s276 + $0x170] sm:$0xff]
        %v330 = vld [vmem:[%s276 + $0x178] sm:$0xff]
        %v331 = vld [vmem:[%s276 + $0x180] sm:$0xff]
        %v332 = vld [vmem:[%s276 + $0x188] sm:$0xff]
        %v333 = vld [vmem:[%s276 + $0x190] sm:$0xff]
        %v334 = vld [vmem:[%s276 + $0x198] sm:$0xff]
        %v335 = vld [vmem:[%s276 + $0x1a0] sm:$0xff]
        %v336 = vld [vmem:[%s276 + $0x1a8] sm:$0xff]
        %v337 = vld [vmem:[%s276 + $0x1b0] sm:$0xff]
        %v338 = vld [vmem:[%s276 + $0x1b8] sm:$0xff]
        %v339 = vld [vmem:[%s276 + $0x1c0] sm:$0xff]
        %v340 = vld [vmem:[%s276 + $0x1c8] sm:$0xff]
        %v341 = vld [vmem:[%s276 + $0x1d0] sm:$0xff]
        %v342 = vld [vmem:[%s276 + $0x1d8] sm:$0xff]
        %v343 = vld [vmem:[%s276 + $0x1e0] sm:$0xff]
        %v344 = vld [vmem:[%s276 + $0x1e8] sm:$0xff]
        %v345 = vld [vmem:[%s276 + $0x1f0] sm:$0xff]
        %v346 = vld [vmem:[%s276 + $0x1f8] sm:$0xff]
        %v347 = vld [vmem:[%s276 + $0x200] sm:$0xff]
        %v348 = vld [vmem:[%s276 + $0x208] sm:$0xff]
        %v349 = vld [vmem:[%s276 + $0x210] sm:$0xff]
        %v350 = vld [vmem:[%s276 + $0x218] sm:$0xff]
        %v351 = vld [vmem:[%s276 + $0x220] sm:$0xff]
        %v352 = vld [vmem:[%s276 + $0x228] sm:$0xff]
        %v353 = vld [vmem:[%s276 + $0x230] sm:$0xff]
        %v354 = vld [vmem:[%s276 + $0x238] sm:$0xff]
        %v355 = vld [vmem:[%s276 + $0x240] sm:$0xff]
        %v356 = vld [vmem:[%s276 + $0x248] sm:$0xff]
        %v357 = vld [vmem:[%s276 + $0x250] sm:$0xff]
        %v358 = vld [vmem:[%s276 + $0x258] sm:$0xff]
        %v359 = vld [vmem:[%s276 + $0x260] sm:$0xff]
        %v360 = vld [vmem:[%s276 + $0x268] sm:$0xff]
        %v361 = vld [vmem:[%s276 + $0x270] sm:$0xff]
        %v362 = vld [vmem:[%s276 + $0x278] sm:$0xff]
        %v363 = vld [vmem:[%s276 + $0x280] sm:$0xff]
        %v364 = vld [vmem:[%s276 + $0x288] sm:$0xff]
        %v365 = vld [vmem:[%s276 + $0x290] sm:$0xff]
        %v366 = vld [vmem:[%s276 + $0x298] sm:$0xff]
        %v367 = vld [vmem:[%s276 + $0x2a0] sm:$0xff]
        %v368 = vld [vmem:[%s276 + $0x2a8] sm:$0xff]
        %v369 = vld [vmem:[%s276 + $0x2b0] sm:$0xff]
        %v370 = vld [vmem:[%s276 + $0x2b8] sm:$0xff]
        %v371 = vld [vmem:[%s276 + $0x2c0] sm:$0xff]
        %v372 = vld [vmem:[%s276 + $0x2c8] sm:$0xff]
        %v373 = vld [vmem:[%s276 + $0x2d0] sm:$0xff]
        %v374 = vld [vmem:[%s276 + $0x2d8] sm:$0xff]
        %v375 = vld [vmem:[%s276 + $0x2e0] sm:$0xff]
        %v376 = vld [vmem:[%s276 + $0x2e8] sm:$0xff]
        %v377 = vld [vmem:[%s276 + $0x2f0] sm:$0xff]
        %v378 = vld [vmem:[%s276 + $0x2f8] sm:$0xff]
        %v379 = vld [vmem:[%s276 + $0x300] sm:$0xff]
        %v380 = vld [vmem:[%s276 + $0x308] sm:$0xff]
        %v381 = vld [vmem:[%s276 + $0x310] sm:$0xff]
        %v382 = vld [vmem:[%s276 + $0x318] sm:$0xff]
        %v383 = vld [vmem:[%s276 + $0x320] sm:$0xff]
        %v384 = vld [vmem:[%s276 + $0x328] sm:$0xff]
        %v385 = vld [vmem:[%s276 + $0x330] sm:$0xff]
        %v386 = vld [vmem:[%s276 + $0x338] sm:$0xff]
        %v387 = vld [vmem:[%s276 + $0x340] sm:$0xff]
        %v388 = vld [vmem:[%s276 + $0x348] sm:$0xff]
        %v389 = vld [vmem:[%s276 + $0x350] sm:$0xff]
        %v390 = vld [vmem:[%s276 + $0x358] sm:$0xff]
        %v391 = vld [vmem:[%s276 + $0x360] sm:$0xff]
        %v392 = vld [vmem:[%s276 + $0x368] sm:$0xff]
        %v393 = vld [vmem:[%s276 + $0x370] sm:$0xff]
        %v394 = vld [vmem:[%s276 + $0x378] sm:$0xff]
        %v395 = vld [vmem:[%s276 + $0x380] sm:$0xff]
        %v396 = vld [vmem:[%s276 + $0x388] sm:$0xff]
        %v397 = vld [vmem:[%s276 + $0x390] sm:$0xff]
        %v398 = vld [vmem:[%s276 + $0x398] sm:$0xff]
        %v399 = vld [vmem:[%s276 + $0x3a0] sm:$0xff]
        %v400 = vld [vmem:[%s276 + $0x3a8] sm:$0xff]
        %v401 = vld [vmem:[%s276 + $0x3b0] sm:$0xff]
        %v402 = vld [vmem:[%s276 + $0x3b8] sm:$0xff]
        %v403 = vld [vmem:[%s276 + $0x3c0] sm:$0xff]
        %v404 = vld [vmem:[%s276 + $0x3c8] sm:$0xff]
        %v405 = vld [vmem:[%s276 + $0x3d0] sm:$0xff]
        %v406 = vld [vmem:[%s276 + $0x3d8] sm:$0xff]
        %v407 = vld [vmem:[%s276 + $0x3e0] sm:$0xff]
        %v408 = vld [vmem:[%s276 + $0x3e8] sm:$0xff]
        %v409 = vld [vmem:[%s276 + $0x3f0] sm:$0xff]
        %v410 = vld [vmem:[%s276 + $0x3f8] sm:$0xff]
        %v411 = vld [vmem:[%s276 + $0x400] sm:$0xff]
        %v412 = vld [vmem:[%s276 + $0x408] sm:$0xff]
        %v413 = vld [vmem:[%s276 + $0x410] sm:$0xff]
        %v414 = vld [vmem:[%s276 + $0x418] sm:$0xff]
        %v415 = vld [vmem:[%s276 + $0x420] sm:$0xff]
        %v416 = vld [vmem:[%s276 + $0x428] sm:$0xff]
        %v417 = vld [vmem:[%s276 + $0x430] sm:$0xff]
        %v418 = vld [vmem:[%s276 + $0x438] sm:$0xff]
        %v419 = vld [vmem:[%s276 + $0x440] sm:$0xff]
        %v420 = vld [vmem:[%s276 + $0x448] sm:$0xff]
        %v421 = vld [vmem:[%s276 + $0x450] sm:$0xff]
        %v422 = vld [vmem:[%s276 + $0x458] sm:$0xff]
        %v423 = vld [vmem:[%s276 + $0x460] sm:$0xff]
        %v424 = vld [vmem:[%s276 + $0x468] sm:$0xff]
        %v425 = vld [vmem:[%s276 + $0x470] sm:$0xff]
        %v426 = vld [vmem:[%s276 + $0x478] sm:$0xff]
        %v427 = vld [vmem:[%s276 + $0x480] sm:$0xff]
        %v428 = vld [vmem:[%s276 + $0x488] sm:$0xff]
        %v429 = vld [vmem:[%s276 + $0x490] sm:$0xff]
        %v430 = vld [vmem:[%s276 + $0x498] sm:$0xff]
        %v431 = vld [vmem:[%s276 + $0x4a0] sm:$0xff]
        %v432 = vld [vmem:[%s276 + $0x4a8] sm:$0xff]
        %v433 = vld [vmem:[%s276 + $0x4b0] sm:$0xff]
        %v434 = vld [vmem:[%s276 + $0x4b8] sm:$0xff]
        %v435 = vld [vmem:[%s276 + $0x4c0] sm:$0xff]
        %v436 = vld [vmem:[%s276 + $0x4c8] sm:$0xff]
        %v437 = vld [vmem:[%s276 + $0x4d0] sm:$0xff]
        %v438 = vld [vmem:[%s276 + $0x4d8] sm:$0xff]
        %v439 = vld [vmem:[%s276 + $0x4e0] sm:$0xff]
        %v440 = vld [vmem:[%s276 + $0x4e8] sm:$0xff]
        %v441 = vld [vmem:[%s276 + $0x4f0] sm:$0xff]
        %v442 = vld [vmem:[%s276 + $0x4f8] sm:$0xff]
        %v443 = vld [vmem:[%s276 + $0x500] sm:$0xff]
        %v444 = vld [vmem:[%s276 + $0x508] sm:$0xff]
        %v445 = vld [vmem:[%s276 + $0x510] sm:$0xff]
        %v446 = vld [vmem:[%s276 + $0x518] sm:$0xff]
        %v447 = vld [vmem:[%s276 + $0x520] sm:$0xff]
        %v448 = vld [vmem:[%s276 + $0x528] sm:$0xff]
        %v449 = vld [vmem:[%s276 + $0x530] sm:$0xff]
        %v450 = vld [vmem:[%s276 + $0x538] sm:$0xff]
        %v451 = vld [vmem:[%s276 + $0x540] sm:$0xff]
        %v452 = vld [vmem:[%s276 + $0x548] sm:$0xff]
        %v453 = vld [vmem:[%s276 + $0x550] sm:$0xff]
        %v454 = vld [vmem:[%s276 + $0x558] sm:$0xff]
        %v455 = vld [vmem:[%s276 + $0x560] sm:$0xff]
        %v456 = vld [vmem:[%s276 + $0x568] sm:$0xff]
        %v457 = vld [vmem:[%s276 + $0x570] sm:$0xff]
        %v458 = vld [vmem:[%s276 + $0x578] sm:$0xff]
        %v459 = vld [vmem:[%s276 + $0x580] sm:$0xff]
        %v460 = vld [vmem:[%s276 + $0x588] sm:$0xff]
        %v461 = vld [vmem:[%s276 + $0x590] sm:$0xff]
        %v462 = vld [vmem:[%s276 + $0x598] sm:$0xff]
        %v463 = vld [vmem:[%s276 + $0x5a0] sm:$0xff]
        %v464 = vld [vmem:[%s276 + $0x5a8] sm:$0xff]
        %v465 = vld [vmem:[%s276 + $0x5b0] sm:$0xff]
        %v466 = vld [vmem:[%s276 + $0x5b8] sm:$0xff]
        %v467 = vld [vmem:[%s276 + $0x5c0] sm:$0xff]
        %v468 = vld [vmem:[%s276 + $0x5c8] sm:$0xff]
        %v469 = vld [vmem:[%s276 + $0x5d0] sm:$0xff]
        %v470 = vld [vmem:[%s276 + $0x5d8] sm:$0xff]
        %v471 = vld [vmem:[%s276 + $0x5e0] sm:$0xff]
        %v472 = vld [vmem:[%s276 + $0x5e8] sm:$0xff]
        %v473 = vld [vmem:[%s276 + $0x5f0] sm:$0xff]
        %v474 = vld [vmem:[%s276 + $0x5f8] sm:$0xff]
        %v475 = vld [vmem:[%s276 + $0x600] sm:$0xff]
        %v476 = vld [vmem:[%s276 + $0x608] sm:$0xff]
        %v477 = vld [vmem:[%s276 + $0x610] sm:$0xff]
        %v478 = vld [vmem:[%s276 + $0x618] sm:$0xff]
        %v479 = vld [vmem:[%s276 + $0x620] sm:$0xff]
        %v480 = vld [vmem:[%s276 + $0x628] sm:$0xff]
        %v481 = vld [vmem:[%s276 + $0x630] sm:$0xff]
        %v482 = vld [vmem:[%s276 + $0x638] sm:$0xff]
        %v483 = vld [vmem:[%s276 + $0x640] sm:$0xff]
        %v484 = vld [vmem:[%s276 + $0x648] sm:$0xff]
        %v485 = vld [vmem:[%s276 + $0x650] sm:$0xff]
        %v486 = vld [vmem:[%s276 + $0x658] sm:$0xff]
        %v487 = vld [vmem:[%s276 + $0x660] sm:$0xff]
        %v488 = vld [vmem:[%s276 + $0x668] sm:$0xff]
        %v489 = vld [vmem:[%s276 + $0x670] sm:$0xff]
        %v490 = vld [vmem:[%s276 + $0x678] sm:$0xff]
        %v491 = vld [vmem:[%s276 + $0x680] sm:$0xff]
        %v492 = vld [vmem:[%s276 + $0x688] sm:$0xff]
        %v493 = vld [vmem:[%s276 + $0x690] sm:$0xff]
        %v494 = vld [vmem:[%s276 + $0x698] sm:$0xff]
        %v495 = vld [vmem:[%s276 + $0x6a0] sm:$0xff]
        %v496 = vld [vmem:[%s276 + $0x6a8] sm:$0xff]
        %v497 = vld [vmem:[%s276 + $0x6b0] sm:$0xff]
        %v498 = vld [vmem:[%s276 + $0x6b8] sm:$0xff]
        %v499 = vld [vmem:[%s276 + $0x6c0] sm:$0xff]
        %v500 = vld [vmem:[%s276 + $0x6c8] sm:$0xff]
        %v501 = vld [vmem:[%s276 + $0x6d0] sm:$0xff]
        %v502 = vld [vmem:[%s276 + $0x6d8] sm:$0xff]
        %v503 = vld [vmem:[%s276 + $0x6e0] sm:$0xff]
        %v504 = vld [vmem:[%s276 + $0x6e8] sm:$0xff]
        %v505 = vld [vmem:[%s276 + $0x6f0] sm:$0xff]
        %v506 = vld [vmem:[%s276 + $0x6f8] sm:$0xff]
        %v507 = vld [vmem:[%s1] sm:$0xff]
        %v508 = vld [vmem:[%s1 + $0x8] sm:$0xff]
        %vm509 = vcmask 130048
        %v511 = vsel %vm509, %v283, 0
        %v514 = vsel %vm509, %v284, 0
        %v517 = vsel %vm509, %v285, 0
        %v520 = vsel %vm509, %v286, 0
        %v523 = vsel %vm509, %v287, 0
        %v526 = vsel %vm509, %v288, 0
        %v529 = vsel %vm509, %v289, 0
        %v532 = vsel %vm509, %v290, 0
        %v535 = vsel %vm509, %v291, 0
        %v538 = vsel %vm509, %v292, 0
        %v541 = vsel %vm509, %v293, 0
        %v544 = vsel %vm509, %v294, 0
        %v547 = vsel %vm509, %v295, 0
        %v550 = vsel %vm509, %v296, 0
        %v553 = vsel %vm509, %v297, 0
        %v556 = vsel %vm509, %v298, 0
        %v559 = vsel %vm509, %v299, 0
        %v562 = vsel %vm509, %v300, 0
        %v565 = vsel %vm509, %v301, 0
        %v568 = vsel %vm509, %v302, 0
        %v571 = vsel %vm509, %v303, 0
        %v574 = vsel %vm509, %v304, 0
        %v577 = vsel %vm509, %v305, 0
        %v580 = vsel %vm509, %v306, 0
        %v583 = vsel %vm509, %v307, 0
        %v586 = vsel %vm509, %v308, 0
        %v589 = vsel %vm509, %v309, 0
        %v592 = vsel %vm509, %v310, 0
        %v595 = vsel %vm509, %v311, 0
        %v598 = vsel %vm509, %v312, 0
        %v601 = vsel %vm509, %v313, 0
        %v604 = vsel %vm509, %v314, 0
        %v607 = vsel %vm509, %v315, 0
        %v610 = vsel %vm509, %v316, 0
        %v613 = vsel %vm509, %v317, 0
        %v616 = vsel %vm509, %v318, 0
        %v619 = vsel %vm509, %v319, 0
        %v622 = vsel %vm509, %v320, 0
        %v625 = vsel %vm509, %v321, 0
        %v628 = vsel %vm509, %v322, 0
        %v631 = vsel %vm509, %v323, 0
        %v634 = vsel %vm509, %v324, 0
        %v637 = vsel %vm509, %v325, 0
        %v640 = vsel %vm509, %v326, 0
        %v643 = vsel %vm509, %v327, 0
        %v646 = vsel %vm509, %v328, 0
        %v649 = vsel %vm509, %v329, 0
        %v652 = vsel %vm509, %v330, 0
        %v655 = vsel %vm509, %v331, 0
        %v658 = vsel %vm509, %v332, 0
        %v661 = vsel %vm509, %v333, 0
        %v664 = vsel %vm509, %v334, 0
        %v667 = vsel %vm509, %v335, 0
        %v670 = vsel %vm509, %v336, 0
        %v673 = vsel %vm509, %v337, 0
        %v676 = vsel %vm509, %v338, 0
        %v679 = vsel %vm509, %v339, 0
        %v682 = vsel %vm509, %v340, 0
        %v685 = vsel %vm509, %v341, 0
        %v688 = vsel %vm509, %v342, 0
        %v691 = vsel %vm509, %v343, 0
        %v694 = vsel %vm509, %v344, 0
        %v697 = vsel %vm509, %v345, 0
        %v700 = vsel %vm509, %v346, 0
        %v703 = vsel %vm509, %v347, 0
        %v706 = vsel %vm509, %v348, 0
        %v709 = vsel %vm509, %v349, 0
        %v712 = vsel %vm509, %v350, 0
        %v715 = vsel %vm509, %v351, 0
        %v718 = vsel %vm509, %v352, 0
        %v721 = vsel %vm509, %v353, 0
        %v724 = vsel %vm509, %v354, 0
        %v727 = vsel %vm509, %v355, 0
        %v730 = vsel %vm509, %v356, 0
        %v733 = vsel %vm509, %v357, 0
        %v736 = vsel %vm509, %v358, 0
        %v739 = vsel %vm509, %v359, 0
        %v742 = vsel %vm509, %v360, 0
        %v745 = vsel %vm509, %v361, 0
        %v748 = vsel %vm509, %v362, 0
        %v751 = vsel %vm509, %v363, 0
        %v754 = vsel %vm509, %v364, 0
        %v757 = vsel %vm509, %v365, 0
        %v760 = vsel %vm509, %v366, 0
        %v763 = vsel %vm509, %v367, 0
        %v766 = vsel %vm509, %v368, 0
        %v769 = vsel %vm509, %v369, 0
        %v772 = vsel %vm509, %v370, 0
        %v775 = vsel %vm509, %v371, 0
        %v778 = vsel %vm509, %v372, 0
        %v781 = vsel %vm509, %v373, 0
        %v784 = vsel %vm509, %v374, 0
        %v787 = vsel %vm509, %v375, 0
        %v790 = vsel %vm509, %v376, 0
        %v793 = vsel %vm509, %v377, 0
        %v796 = vsel %vm509, %v378, 0
        %v799 = vsel %vm509, %v379, 0
        %v802 = vsel %vm509, %v380, 0
        %v805 = vsel %vm509, %v381, 0
        %v808 = vsel %vm509, %v382, 0
        %v811 = vsel %vm509, %v383, 0
        %v814 = vsel %vm509, %v384, 0
        %v817 = vsel %vm509, %v385, 0
        %v820 = vsel %vm509, %v386, 0
        %v823 = vsel %vm509, %v387, 0
        %v826 = vsel %vm509, %v388, 0
        %v829 = vsel %vm509, %v389, 0
        %v832 = vsel %vm509, %v390, 0
        %v835 = vsel %vm509, %v391, 0
        %v838 = vsel %vm509, %v392, 0
        %v841 = vsel %vm509, %v393, 0
        %v844 = vsel %vm509, %v394, 0
        %v847 = vsel %vm509, %v395, 0
        %v850 = vsel %vm509, %v396, 0
        %v853 = vsel %vm509, %v397, 0
        %v856 = vsel %vm509, %v398, 0
        %v859 = vsel %vm509, %v399, 0
        %v862 = vsel %vm509, %v400, 0
        %v865 = vsel %vm509, %v401, 0
        %v868 = vsel %vm509, %v402, 0
        %v871 = vsel %vm509, %v403, 0
        %v874 = vsel %vm509, %v404, 0
        %v877 = vsel %vm509, %v405, 0
        %v880 = vsel %vm509, %v406, 0
        %v883 = vsel %vm509, %v407, 0
        %v886 = vsel %vm509, %v408, 0
        %v889 = vsel %vm509, %v409, 0
        %v892 = vsel %vm509, %v410, 0
        %v895 = vsel %vm509, %v411, 0
        %v898 = vsel %vm509, %v412, 0
        %v901 = vsel %vm509, %v413, 0
        %v904 = vsel %vm509, %v414, 0
        %v907 = vsel %vm509, %v415, 0
        %v910 = vsel %vm509, %v416, 0
        %v913 = vsel %vm509, %v417, 0
        %v916 = vsel %vm509, %v418, 0
        %v919 = vsel %vm509, %v419, 0
        %v922 = vsel %vm509, %v420, 0
        %v925 = vsel %vm509, %v421, 0
        %v928 = vsel %vm509, %v422, 0
        %v931 = vsel %vm509, %v423, 0
        %v934 = vsel %vm509, %v424, 0
        %v937 = vsel %vm509, %v425, 0
        %v940 = vsel %vm509, %v426, 0
        %v943 = vsel %vm509, %v427, 0
        %v946 = vsel %vm509, %v428, 0
        %v949 = vsel %vm509, %v429, 0
        %v952 = vsel %vm509, %v430, 0
        %v955 = vsel %vm509, %v431, 0
        %v958 = vsel %vm509, %v432, 0
        %v961 = vsel %vm509, %v433, 0
        %v964 = vsel %vm509, %v434, 0
        %v967 = vsel %vm509, %v435, 0
        %v970 = vsel %vm509, %v436, 0
        %v973 = vsel %vm509, %v437, 0
        %v976 = vsel %vm509, %v438, 0
        %v979 = vsel %vm509, %v439, 0
        %v982 = vsel %vm509, %v440, 0
        %v985 = vsel %vm509, %v441, 0
        %v988 = vsel %vm509, %v442, 0
        %v991 = vsel %vm509, %v443, 0
        %v994 = vsel %vm509, %v444, 0
        %v997 = vsel %vm509, %v445, 0
        %v1000 = vsel %vm509, %v446, 0
        %v1003 = vsel %vm509, %v447, 0
        %v1006 = vsel %vm509, %v448, 0
        %v1009 = vsel %vm509, %v449, 0
        %v1012 = vsel %vm509, %v450, 0
        %v1015 = vsel %vm509, %v451, 0
        %v1018 = vsel %vm509, %v452, 0
        %v1021 = vsel %vm509, %v453, 0
        %v1024 = vsel %vm509, %v454, 0
        %v1027 = vsel %vm509, %v455, 0
        %v1030 = vsel %vm509, %v456, 0
        %v1033 = vsel %vm509, %v457, 0
        %v1036 = vsel %vm509, %v458, 0
        %v1039 = vsel %vm509, %v459, 0
        %v1042 = vsel %vm509, %v460, 0
        %v1045 = vsel %vm509, %v461, 0
        %v1048 = vsel %vm509, %v462, 0
        %v1051 = vsel %vm509, %v463, 0
        %v1054 = vsel %vm509, %v464, 0
        %v1057 = vsel %vm509, %v465, 0
        %v1060 = vsel %vm509, %v466, 0
        %v1063 = vsel %vm509, %v467, 0
        %v1066 = vsel %vm509, %v468, 0
        %v1069 = vsel %vm509, %v469, 0
        %v1072 = vsel %vm509, %v470, 0
        %v1075 = vsel %vm509, %v471, 0
        %v1078 = vsel %vm509, %v472, 0
        %v1081 = vsel %vm509, %v473, 0
        %v1084 = vsel %vm509, %v474, 0
        %v1087 = vsel %vm509, %v475, 0
        %v1090 = vsel %vm509, %v476, 0
        %v1093 = vsel %vm509, %v477, 0
        %v1096 = vsel %vm509, %v478, 0
        %v1099 = vsel %vm509, %v479, 0
        %v1102 = vsel %vm509, %v480, 0
        %v1105 = vsel %vm509, %v481, 0
        %v1108 = vsel %vm509, %v482, 0
        %v1111 = vsel %vm509, %v483, 0
        %v1114 = vsel %vm509, %v484, 0
        %v1117 = vsel %vm509, %v485, 0
        %v1120 = vsel %vm509, %v486, 0
        %v1123 = vsel %vm509, %v487, 0
        %v1126 = vsel %vm509, %v488, 0
        %v1129 = vsel %vm509, %v489, 0
        %v1132 = vsel %vm509, %v490, 0
        %v1135 = vsel %vm509, %v491, 0
        %v1138 = vsel %vm509, %v492, 0
        %v1141 = vsel %vm509, %v493, 0
        %v1144 = vsel %vm509, %v494, 0
        %v1147 = vsel %vm509, %v495, 0
        %v1150 = vsel %vm509, %v496, 0
        %v1153 = vsel %vm509, %v497, 0
        %v1156 = vsel %vm509, %v498, 0
        %v1159 = vsel %vm509, %v499, 0
        %v1162 = vsel %vm509, %v500, 0
        %v1165 = vsel %vm509, %v501, 0
        %v1168 = vsel %vm509, %v502, 0
        %v1171 = vsel %vm509, %v503, 0
        %v1174 = vsel %vm509, %v504, 0
        %v1177 = vsel %vm509, %v505, 0
        %v1180 = vsel %vm509, %v506, 0
        %1182 = vmatprep.subr.mxu0 0.0
        %1183 = vmatpush1.msra.mxu0 0.0
        %1184 = vmatprep.subr.mxu0 0.0
        %1185 = vmatpush1.msra.mxu0 0.0
        %1186 = vmatprep.subr.mxu0 0.0
        %1187 = vmatpush1.msra.mxu0 0.0
        %1188 = vmatprep.subr.mxu0 0.0
        %1189 = vmatpush1.msra.mxu0 0.0
        %1190 = vmatprep.subr.mxu0 0.0
        %1191 = vmatpush1.msra.mxu0 0.0
        %1192 = vmatprep.subr.mxu0 0.0
        %1193 = vmatpush1.msra.mxu0 0.0
        %1194 = vmatprep.subr.mxu0 0.0
        %1195 = vmatpush1.msra.mxu0 0.0
        %1196 = vmatprep.subr.mxu0 0.0
        %1197 = vmatpush1.msra.mxu0 0.0
        %1198 = vmatprep.subr.mxu0 0.0
        %1199 = vmatpush1.msra.mxu0 0.0
        %1200 = vmatprep.subr.mxu0 0.0
        %1201 = vmatpush1.msra.mxu0 0.0
        %1202 = vmatprep.subr.mxu0 0.0
        %1203 = vmatpush1.msra.mxu0 0.0
        %1204 = vmatprep.subr.mxu0 0.0
        %1205 = vmatpush1.msra.mxu0 0.0
        %1206 = vmatprep.subr.mxu0 0.0
        %1207 = vmatpush1.msra.mxu0 0.0
        %1208 = vmatprep.subr.mxu0 0.0
        %1209 = vmatpush1.msra.mxu0 0.0
        %1210 = vmatprep.subr.mxu0 0.0
        %1211 = vmatpush1.msra.mxu0 %v508
        %1212 = vmatprep.subr.mxu0 0.0
        %1213 = vmatpush1.msra.mxu0 %v507
        %1214 = vmatprep.subr.mxu0 0.0
        %1215 = vmatpush2.msra.mxu0 0.0
        %1216 = vmatprep.subr.mxu0 0.0
        %1217 = vmatpush2.msra.mxu0 0.0
        %1218 = vmatprep.subr.mxu0 0.0
        %1219 = vmatpush2.msra.mxu0 0.0
        %1220 = vmatprep.subr.mxu0 0.0
        %1221 = vmatpush2.msra.mxu0 0.0
        %1222 = vmatprep.subr.mxu0 0.0
        %1223 = vmatpush2.msra.mxu0 0.0
        %1224 = vmatprep.subr.mxu0 0.0
        %1225 = vmatpush2.msra.mxu0 0.0
        %1226 = vmatprep.subr.mxu0 0.0
        %1227 = vmatpush2.msra.mxu0 0.0
        %1228 = vmatprep.subr.mxu0 0.0
        %1229 = vmatpush2.msra.mxu0 0.0
        %1230 = vmatprep.subr.mxu0 0.0
        %1231 = vmatpush2.msra.mxu0 0.0
        %1232 = vmatprep.subr.mxu0 0.0
        %1233 = vmatpush2.msra.mxu0 0.0
        %1234 = vmatprep.subr.mxu0 0.0
        %1235 = vmatpush2.msra.mxu0 0.0
        %1236 = vmatprep.subr.mxu0 0.0
        %1237 = vmatpush2.msra.mxu0 0.0
        %1238 = vmatprep.subr.mxu0 0.0
        %1239 = vmatpush2.msra.mxu0 0.0
        %1240 = vmatprep.subr.mxu0 0.0
        %1241 = vmatpush2.msra.mxu0 0.0
        %1242 = vmatprep.subr.mxu0 0.0
        %1243 = vmatpush2.msra.mxu0 0.0
        %1244 = vmatprep.subr.mxu0 0.0
        %1245 = vmatpush2.msra.mxu0 0.0
        %1246 = vmatprep.mubr.f32.mxu0 0.0
        %1247 = vmatmul.mubr.f32.gmra.mxu0 %v511
        %v1248 = vpop.f32.mrf.mxu0
        %v1249 = vadd.f32 0.0, %v1248
        %v1250 = vpop.f32.mrf.mxu0
        %1251 = vmatprep.mubr.f32.mxu0 0.0
        %1252 = vmatmul.mubr.f32.gmra.mxu0 %v514
        %v1253 = vpop.f32.mrf.mxu0
        %v1254 = vadd.f32 0.0, %v1253
        %v1255 = vpop.f32.mrf.mxu0
        %1256 = vmatprep.mubr.f32.mxu0 0.0
        %1257 = vmatmul.mubr.f32.gmra.mxu0 %v517
        %v1258 = vpop.f32.mrf.mxu0
        %v1259 = vadd.f32 0.0, %v1258
        %v1260 = vpop.f32.mrf.mxu0
        %1261 = vmatprep.mubr.f32.mxu0 0.0
        %1262 = vmatmul.mubr.f32.gmra.mxu0 %v520
        %v1263 = vpop.f32.mrf.mxu0
        %v1264 = vadd.f32 0.0, %v1263
        %v1265 = vpop.f32.mrf.mxu0
        %1266 = vmatprep.mubr.f32.mxu0 0.0
        %1267 = vmatmul.mubr.f32.gmra.mxu0 %v523
        %v1268 = vpop.f32.mrf.mxu0
        %v1269 = vadd.f32 0.0, %v1268
        %v1270 = vpop.f32.mrf.mxu0
        %1271 = vmatprep.mubr.f32.mxu0 0.0
        %1272 = vmatmul.mubr.f32.gmra.mxu0 %v526
        %v1273 = vpop.f32.mrf.mxu0
        %v1274 = vadd.f32 0.0, %v1273
        %v1275 = vpop.f32.mrf.mxu0
        %1276 = vmatprep.mubr.f32.mxu0 0.0
        %1277 = vmatmul.mubr.f32.gmra.mxu0 %v529
        %v1278 = vpop.f32.mrf.mxu0
        %v1279 = vadd.f32 0.0, %v1278
        %v1280 = vpop.f32.mrf.mxu0
        %1281 = vmatprep.mubr.f32.mxu0 0.0
        %1282 = vmatmul.mubr.f32.gmra.mxu0 %v532
        %v1283 = vpop.f32.mrf.mxu0
        %v1284 = vadd.f32 0.0, %v1283
        %v1285 = vpop.f32.mrf.mxu0
        %1286 = vmatprep.mubr.f32.mxu0 0.0
        %1287 = vmatmul.mubr.f32.gmra.mxu0 %v535
        %v1288 = vpop.f32.mrf.mxu0
        %v1289 = vadd.f32 0.0, %v1288
        %v1290 = vpop.f32.mrf.mxu0
        %1291 = vmatprep.mubr.f32.mxu0 0.0
        %1292 = vmatmul.mubr.f32.gmra.mxu0 %v538
        %v1293 = vpop.f32.mrf.mxu0
        %v1294 = vadd.f32 0.0, %v1293
        %v1295 = vpop.f32.mrf.mxu0
        %1296 = vmatprep.mubr.f32.mxu0 0.0
        %1297 = vmatmul.mubr.f32.gmra.mxu0 %v541
        %v1298 = vpop.f32.mrf.mxu0
        %v1299 = vadd.f32 0.0, %v1298
        %v1300 = vpop.f32.mrf.mxu0
        %1301 = vmatprep.mubr.f32.mxu0 0.0
        %1302 = vmatmul.mubr.f32.gmra.mxu0 %v544
        %v1303 = vpop.f32.mrf.mxu0
        %v1304 = vadd.f32 0.0, %v1303
        %v1305 = vpop.f32.mrf.mxu0
        %1306 = vmatprep.mubr.f32.mxu0 0.0
        %1307 = vmatmul.mubr.f32.gmra.mxu0 %v547
        %v1308 = vpop.f32.mrf.mxu0
        %v1309 = vadd.f32 0.0, %v1308
        %v1310 = vpop.f32.mrf.mxu0
        %1311 = vmatprep.mubr.f32.mxu0 0.0
        %1312 = vmatmul.mubr.f32.gmra.mxu0 %v550
        %v1313 = vpop.f32.mrf.mxu0
        %v1314 = vadd.f32 0.0, %v1313
        %v1315 = vpop.f32.mrf.mxu0
        %1316 = vmatprep.mubr.f32.mxu0 0.0
        %1317 = vmatmul.mubr.f32.gmra.mxu0 %v553
        %v1318 = vpop.f32.mrf.mxu0
        %v1319 = vadd.f32 0.0, %v1318
        %v1320 = vpop.f32.mrf.mxu0
        %1321 = vmatprep.mubr.f32.mxu0 0.0
        %1322 = vmatmul.mubr.f32.gmra.mxu0 %v556
        %v1323 = vpop.f32.mrf.mxu0
        %v1324 = vadd.f32 0.0, %v1323
        %v1325 = vpop.f32.mrf.mxu0
        %1326 = vmatprep.mubr.f32.mxu0 0.0
        %1327 = vmatmul.mubr.f32.gmra.mxu0 %v559
        %v1328 = vpop.f32.mrf.mxu0
        %v1329 = vadd.f32 0.0, %v1328
        %v1330 = vpop.f32.mrf.mxu0
        %1331 = vmatprep.mubr.f32.mxu0 0.0
        %1332 = vmatmul.mubr.f32.gmra.mxu0 %v562
        %v1333 = vpop.f32.mrf.mxu0
        %v1334 = vadd.f32 0.0, %v1333
        %v1335 = vpop.f32.mrf.mxu0
        %1336 = vmatprep.mubr.f32.mxu0 0.0
        %1337 = vmatmul.mubr.f32.gmra.mxu0 %v565
        %v1338 = vpop.f32.mrf.mxu0
        %v1339 = vadd.f32 0.0, %v1338
        %v1340 = vpop.f32.mrf.mxu0
        %1341 = vmatprep.mubr.f32.mxu0 0.0
        %1342 = vmatmul.mubr.f32.gmra.mxu0 %v568
        %v1343 = vpop.f32.mrf.mxu0
        %v1344 = vadd.f32 0.0, %v1343
        %v1345 = vpop.f32.mrf.mxu0
        %1346 = vmatprep.mubr.f32.mxu0 0.0
        %1347 = vmatmul.mubr.f32.gmra.mxu0 %v571
        %v1348 = vpop.f32.mrf.mxu0
        %v1349 = vadd.f32 0.0, %v1348
        %v1350 = vpop.f32.mrf.mxu0
        %1351 = vmatprep.mubr.f32.mxu0 0.0
        %1352 = vmatmul.mubr.f32.gmra.mxu0 %v574
        %v1353 = vpop.f32.mrf.mxu0
        %v1354 = vadd.f32 0.0, %v1353
        %v1355 = vpop.f32.mrf.mxu0
        %1356 = vmatprep.mubr.f32.mxu0 0.0
        %1357 = vmatmul.mubr.f32.gmra.mxu0 %v577
        %v1358 = vpop.f32.mrf.mxu0
        %v1359 = vadd.f32 0.0, %v1358
        %v1360 = vpop.f32.mrf.mxu0
        %1361 = vmatprep.mubr.f32.mxu0 0.0
        %1362 = vmatmul.mubr.f32.gmra.mxu0 %v580
        %v1363 = vpop.f32.mrf.mxu0
        %v1364 = vadd.f32 0.0, %v1363
        %v1365 = vpop.f32.mrf.mxu0
        %1366 = vmatprep.mubr.f32.mxu0 0.0
        %1367 = vmatmul.mubr.f32.gmra.mxu0 %v583
        %v1368 = vpop.f32.mrf.mxu0
        %v1369 = vadd.f32 0.0, %v1368
        %v1370 = vpop.f32.mrf.mxu0
        %1371 = vmatprep.mubr.f32.mxu0 0.0
        %1372 = vmatmul.mubr.f32.gmra.mxu0 %v586
        %v1373 = vpop.f32.mrf.mxu0
        %v1374 = vadd.f32 0.0, %v1373
        %v1375 = vpop.f32.mrf.mxu0
        %1376 = vmatprep.mubr.f32.mxu0 0.0
        %1377 = vmatmul.mubr.f32.gmra.mxu0 %v589
        %v1378 = vpop.f32.mrf.mxu0
        %v1379 = vadd.f32 0.0, %v1378
        %v1380 = vpop.f32.mrf.mxu0
        %1381 = vmatprep.mubr.f32.mxu0 0.0
        %1382 = vmatmul.mubr.f32.gmra.mxu0 %v592
        %v1383 = vpop.f32.mrf.mxu0
        %v1384 = vadd.f32 0.0, %v1383
        %v1385 = vpop.f32.mrf.mxu0
        %1386 = vmatprep.mubr.f32.mxu0 0.0
        %1387 = vmatmul.mubr.f32.gmra.mxu0 %v595
        %v1388 = vpop.f32.mrf.mxu0
        %v1389 = vadd.f32 0.0, %v1388
        %v1390 = vpop.f32.mrf.mxu0
        %1391 = vmatprep.mubr.f32.mxu0 0.0
        %1392 = vmatmul.mubr.f32.gmra.mxu0 %v598
        %v1393 = vpop.f32.mrf.mxu0
        %v1394 = vadd.f32 0.0, %v1393
        %v1395 = vpop.f32.mrf.mxu0
        %1396 = vmatprep.mubr.f32.mxu0 0.0
        %1397 = vmatmul.mubr.f32.gmra.mxu0 %v601
        %v1398 = vpop.f32.mrf.mxu0
        %v1399 = vadd.f32 0.0, %v1398
        %v1400 = vpop.f32.mrf.mxu0
        %1401 = vmatprep.mubr.f32.mxu0 0.0
        %1402 = vmatmul.mubr.f32.gmra.mxu0 %v604
        %v1403 = vpop.f32.mrf.mxu0
        %v1404 = vadd.f32 0.0, %v1403
        %v1405 = vpop.f32.mrf.mxu0
        %1406 = vmatprep.mubr.f32.mxu0 0.0
        %1407 = vmatmul.mubr.f32.gmra.mxu0 %v607
        %v1408 = vpop.f32.mrf.mxu0
        %v1409 = vadd.f32 0.0, %v1408
        %v1410 = vpop.f32.mrf.mxu0
        %1411 = vmatprep.mubr.f32.mxu0 0.0
        %1412 = vmatmul.mubr.f32.gmra.mxu0 %v610
        %v1413 = vpop.f32.mrf.mxu0
        %v1414 = vadd.f32 0.0, %v1413
        %v1415 = vpop.f32.mrf.mxu0
        %1416 = vmatprep.mubr.f32.mxu0 0.0
        %1417 = vmatmul.mubr.f32.gmra.mxu0 %v613
        %v1418 = vpop.f32.mrf.mxu0
        %v1419 = vadd.f32 0.0, %v1418
        %v1420 = vpop.f32.mrf.mxu0
        %1421 = vmatprep.mubr.f32.mxu0 0.0
        %1422 = vmatmul.mubr.f32.gmra.mxu0 %v616
        %v1423 = vpop.f32.mrf.mxu0
        %v1424 = vadd.f32 0.0, %v1423
        %v1425 = vpop.f32.mrf.mxu0
        %1426 = vmatprep.mubr.f32.mxu0 0.0
        %1427 = vmatmul.mubr.f32.gmra.mxu0 %v619
        %v1428 = vpop.f32.mrf.mxu0
        %v1429 = vadd.f32 0.0, %v1428
        %v1430 = vpop.f32.mrf.mxu0
        %1431 = vmatprep.mubr.f32.mxu0 0.0
        %1432 = vmatmul.mubr.f32.gmra.mxu0 %v622
        %v1433 = vpop.f32.mrf.mxu0
        %v1434 = vadd.f32 0.0, %v1433
        %v1435 = vpop.f32.mrf.mxu0
        %1436 = vmatprep.mubr.f32.mxu0 0.0
        %1437 = vmatmul.mubr.f32.gmra.mxu0 %v625
        %v1438 = vpop.f32.mrf.mxu0
        %v1439 = vadd.f32 0.0, %v1438
        %v1440 = vpop.f32.mrf.mxu0
        %1441 = vmatprep.mubr.f32.mxu0 0.0
        %1442 = vmatmul.mubr.f32.gmra.mxu0 %v628
        %v1443 = vpop.f32.mrf.mxu0
        %v1444 = vadd.f32 0.0, %v1443
        %v1445 = vpop.f32.mrf.mxu0
        %1446 = vmatprep.mubr.f32.mxu0 0.0
        %1447 = vmatmul.mubr.f32.gmra.mxu0 %v631
        %v1448 = vpop.f32.mrf.mxu0
        %v1449 = vadd.f32 0.0, %v1448
        %v1450 = vpop.f32.mrf.mxu0
        %1451 = vmatprep.mubr.f32.mxu0 0.0
        %1452 = vmatmul.mubr.f32.gmra.mxu0 %v634
        %v1453 = vpop.f32.mrf.mxu0
        %v1454 = vadd.f32 0.0, %v1453
        %v1455 = vpop.f32.mrf.mxu0
        %1456 = vmatprep.mubr.f32.mxu0 0.0
        %1457 = vmatmul.mubr.f32.gmra.mxu0 %v637
        %v1458 = vpop.f32.mrf.mxu0
        %v1459 = vadd.f32 0.0, %v1458
        %v1460 = vpop.f32.mrf.mxu0
        %1461 = vmatprep.mubr.f32.mxu0 0.0
        %1462 = vmatmul.mubr.f32.gmra.mxu0 %v640
        %v1463 = vpop.f32.mrf.mxu0
        %v1464 = vadd.f32 0.0, %v1463
        %v1465 = vpop.f32.mrf.mxu0
        %1466 = vmatprep.mubr.f32.mxu0 0.0
        %1467 = vmatmul.mubr.f32.gmra.mxu0 %v643
        %v1468 = vpop.f32.mrf.mxu0
        %v1469 = vadd.f32 0.0, %v1468
        %v1470 = vpop.f32.mrf.mxu0
        %1471 = vmatprep.mubr.f32.mxu0 0.0
        %1472 = vmatmul.mubr.f32.gmra.mxu0 %v646
        %v1473 = vpop.f32.mrf.mxu0
        %v1474 = vadd.f32 0.0, %v1473
        %v1475 = vpop.f32.mrf.mxu0
        %1476 = vmatprep.mubr.f32.mxu0 0.0
        %1477 = vmatmul.mubr.f32.gmra.mxu0 %v649
        %v1478 = vpop.f32.mrf.mxu0
        %v1479 = vadd.f32 0.0, %v1478
        %v1480 = vpop.f32.mrf.mxu0
        %1481 = vmatprep.mubr.f32.mxu0 0.0
        %1482 = vmatmul.mubr.f32.gmra.mxu0 %v652
        %v1483 = vpop.f32.mrf.mxu0
        %v1484 = vadd.f32 0.0, %v1483
        %v1485 = vpop.f32.mrf.mxu0
        %1486 = vmatprep.mubr.f32.mxu0 0.0
        %1487 = vmatmul.mubr.f32.gmra.mxu0 %v655
        %v1488 = vpop.f32.mrf.mxu0
        %v1489 = vadd.f32 0.0, %v1488
        %v1490 = vpop.f32.mrf.mxu0
        %1491 = vmatprep.mubr.f32.mxu0 0.0
        %1492 = vmatmul.mubr.f32.gmra.mxu0 %v658
        %v1493 = vpop.f32.mrf.mxu0
        %v1494 = vadd.f32 0.0, %v1493
        %v1495 = vpop.f32.mrf.mxu0
        %1496 = vmatprep.mubr.f32.mxu0 0.0
        %1497 = vmatmul.mubr.f32.gmra.mxu0 %v661
        %v1498 = vpop.f32.mrf.mxu0
        %v1499 = vadd.f32 0.0, %v1498
        %v1500 = vpop.f32.mrf.mxu0
        %1501 = vmatprep.mubr.f32.mxu0 0.0
        %1502 = vmatmul.mubr.f32.gmra.mxu0 %v664
        %v1503 = vpop.f32.mrf.mxu0
        %v1504 = vadd.f32 0.0, %v1503
        %v1505 = vpop.f32.mrf.mxu0
        %1506 = vmatprep.mubr.f32.mxu0 0.0
        %1507 = vmatmul.mubr.f32.gmra.mxu0 %v667
        %v1508 = vpop.f32.mrf.mxu0
        %v1509 = vadd.f32 0.0, %v1508
        %v1510 = vpop.f32.mrf.mxu0
        %1511 = vmatprep.mubr.f32.mxu0 0.0
        %1512 = vmatmul.mubr.f32.gmra.mxu0 %v670
        %v1513 = vpop.f32.mrf.mxu0
        %v1514 = vadd.f32 0.0, %v1513
        %v1515 = vpop.f32.mrf.mxu0
        %1516 = vmatprep.mubr.f32.mxu0 0.0
        %1517 = vmatmul.mubr.f32.gmra.mxu0 %v673
        %v1518 = vpop.f32.mrf.mxu0
        %v1519 = vadd.f32 0.0, %v1518
        %v1520 = vpop.f32.mrf.mxu0
        %1521 = vmatprep.mubr.f32.mxu0 0.0
        %1522 = vmatmul.mubr.f32.gmra.mxu0 %v676
        %v1523 = vpop.f32.mrf.mxu0
        %v1524 = vadd.f32 0.0, %v1523
        %v1525 = vpop.f32.mrf.mxu0
        %1526 = vmatprep.mubr.f32.mxu0 0.0
        %1527 = vmatmul.mubr.f32.gmra.mxu0 %v679
        %v1528 = vpop.f32.mrf.mxu0
        %v1529 = vadd.f32 0.0, %v1528
        %v1530 = vpop.f32.mrf.mxu0
        %1531 = vmatprep.mubr.f32.mxu0 0.0
        %1532 = vmatmul.mubr.f32.gmra.mxu0 %v682
        %v1533 = vpop.f32.mrf.mxu0
        %v1534 = vadd.f32 0.0, %v1533
        %v1535 = vpop.f32.mrf.mxu0
        %1536 = vmatprep.mubr.f32.mxu0 0.0
        %1537 = vmatmul.mubr.f32.gmra.mxu0 %v685
        %v1538 = vpop.f32.mrf.mxu0
        %v1539 = vadd.f32 0.0, %v1538
        %v1540 = vpop.f32.mrf.mxu0
        %1541 = vmatprep.mubr.f32.mxu0 0.0
        %1542 = vmatmul.mubr.f32.gmra.mxu0 %v688
        %v1543 = vpop.f32.mrf.mxu0
        %v1544 = vadd.f32 0.0, %v1543
        %v1545 = vpop.f32.mrf.mxu0
        %1546 = vmatprep.mubr.f32.mxu0 0.0
        %1547 = vmatmul.mubr.f32.gmra.mxu0 %v691
        %v1548 = vpop.f32.mrf.mxu0
        %v1549 = vadd.f32 0.0, %v1548
        %v1550 = vpop.f32.mrf.mxu0
        %1551 = vmatprep.mubr.f32.mxu0 0.0
        %1552 = vmatmul.mubr.f32.gmra.mxu0 %v694
        %v1553 = vpop.f32.mrf.mxu0
        %v1554 = vadd.f32 0.0, %v1553
        %v1555 = vpop.f32.mrf.mxu0
        %1556 = vmatprep.mubr.f32.mxu0 0.0
        %1557 = vmatmul.mubr.f32.gmra.mxu0 %v697
        %v1558 = vpop.f32.mrf.mxu0
        %v1559 = vadd.f32 0.0, %v1558
        %v1560 = vpop.f32.mrf.mxu0
        %1561 = vmatprep.mubr.f32.mxu0 0.0
        %1562 = vmatmul.mubr.f32.gmra.mxu0 %v700
        %v1563 = vpop.f32.mrf.mxu0
        %v1564 = vadd.f32 0.0, %v1563
        %v1565 = vpop.f32.mrf.mxu0
        %1566 = vmatprep.mubr.f32.mxu0 0.0
        %1567 = vmatmul.mubr.f32.gmra.mxu0 %v703
        %v1568 = vpop.f32.mrf.mxu0
        %v1569 = vadd.f32 0.0, %v1568
        %v1570 = vpop.f32.mrf.mxu0
        %1571 = vmatprep.mubr.f32.mxu0 0.0
        %1572 = vmatmul.mubr.f32.gmra.mxu0 %v706
        %v1573 = vpop.f32.mrf.mxu0
        %v1574 = vadd.f32 0.0, %v1573
        %v1575 = vpop.f32.mrf.mxu0
        %1576 = vmatprep.mubr.f32.mxu0 0.0
        %1577 = vmatmul.mubr.f32.gmra.mxu0 %v709
        %v1578 = vpop.f32.mrf.mxu0
        %v1579 = vadd.f32 0.0, %v1578
        %v1580 = vpop.f32.mrf.mxu0
        %1581 = vmatprep.mubr.f32.mxu0 0.0
        %1582 = vmatmul.mubr.f32.gmra.mxu0 %v712
        %v1583 = vpop.f32.mrf.mxu0
        %v1584 = vadd.f32 0.0, %v1583
        %v1585 = vpop.f32.mrf.mxu0
        %1586 = vmatprep.mubr.f32.mxu0 0.0
        %1587 = vmatmul.mubr.f32.gmra.mxu0 %v715
        %v1588 = vpop.f32.mrf.mxu0
        %v1589 = vadd.f32 0.0, %v1588
        %v1590 = vpop.f32.mrf.mxu0
        %1591 = vmatprep.mubr.f32.mxu0 0.0
        %1592 = vmatmul.mubr.f32.gmra.mxu0 %v718
        %v1593 = vpop.f32.mrf.mxu0
        %v1594 = vadd.f32 0.0, %v1593
        %v1595 = vpop.f32.mrf.mxu0
        %1596 = vmatprep.mubr.f32.mxu0 0.0
        %1597 = vmatmul.mubr.f32.gmra.mxu0 %v721
        %v1598 = vpop.f32.mrf.mxu0
        %v1599 = vadd.f32 0.0, %v1598
        %v1600 = vpop.f32.mrf.mxu0
        %1601 = vmatprep.mubr.f32.mxu0 0.0
        %1602 = vmatmul.mubr.f32.gmra.mxu0 %v724
        %v1603 = vpop.f32.mrf.mxu0
        %v1604 = vadd.f32 0.0, %v1603
        %v1605 = vpop.f32.mrf.mxu0
        %1606 = vmatprep.mubr.f32.mxu0 0.0
        %1607 = vmatmul.mubr.f32.gmra.mxu0 %v727
        %v1608 = vpop.f32.mrf.mxu0
        %v1609 = vadd.f32 0.0, %v1608
        %v1610 = vpop.f32.mrf.mxu0
        %1611 = vmatprep.mubr.f32.mxu0 0.0
        %1612 = vmatmul.mubr.f32.gmra.mxu0 %v730
        %v1613 = vpop.f32.mrf.mxu0
        %v1614 = vadd.f32 0.0, %v1613
        %v1615 = vpop.f32.mrf.mxu0
        %1616 = vmatprep.mubr.f32.mxu0 0.0
        %1617 = vmatmul.mubr.f32.gmra.mxu0 %v733
        %v1618 = vpop.f32.mrf.mxu0
        %v1619 = vadd.f32 0.0, %v1618
        %v1620 = vpop.f32.mrf.mxu0
        %1621 = vmatprep.mubr.f32.mxu0 0.0
        %1622 = vmatmul.mubr.f32.gmra.mxu0 %v736
        %v1623 = vpop.f32.mrf.mxu0
        %v1624 = vadd.f32 0.0, %v1623
        %v1625 = vpop.f32.mrf.mxu0
        %1626 = vmatprep.mubr.f32.mxu0 0.0
        %1627 = vmatmul.mubr.f32.gmra.mxu0 %v739
        %v1628 = vpop.f32.mrf.mxu0
        %v1629 = vadd.f32 0.0, %v1628
        %v1630 = vpop.f32.mrf.mxu0
        %1631 = vmatprep.mubr.f32.mxu0 0.0
        %1632 = vmatmul.mubr.f32.gmra.mxu0 %v742
        %v1633 = vpop.f32.mrf.mxu0
        %v1634 = vadd.f32 0.0, %v1633
        %v1635 = vpop.f32.mrf.mxu0
        %1636 = vmatprep.mubr.f32.mxu0 0.0
        %1637 = vmatmul.mubr.f32.gmra.mxu0 %v745
        %v1638 = vpop.f32.mrf.mxu0
        %v1639 = vadd.f32 0.0, %v1638
        %v1640 = vpop.f32.mrf.mxu0
        %1641 = vmatprep.mubr.f32.mxu0 0.0
        %1642 = vmatmul.mubr.f32.gmra.mxu0 %v748
        %v1643 = vpop.f32.mrf.mxu0
        %v1644 = vadd.f32 0.0, %v1643
        %v1645 = vpop.f32.mrf.mxu0
        %1646 = vmatprep.mubr.f32.mxu0 0.0
        %1647 = vmatmul.mubr.f32.gmra.mxu0 %v751
        %v1648 = vpop.f32.mrf.mxu0
        %v1649 = vadd.f32 0.0, %v1648
        %v1650 = vpop.f32.mrf.mxu0
        %1651 = vmatprep.mubr.f32.mxu0 0.0
        %1652 = vmatmul.mubr.f32.gmra.mxu0 %v754
        %v1653 = vpop.f32.mrf.mxu0
        %v1654 = vadd.f32 0.0, %v1653
        %v1655 = vpop.f32.mrf.mxu0
        %1656 = vmatprep.mubr.f32.mxu0 0.0
        %1657 = vmatmul.mubr.f32.gmra.mxu0 %v757
        %v1658 = vpop.f32.mrf.mxu0
        %v1659 = vadd.f32 0.0, %v1658
        %v1660 = vpop.f32.mrf.mxu0
        %1661 = vmatprep.mubr.f32.mxu0 0.0
        %1662 = vmatmul.mubr.f32.gmra.mxu0 %v760
        %v1663 = vpop.f32.mrf.mxu0
        %v1664 = vadd.f32 0.0, %v1663
        %v1665 = vpop.f32.mrf.mxu0
        %1666 = vmatprep.mubr.f32.mxu0 0.0
        %1667 = vmatmul.mubr.f32.gmra.mxu0 %v763
        %v1668 = vpop.f32.mrf.mxu0
        %v1669 = vadd.f32 0.0, %v1668
        %v1670 = vpop.f32.mrf.mxu0
        %1671 = vmatprep.mubr.f32.mxu0 0.0
        %1672 = vmatmul.mubr.f32.gmra.mxu0 %v766
        %v1673 = vpop.f32.mrf.mxu0
        %v1674 = vadd.f32 0.0, %v1673
        %v1675 = vpop.f32.mrf.mxu0
        %1676 = vmatprep.mubr.f32.mxu0 0.0
        %1677 = vmatmul.mubr.f32.gmra.mxu0 %v769
        %v1678 = vpop.f32.mrf.mxu0
        %v1679 = vadd.f32 0.0, %v1678
        %v1680 = vpop.f32.mrf.mxu0
        %1681 = vmatprep.mubr.f32.mxu0 0.0
        %1682 = vmatmul.mubr.f32.gmra.mxu0 %v772
        %v1683 = vpop.f32.mrf.mxu0
        %v1684 = vadd.f32 0.0, %v1683
        %v1685 = vpop.f32.mrf.mxu0
        %1686 = vmatprep.mubr.f32.mxu0 0.0
        %1687 = vmatmul.mubr.f32.gmra.mxu0 %v775
        %v1688 = vpop.f32.mrf.mxu0
        %v1689 = vadd.f32 0.0, %v1688
        %v1690 = vpop.f32.mrf.mxu0
        %1691 = vmatprep.mubr.f32.mxu0 0.0
        %1692 = vmatmul.mubr.f32.gmra.mxu0 %v778
        %v1693 = vpop.f32.mrf.mxu0
        %v1694 = vadd.f32 0.0, %v1693
        %v1695 = vpop.f32.mrf.mxu0
        %1696 = vmatprep.mubr.f32.mxu0 0.0
        %1697 = vmatmul.mubr.f32.gmra.mxu0 %v781
        %v1698 = vpop.f32.mrf.mxu0
        %v1699 = vadd.f32 0.0, %v1698
        %v1700 = vpop.f32.mrf.mxu0
        %1701 = vmatprep.mubr.f32.mxu0 0.0
        %1702 = vmatmul.mubr.f32.gmra.mxu0 %v784
        %v1703 = vpop.f32.mrf.mxu0
        %v1704 = vadd.f32 0.0, %v1703
        %v1705 = vpop.f32.mrf.mxu0
        %1706 = vmatprep.mubr.f32.mxu0 0.0
        %1707 = vmatmul.mubr.f32.gmra.mxu0 %v787
        %v1708 = vpop.f32.mrf.mxu0
        %v1709 = vadd.f32 0.0, %v1708
        %v1710 = vpop.f32.mrf.mxu0
        %1711 = vmatprep.mubr.f32.mxu0 0.0
        %1712 = vmatmul.mubr.f32.gmra.mxu0 %v790
        %v1713 = vpop.f32.mrf.mxu0
        %v1714 = vadd.f32 0.0, %v1713
        %v1715 = vpop.f32.mrf.mxu0
        %1716 = vmatprep.mubr.f32.mxu0 0.0
        %1717 = vmatmul.mubr.f32.gmra.mxu0 %v793
        %v1718 = vpop.f32.mrf.mxu0
        %v1719 = vadd.f32 0.0, %v1718
        %v1720 = vpop.f32.mrf.mxu0
        %1721 = vmatprep.mubr.f32.mxu0 0.0
        %1722 = vmatmul.mubr.f32.gmra.mxu0 %v796
        %v1723 = vpop.f32.mrf.mxu0
        %v1724 = vadd.f32 0.0, %v1723
        %v1725 = vpop.f32.mrf.mxu0
        %1726 = vmatprep.mubr.f32.mxu0 0.0
        %1727 = vmatmul.mubr.f32.gmra.mxu0 %v799
        %v1728 = vpop.f32.mrf.mxu0
        %v1729 = vadd.f32 0.0, %v1728
        %v1730 = vpop.f32.mrf.mxu0
        %1731 = vmatprep.mubr.f32.mxu0 0.0
        %1732 = vmatmul.mubr.f32.gmra.mxu0 %v802
        %v1733 = vpop.f32.mrf.mxu0
        %v1734 = vadd.f32 0.0, %v1733
        %v1735 = vpop.f32.mrf.mxu0
        %1736 = vmatprep.mubr.f32.mxu0 0.0
        %1737 = vmatmul.mubr.f32.gmra.mxu0 %v805
        %v1738 = vpop.f32.mrf.mxu0
        %v1739 = vadd.f32 0.0, %v1738
        %v1740 = vpop.f32.mrf.mxu0
        %1741 = vmatprep.mubr.f32.mxu0 0.0
        %1742 = vmatmul.mubr.f32.gmra.mxu0 %v808
        %v1743 = vpop.f32.mrf.mxu0
        %v1744 = vadd.f32 0.0, %v1743
        %v1745 = vpop.f32.mrf.mxu0
        %1746 = vmatprep.mubr.f32.mxu0 0.0
        %1747 = vmatmul.mubr.f32.gmra.mxu0 %v811
        %v1748 = vpop.f32.mrf.mxu0
        %v1749 = vadd.f32 0.0, %v1748
        %v1750 = vpop.f32.mrf.mxu0
        %1751 = vmatprep.mubr.f32.mxu0 0.0
        %1752 = vmatmul.mubr.f32.gmra.mxu0 %v814
        %v1753 = vpop.f32.mrf.mxu0
        %v1754 = vadd.f32 0.0, %v1753
        %v1755 = vpop.f32.mrf.mxu0
        %1756 = vmatprep.mubr.f32.mxu0 0.0
        %1757 = vmatmul.mubr.f32.gmra.mxu0 %v817
        %v1758 = vpop.f32.mrf.mxu0
        %v1759 = vadd.f32 0.0, %v1758
        %v1760 = vpop.f32.mrf.mxu0
        %1761 = vmatprep.mubr.f32.mxu0 0.0
        %1762 = vmatmul.mubr.f32.gmra.mxu0 %v820
        %v1763 = vpop.f32.mrf.mxu0
        %v1764 = vadd.f32 0.0, %v1763
        %v1765 = vpop.f32.mrf.mxu0
        %1766 = vmatprep.mubr.f32.mxu0 0.0
        %1767 = vmatmul.mubr.f32.gmra.mxu0 %v823
        %v1768 = vpop.f32.mrf.mxu0
        %v1769 = vadd.f32 0.0, %v1768
        %v1770 = vpop.f32.mrf.mxu0
        %1771 = vmatprep.mubr.f32.mxu0 0.0
        %1772 = vmatmul.mubr.f32.gmra.mxu0 %v826
        %v1773 = vpop.f32.mrf.mxu0
        %v1774 = vadd.f32 0.0, %v1773
        %v1775 = vpop.f32.mrf.mxu0
        %1776 = vmatprep.mubr.f32.mxu0 0.0
        %1777 = vmatmul.mubr.f32.gmra.mxu0 %v829
        %v1778 = vpop.f32.mrf.mxu0
        %v1779 = vadd.f32 0.0, %v1778
        %v1780 = vpop.f32.mrf.mxu0
        %1781 = vmatprep.mubr.f32.mxu0 0.0
        %1782 = vmatmul.mubr.f32.gmra.mxu0 %v832
        %v1783 = vpop.f32.mrf.mxu0
        %v1784 = vadd.f32 0.0, %v1783
        %v1785 = vpop.f32.mrf.mxu0
        %1786 = vmatprep.mubr.f32.mxu0 0.0
        %1787 = vmatmul.mubr.f32.gmra.mxu0 %v835
        %v1788 = vpop.f32.mrf.mxu0
        %v1789 = vadd.f32 0.0, %v1788
        %v1790 = vpop.f32.mrf.mxu0
        %1791 = vmatprep.mubr.f32.mxu0 0.0
        %1792 = vmatmul.mubr.f32.gmra.mxu0 %v838
        %v1793 = vpop.f32.mrf.mxu0
        %v1794 = vadd.f32 0.0, %v1793
        %v1795 = vpop.f32.mrf.mxu0
        %1796 = vmatprep.mubr.f32.mxu0 0.0
        %1797 = vmatmul.mubr.f32.gmra.mxu0 %v841
        %v1798 = vpop.f32.mrf.mxu0
        %v1799 = vadd.f32 0.0, %v1798
        %v1800 = vpop.f32.mrf.mxu0
        %1801 = vmatprep.mubr.f32.mxu0 0.0
        %1802 = vmatmul.mubr.f32.gmra.mxu0 %v844
        %v1803 = vpop.f32.mrf.mxu0
        %v1804 = vadd.f32 0.0, %v1803
        %v1805 = vpop.f32.mrf.mxu0
        %1806 = vmatprep.mubr.f32.mxu0 0.0
        %1807 = vmatmul.mubr.f32.gmra.mxu0 %v847
        %v1808 = vpop.f32.mrf.mxu0
        %v1809 = vadd.f32 0.0, %v1808
        %v1810 = vpop.f32.mrf.mxu0
        %1811 = vmatprep.mubr.f32.mxu0 0.0
        %1812 = vmatmul.mubr.f32.gmra.mxu0 %v850
        %v1813 = vpop.f32.mrf.mxu0
        %v1814 = vadd.f32 0.0, %v1813
        %v1815 = vpop.f32.mrf.mxu0
        %1816 = vmatprep.mubr.f32.mxu0 0.0
        %1817 = vmatmul.mubr.f32.gmra.mxu0 %v853
        %v1818 = vpop.f32.mrf.mxu0
        %v1819 = vadd.f32 0.0, %v1818
        %v1820 = vpop.f32.mrf.mxu0
        %1821 = vmatprep.mubr.f32.mxu0 0.0
        %1822 = vmatmul.mubr.f32.gmra.mxu0 %v856
        %v1823 = vpop.f32.mrf.mxu0
        %v1824 = vadd.f32 0.0, %v1823
        %v1825 = vpop.f32.mrf.mxu0
        %1826 = vmatprep.mubr.f32.mxu0 0.0
        %1827 = vmatmul.mubr.f32.gmra.mxu0 %v859
        %v1828 = vpop.f32.mrf.mxu0
        %v1829 = vadd.f32 0.0, %v1828
        %v1830 = vpop.f32.mrf.mxu0
        %1831 = vmatprep.mubr.f32.mxu0 0.0
        %1832 = vmatmul.mubr.f32.gmra.mxu0 %v862
        %v1833 = vpop.f32.mrf.mxu0
        %v1834 = vadd.f32 0.0, %v1833
        %v1835 = vpop.f32.mrf.mxu0
        %1836 = vmatprep.mubr.f32.mxu0 0.0
        %1837 = vmatmul.mubr.f32.gmra.mxu0 %v865
        %v1838 = vpop.f32.mrf.mxu0
        %v1839 = vadd.f32 0.0, %v1838
        %v1840 = vpop.f32.mrf.mxu0
        %1841 = vmatprep.mubr.f32.mxu0 0.0
        %1842 = vmatmul.mubr.f32.gmra.mxu0 %v868
        %v1843 = vpop.f32.mrf.mxu0
        %v1844 = vadd.f32 0.0, %v1843
        %v1845 = vpop.f32.mrf.mxu0
        %1846 = vmatprep.mubr.f32.mxu0 0.0
        %1847 = vmatmul.mubr.f32.gmra.mxu0 %v871
        %v1848 = vpop.f32.mrf.mxu0
        %v1849 = vadd.f32 0.0, %v1848
        %v1850 = vpop.f32.mrf.mxu0
        %1851 = vmatprep.mubr.f32.mxu0 0.0
        %1852 = vmatmul.mubr.f32.gmra.mxu0 %v874
        %v1853 = vpop.f32.mrf.mxu0
        %v1854 = vadd.f32 0.0, %v1853
        %v1855 = vpop.f32.mrf.mxu0
        %1856 = vmatprep.mubr.f32.mxu0 0.0
        %1857 = vmatmul.mubr.f32.gmra.mxu0 %v877
        %v1858 = vpop.f32.mrf.mxu0
        %v1859 = vadd.f32 0.0, %v1858
        %v1860 = vpop.f32.mrf.mxu0
        %1861 = vmatprep.mubr.f32.mxu0 0.0
        %1862 = vmatmul.mubr.f32.gmra.mxu0 %v880
        %v1863 = vpop.f32.mrf.mxu0
        %v1864 = vadd.f32 0.0, %v1863
        %v1865 = vpop.f32.mrf.mxu0
        %1866 = vmatprep.mubr.f32.mxu0 0.0
        %1867 = vmatmul.mubr.f32.gmra.mxu0 %v883
        %v1868 = vpop.f32.mrf.mxu0
        %v1869 = vadd.f32 0.0, %v1868
        %v1870 = vpop.f32.mrf.mxu0
        %1871 = vmatprep.mubr.f32.mxu0 0.0
        %1872 = vmatmul.mubr.f32.gmra.mxu0 %v886
        %v1873 = vpop.f32.mrf.mxu0
        %v1874 = vadd.f32 0.0, %v1873
        %v1875 = vpop.f32.mrf.mxu0
        %1876 = vmatprep.mubr.f32.mxu0 0.0
        %1877 = vmatmul.mubr.f32.gmra.mxu0 %v889
        %v1878 = vpop.f32.mrf.mxu0
        %v1879 = vadd.f32 0.0, %v1878
        %v1880 = vpop.f32.mrf.mxu0
        %1881 = vmatprep.mubr.f32.mxu0 0.0
        %1882 = vmatmul.mubr.f32.gmra.mxu0 %v892
        %v1883 = vpop.f32.mrf.mxu0
        %v1884 = vadd.f32 0.0, %v1883
        %v1885 = vpop.f32.mrf.mxu0
        %1886 = vmatprep.mubr.f32.mxu0 0.0
        %1887 = vmatmul.mubr.f32.gmra.mxu0 %v895
        %v1888 = vpop.f32.mrf.mxu0
        %v1889 = vadd.f32 0.0, %v1888
        %v1890 = vpop.f32.mrf.mxu0
        %1891 = vmatprep.mubr.f32.mxu0 0.0
        %1892 = vmatmul.mubr.f32.gmra.mxu0 %v898
        %v1893 = vpop.f32.mrf.mxu0
        %v1894 = vadd.f32 0.0, %v1893
        %v1895 = vpop.f32.mrf.mxu0
        %1896 = vmatprep.mubr.f32.mxu0 0.0
        %1897 = vmatmul.mubr.f32.gmra.mxu0 %v901
        %v1898 = vpop.f32.mrf.mxu0
        %v1899 = vadd.f32 0.0, %v1898
        %v1900 = vpop.f32.mrf.mxu0
        %1901 = vmatprep.mubr.f32.mxu0 0.0
        %1902 = vmatmul.mubr.f32.gmra.mxu0 %v904
        %v1903 = vpop.f32.mrf.mxu0
        %v1904 = vadd.f32 0.0, %v1903
        %v1905 = vpop.f32.mrf.mxu0
        %1906 = vmatprep.mubr.f32.mxu0 0.0
        %1907 = vmatmul.mubr.f32.gmra.mxu0 %v907
        %v1908 = vpop.f32.mrf.mxu0
        %v1909 = vadd.f32 0.0, %v1908
        %v1910 = vpop.f32.mrf.mxu0
        %1911 = vmatprep.mubr.f32.mxu0 0.0
        %1912 = vmatmul.mubr.f32.gmra.mxu0 %v910
        %v1913 = vpop.f32.mrf.mxu0
        %v1914 = vadd.f32 0.0, %v1913
        %v1915 = vpop.f32.mrf.mxu0
        %1916 = vmatprep.mubr.f32.mxu0 0.0
        %1917 = vmatmul.mubr.f32.gmra.mxu0 %v913
        %v1918 = vpop.f32.mrf.mxu0
        %v1919 = vadd.f32 0.0, %v1918
        %v1920 = vpop.f32.mrf.mxu0
        %1921 = vmatprep.mubr.f32.mxu0 0.0
        %1922 = vmatmul.mubr.f32.gmra.mxu0 %v916
        %v1923 = vpop.f32.mrf.mxu0
        %v1924 = vadd.f32 0.0, %v1923
        %v1925 = vpop.f32.mrf.mxu0
        %1926 = vmatprep.mubr.f32.mxu0 0.0
        %1927 = vmatmul.mubr.f32.gmra.mxu0 %v919
        %v1928 = vpop.f32.mrf.mxu0
        %v1929 = vadd.f32 0.0, %v1928
        %v1930 = vpop.f32.mrf.mxu0
        %1931 = vmatprep.mubr.f32.mxu0 0.0
        %1932 = vmatmul.mubr.f32.gmra.mxu0 %v922
        %v1933 = vpop.f32.mrf.mxu0
        %v1934 = vadd.f32 0.0, %v1933
        %v1935 = vpop.f32.mrf.mxu0
        %1936 = vmatprep.mubr.f32.mxu0 0.0
        %1937 = vmatmul.mubr.f32.gmra.mxu0 %v925
        %v1938 = vpop.f32.mrf.mxu0
        %v1939 = vadd.f32 0.0, %v1938
        %v1940 = vpop.f32.mrf.mxu0
        %1941 = vmatprep.mubr.f32.mxu0 0.0
        %1942 = vmatmul.mubr.f32.gmra.mxu0 %v928
        %v1943 = vpop.f32.mrf.mxu0
        %v1944 = vadd.f32 0.0, %v1943
        %v1945 = vpop.f32.mrf.mxu0
        %1946 = vmatprep.mubr.f32.mxu0 0.0
        %1947 = vmatmul.mubr.f32.gmra.mxu0 %v931
        %v1948 = vpop.f32.mrf.mxu0
        %v1949 = vadd.f32 0.0, %v1948
        %v1950 = vpop.f32.mrf.mxu0
        %1951 = vmatprep.mubr.f32.mxu0 0.0
        %1952 = vmatmul.mubr.f32.gmra.mxu0 %v934
        %v1953 = vpop.f32.mrf.mxu0
        %v1954 = vadd.f32 0.0, %v1953
        %v1955 = vpop.f32.mrf.mxu0
        %1956 = vmatprep.mubr.f32.mxu0 0.0
        %1957 = vmatmul.mubr.f32.gmra.mxu0 %v937
        %v1958 = vpop.f32.mrf.mxu0
        %v1959 = vadd.f32 0.0, %v1958
        %v1960 = vpop.f32.mrf.mxu0
        %1961 = vmatprep.mubr.f32.mxu0 0.0
        %1962 = vmatmul.mubr.f32.gmra.mxu0 %v940
        %v1963 = vpop.f32.mrf.mxu0
        %v1964 = vadd.f32 0.0, %v1963
        %v1965 = vpop.f32.mrf.mxu0
        %1966 = vmatprep.mubr.f32.mxu0 0.0
        %1967 = vmatmul.mubr.f32.gmra.mxu0 %v943
        %v1968 = vpop.f32.mrf.mxu0
        %v1969 = vadd.f32 0.0, %v1968
        %v1970 = vpop.f32.mrf.mxu0
        %1971 = vmatprep.mubr.f32.mxu0 0.0
        %1972 = vmatmul.mubr.f32.gmra.mxu0 %v946
        %v1973 = vpop.f32.mrf.mxu0
        %v1974 = vadd.f32 0.0, %v1973
        %v1975 = vpop.f32.mrf.mxu0
        %1976 = vmatprep.mubr.f32.mxu0 0.0
        %1977 = vmatmul.mubr.f32.gmra.mxu0 %v949
        %v1978 = vpop.f32.mrf.mxu0
        %v1979 = vadd.f32 0.0, %v1978
        %v1980 = vpop.f32.mrf.mxu0
        %1981 = vmatprep.mubr.f32.mxu0 0.0
        %1982 = vmatmul.mubr.f32.gmra.mxu0 %v952
        %v1983 = vpop.f32.mrf.mxu0
        %v1984 = vadd.f32 0.0, %v1983
        %v1985 = vpop.f32.mrf.mxu0
        %1986 = vmatprep.mubr.f32.mxu0 0.0
        %1987 = vmatmul.mubr.f32.gmra.mxu0 %v955
        %v1988 = vpop.f32.mrf.mxu0
        %v1989 = vadd.f32 0.0, %v1988
        %v1990 = vpop.f32.mrf.mxu0
        %1991 = vmatprep.mubr.f32.mxu0 0.0
        %1992 = vmatmul.mubr.f32.gmra.mxu0 %v958
        %v1993 = vpop.f32.mrf.mxu0
        %v1994 = vadd.f32 0.0, %v1993
        %v1995 = vpop.f32.mrf.mxu0
        %1996 = vmatprep.mubr.f32.mxu0 0.0
        %1997 = vmatmul.mubr.f32.gmra.mxu0 %v961
        %v1998 = vpop.f32.mrf.mxu0
        %v1999 = vadd.f32 0.0, %v1998
        %v2000 = vpop.f32.mrf.mxu0
        %2001 = vmatprep.mubr.f32.mxu0 0.0
        %2002 = vmatmul.mubr.f32.gmra.mxu0 %v964
        %v2003 = vpop.f32.mrf.mxu0
        %v2004 = vadd.f32 0.0, %v2003
        %v2005 = vpop.f32.mrf.mxu0
        %2006 = vmatprep.mubr.f32.mxu0 0.0
        %2007 = vmatmul.mubr.f32.gmra.mxu0 %v967
        %v2008 = vpop.f32.mrf.mxu0
        %v2009 = vadd.f32 0.0, %v2008
        %v2010 = vpop.f32.mrf.mxu0
        %2011 = vmatprep.mubr.f32.mxu0 0.0
        %2012 = vmatmul.mubr.f32.gmra.mxu0 %v970
        %v2013 = vpop.f32.mrf.mxu0
        %v2014 = vadd.f32 0.0, %v2013
        %v2015 = vpop.f32.mrf.mxu0
        %2016 = vmatprep.mubr.f32.mxu0 0.0
        %2017 = vmatmul.mubr.f32.gmra.mxu0 %v973
        %v2018 = vpop.f32.mrf.mxu0
        %v2019 = vadd.f32 0.0, %v2018
        %v2020 = vpop.f32.mrf.mxu0
        %2021 = vmatprep.mubr.f32.mxu0 0.0
        %2022 = vmatmul.mubr.f32.gmra.mxu0 %v976
        %v2023 = vpop.f32.mrf.mxu0
        %v2024 = vadd.f32 0.0, %v2023
        %v2025 = vpop.f32.mrf.mxu0
        %2026 = vmatprep.mubr.f32.mxu0 0.0
        %2027 = vmatmul.mubr.f32.gmra.mxu0 %v979
        %v2028 = vpop.f32.mrf.mxu0
        %v2029 = vadd.f32 0.0, %v2028
        %v2030 = vpop.f32.mrf.mxu0
        %2031 = vmatprep.mubr.f32.mxu0 0.0
        %2032 = vmatmul.mubr.f32.gmra.mxu0 %v982
        %v2033 = vpop.f32.mrf.mxu0
        %v2034 = vadd.f32 0.0, %v2033
        %v2035 = vpop.f32.mrf.mxu0
        %2036 = vmatprep.mubr.f32.mxu0 0.0
        %2037 = vmatmul.mubr.f32.gmra.mxu0 %v985
        %v2038 = vpop.f32.mrf.mxu0
        %v2039 = vadd.f32 0.0, %v2038
        %v2040 = vpop.f32.mrf.mxu0
        %2041 = vmatprep.mubr.f32.mxu0 0.0
        %2042 = vmatmul.mubr.f32.gmra.mxu0 %v988
        %v2043 = vpop.f32.mrf.mxu0
        %v2044 = vadd.f32 0.0, %v2043
        %v2045 = vpop.f32.mrf.mxu0
        %2046 = vmatprep.mubr.f32.mxu0 0.0
        %2047 = vmatmul.mubr.f32.gmra.mxu0 %v991
        %v2048 = vpop.f32.mrf.mxu0
        %v2049 = vadd.f32 0.0, %v2048
        %v2050 = vpop.f32.mrf.mxu0
        %2051 = vmatprep.mubr.f32.mxu0 0.0
        %2052 = vmatmul.mubr.f32.gmra.mxu0 %v994
        %v2053 = vpop.f32.mrf.mxu0
        %v2054 = vadd.f32 0.0, %v2053
        %v2055 = vpop.f32.mrf.mxu0
        %2056 = vmatprep.mubr.f32.mxu0 0.0
        %2057 = vmatmul.mubr.f32.gmra.mxu0 %v997
        %v2058 = vpop.f32.mrf.mxu0
        %v2059 = vadd.f32 0.0, %v2058
        %v2060 = vpop.f32.mrf.mxu0
        %2061 = vmatprep.mubr.f32.mxu0 0.0
        %2062 = vmatmul.mubr.f32.gmra.mxu0 %v1000
        %v2063 = vpop.f32.mrf.mxu0
        %v2064 = vadd.f32 0.0, %v2063
        %v2065 = vpop.f32.mrf.mxu0
        %2066 = vmatprep.mubr.f32.mxu0 0.0
        %2067 = vmatmul.mubr.f32.gmra.mxu0 %v1003
        %v2068 = vpop.f32.mrf.mxu0
        %v2069 = vadd.f32 0.0, %v2068
        %v2070 = vpop.f32.mrf.mxu0
        %2071 = vmatprep.mubr.f32.mxu0 0.0
        %2072 = vmatmul.mubr.f32.gmra.mxu0 %v1006
        %v2073 = vpop.f32.mrf.mxu0
        %v2074 = vadd.f32 0.0, %v2073
        %v2075 = vpop.f32.mrf.mxu0
        %2076 = vmatprep.mubr.f32.mxu0 0.0
        %2077 = vmatmul.mubr.f32.gmra.mxu0 %v1009
        %v2078 = vpop.f32.mrf.mxu0
        %v2079 = vadd.f32 0.0, %v2078
        %v2080 = vpop.f32.mrf.mxu0
        %2081 = vmatprep.mubr.f32.mxu0 0.0
        %2082 = vmatmul.mubr.f32.gmra.mxu0 %v1012
        %v2083 = vpop.f32.mrf.mxu0
        %v2084 = vadd.f32 0.0, %v2083
        %v2085 = vpop.f32.mrf.mxu0
        %2086 = vmatprep.mubr.f32.mxu0 0.0
        %2087 = vmatmul.mubr.f32.gmra.mxu0 %v1015
        %v2088 = vpop.f32.mrf.mxu0
        %v2089 = vadd.f32 0.0, %v2088
        %v2090 = vpop.f32.mrf.mxu0
        %2091 = vmatprep.mubr.f32.mxu0 0.0
        %2092 = vmatmul.mubr.f32.gmra.mxu0 %v1018
        %v2093 = vpop.f32.mrf.mxu0
        %v2094 = vadd.f32 0.0, %v2093
        %v2095 = vpop.f32.mrf.mxu0
        %2096 = vmatprep.mubr.f32.mxu0 0.0
        %2097 = vmatmul.mubr.f32.gmra.mxu0 %v1021
        %v2098 = vpop.f32.mrf.mxu0
        %v2099 = vadd.f32 0.0, %v2098
        %v2100 = vpop.f32.mrf.mxu0
        %2101 = vmatprep.mubr.f32.mxu0 0.0
        %2102 = vmatmul.mubr.f32.gmra.mxu0 %v1024
        %v2103 = vpop.f32.mrf.mxu0
        %v2104 = vadd.f32 0.0, %v2103
        %v2105 = vpop.f32.mrf.mxu0
        %2106 = vmatprep.mubr.f32.mxu0 0.0
        %2107 = vmatmul.mubr.f32.gmra.mxu0 %v1027
        %v2108 = vpop.f32.mrf.mxu0
        %v2109 = vadd.f32 0.0, %v2108
        %v2110 = vpop.f32.mrf.mxu0
        %2111 = vmatprep.mubr.f32.mxu0 0.0
        %2112 = vmatmul.mubr.f32.gmra.mxu0 %v1030
        %v2113 = vpop.f32.mrf.mxu0
        %v2114 = vadd.f32 0.0, %v2113
        %v2115 = vpop.f32.mrf.mxu0
        %2116 = vmatprep.mubr.f32.mxu0 0.0
        %2117 = vmatmul.mubr.f32.gmra.mxu0 %v1033
        %v2118 = vpop.f32.mrf.mxu0
        %v2119 = vadd.f32 0.0, %v2118
        %v2120 = vpop.f32.mrf.mxu0
        %2121 = vmatprep.mubr.f32.mxu0 0.0
        %2122 = vmatmul.mubr.f32.gmra.mxu0 %v1036
        %v2123 = vpop.f32.mrf.mxu0
        %v2124 = vadd.f32 0.0, %v2123
        %v2125 = vpop.f32.mrf.mxu0
        %2126 = vmatprep.mubr.f32.mxu0 0.0
        %2127 = vmatmul.mubr.f32.gmra.mxu0 %v1039
        %v2128 = vpop.f32.mrf.mxu0
        %v2129 = vadd.f32 0.0, %v2128
        %v2130 = vpop.f32.mrf.mxu0
        %2131 = vmatprep.mubr.f32.mxu0 0.0
        %2132 = vmatmul.mubr.f32.gmra.mxu0 %v1042
        %v2133 = vpop.f32.mrf.mxu0
        %v2134 = vadd.f32 0.0, %v2133
        %v2135 = vpop.f32.mrf.mxu0
        %2136 = vmatprep.mubr.f32.mxu0 0.0
        %2137 = vmatmul.mubr.f32.gmra.mxu0 %v1045
        %v2138 = vpop.f32.mrf.mxu0
        %v2139 = vadd.f32 0.0, %v2138
        %v2140 = vpop.f32.mrf.mxu0
        %2141 = vmatprep.mubr.f32.mxu0 0.0
        %2142 = vmatmul.mubr.f32.gmra.mxu0 %v1048
        %v2143 = vpop.f32.mrf.mxu0
        %v2144 = vadd.f32 0.0, %v2143
        %v2145 = vpop.f32.mrf.mxu0
        %2146 = vmatprep.mubr.f32.mxu0 0.0
        %2147 = vmatmul.mubr.f32.gmra.mxu0 %v1051
        %v2148 = vpop.f32.mrf.mxu0
        %v2149 = vadd.f32 0.0, %v2148
        %v2150 = vpop.f32.mrf.mxu0
        %2151 = vmatprep.mubr.f32.mxu0 0.0
        %2152 = vmatmul.mubr.f32.gmra.mxu0 %v1054
        %v2153 = vpop.f32.mrf.mxu0
        %v2154 = vadd.f32 0.0, %v2153
        %v2155 = vpop.f32.mrf.mxu0
        %2156 = vmatprep.mubr.f32.mxu0 0.0
        %2157 = vmatmul.mubr.f32.gmra.mxu0 %v1057
        %v2158 = vpop.f32.mrf.mxu0
        %v2159 = vadd.f32 0.0, %v2158
        %v2160 = vpop.f32.mrf.mxu0
        %2161 = vmatprep.mubr.f32.mxu0 0.0
        %2162 = vmatmul.mubr.f32.gmra.mxu0 %v1060
        %v2163 = vpop.f32.mrf.mxu0
        %v2164 = vadd.f32 0.0, %v2163
        %v2165 = vpop.f32.mrf.mxu0
        %2166 = vmatprep.mubr.f32.mxu0 0.0
        %2167 = vmatmul.mubr.f32.gmra.mxu0 %v1063
        %v2168 = vpop.f32.mrf.mxu0
        %v2169 = vadd.f32 0.0, %v2168
        %v2170 = vpop.f32.mrf.mxu0
        %2171 = vmatprep.mubr.f32.mxu0 0.0
        %2172 = vmatmul.mubr.f32.gmra.mxu0 %v1066
        %v2173 = vpop.f32.mrf.mxu0
        %v2174 = vadd.f32 0.0, %v2173
        %v2175 = vpop.f32.mrf.mxu0
        %2176 = vmatprep.mubr.f32.mxu0 0.0
        %2177 = vmatmul.mubr.f32.gmra.mxu0 %v1069
        %v2178 = vpop.f32.mrf.mxu0
        %v2179 = vadd.f32 0.0, %v2178
        %v2180 = vpop.f32.mrf.mxu0
        %2181 = vmatprep.mubr.f32.mxu0 0.0
        %2182 = vmatmul.mubr.f32.gmra.mxu0 %v1072
        %v2183 = vpop.f32.mrf.mxu0
        %v2184 = vadd.f32 0.0, %v2183
        %v2185 = vpop.f32.mrf.mxu0
        %2186 = vmatprep.mubr.f32.mxu0 0.0
        %2187 = vmatmul.mubr.f32.gmra.mxu0 %v1075
        %v2188 = vpop.f32.mrf.mxu0
        %v2189 = vadd.f32 0.0, %v2188
        %v2190 = vpop.f32.mrf.mxu0
        %2191 = vmatprep.mubr.f32.mxu0 0.0
        %2192 = vmatmul.mubr.f32.gmra.mxu0 %v1078
        %v2193 = vpop.f32.mrf.mxu0
        %v2194 = vadd.f32 0.0, %v2193
        %v2195 = vpop.f32.mrf.mxu0
        %2196 = vmatprep.mubr.f32.mxu0 0.0
        %2197 = vmatmul.mubr.f32.gmra.mxu0 %v1081
        %v2198 = vpop.f32.mrf.mxu0
        %v2199 = vadd.f32 0.0, %v2198
        %v2200 = vpop.f32.mrf.mxu0
        %2201 = vmatprep.mubr.f32.mxu0 0.0
        %2202 = vmatmul.mubr.f32.gmra.mxu0 %v1084
        %v2203 = vpop.f32.mrf.mxu0
        %v2204 = vadd.f32 0.0, %v2203
        %v2205 = vpop.f32.mrf.mxu0
        %2206 = vmatprep.mubr.f32.mxu0 0.0
        %2207 = vmatmul.mubr.f32.gmra.mxu0 %v1087
        %v2208 = vpop.f32.mrf.mxu0
        %v2209 = vadd.f32 0.0, %v2208
        %v2210 = vpop.f32.mrf.mxu0
        %2211 = vmatprep.mubr.f32.mxu0 0.0
        %2212 = vmatmul.mubr.f32.gmra.mxu0 %v1090
        %v2213 = vpop.f32.mrf.mxu0
        %v2214 = vadd.f32 0.0, %v2213
        %v2215 = vpop.f32.mrf.mxu0
        %2216 = vmatprep.mubr.f32.mxu0 0.0
        %2217 = vmatmul.mubr.f32.gmra.mxu0 %v1093
        %v2218 = vpop.f32.mrf.mxu0
        %v2219 = vadd.f32 0.0, %v2218
        %v2220 = vpop.f32.mrf.mxu0
        %2221 = vmatprep.mubr.f32.mxu0 0.0
        %2222 = vmatmul.mubr.f32.gmra.mxu0 %v1096
        %v2223 = vpop.f32.mrf.mxu0
        %v2224 = vadd.f32 0.0, %v2223
        %v2225 = vpop.f32.mrf.mxu0
        %2226 = vmatprep.mubr.f32.mxu0 0.0
        %2227 = vmatmul.mubr.f32.gmra.mxu0 %v1099
        %v2228 = vpop.f32.mrf.mxu0
        %v2229 = vadd.f32 0.0, %v2228
        %v2230 = vpop.f32.mrf.mxu0
        %2231 = vmatprep.mubr.f32.mxu0 0.0
        %2232 = vmatmul.mubr.f32.gmra.mxu0 %v1102
        %v2233 = vpop.f32.mrf.mxu0
        %v2234 = vadd.f32 0.0, %v2233
        %v2235 = vpop.f32.mrf.mxu0
        %2236 = vmatprep.mubr.f32.mxu0 0.0
        %2237 = vmatmul.mubr.f32.gmra.mxu0 %v1105
        %v2238 = vpop.f32.mrf.mxu0
        %v2239 = vadd.f32 0.0, %v2238
        %v2240 = vpop.f32.mrf.mxu0
        %2241 = vmatprep.mubr.f32.mxu0 0.0
        %2242 = vmatmul.mubr.f32.gmra.mxu0 %v1108
        %v2243 = vpop.f32.mrf.mxu0
        %v2244 = vadd.f32 0.0, %v2243
        %v2245 = vpop.f32.mrf.mxu0
        %2246 = vmatprep.mubr.f32.mxu0 0.0
        %2247 = vmatmul.mubr.f32.gmra.mxu0 %v1111
        %v2248 = vpop.f32.mrf.mxu0
        %v2249 = vadd.f32 0.0, %v2248
        %v2250 = vpop.f32.mrf.mxu0
        %2251 = vmatprep.mubr.f32.mxu0 0.0
        %2252 = vmatmul.mubr.f32.gmra.mxu0 %v1114
        %v2253 = vpop.f32.mrf.mxu0
        %v2254 = vadd.f32 0.0, %v2253
        %v2255 = vpop.f32.mrf.mxu0
        %2256 = vmatprep.mubr.f32.mxu0 0.0
        %2257 = vmatmul.mubr.f32.gmra.mxu0 %v1117
        %v2258 = vpop.f32.mrf.mxu0
        %v2259 = vadd.f32 0.0, %v2258
        %v2260 = vpop.f32.mrf.mxu0
        %2261 = vmatprep.mubr.f32.mxu0 0.0
        %2262 = vmatmul.mubr.f32.gmra.mxu0 %v1120
        %v2263 = vpop.f32.mrf.mxu0
        %v2264 = vadd.f32 0.0, %v2263
        %v2265 = vpop.f32.mrf.mxu0
        %2266 = vmatprep.mubr.f32.mxu0 0.0
        %2267 = vmatmul.mubr.f32.gmra.mxu0 %v1123
        %v2268 = vpop.f32.mrf.mxu0
        %v2269 = vadd.f32 0.0, %v2268
        %v2270 = vpop.f32.mrf.mxu0
        %2271 = vmatprep.mubr.f32.mxu0 0.0
        %2272 = vmatmul.mubr.f32.gmra.mxu0 %v1126
        %v2273 = vpop.f32.mrf.mxu0
        %v2274 = vadd.f32 0.0, %v2273
        %v2275 = vpop.f32.mrf.mxu0
        %2276 = vmatprep.mubr.f32.mxu0 0.0
        %2277 = vmatmul.mubr.f32.gmra.mxu0 %v1129
        %v2278 = vpop.f32.mrf.mxu0
        %v2279 = vadd.f32 0.0, %v2278
        %v2280 = vpop.f32.mrf.mxu0
        %2281 = vmatprep.mubr.f32.mxu0 0.0
        %2282 = vmatmul.mubr.f32.gmra.mxu0 %v1132
        %v2283 = vpop.f32.mrf.mxu0
        %v2284 = vadd.f32 0.0, %v2283
        %v2285 = vpop.f32.mrf.mxu0
        %2286 = vmatprep.mubr.f32.mxu0 0.0
        %2287 = vmatmul.mubr.f32.gmra.mxu0 %v1135
        %v2288 = vpop.f32.mrf.mxu0
        %v2289 = vadd.f32 0.0, %v2288
        %v2290 = vpop.f32.mrf.mxu0
        %2291 = vmatprep.mubr.f32.mxu0 0.0
        %2292 = vmatmul.mubr.f32.gmra.mxu0 %v1138
        %v2293 = vpop.f32.mrf.mxu0
        %v2294 = vadd.f32 0.0, %v2293
        %v2295 = vpop.f32.mrf.mxu0
        %2296 = vmatprep.mubr.f32.mxu0 0.0
        %2297 = vmatmul.mubr.f32.gmra.mxu0 %v1141
        %v2298 = vpop.f32.mrf.mxu0
        %v2299 = vadd.f32 0.0, %v2298
        %v2300 = vpop.f32.mrf.mxu0
        %2301 = vmatprep.mubr.f32.mxu0 0.0
        %2302 = vmatmul.mubr.f32.gmra.mxu0 %v1144
        %v2303 = vpop.f32.mrf.mxu0
        %v2304 = vadd.f32 0.0, %v2303
        %v2305 = vpop.f32.mrf.mxu0
        %2306 = vmatprep.mubr.f32.mxu0 0.0
        %2307 = vmatmul.mubr.f32.gmra.mxu0 %v1147
        %v2308 = vpop.f32.mrf.mxu0
        %v2309 = vadd.f32 0.0, %v2308
        %v2310 = vpop.f32.mrf.mxu0
        %2311 = vmatprep.mubr.f32.mxu0 0.0
        %2312 = vmatmul.mubr.f32.gmra.mxu0 %v1150
        %v2313 = vpop.f32.mrf.mxu0
        %v2314 = vadd.f32 0.0, %v2313
        %v2315 = vpop.f32.mrf.mxu0
        %2316 = vmatprep.mubr.f32.mxu0 0.0
        %2317 = vmatmul.mubr.f32.gmra.mxu0 %v1153
        %v2318 = vpop.f32.mrf.mxu0
        %v2319 = vadd.f32 0.0, %v2318
        %v2320 = vpop.f32.mrf.mxu0
        %2321 = vmatprep.mubr.f32.mxu0 0.0
        %2322 = vmatmul.mubr.f32.gmra.mxu0 %v1156
        %v2323 = vpop.f32.mrf.mxu0
        %v2324 = vadd.f32 0.0, %v2323
        %v2325 = vpop.f32.mrf.mxu0
        %2326 = vmatprep.mubr.f32.mxu0 0.0
        %2327 = vmatmul.mubr.f32.gmra.mxu0 %v1159
        %v2328 = vpop.f32.mrf.mxu0
        %v2329 = vadd.f32 0.0, %v2328
        %v2330 = vpop.f32.mrf.mxu0
        %2331 = vmatprep.mubr.f32.mxu0 0.0
        %2332 = vmatmul.mubr.f32.gmra.mxu0 %v1162
        %v2333 = vpop.f32.mrf.mxu0
        %v2334 = vadd.f32 0.0, %v2333
        %v2335 = vpop.f32.mrf.mxu0
        %2336 = vmatprep.mubr.f32.mxu0 0.0
        %2337 = vmatmul.mubr.f32.gmra.mxu0 %v1165
        %v2338 = vpop.f32.mrf.mxu0
        %v2339 = vadd.f32 0.0, %v2338
        %v2340 = vpop.f32.mrf.mxu0
        %2341 = vmatprep.mubr.f32.mxu0 0.0
        %2342 = vmatmul.mubr.f32.gmra.mxu0 %v1168
        %v2343 = vpop.f32.mrf.mxu0
        %v2344 = vadd.f32 0.0, %v2343
        %v2345 = vpop.f32.mrf.mxu0
        %2346 = vmatprep.mubr.f32.mxu0 0.0
        %2347 = vmatmul.mubr.f32.gmra.mxu0 %v1171
        %v2348 = vpop.f32.mrf.mxu0
        %v2349 = vadd.f32 0.0, %v2348
        %v2350 = vpop.f32.mrf.mxu0
        %2351 = vmatprep.mubr.f32.mxu0 0.0
        %2352 = vmatmul.mubr.f32.gmra.mxu0 %v1174
        %v2353 = vpop.f32.mrf.mxu0
        %v2354 = vadd.f32 0.0, %v2353
        %v2355 = vpop.f32.mrf.mxu0
        %2356 = vmatprep.mubr.f32.mxu0 0.0
        %2357 = vmatmul.mubr.f32.gmra.mxu0 %v1177
        %v2358 = vpop.f32.mrf.mxu0
        %v2359 = vadd.f32 0.0, %v2358
        %v2360 = vpop.f32.mrf.mxu0
        %2361 = vmatprep.mubr.f32.mxu0 0.0
        %2362 = vmatmul.mubr.f32.gmra.mxu0 %v1180
        %v2363 = vpop.f32.mrf.mxu0
        %v2364 = vadd.f32 0.0, %v2363
        %v2365 = vpop.f32.mrf.mxu0
        %2366 = vdwg.mxu0
        %vm2367 = vcmask 523264
        %2368 = vst.msk [vmem:[#allocation2] sm:$0xff] %vm2367, %v1249
        %2369 = vst.msk [vmem:[#allocation2 + $0x8] sm:$0xff] %vm2367, %v1254
        %2370 = vst.msk [vmem:[#allocation2 + $0x10] sm:$0xff] %vm2367, %v1259
        %2371 = vst.msk [vmem:[#allocation2 + $0x18] sm:$0xff] %vm2367, %v1264
        %2372 = vst.msk [vmem:[#allocation2 + $0x20] sm:$0xff] %vm2367, %v1269
        %2373 = vst.msk [vmem:[#allocation2 + $0x28] sm:$0xff] %vm2367, %v1274
        %2374 = vst.msk [vmem:[#allocation2 + $0x30] sm:$0xff] %vm2367, %v1279
        %2375 = vst.msk [vmem:[#allocation2 + $0x38] sm:$0xff] %vm2367, %v1284
        %2376 = vst.msk [vmem:[#allocation2 + $0x40] sm:$0xff] %vm2367, %v1289
        %2377 = vst.msk [vmem:[#allocation2 + $0x48] sm:$0xff] %vm2367, %v1294
        %2378 = vst.msk [vmem:[#allocation2 + $0x50] sm:$0xff] %vm2367, %v1299
        %2379 = vst.msk [vmem:[#allocation2 + $0x58] sm:$0xff] %vm2367, %v1304
        %2380 = vst.msk [vmem:[#allocation2 + $0x60] sm:$0xff] %vm2367, %v1309
        %2381 = vst.msk [vmem:[#allocation2 + $0x68] sm:$0xff] %vm2367, %v1314
        %2382 = vst.msk [vmem:[#allocation2 + $0x70] sm:$0xff] %vm2367, %v1319
        %2383 = vst.msk [vmem:[#allocation2 + $0x78] sm:$0xff] %vm2367, %v1324
        %2384 = vst.msk [vmem:[#allocation2 + $0x80] sm:$0xff] %vm2367, %v1329
        %2385 = vst.msk [vmem:[#allocation2 + $0x88] sm:$0xff] %vm2367, %v1334
        %2386 = vst.msk [vmem:[#allocation2 + $0x90] sm:$0xff] %vm2367, %v1339
        %2387 = vst.msk [vmem:[#allocation2 + $0x98] sm:$0xff] %vm2367, %v1344
        %2388 = vst.msk [vmem:[#allocation2 + $0xa0] sm:$0xff] %vm2367, %v1349
        %2389 = vst.msk [vmem:[#allocation2 + $0xa8] sm:$0xff] %vm2367, %v1354
        %2390 = vst.msk [vmem:[#allocation2 + $0xb0] sm:$0xff] %vm2367, %v1359
        %2391 = vst.msk [vmem:[#allocation2 + $0xb8] sm:$0xff] %vm2367, %v1364
        %2392 = vst.msk [vmem:[#allocation2 + $0xc0] sm:$0xff] %vm2367, %v1369
        %2393 = vst.msk [vmem:[#allocation2 + $0xc8] sm:$0xff] %vm2367, %v1374
        %2394 = vst.msk [vmem:[#allocation2 + $0xd0] sm:$0xff] %vm2367, %v1379
        %2395 = vst.msk [vmem:[#allocation2 + $0xd8] sm:$0xff] %vm2367, %v1384
        %2396 = vst.msk [vmem:[#allocation2 + $0xe0] sm:$0xff] %vm2367, %v1389
        %2397 = vst.msk [vmem:[#allocation2 + $0xe8] sm:$0xff] %vm2367, %v1394
        %2398 = vst.msk [vmem:[#allocation2 + $0xf0] sm:$0xff] %vm2367, %v1399
        %2399 = vst.msk [vmem:[#allocation2 + $0xf8] sm:$0xff] %vm2367, %v1404
        %2400 = vst.msk [vmem:[#allocation2 + $0x100] sm:$0xff] %vm2367, %v1409
        %2401 = vst.msk [vmem:[#allocation2 + $0x108] sm:$0xff] %vm2367, %v1414
        %2402 = vst.msk [vmem:[#allocation2 + $0x110] sm:$0xff] %vm2367, %v1419
        %2403 = vst.msk [vmem:[#allocation2 + $0x118] sm:$0xff] %vm2367, %v1424
        %2404 = vst.msk [vmem:[#allocation2 + $0x120] sm:$0xff] %vm2367, %v1429
        %2405 = vst.msk [vmem:[#allocation2 + $0x128] sm:$0xff] %vm2367, %v1434
        %2406 = vst.msk [vmem:[#allocation2 + $0x130] sm:$0xff] %vm2367, %v1439
        %2407 = vst.msk [vmem:[#allocation2 + $0x138] sm:$0xff] %vm2367, %v1444
        %2408 = vst.msk [vmem:[#allocation2 + $0x140] sm:$0xff] %vm2367, %v1449
        %2409 = vst.msk [vmem:[#allocation2 + $0x148] sm:$0xff] %vm2367, %v1454
        %2410 = vst.msk [vmem:[#allocation2 + $0x150] sm:$0xff] %vm2367, %v1459
        %2411 = vst.msk [vmem:[#allocation2 + $0x158] sm:$0xff] %vm2367, %v1464
        %2412 = vst.msk [vmem:[#allocation2 + $0x160] sm:$0xff] %vm2367, %v1469
        %2413 = vst.msk [vmem:[#allocation2 + $0x168] sm:$0xff] %vm2367, %v1474
        %2414 = vst.msk [vmem:[#allocation2 + $0x170] sm:$0xff] %vm2367, %v1479
        %2415 = vst.msk [vmem:[#allocation2 + $0x178] sm:$0xff] %vm2367, %v1484
        %2416 = vst.msk [vmem:[#allocation2 + $0x180] sm:$0xff] %vm2367, %v1489
        %2417 = vst.msk [vmem:[#allocation2 + $0x188] sm:$0xff] %vm2367, %v1494
        %2418 = vst.msk [vmem:[#allocation2 + $0x190] sm:$0xff] %vm2367, %v1499
        %2419 = vst.msk [vmem:[#allocation2 + $0x198] sm:$0xff] %vm2367, %v1504
        %2420 = vst.msk [vmem:[#allocation2 + $0x1a0] sm:$0xff] %vm2367, %v1509
        %2421 = vst.msk [vmem:[#allocation2 + $0x1a8] sm:$0xff] %vm2367, %v1514
        %2422 = vst.msk [vmem:[#allocation2 + $0x1b0] sm:$0xff] %vm2367, %v1519
        %2423 = vst.msk [vmem:[#allocation2 + $0x1b8] sm:$0xff] %vm2367, %v1524
        %2424 = vst.msk [vmem:[#allocation2 + $0x1c0] sm:$0xff] %vm2367, %v1529
        %2425 = vst.msk [vmem:[#allocation2 + $0x1c8] sm:$0xff] %vm2367, %v1534
        %2426 = vst.msk [vmem:[#allocation2 + $0x1d0] sm:$0xff] %vm2367, %v1539
        %2427 = vst.msk [vmem:[#allocation2 + $0x1d8] sm:$0xff] %vm2367, %v1544
        %2428 = vst.msk [vmem:[#allocation2 + $0x1e0] sm:$0xff] %vm2367, %v1549
        %2429 = vst.msk [vmem:[#allocation2 + $0x1e8] sm:$0xff] %vm2367, %v1554
        %2430 = vst.msk [vmem:[#allocation2 + $0x1f0] sm:$0xff] %vm2367, %v1559
        %2431 = vst.msk [vmem:[#allocation2 + $0x1f8] sm:$0xff] %vm2367, %v1564
        %2432 = vst.msk [vmem:[#allocation2 + $0x200] sm:$0xff] %vm2367, %v1569
        %2433 = vst.msk [vmem:[#allocation2 + $0x208] sm:$0xff] %vm2367, %v1574
        %2434 = vst.msk [vmem:[#allocation2 + $0x210] sm:$0xff] %vm2367, %v1579
        %2435 = vst.msk [vmem:[#allocation2 + $0x218] sm:$0xff] %vm2367, %v1584
        %2436 = vst.msk [vmem:[#allocation2 + $0x220] sm:$0xff] %vm2367, %v1589
        %2437 = vst.msk [vmem:[#allocation2 + $0x228] sm:$0xff] %vm2367, %v1594
        %2438 = vst.msk [vmem:[#allocation2 + $0x230] sm:$0xff] %vm2367, %v1599
        %2439 = vst.msk [vmem:[#allocation2 + $0x238] sm:$0xff] %vm2367, %v1604
        %2440 = vst.msk [vmem:[#allocation2 + $0x240] sm:$0xff] %vm2367, %v1609
        %2441 = vst.msk [vmem:[#allocation2 + $0x248] sm:$0xff] %vm2367, %v1614
        %2442 = vst.msk [vmem:[#allocation2 + $0x250] sm:$0xff] %vm2367, %v1619
        %2443 = vst.msk [vmem:[#allocation2 + $0x258] sm:$0xff] %vm2367, %v1624
        %2444 = vst.msk [vmem:[#allocation2 + $0x260] sm:$0xff] %vm2367, %v1629
        %2445 = vst.msk [vmem:[#allocation2 + $0x268] sm:$0xff] %vm2367, %v1634
        %2446 = vst.msk [vmem:[#allocation2 + $0x270] sm:$0xff] %vm2367, %v1639
        %2447 = vst.msk [vmem:[#allocation2 + $0x278] sm:$0xff] %vm2367, %v1644
        %2448 = vst.msk [vmem:[#allocation2 + $0x280] sm:$0xff] %vm2367, %v1649
        %2449 = vst.msk [vmem:[#allocation2 + $0x288] sm:$0xff] %vm2367, %v1654
        %2450 = vst.msk [vmem:[#allocation2 + $0x290] sm:$0xff] %vm2367, %v1659
        %2451 = vst.msk [vmem:[#allocation2 + $0x298] sm:$0xff] %vm2367, %v1664
        %2452 = vst.msk [vmem:[#allocation2 + $0x2a0] sm:$0xff] %vm2367, %v1669
        %2453 = vst.msk [vmem:[#allocation2 + $0x2a8] sm:$0xff] %vm2367, %v1674
        %2454 = vst.msk [vmem:[#allocation2 + $0x2b0] sm:$0xff] %vm2367, %v1679
        %2455 = vst.msk [vmem:[#allocation2 + $0x2b8] sm:$0xff] %vm2367, %v1684
        %2456 = vst.msk [vmem:[#allocation2 + $0x2c0] sm:$0xff] %vm2367, %v1689
        %2457 = vst.msk [vmem:[#allocation2 + $0x2c8] sm:$0xff] %vm2367, %v1694
        %2458 = vst.msk [vmem:[#allocation2 + $0x2d0] sm:$0xff] %vm2367, %v1699
        %2459 = vst.msk [vmem:[#allocation2 + $0x2d8] sm:$0xff] %vm2367, %v1704
        %2460 = vst.msk [vmem:[#allocation2 + $0x2e0] sm:$0xff] %vm2367, %v1709
        %2461 = vst.msk [vmem:[#allocation2 + $0x2e8] sm:$0xff] %vm2367, %v1714
        %2462 = vst.msk [vmem:[#allocation2 + $0x2f0] sm:$0xff] %vm2367, %v1719
        %2463 = vst.msk [vmem:[#allocation2 + $0x2f8] sm:$0xff] %vm2367, %v1724
        %2464 = vst.msk [vmem:[#allocation2 + $0x300] sm:$0xff] %vm2367, %v1729
        %2465 = vst.msk [vmem:[#allocation2 + $0x308] sm:$0xff] %vm2367, %v1734
        %2466 = vst.msk [vmem:[#allocation2 + $0x310] sm:$0xff] %vm2367, %v1739
        %2467 = vst.msk [vmem:[#allocation2 + $0x318] sm:$0xff] %vm2367, %v1744
        %2468 = vst.msk [vmem:[#allocation2 + $0x320] sm:$0xff] %vm2367, %v1749
        %2469 = vst.msk [vmem:[#allocation2 + $0x328] sm:$0xff] %vm2367, %v1754
        %2470 = vst.msk [vmem:[#allocation2 + $0x330] sm:$0xff] %vm2367, %v1759
        %2471 = vst.msk [vmem:[#allocation2 + $0x338] sm:$0xff] %vm2367, %v1764
        %2472 = vst.msk [vmem:[#allocation2 + $0x340] sm:$0xff] %vm2367, %v1769
        %2473 = vst.msk [vmem:[#allocation2 + $0x348] sm:$0xff] %vm2367, %v1774
        %2474 = vst.msk [vmem:[#allocation2 + $0x350] sm:$0xff] %vm2367, %v1779
        %2475 = vst.msk [vmem:[#allocation2 + $0x358] sm:$0xff] %vm2367, %v1784
        %2476 = vst.msk [vmem:[#allocation2 + $0x360] sm:$0xff] %vm2367, %v1789
        %2477 = vst.msk [vmem:[#allocation2 + $0x368] sm:$0xff] %vm2367, %v1794
        %2478 = vst.msk [vmem:[#allocation2 + $0x370] sm:$0xff] %vm2367, %v1799
        %2479 = vst.msk [vmem:[#allocation2 + $0x378] sm:$0xff] %vm2367, %v1804
        %2480 = vst.msk [vmem:[#allocation2 + $0x380] sm:$0xff] %vm2367, %v1809
        %2481 = vst.msk [vmem:[#allocation2 + $0x388] sm:$0xff] %vm2367, %v1814
        %2482 = vst.msk [vmem:[#allocation2 + $0x390] sm:$0xff] %vm2367, %v1819
        %2483 = vst.msk [vmem:[#allocation2 + $0x398] sm:$0xff] %vm2367, %v1824
        %2484 = vst.msk [vmem:[#allocation2 + $0x3a0] sm:$0xff] %vm2367, %v1829
        %2485 = vst.msk [vmem:[#allocation2 + $0x3a8] sm:$0xff] %vm2367, %v1834
        %2486 = vst.msk [vmem:[#allocation2 + $0x3b0] sm:$0xff] %vm2367, %v1839
        %2487 = vst.msk [vmem:[#allocation2 + $0x3b8] sm:$0xff] %vm2367, %v1844
        %2488 = vst.msk [vmem:[#allocation2 + $0x3c0] sm:$0xff] %vm2367, %v1849
        %2489 = vst.msk [vmem:[#allocation2 + $0x3c8] sm:$0xff] %vm2367, %v1854
        %2490 = vst.msk [vmem:[#allocation2 + $0x3d0] sm:$0xff] %vm2367, %v1859
        %2491 = vst.msk [vmem:[#allocation2 + $0x3d8] sm:$0xff] %vm2367, %v1864
        %2492 = vst.msk [vmem:[#allocation2 + $0x3e0] sm:$0xff] %vm2367, %v1869
        %2493 = vst.msk [vmem:[#allocation2 + $0x3e8] sm:$0xff] %vm2367, %v1874
        %2494 = vst.msk [vmem:[#allocation2 + $0x3f0] sm:$0xff] %vm2367, %v1879
        %2495 = vst.msk [vmem:[#allocation2 + $0x3f8] sm:$0xff] %vm2367, %v1884
        %2496 = vst.msk [vmem:[#allocation2 + $0x400] sm:$0xff] %vm2367, %v1889
        %2497 = vst.msk [vmem:[#allocation2 + $0x408] sm:$0xff] %vm2367, %v1894
        %2498 = vst.msk [vmem:[#allocation2 + $0x410] sm:$0xff] %vm2367, %v1899
        %2499 = vst.msk [vmem:[#allocation2 + $0x418] sm:$0xff] %vm2367, %v1904
        %2500 = vst.msk [vmem:[#allocation2 + $0x420] sm:$0xff] %vm2367, %v1909
        %2501 = vst.msk [vmem:[#allocation2 + $0x428] sm:$0xff] %vm2367, %v1914
        %2502 = vst.msk [vmem:[#allocation2 + $0x430] sm:$0xff] %vm2367, %v1919
        %2503 = vst.msk [vmem:[#allocation2 + $0x438] sm:$0xff] %vm2367, %v1924
        %2504 = vst.msk [vmem:[#allocation2 + $0x440] sm:$0xff] %vm2367, %v1929
        %2505 = vst.msk [vmem:[#allocation2 + $0x448] sm:$0xff] %vm2367, %v1934
        %2506 = vst.msk [vmem:[#allocation2 + $0x450] sm:$0xff] %vm2367, %v1939
        %2507 = vst.msk [vmem:[#allocation2 + $0x458] sm:$0xff] %vm2367, %v1944
        %2508 = vst.msk [vmem:[#allocation2 + $0x460] sm:$0xff] %vm2367, %v1949
        %2509 = vst.msk [vmem:[#allocation2 + $0x468] sm:$0xff] %vm2367, %v1954
        %2510 = vst.msk [vmem:[#allocation2 + $0x470] sm:$0xff] %vm2367, %v1959
        %2511 = vst.msk [vmem:[#allocation2 + $0x478] sm:$0xff] %vm2367, %v1964
        %2512 = vst.msk [vmem:[#allocation2 + $0x480] sm:$0xff] %vm2367, %v1969
        %2513 = vst.msk [vmem:[#allocation2 + $0x488] sm:$0xff] %vm2367, %v1974
        %2514 = vst.msk [vmem:[#allocation2 + $0x490] sm:$0xff] %vm2367, %v1979
        %2515 = vst.msk [vmem:[#allocation2 + $0x498] sm:$0xff] %vm2367, %v1984
        %2516 = vst.msk [vmem:[#allocation2 + $0x4a0] sm:$0xff] %vm2367, %v1989
        %2517 = vst.msk [vmem:[#allocation2 + $0x4a8] sm:$0xff] %vm2367, %v1994
        %2518 = vst.msk [vmem:[#allocation2 + $0x4b0] sm:$0xff] %vm2367, %v1999
        %2519 = vst.msk [vmem:[#allocation2 + $0x4b8] sm:$0xff] %vm2367, %v2004
        %2520 = vst.msk [vmem:[#allocation2 + $0x4c0] sm:$0xff] %vm2367, %v2009
        %2521 = vst.msk [vmem:[#allocation2 + $0x4c8] sm:$0xff] %vm2367, %v2014
        %2522 = vst.msk [vmem:[#allocation2 + $0x4d0] sm:$0xff] %vm2367, %v2019
        %2523 = vst.msk [vmem:[#allocation2 + $0x4d8] sm:$0xff] %vm2367, %v2024
        %2524 = vst.msk [vmem:[#allocation2 + $0x4e0] sm:$0xff] %vm2367, %v2029
        %2525 = vst.msk [vmem:[#allocation2 + $0x4e8] sm:$0xff] %vm2367, %v2034
        %2526 = vst.msk [vmem:[#allocation2 + $0x4f0] sm:$0xff] %vm2367, %v2039
        %2527 = vst.msk [vmem:[#allocation2 + $0x4f8] sm:$0xff] %vm2367, %v2044
        %2528 = vst.msk [vmem:[#allocation2 + $0x500] sm:$0xff] %vm2367, %v2049
        %2529 = vst.msk [vmem:[#allocation2 + $0x508] sm:$0xff] %vm2367, %v2054
        %2530 = vst.msk [vmem:[#allocation2 + $0x510] sm:$0xff] %vm2367, %v2059
        %2531 = vst.msk [vmem:[#allocation2 + $0x518] sm:$0xff] %vm2367, %v2064
        %2532 = vst.msk [vmem:[#allocation2 + $0x520] sm:$0xff] %vm2367, %v2069
        %2533 = vst.msk [vmem:[#allocation2 + $0x528] sm:$0xff] %vm2367, %v2074
        %2534 = vst.msk [vmem:[#allocation2 + $0x530] sm:$0xff] %vm2367, %v2079
        %2535 = vst.msk [vmem:[#allocation2 + $0x538] sm:$0xff] %vm2367, %v2084
        %2536 = vst.msk [vmem:[#allocation2 + $0x540] sm:$0xff] %vm2367, %v2089
        %2537 = vst.msk [vmem:[#allocation2 + $0x548] sm:$0xff] %vm2367, %v2094
        %2538 = vst.msk [vmem:[#allocation2 + $0x550] sm:$0xff] %vm2367, %v2099
        %2539 = vst.msk [vmem:[#allocation2 + $0x558] sm:$0xff] %vm2367, %v2104
        %2540 = vst.msk [vmem:[#allocation2 + $0x560] sm:$0xff] %vm2367, %v2109
        %2541 = vst.msk [vmem:[#allocation2 + $0x568] sm:$0xff] %vm2367, %v2114
        %2542 = vst.msk [vmem:[#allocation2 + $0x570] sm:$0xff] %vm2367, %v2119
        %2543 = vst.msk [vmem:[#allocation2 + $0x578] sm:$0xff] %vm2367, %v2124
        %2544 = vst.msk [vmem:[#allocation2 + $0x580] sm:$0xff] %vm2367, %v2129
        %2545 = vst.msk [vmem:[#allocation2 + $0x588] sm:$0xff] %vm2367, %v2134
        %2546 = vst.msk [vmem:[#allocation2 + $0x590] sm:$0xff] %vm2367, %v2139
        %2547 = vst.msk [vmem:[#allocation2 + $0x598] sm:$0xff] %vm2367, %v2144
        %2548 = vst.msk [vmem:[#allocation2 + $0x5a0] sm:$0xff] %vm2367, %v2149
        %2549 = vst.msk [vmem:[#allocation2 + $0x5a8] sm:$0xff] %vm2367, %v2154
        %2550 = vst.msk [vmem:[#allocation2 + $0x5b0] sm:$0xff] %vm2367, %v2159
        %2551 = vst.msk [vmem:[#allocation2 + $0x5b8] sm:$0xff] %vm2367, %v2164
        %2552 = vst.msk [vmem:[#allocation2 + $0x5c0] sm:$0xff] %vm2367, %v2169
        %2553 = vst.msk [vmem:[#allocation2 + $0x5c8] sm:$0xff] %vm2367, %v2174
        %2554 = vst.msk [vmem:[#allocation2 + $0x5d0] sm:$0xff] %vm2367, %v2179
        %2555 = vst.msk [vmem:[#allocation2 + $0x5d8] sm:$0xff] %vm2367, %v2184
        %2556 = vst.msk [vmem:[#allocation2 + $0x5e0] sm:$0xff] %vm2367, %v2189
        %2557 = vst.msk [vmem:[#allocation2 + $0x5e8] sm:$0xff] %vm2367, %v2194
        %2558 = vst.msk [vmem:[#allocation2 + $0x5f0] sm:$0xff] %vm2367, %v2199
        %2559 = vst.msk [vmem:[#allocation2 + $0x5f8] sm:$0xff] %vm2367, %v2204
        %2560 = vst.msk [vmem:[#allocation2 + $0x600] sm:$0xff] %vm2367, %v2209
        %2561 = vst.msk [vmem:[#allocation2 + $0x608] sm:$0xff] %vm2367, %v2214
        %2562 = vst.msk [vmem:[#allocation2 + $0x610] sm:$0xff] %vm2367, %v2219
        %2563 = vst.msk [vmem:[#allocation2 + $0x618] sm:$0xff] %vm2367, %v2224
        %2564 = vst.msk [vmem:[#allocation2 + $0x620] sm:$0xff] %vm2367, %v2229
        %2565 = vst.msk [vmem:[#allocation2 + $0x628] sm:$0xff] %vm2367, %v2234
        %2566 = vst.msk [vmem:[#allocation2 + $0x630] sm:$0xff] %vm2367, %v2239
        %2567 = vst.msk [vmem:[#allocation2 + $0x638] sm:$0xff] %vm2367, %v2244
        %2568 = vst.msk [vmem:[#allocation2 + $0x640] sm:$0xff] %vm2367, %v2249
        %2569 = vst.msk [vmem:[#allocation2 + $0x648] sm:$0xff] %vm2367, %v2254
        %2570 = vst.msk [vmem:[#allocation2 + $0x650] sm:$0xff] %vm2367, %v2259
        %2571 = vst.msk [vmem:[#allocation2 + $0x658] sm:$0xff] %vm2367, %v2264
        %2572 = vst.msk [vmem:[#allocation2 + $0x660] sm:$0xff] %vm2367, %v2269
        %2573 = vst.msk [vmem:[#allocation2 + $0x668] sm:$0xff] %vm2367, %v2274
        %2574 = vst.msk [vmem:[#allocation2 + $0x670] sm:$0xff] %vm2367, %v2279
        %2575 = vst.msk [vmem:[#allocation2 + $0x678] sm:$0xff] %vm2367, %v2284
        %2576 = vst.msk [vmem:[#allocation2 + $0x680] sm:$0xff] %vm2367, %v2289
        %2577 = vst.msk [vmem:[#allocation2 + $0x688] sm:$0xff] %vm2367, %v2294
        %2578 = vst.msk [vmem:[#allocation2 + $0x690] sm:$0xff] %vm2367, %v2299
        %2579 = vst.msk [vmem:[#allocation2 + $0x698] sm:$0xff] %vm2367, %v2304
        %2580 = vst.msk [vmem:[#allocation2 + $0x6a0] sm:$0xff] %vm2367, %v2309
        %2581 = vst.msk [vmem:[#allocation2 + $0x6a8] sm:$0xff] %vm2367, %v2314
        %2582 = vst.msk [vmem:[#allocation2 + $0x6b0] sm:$0xff] %vm2367, %v2319
        %2583 = vst.msk [vmem:[#allocation2 + $0x6b8] sm:$0xff] %vm2367, %v2324
        %2584 = vst.msk [vmem:[#allocation2 + $0x6c0] sm:$0xff] %vm2367, %v2329
        %2585 = vst.msk [vmem:[#allocation2 + $0x6c8] sm:$0xff] %vm2367, %v2334
        %2586 = vst.msk [vmem:[#allocation2 + $0x6d0] sm:$0xff] %vm2367, %v2339
        %2587 = vst.msk [vmem:[#allocation2 + $0x6d8] sm:$0xff] %vm2367, %v2344
        %2588 = vst.msk [vmem:[#allocation2 + $0x6e0] sm:$0xff] %vm2367, %v2349
        %2589 = vst.msk [vmem:[#allocation2 + $0x6e8] sm:$0xff] %vm2367, %v2354
        %2590 = vst.msk [vmem:[#allocation2 + $0x6f0] sm:$0xff] %vm2367, %v2359
        %2591 = vst.msk [vmem:[#allocation2 + $0x6f8] sm:$0xff] %vm2367, %v2364
        %2592 = vst.msk [vmem:[#allocation3] sm:$0xff] %vm2367, 0.0
        %2593 = vst.msk [vmem:[#allocation3 + $0x8] sm:$0xff] %vm2367, 0.0
        %vm2594 = vcmask 516096
        %2595 = vst.msk [vmem:[#allocation3 + $0x10] sm:$0x1] %vm2594, 0.0
        %2596 = vst.msk [vmem:[#allocation3 + $0xf1] sm:$0xff] %vm2367, 0.0
        %2597 = vst.msk [vmem:[#allocation3 + $0xf9] sm:$0xff] %vm2367, 0.0
        %2598 = vst.msk [vmem:[#allocation3 + $0x101] sm:$0xff] %vm2367, 0.0
        %2599 = vst.msk [vmem:[#allocation3 + $0x109] sm:$0xff] %vm2367, 0.0
        %2600 = vst.msk [vmem:[#allocation3 + $0x1f1] sm:$0xff] %vm2367, 0.0
        %2601 = vst.msk [vmem:[#allocation3 + $0x1f9] sm:$0xff] %vm2367, 0.0
        %2602 = vst.msk [vmem:[#allocation3 + $0x201] sm:$0xff] %vm2367, 0.0
        %2603 = vst.msk [vmem:[#allocation3 + $0x209] sm:$0xff] %vm2367, 0.0
        %v2604 = vlaneseq
        %v2605 = vshrl.u32 %v2604, 7
        %v2606 = vadd.s32 %v2605, 8
        %v2607 = vadd.s32 %v2605, 16
        %v2608 = vadd.s32 %v2605, 24
        %v2609 = vadd.s32 %v2605, 32
        %v2610 = vadd.s32 %v2605, 40
        %v2611 = vadd.s32 %v2605, 48
        %v2612 = vadd.s32 %v2605, 56
        %v2613 = vadd.s32 %v2605, 64
        %v2614 = vadd.s32 %v2605, 72
        %v2615 = vadd.s32 %v2605, 80
        %v2616 = vadd.s32 %v2605, 88
        %v2617 = vadd.s32 %v2605, 96
        %v2618 = vadd.s32 %v2605, 104
        %v2619 = vadd.s32 %v2605, 112
        %v2620 = vadd.s32 %v2605, 120
        %v2621 = vadd.s32 %v2605, 128
        %v2622 = vadd.s32 %v2605, 136
        %v2623 = vadd.s32 %v2605, 144
        %v2624 = vadd.s32 %v2605, 152
        %v2625 = vadd.s32 %v2605, 160
        %v2626 = vadd.s32 %v2605, 168
        %v2627 = vadd.s32 %v2605, 176
        %v2628 = vadd.s32 %v2605, 184
        %v2629 = vadd.s32 %v2605, 192
        %v2630 = vadd.s32 %v2605, 200
        %v2631 = vadd.s32 %v2605, 208
        %v2632 = vadd.s32 %v2605, 216
        %vm2633 = vcmp.lt.s32.totalorder %v2605, 0
        %v2634 = vsub.s32 0, %v2605
        %v2635 = vsel %vm2633, %v2634, %v2605
        %v2636 = vshrl.u32 %v2635, 4
        %v2637 = vand.u32 %v2635, 15
        %v2638 = vsub.s32 0, %v2637
        %v2639 = vsel %vm2633, %v2638, %v2637
        %vm2640 = vcmp.lt.s32.totalorder %v2606, 0
        %v2641 = vsub.s32 0, %v2606
        %v2642 = vsel %vm2640, %v2641, %v2606
        %v2643 = vshrl.u32 %v2642, 4
        %v2644 = vand.u32 %v2642, 15
        %v2645 = vsub.s32 0, %v2644
        %v2646 = vsel %vm2640, %v2645, %v2644
        %vm2647 = vcmp.lt.s32.totalorder %v2607, 0
        %v2648 = vsub.s32 0, %v2607
        %v2649 = vsel %vm2647, %v2648, %v2607
        %v2650 = vshrl.u32 %v2649, 4
        %v2651 = vand.u32 %v2649, 15
        %v2652 = vsub.s32 0, %v2651
        %v2653 = vsel %vm2647, %v2652, %v2651
        %vm2654 = vcmp.lt.s32.totalorder %v2608, 0
        %v2655 = vsub.s32 0, %v2608
        %v2656 = vsel %vm2654, %v2655, %v2608
        %v2657 = vshrl.u32 %v2656, 4
        %v2658 = vand.u32 %v2656, 15
        %v2659 = vsub.s32 0, %v2658
        %v2660 = vsel %vm2654, %v2659, %v2658
        %vm2661 = vcmp.lt.s32.totalorder %v2609, 0
        %v2662 = vsub.s32 0, %v2609
        %v2663 = vsel %vm2661, %v2662, %v2609
        %v2664 = vshrl.u32 %v2663, 4
        %v2665 = vand.u32 %v2663, 15
        %v2666 = vsub.s32 0, %v2665
        %v2667 = vsel %vm2661, %v2666, %v2665
        %vm2668 = vcmp.lt.s32.totalorder %v2610, 0
        %v2669 = vsub.s32 0, %v2610
        %v2670 = vsel %vm2668, %v2669, %v2610
        %v2671 = vshrl.u32 %v2670, 4
        %v2672 = vand.u32 %v2670, 15
        %v2673 = vsub.s32 0, %v2672
        %v2674 = vsel %vm2668, %v2673, %v2672
        %vm2675 = vcmp.lt.s32.totalorder %v2611, 0
        %v2676 = vsub.s32 0, %v2611
        %v2677 = vsel %vm2675, %v2676, %v2611
        %v2678 = vshrl.u32 %v2677, 4
        %v2679 = vand.u32 %v2677, 15
        %v2680 = vsub.s32 0, %v2679
        %v2681 = vsel %vm2675, %v2680, %v2679
        %vm2682 = vcmp.lt.s32.totalorder %v2612, 0
        %v2683 = vsub.s32 0, %v2612
        %v2684 = vsel %vm2682, %v2683, %v2612
        %v2685 = vshrl.u32 %v2684, 4
        %v2686 = vand.u32 %v2684, 15
        %v2687 = vsub.s32 0, %v2686
        %v2688 = vsel %vm2682, %v2687, %v2686
        %vm2689 = vcmp.lt.s32.totalorder %v2613, 0
        %v2690 = vsub.s32 0, %v2613
        %v2691 = vsel %vm2689, %v2690, %v2613
        %v2692 = vshrl.u32 %v2691, 4
        %v2693 = vand.u32 %v2691, 15
        %v2694 = vsub.s32 0, %v2693
        %v2695 = vsel %vm2689, %v2694, %v2693
        %vm2696 = vcmp.lt.s32.totalorder %v2614, 0
        %v2697 = vsub.s32 0, %v2614
        %v2698 = vsel %vm2696, %v2697, %v2614
        %v2699 = vshrl.u32 %v2698, 4
        %v2700 = vand.u32 %v2698, 15
        %v2701 = vsub.s32 0, %v2700
        %v2702 = vsel %vm2696, %v2701, %v2700
        %vm2703 = vcmp.lt.s32.totalorder %v2615, 0
        %v2704 = vsub.s32 0, %v2615
        %v2705 = vsel %vm2703, %v2704, %v2615
        %v2706 = vshrl.u32 %v2705, 4
        %v2707 = vand.u32 %v2705, 15
        %v2708 = vsub.s32 0, %v2707
        %v2709 = vsel %vm2703, %v2708, %v2707
        %vm2710 = vcmp.lt.s32.totalorder %v2616, 0
        %v2711 = vsub.s32 0, %v2616
        %v2712 = vsel %vm2710, %v2711, %v2616
        %v2713 = vshrl.u32 %v2712, 4
        %v2714 = vand.u32 %v2712, 15
        %v2715 = vsub.s32 0, %v2714
        %v2716 = vsel %vm2710, %v2715, %v2714
        %vm2717 = vcmp.lt.s32.totalorder %v2617, 0
        %v2718 = vsub.s32 0, %v2617
        %v2719 = vsel %vm2717, %v2718, %v2617
        %v2720 = vshrl.u32 %v2719, 4
        %v2721 = vand.u32 %v2719, 15
        %v2722 = vsub.s32 0, %v2721
        %v2723 = vsel %vm2717, %v2722, %v2721
        %vm2724 = vcmp.lt.s32.totalorder %v2618, 0
        %v2725 = vsub.s32 0, %v2618
        %v2726 = vsel %vm2724, %v2725, %v2618
        %v2727 = vshrl.u32 %v2726, 4
        %v2728 = vand.u32 %v2726, 15
        %v2729 = vsub.s32 0, %v2728
        %v2730 = vsel %vm2724, %v2729, %v2728
        %vm2731 = vcmp.lt.s32.totalorder %v2619, 0
        %v2732 = vsub.s32 0, %v2619
        %v2733 = vsel %vm2731, %v2732, %v2619
        %v2734 = vshrl.u32 %v2733, 4
        %v2735 = vand.u32 %v2733, 15
        %v2736 = vsub.s32 0, %v2735
        %v2737 = vsel %vm2731, %v2736, %v2735
        %vm2738 = vcmp.lt.s32.totalorder %v2620, 0
        %v2739 = vsub.s32 0, %v2620
        %v2740 = vsel %vm2738, %v2739, %v2620
        %v2741 = vshrl.u32 %v2740, 4
        %v2742 = vand.u32 %v2740, 15
        %v2743 = vsub.s32 0, %v2742
        %v2744 = vsel %vm2738, %v2743, %v2742
        %vm2745 = vcmp.lt.s32.totalorder %v2621, 0
        %v2746 = vsub.s32 0, %v2621
        %v2747 = vsel %vm2745, %v2746, %v2621
        %v2748 = vshrl.u32 %v2747, 4
        %v2749 = vand.u32 %v2747, 15
        %v2750 = vsub.s32 0, %v2749
        %v2751 = vsel %vm2745, %v2750, %v2749
        %vm2752 = vcmp.lt.s32.totalorder %v2622, 0
        %v2753 = vsub.s32 0, %v2622
        %v2754 = vsel %vm2752, %v2753, %v2622
        %v2755 = vshrl.u32 %v2754, 4
        %v2756 = vand.u32 %v2754, 15
        %v2757 = vsub.s32 0, %v2756
        %v2758 = vsel %vm2752, %v2757, %v2756
        %vm2759 = vcmp.lt.s32.totalorder %v2623, 0
        %v2760 = vsub.s32 0, %v2623
        %v2761 = vsel %vm2759, %v2760, %v2623
        %v2762 = vshrl.u32 %v2761, 4
        %v2763 = vand.u32 %v2761, 15
        %v2764 = vsub.s32 0, %v2763
        %v2765 = vsel %vm2759, %v2764, %v2763
        %vm2766 = vcmp.lt.s32.totalorder %v2624, 0
        %v2767 = vsub.s32 0, %v2624
        %v2768 = vsel %vm2766, %v2767, %v2624
        %v2769 = vshrl.u32 %v2768, 4
        %v2770 = vand.u32 %v2768, 15
        %v2771 = vsub.s32 0, %v2770
        %v2772 = vsel %vm2766, %v2771, %v2770
        %vm2773 = vcmp.lt.s32.totalorder %v2625, 0
        %v2774 = vsub.s32 0, %v2625
        %v2775 = vsel %vm2773, %v2774, %v2625
        %v2776 = vshrl.u32 %v2775, 4
        %v2777 = vand.u32 %v2775, 15
        %v2778 = vsub.s32 0, %v2777
        %v2779 = vsel %vm2773, %v2778, %v2777
        %vm2780 = vcmp.lt.s32.totalorder %v2626, 0
        %v2781 = vsub.s32 0, %v2626
        %v2782 = vsel %vm2780, %v2781, %v2626
        %v2783 = vshrl.u32 %v2782, 4
        %v2784 = vand.u32 %v2782, 15
        %v2785 = vsub.s32 0, %v2784
        %v2786 = vsel %vm2780, %v2785, %v2784
        %vm2787 = vcmp.lt.s32.totalorder %v2627, 0
        %v2788 = vsub.s32 0, %v2627
        %v2789 = vsel %vm2787, %v2788, %v2627
        %v2790 = vshrl.u32 %v2789, 4
        %v2791 = vand.u32 %v2789, 15
        %v2792 = vsub.s32 0, %v2791
        %v2793 = vsel %vm2787, %v2792, %v2791
        %vm2794 = vcmp.lt.s32.totalorder %v2628, 0
        %v2795 = vsub.s32 0, %v2628
        %v2796 = vsel %vm2794, %v2795, %v2628
        %v2797 = vshrl.u32 %v2796, 4
        %v2798 = vand.u32 %v2796, 15
        %v2799 = vsub.s32 0, %v2798
        %v2800 = vsel %vm2794, %v2799, %v2798
        %vm2801 = vcmp.lt.s32.totalorder %v2629, 0
        %v2802 = vsub.s32 0, %v2629
        %v2803 = vsel %vm2801, %v2802, %v2629
        %v2804 = vshrl.u32 %v2803, 4
        %v2805 = vand.u32 %v2803, 15
        %v2806 = vsub.s32 0, %v2805
        %v2807 = vsel %vm2801, %v2806, %v2805
        %vm2808 = vcmp.lt.s32.totalorder %v2630, 0
        %v2809 = vsub.s32 0, %v2630
        %v2810 = vsel %vm2808, %v2809, %v2630
        %v2811 = vshrl.u32 %v2810, 4
        %v2812 = vand.u32 %v2810, 15
        %v2813 = vsub.s32 0, %v2812
        %v2814 = vsel %vm2808, %v2813, %v2812
        %vm2815 = vcmp.lt.s32.totalorder %v2631, 0
        %v2816 = vsub.s32 0, %v2631
        %v2817 = vsel %vm2815, %v2816, %v2631
        %v2818 = vshrl.u32 %v2817, 4
        %v2819 = vand.u32 %v2817, 15
        %v2820 = vsub.s32 0, %v2819
        %v2821 = vsel %vm2815, %v2820, %v2819
        %vm2822 = vcmp.lt.s32.totalorder %v2632, 0
        %v2823 = vsub.s32 0, %v2632
        %v2824 = vsel %vm2822, %v2823, %v2632
        %v2825 = vshrl.u32 %v2824, 4
        %v2826 = vand.u32 %v2824, 15
        %v2827 = vsub.s32 0, %v2826
        %v2828 = vsel %vm2822, %v2827, %v2826
        %vm2829 = vcmp.ne.s32.totalorder %v2639, 0
        %vm2830 = vcmp.ne.s32.totalorder %v2646, 0
        %vm2831 = vcmp.ne.s32.totalorder %v2653, 0
        %vm2832 = vcmp.ne.s32.totalorder %v2660, 0
        %vm2833 = vcmp.ne.s32.totalorder %v2667, 0
        %vm2834 = vcmp.ne.s32.totalorder %v2674, 0
        %vm2835 = vcmp.ne.s32.totalorder %v2681, 0
        %vm2836 = vcmp.ne.s32.totalorder %v2688, 0
        %vm2837 = vcmp.ne.s32.totalorder %v2695, 0
        %vm2838 = vcmp.ne.s32.totalorder %v2702, 0
        %vm2839 = vcmp.ne.s32.totalorder %v2709, 0
        %vm2840 = vcmp.ne.s32.totalorder %v2716, 0
        %vm2841 = vcmp.ne.s32.totalorder %v2723, 0
        %vm2842 = vcmp.ne.s32.totalorder %v2730, 0
        %vm2843 = vcmp.ne.s32.totalorder %v2737, 0
        %vm2844 = vcmp.ne.s32.totalorder %v2744, 0
        %vm2845 = vcmp.ne.s32.totalorder %v2751, 0
        %vm2846 = vcmp.ne.s32.totalorder %v2758, 0
        %vm2847 = vcmp.ne.s32.totalorder %v2765, 0
        %vm2848 = vcmp.ne.s32.totalorder %v2772, 0
        %vm2849 = vcmp.ne.s32.totalorder %v2779, 0
        %vm2850 = vcmp.ne.s32.totalorder %v2786, 0
        %vm2851 = vcmp.ne.s32.totalorder %v2793, 0
        %vm2852 = vcmp.ne.s32.totalorder %v2800, 0
        %vm2853 = vcmp.ne.s32.totalorder %v2807, 0
        %vm2854 = vcmp.ne.s32.totalorder %v2814, 0
        %vm2855 = vcmp.ne.s32.totalorder %v2821, 0
        %vm2856 = vcmp.ne.s32.totalorder %v2828, 0
        %vm2857 = vcmp.lt.s32.totalorder %v2639, 0
        %vm2858 = vcmp.lt.s32.totalorder %v2646, 0
        %vm2859 = vcmp.lt.s32.totalorder %v2653, 0
        %vm2860 = vcmp.lt.s32.totalorder %v2660, 0
        %vm2861 = vcmp.lt.s32.totalorder %v2667, 0
        %vm2862 = vcmp.lt.s32.totalorder %v2674, 0
        %vm2863 = vcmp.lt.s32.totalorder %v2681, 0
        %vm2864 = vcmp.lt.s32.totalorder %v2688, 0
        %vm2865 = vcmp.lt.s32.totalorder %v2695, 0
        %vm2866 = vcmp.lt.s32.totalorder %v2702, 0
        %vm2867 = vcmp.lt.s32.totalorder %v2709, 0
        %vm2868 = vcmp.lt.s32.totalorder %v2716, 0
        %vm2869 = vcmp.lt.s32.totalorder %v2723, 0
        %vm2870 = vcmp.lt.s32.totalorder %v2730, 0
        %vm2871 = vcmp.lt.s32.totalorder %v2737, 0
        %vm2872 = vcmp.lt.s32.totalorder %v2744, 0
        %vm2873 = vcmp.lt.s32.totalorder %v2751, 0
        %vm2874 = vcmp.lt.s32.totalorder %v2758, 0
        %vm2875 = vcmp.lt.s32.totalorder %v2765, 0
        %vm2876 = vcmp.lt.s32.totalorder %v2772, 0
        %vm2877 = vcmp.lt.s32.totalorder %v2779, 0
        %vm2878 = vcmp.lt.s32.totalorder %v2786, 0
        %vm2879 = vcmp.lt.s32.totalorder %v2793, 0
        %vm2880 = vcmp.lt.s32.totalorder %v2800, 0
        %vm2881 = vcmp.lt.s32.totalorder %v2807, 0
        %vm2882 = vcmp.lt.s32.totalorder %v2814, 0
        %vm2883 = vcmp.lt.s32.totalorder %v2821, 0
        %vm2884 = vcmp.lt.s32.totalorder %v2828, 0
        %vm2885 = vmand %vm2857, %vm2829
        %vm2886 = vmand %vm2858, %vm2830
        %vm2887 = vmand %vm2859, %vm2831
        %vm2888 = vmand %vm2860, %vm2832
        %vm2889 = vmand %vm2861, %vm2833
        %vm2890 = vmand %vm2862, %vm2834
        %vm2891 = vmand %vm2863, %vm2835
        %vm2892 = vmand %vm2864, %vm2836
        %vm2893 = vmand %vm2865, %vm2837
        %vm2894 = vmand %vm2866, %vm2838
        %vm2895 = vmand %vm2867, %vm2839
        %vm2896 = vmand %vm2868, %vm2840
        %vm2897 = vmand %vm2869, %vm2841
        %vm2898 = vmand %vm2870, %vm2842
        %vm2899 = vmand %vm2871, %vm2843
        %vm2900 = vmand %vm2872, %vm2844
        %vm2901 = vmand %vm2873, %vm2845
        %vm2902 = vmand %vm2874, %vm2846
        %vm2903 = vmand %vm2875, %vm2847
        %vm2904 = vmand %vm2876, %vm2848
        %vm2905 = vmand %vm2877, %vm2849
        %vm2906 = vmand %vm2878, %vm2850
        %vm2907 = vmand %vm2879, %vm2851
        %vm2908 = vmand %vm2880, %vm2852
        %vm2909 = vmand %vm2881, %vm2853
        %vm2910 = vmand %vm2882, %vm2854
        %vm2911 = vmand %vm2883, %vm2855
        %vm2912 = vmand %vm2884, %vm2856
        %v2913 = vadd.s32 %v2639, 16
        %v2914 = vadd.s32 %v2646, 16
        %v2915 = vadd.s32 %v2653, 16
        %v2916 = vadd.s32 %v2660, 16
        %v2917 = vadd.s32 %v2667, 16
        %v2918 = vadd.s32 %v2674, 16
        %v2919 = vadd.s32 %v2681, 16
        %v2920 = vadd.s32 %v2688, 16
        %v2921 = vadd.s32 %v2695, 16
        %v2922 = vadd.s32 %v2702, 16
        %v2923 = vadd.s32 %v2709, 16
        %v2924 = vadd.s32 %v2716, 16
        %v2925 = vadd.s32 %v2723, 16
        %v2926 = vadd.s32 %v2730, 16
        %v2927 = vadd.s32 %v2737, 16
        %v2928 = vadd.s32 %v2744, 16
        %v2929 = vadd.s32 %v2751, 16
        %v2930 = vadd.s32 %v2758, 16
        %v2931 = vadd.s32 %v2765, 16
        %v2932 = vadd.s32 %v2772, 16
        %v2933 = vadd.s32 %v2779, 16
        %v2934 = vadd.s32 %v2786, 16
        %v2935 = vadd.s32 %v2793, 16
        %v2936 = vadd.s32 %v2800, 16
        %v2937 = vadd.s32 %v2807, 16
        %v2938 = vadd.s32 %v2814, 16
        %v2939 = vadd.s32 %v2821, 16
        %v2940 = vadd.s32 %v2828, 16
        %v2941 = vsel %vm2885, %v2913, %v2639
        %v2942 = vsel %vm2886, %v2914, %v2646
        %v2943 = vsel %vm2887, %v2915, %v2653
        %v2944 = vsel %vm2888, %v2916, %v2660
        %v2945 = vsel %vm2889, %v2917, %v2667
        %v2946 = vsel %vm2890, %v2918, %v2674
        %v2947 = vsel %vm2891, %v2919, %v2681
        %v2948 = vsel %vm2892, %v2920, %v2688
        %v2949 = vsel %vm2893, %v2921, %v2695
        %v2950 = vsel %vm2894, %v2922, %v2702
        %v2951 = vsel %vm2895, %v2923, %v2709
        %v2952 = vsel %vm2896, %v2924, %v2716
        %v2953 = vsel %vm2897, %v2925, %v2723
        %v2954 = vsel %vm2898, %v2926, %v2730
        %v2955 = vsel %vm2899, %v2927, %v2737
        %v2956 = vsel %vm2900, %v2928, %v2744
        %v2957 = vsel %vm2901, %v2929, %v2751
        %v2958 = vsel %vm2902, %v2930, %v2758
        %v2959 = vsel %vm2903, %v2931, %v2765
        %v2960 = vsel %vm2904, %v2932, %v2772
        %v2961 = vsel %vm2905, %v2933, %v2779
        %v2962 = vsel %vm2906, %v2934, %v2786
        %v2963 = vsel %vm2907, %v2935, %v2793
        %v2964 = vsel %vm2908, %v2936, %v2800
        %v2965 = vsel %vm2909, %v2937, %v2807
        %v2966 = vsel %vm2910, %v2938, %v2814
        %v2967 = vsel %vm2911, %v2939, %v2821
        %v2968 = vsel %vm2912, %v2940, %v2828
        %vm2969 = vcmp.lt.s32.totalorder %v2941, 14
        %vm2970 = vcmp.lt.s32.totalorder %v2942, 14
        %vm2971 = vcmp.lt.s32.totalorder %v2943, 14
        %vm2972 = vcmp.lt.s32.totalorder %v2944, 14
        %vm2973 = vcmp.lt.s32.totalorder %v2945, 14
        %vm2974 = vcmp.lt.s32.totalorder %v2946, 14
        %vm2975 = vcmp.lt.s32.totalorder %v2947, 14
        %vm2976 = vcmp.lt.s32.totalorder %v2948, 14
        %vm2977 = vcmp.lt.s32.totalorder %v2949, 14
        %vm2978 = vcmp.lt.s32.totalorder %v2950, 14
        %vm2979 = vcmp.lt.s32.totalorder %v2951, 14
        %vm2980 = vcmp.lt.s32.totalorder %v2952, 14
        %vm2981 = vcmp.lt.s32.totalorder %v2953, 14
        %vm2982 = vcmp.lt.s32.totalorder %v2954, 14
        %vm2983 = vcmp.lt.s32.totalorder %v2955, 14
        %vm2984 = vcmp.lt.s32.totalorder %v2956, 14
        %vm2985 = vcmp.lt.s32.totalorder %v2957, 14
        %vm2986 = vcmp.lt.s32.totalorder %v2958, 14
        %vm2987 = vcmp.lt.s32.totalorder %v2959, 14
        %vm2988 = vcmp.lt.s32.totalorder %v2960, 14
        %vm2989 = vcmp.lt.s32.totalorder %v2961, 14
        %vm2990 = vcmp.lt.s32.totalorder %v2962, 14
        %vm2991 = vcmp.lt.s32.totalorder %v2963, 14
        %vm2992 = vcmp.lt.s32.totalorder %v2964, 14
        %vm2993 = vcmp.lt.s32.totalorder %v2965, 14
        %vm2994 = vcmp.lt.s32.totalorder %v2966, 14
        %vm2995 = vcmp.lt.s32.totalorder %v2967, 14
        %vm2996 = vcmp.lt.s32.totalorder %v2968, 14
        %v2997 = vld [vmem:[#allocation2] sm:$0xff]
        %v2998 = vld [vmem:[#allocation2 + $0x8] sm:$0xff]
        %v2999 = vld [vmem:[#allocation2 + $0x10] sm:$0xff]
        %v3000 = vld [vmem:[#allocation2 + $0x18] sm:$0xff]
        %v3001 = vld [vmem:[#allocation2 + $0x20] sm:$0xff]
        %v3002 = vld [vmem:[#allocation2 + $0x28] sm:$0xff]
        %v3003 = vld [vmem:[#allocation2 + $0x30] sm:$0xff]
        %v3004 = vld [vmem:[#allocation2 + $0x38] sm:$0xff]
        %v3005 = vld [vmem:[#allocation2 + $0x40] sm:$0xff]
        %v3006 = vld [vmem:[#allocation2 + $0x48] sm:$0xff]
        %v3007 = vld [vmem:[#allocation2 + $0x50] sm:$0xff]
        %v3008 = vld [vmem:[#allocation2 + $0x58] sm:$0xff]
        %v3009 = vld [vmem:[#allocation2 + $0x60] sm:$0xff]
        %v3010 = vld [vmem:[#allocation2 + $0x68] sm:$0xff]
        %v3011 = vld [vmem:[#allocation2 + $0x70] sm:$0xff]
        %v3012 = vld [vmem:[#allocation2 + $0x78] sm:$0xff]
        %v3013 = vld [vmem:[#allocation2 + $0x80] sm:$0xff]
        %v3014 = vld [vmem:[#allocation2 + $0x88] sm:$0xff]
        %v3015 = vld [vmem:[#allocation2 + $0x90] sm:$0xff]
        %v3016 = vld [vmem:[#allocation2 + $0x98] sm:$0xff]
        %v3017 = vld [vmem:[#allocation2 + $0xa0] sm:$0xff]
        %v3018 = vld [vmem:[#allocation2 + $0xa8] sm:$0xff]
        %v3019 = vld [vmem:[#allocation2 + $0xb0] sm:$0xff]
        %v3020 = vld [vmem:[#allocation2 + $0xb8] sm:$0xff]
        %v3021 = vld [vmem:[#allocation2 + $0xc0] sm:$0xff]
        %v3022 = vld [vmem:[#allocation2 + $0xc8] sm:$0xff]
        %v3023 = vld [vmem:[#allocation2 + $0xd0] sm:$0xff]
        %v3024 = vld [vmem:[#allocation2 + $0xd8] sm:$0xff]
        %v3025 = vld [vmem:[#allocation2 + $0x1c0] sm:$0xff]
        %v3026 = vld [vmem:[#allocation2 + $0x1c8] sm:$0xff]
        %v3027 = vld [vmem:[#allocation2 + $0x1d0] sm:$0xff]
        %v3028 = vld [vmem:[#allocation2 + $0x1d8] sm:$0xff]
        %v3029 = vld [vmem:[#allocation2 + $0x1e0] sm:$0xff]
        %v3030 = vld [vmem:[#allocation2 + $0x1e8] sm:$0xff]
        %v3031 = vld [vmem:[#allocation2 + $0x1f0] sm:$0xff]
        %v3032 = vld [vmem:[#allocation2 + $0x1f8] sm:$0xff]
        %v3033 = vld [vmem:[#allocation2 + $0x200] sm:$0xff]
        %v3034 = vld [vmem:[#allocation2 + $0x208] sm:$0xff]
        %v3035 = vld [vmem:[#allocation2 + $0x210] sm:$0xff]
        %v3036 = vld [vmem:[#allocation2 + $0x218] sm:$0xff]
        %v3037 = vld [vmem:[#allocation2 + $0x220] sm:$0xff]
        %v3038 = vld [vmem:[#allocation2 + $0x228] sm:$0xff]
        %v3039 = vld [vmem:[#allocation2 + $0x230] sm:$0xff]
        %v3040 = vld [vmem:[#allocation2 + $0x238] sm:$0xff]
        %v3041 = vld [vmem:[#allocation2 + $0x240] sm:$0xff]
        %v3042 = vld [vmem:[#allocation2 + $0x248] sm:$0xff]
        %v3043 = vld [vmem:[#allocation2 + $0x250] sm:$0xff]
        %v3044 = vld [vmem:[#allocation2 + $0x258] sm:$0xff]
        %v3045 = vld [vmem:[#allocation2 + $0x260] sm:$0xff]
        %v3046 = vld [vmem:[#allocation2 + $0x268] sm:$0xff]
        %v3047 = vld [vmem:[#allocation2 + $0x270] sm:$0xff]
        %v3048 = vld [vmem:[#allocation2 + $0x278] sm:$0xff]
        %v3049 = vld [vmem:[#allocation2 + $0x280] sm:$0xff]
        %v3050 = vld [vmem:[#allocation2 + $0x288] sm:$0xff]
        %v3051 = vld [vmem:[#allocation2 + $0x290] sm:$0xff]
        %v3052 = vld [vmem:[#allocation2 + $0x298] sm:$0xff]
        %v3053 = vmax.f32 %v2997, %v3025
        %v3054 = vmax.f32 %v2998, %v3026
        %v3055 = vmax.f32 %v2999, %v3027
        %v3056 = vmax.f32 %v3000, %v3028
        %v3057 = vmax.f32 %v3001, %v3029
        %v3058 = vmax.f32 %v3002, %v3030
        %v3059 = vmax.f32 %v3003, %v3031
        %v3060 = vmax.f32 %v3004, %v3032
        %v3061 = vmax.f32 %v3005, %v3033
        %v3062 = vmax.f32 %v3006, %v3034
        %v3063 = vmax.f32 %v3007, %v3035
        %v3064 = vmax.f32 %v3008, %v3036
        %v3065 = vmax.f32 %v3009, %v3037
        %v3066 = vmax.f32 %v3010, %v3038
        %v3067 = vmax.f32 %v3011, %v3039
        %v3068 = vmax.f32 %v3012, %v3040
        %v3069 = vmax.f32 %v3013, %v3041
        %v3070 = vmax.f32 %v3014, %v3042
        %v3071 = vmax.f32 %v3015, %v3043
        %v3072 = vmax.f32 %v3016, %v3044
        %v3073 = vmax.f32 %v3017, %v3045
        %v3074 = vmax.f32 %v3018, %v3046
        %v3075 = vmax.f32 %v3019, %v3047
        %v3076 = vmax.f32 %v3020, %v3048
        %v3077 = vmax.f32 %v3021, %v3049
        %v3078 = vmax.f32 %v3022, %v3050
        %v3079 = vmax.f32 %v3023, %v3051
        %v3080 = vmax.f32 %v3024, %v3052
        %v3081 = vld [vmem:[#allocation2 + $0x380] sm:$0xff]
        %v3082 = vld [vmem:[#allocation2 + $0x388] sm:$0xff]
        %v3083 = vld [vmem:[#allocation2 + $0x390] sm:$0xff]
        %v3084 = vld [vmem:[#allocation2 + $0x398] sm:$0xff]
        %v3085 = vld [vmem:[#allocation2 + $0x3a0] sm:$0xff]
        %v3086 = vld [vmem:[#allocation2 + $0x3a8] sm:$0xff]
        %v3087 = vld [vmem:[#allocation2 + $0x3b0] sm:$0xff]
        %v3088 = vld [vmem:[#allocation2 + $0x3b8] sm:$0xff]
        %v3089 = vld [vmem:[#allocation2 + $0x3c0] sm:$0xff]
        %v3090 = vld [vmem:[#allocation2 + $0x3c8] sm:$0xff]
        %v3091 = vld [vmem:[#allocation2 + $0x3d0] sm:$0xff]
        %v3092 = vld [vmem:[#allocation2 + $0x3d8] sm:$0xff]
        %v3093 = vld [vmem:[#allocation2 + $0x3e0] sm:$0xff]
        %v3094 = vld [vmem:[#allocation2 + $0x3e8] sm:$0xff]
        %v3095 = vld [vmem:[#allocation2 + $0x3f0] sm:$0xff]
        %v3096 = vld [vmem:[#allocation2 + $0x3f8] sm:$0xff]
        %v3097 = vld [vmem:[#allocation2 + $0x400] sm:$0xff]
        %v3098 = vld [vmem:[#allocation2 + $0x408] sm:$0xff]
        %v3099 = vld [vmem:[#allocation2 + $0x410] sm:$0xff]
        %v3100 = vld [vmem:[#allocation2 + $0x418] sm:$0xff]
        %v3101 = vld [vmem:[#allocation2 + $0x420] sm:$0xff]
        %v3102 = vld [vmem:[#allocation2 + $0x428] sm:$0xff]
        %v3103 = vld [vmem:[#allocation2 + $0x430] sm:$0xff]
        %v3104 = vld [vmem:[#allocation2 + $0x438] sm:$0xff]
        %v3105 = vld [vmem:[#allocation2 + $0x440] sm:$0xff]
        %v3106 = vld [vmem:[#allocation2 + $0x448] sm:$0xff]
        %v3107 = vld [vmem:[#allocation2 + $0x450] sm:$0xff]
        %v3108 = vld [vmem:[#allocation2 + $0x458] sm:$0xff]
        %v3109 = vmax.f32 %v3053, %v3081
        %v3110 = vmax.f32 %v3054, %v3082
        %v3111 = vmax.f32 %v3055, %v3083
        %v3112 = vmax.f32 %v3056, %v3084
        %v3113 = vmax.f32 %v3057, %v3085
        %v3114 = vmax.f32 %v3058, %v3086
        %v3115 = vmax.f32 %v3059, %v3087
        %v3116 = vmax.f32 %v3060, %v3088
        %v3117 = vmax.f32 %v3061, %v3089
        %v3118 = vmax.f32 %v3062, %v3090
        %v3119 = vmax.f32 %v3063, %v3091
        %v3120 = vmax.f32 %v3064, %v3092
        %v3121 = vmax.f32 %v3065, %v3093
        %v3122 = vmax.f32 %v3066, %v3094
        %v3123 = vmax.f32 %v3067, %v3095
        %v3124 = vmax.f32 %v3068, %v3096
        %v3125 = vmax.f32 %v3069, %v3097
        %v3126 = vmax.f32 %v3070, %v3098
        %v3127 = vmax.f32 %v3071, %v3099
        %v3128 = vmax.f32 %v3072, %v3100
        %v3129 = vmax.f32 %v3073, %v3101
        %v3130 = vmax.f32 %v3074, %v3102
        %v3131 = vmax.f32 %v3075, %v3103
        %v3132 = vmax.f32 %v3076, %v3104
        %v3133 = vmax.f32 %v3077, %v3105
        %v3134 = vmax.f32 %v3078, %v3106
        %v3135 = vmax.f32 %v3079, %v3107
        %v3136 = vmax.f32 %v3080, %v3108
        %v3137 = vld [vmem:[#allocation2 + $0x540] sm:$0xff]
        %v3138 = vld [vmem:[#allocation2 + $0x548] sm:$0xff]
        %v3139 = vld [vmem:[#allocation2 + $0x550] sm:$0xff]
        %v3140 = vld [vmem:[#allocation2 + $0x558] sm:$0xff]
        %v3141 = vld [vmem:[#allocation2 + $0x560] sm:$0xff]
        %v3142 = vld [vmem:[#allocation2 + $0x568] sm:$0xff]
        %v3143 = vld [vmem:[#allocation2 + $0x570] sm:$0xff]
        %v3144 = vld [vmem:[#allocation2 + $0x578] sm:$0xff]
        %v3145 = vld [vmem:[#allocation2 + $0x580] sm:$0xff]
        %v3146 = vld [vmem:[#allocation2 + $0x588] sm:$0xff]
        %v3147 = vld [vmem:[#allocation2 + $0x590] sm:$0xff]
        %v3148 = vld [vmem:[#allocation2 + $0x598] sm:$0xff]
        %v3149 = vld [vmem:[#allocation2 + $0x5a0] sm:$0xff]
        %v3150 = vld [vmem:[#allocation2 + $0x5a8] sm:$0xff]
        %v3151 = vld [vmem:[#allocation2 + $0x5b0] sm:$0xff]
        %v3152 = vld [vmem:[#allocation2 + $0x5b8] sm:$0xff]
        %v3153 = vld [vmem:[#allocation2 + $0x5c0] sm:$0xff]
        %v3154 = vld [vmem:[#allocation2 + $0x5c8] sm:$0xff]
        %v3155 = vld [vmem:[#allocation2 + $0x5d0] sm:$0xff]
        %v3156 = vld [vmem:[#allocation2 + $0x5d8] sm:$0xff]
        %v3157 = vld [vmem:[#allocation2 + $0x5e0] sm:$0xff]
        %v3158 = vld [vmem:[#allocation2 + $0x5e8] sm:$0xff]
        %v3159 = vld [vmem:[#allocation2 + $0x5f0] sm:$0xff]
        %v3160 = vld [vmem:[#allocation2 + $0x5f8] sm:$0xff]
        %v3161 = vld [vmem:[#allocation2 + $0x600] sm:$0xff]
        %v3162 = vld [vmem:[#allocation2 + $0x608] sm:$0xff]
        %v3163 = vld [vmem:[#allocation2 + $0x610] sm:$0xff]
        %v3164 = vld [vmem:[#allocation2 + $0x618] sm:$0xff]
        %v3165 = vmax.f32 %v3109, %v3137
        %v3166 = vmax.f32 %v3110, %v3138
        %v3167 = vmax.f32 %v3111, %v3139
        %v3168 = vmax.f32 %v3112, %v3140
        %v3169 = vmax.f32 %v3113, %v3141
        %v3170 = vmax.f32 %v3114, %v3142
        %v3171 = vmax.f32 %v3115, %v3143
        %v3172 = vmax.f32 %v3116, %v3144
        %v3173 = vmax.f32 %v3117, %v3145
        %v3174 = vmax.f32 %v3118, %v3146
        %v3175 = vmax.f32 %v3119, %v3147
        %v3176 = vmax.f32 %v3120, %v3148
        %v3177 = vmax.f32 %v3121, %v3149
        %v3178 = vmax.f32 %v3122, %v3150
        %v3179 = vmax.f32 %v3123, %v3151
        %v3180 = vmax.f32 %v3124, %v3152
        %v3181 = vmax.f32 %v3125, %v3153
        %v3182 = vmax.f32 %v3126, %v3154
        %v3183 = vmax.f32 %v3127, %v3155
        %v3184 = vmax.f32 %v3128, %v3156
        %v3185 = vmax.f32 %v3129, %v3157
        %v3186 = vmax.f32 %v3130, %v3158
        %v3187 = vmax.f32 %v3131, %v3159
        %v3188 = vmax.f32 %v3132, %v3160
        %v3189 = vmax.f32 %v3133, %v3161
        %v3190 = vmax.f32 %v3134, %v3162
        %v3191 = vmax.f32 %v3135, %v3163
        %v3192 = vmax.f32 %v3136, %v3164
        %v3193 = vlaneseq
        %v3194 = vshrl.u32 %v3193, 7
        %v3195 = vsub.s32 0, %v3194
        %v3196 = vrot.slane %v277, %v3195
        %v3197 = vadd.f32 %v3165, %v3196
        %v3198 = vadd.f32 %v3166, %v3196
        %v3199 = vadd.f32 %v3167, %v3196
        %v3200 = vadd.f32 %v3168, %v3196
        %v3201 = vadd.f32 %v3169, %v3196
        %v3202 = vadd.f32 %v3170, %v3196
        %v3203 = vadd.f32 %v3171, %v3196
        %v3204 = vadd.f32 %v3172, %v3196
        %v3205 = vadd.f32 %v3173, %v3196
        %v3206 = vadd.f32 %v3174, %v3196
        %v3207 = vadd.f32 %v3175, %v3196
        %v3208 = vadd.f32 %v3176, %v3196
        %v3209 = vadd.f32 %v3177, %v3196
        %v3210 = vadd.f32 %v3178, %v3196
        %v3211 = vadd.f32 %v3179, %v3196
        %v3212 = vadd.f32 %v3180, %v3196
        %v3213 = vadd.f32 %v3181, %v3196
        %v3214 = vadd.f32 %v3182, %v3196
        %v3215 = vadd.f32 %v3183, %v3196
        %v3216 = vadd.f32 %v3184, %v3196
        %v3217 = vadd.f32 %v3185, %v3196
        %v3218 = vadd.f32 %v3186, %v3196
        %v3219 = vadd.f32 %v3187, %v3196
        %v3220 = vadd.f32 %v3188, %v3196
        %v3221 = vadd.f32 %v3189, %v3196
        %v3222 = vadd.f32 %v3190, %v3196
        %v3223 = vadd.f32 %v3191, %v3196
        %v3224 = vadd.f32 %v3192, %v3196
        %vm3225 = vcmp.gt.f32.partialorder %v279, 0.5
        %v3226 = vmax.f32 %v3197, 0.0
        %v3227 = vmax.f32 %v3198, 0.0
        %v3228 = vmax.f32 %v3199, 0.0
        %v3229 = vmax.f32 %v3200, 0.0
        %v3230 = vmax.f32 %v3201, 0.0
        %v3231 = vmax.f32 %v3202, 0.0
        %v3232 = vmax.f32 %v3203, 0.0
        %v3233 = vmax.f32 %v3204, 0.0
        %v3234 = vmax.f32 %v3205, 0.0
        %v3235 = vmax.f32 %v3206, 0.0
        %v3236 = vmax.f32 %v3207, 0.0
        %v3237 = vmax.f32 %v3208, 0.0
        %v3238 = vmax.f32 %v3209, 0.0
        %v3239 = vmax.f32 %v3210, 0.0
        %v3240 = vmax.f32 %v3211, 0.0
        %v3241 = vmax.f32 %v3212, 0.0
        %v3242 = vmax.f32 %v3213, 0.0
        %v3243 = vmax.f32 %v3214, 0.0
        %v3244 = vmax.f32 %v3215, 0.0
        %v3245 = vmax.f32 %v3216, 0.0
        %v3246 = vmax.f32 %v3217, 0.0
        %v3247 = vmax.f32 %v3218, 0.0
        %v3248 = vmax.f32 %v3219, 0.0
        %v3249 = vmax.f32 %v3220, 0.0
        %v3250 = vmax.f32 %v3221, 0.0
        %v3251 = vmax.f32 %v3222, 0.0
        %v3252 = vmax.f32 %v3223, 0.0
        %v3253 = vmax.f32 %v3224, 0.0
        %v3254 = vmin.f32 %v3197, 0.0
        %v3255 = vmin.f32 %v3198, 0.0
        %v3256 = vmin.f32 %v3199, 0.0
        %v3257 = vmin.f32 %v3200, 0.0
        %v3258 = vmin.f32 %v3201, 0.0
        %v3259 = vmin.f32 %v3202, 0.0
        %v3260 = vmin.f32 %v3203, 0.0
        %v3261 = vmin.f32 %v3204, 0.0
        %v3262 = vmin.f32 %v3205, 0.0
        %v3263 = vmin.f32 %v3206, 0.0
        %v3264 = vmin.f32 %v3207, 0.0
        %v3265 = vmin.f32 %v3208, 0.0
        %v3266 = vmin.f32 %v3209, 0.0
        %v3267 = vmin.f32 %v3210, 0.0
        %v3268 = vmin.f32 %v3211, 0.0
        %v3269 = vmin.f32 %v3212, 0.0
        %v3270 = vmin.f32 %v3213, 0.0
        %v3271 = vmin.f32 %v3214, 0.0
        %v3272 = vmin.f32 %v3215, 0.0
        %v3273 = vmin.f32 %v3216, 0.0
        %v3274 = vmin.f32 %v3217, 0.0
        %v3275 = vmin.f32 %v3218, 0.0
        %v3276 = vmin.f32 %v3219, 0.0
        %v3277 = vmin.f32 %v3220, 0.0
        %v3278 = vmin.f32 %v3221, 0.0
        %v3279 = vmin.f32 %v3222, 0.0
        %v3280 = vmin.f32 %v3223, 0.0
        %v3281 = vmin.f32 %v3224, 0.0
        %v3282 = vsel %vm3225, 1, 0
        %v3283 = vlaneseq
        %v3284 = vshrl.u32 %v3283, 7
        %v3285 = vsub.s32 0, %v3284
        %v3286 = vrot.slane %v3282, %v3285
        %vm3287 = vcmp.eq.s32.totalorder %v3286, 1
        %v3288 = vsel %vm3287, %v3226, %v3254
        %v3289 = vsel %vm3287, %v3227, %v3255
        %v3290 = vsel %vm3287, %v3228, %v3256
        %v3291 = vsel %vm3287, %v3229, %v3257
        %v3292 = vsel %vm3287, %v3230, %v3258
        %v3293 = vsel %vm3287, %v3231, %v3259
        %v3294 = vsel %vm3287, %v3232, %v3260
        %v3295 = vsel %vm3287, %v3233, %v3261
        %v3296 = vsel %vm3287, %v3234, %v3262
        %v3297 = vsel %vm3287, %v3235, %v3263
        %v3298 = vsel %vm3287, %v3236, %v3264
        %v3299 = vsel %vm3287, %v3237, %v3265
        %v3300 = vsel %vm3287, %v3238, %v3266
        %v3301 = vsel %vm3287, %v3239, %v3267
        %v3302 = vsel %vm3287, %v3240, %v3268
        %v3303 = vsel %vm3287, %v3241, %v3269
        %v3304 = vsel %vm3287, %v3242, %v3270
        %v3305 = vsel %vm3287, %v3243, %v3271
        %v3306 = vsel %vm3287, %v3244, %v3272
        %v3307 = vsel %vm3287, %v3245, %v3273
        %v3308 = vsel %vm3287, %v3246, %v3274
        %v3309 = vsel %vm3287, %v3247, %v3275
        %v3310 = vsel %vm3287, %v3248, %v3276
        %v3311 = vsel %vm3287, %v3249, %v3277
        %v3312 = vsel %vm3287, %v3250, %v3278
        %v3313 = vsel %vm3287, %v3251, %v3279
        %v3314 = vsel %vm3287, %v3252, %v3280
        %v3315 = vsel %vm3287, %v3253, %v3281
        %v3316 = vlaneseq
        %v3317 = vshrl.u32 %v3316, 7
        %v3318 = vsub.s32 0, %v3317
        %v3319 = vrot.slane %v278, %v3318
        %v3320 = vadd.f32 %v3288, %v3319
        %v3321 = vadd.f32 %v3289, %v3319
        %v3322 = vadd.f32 %v3290, %v3319
        %v3323 = vadd.f32 %v3291, %v3319
        %v3324 = vadd.f32 %v3292, %v3319
        %v3325 = vadd.f32 %v3293, %v3319
        %v3326 = vadd.f32 %v3294, %v3319
        %v3327 = vadd.f32 %v3295, %v3319
        %v3328 = vadd.f32 %v3296, %v3319
        %v3329 = vadd.f32 %v3297, %v3319
        %v3330 = vadd.f32 %v3298, %v3319
        %v3331 = vadd.f32 %v3299, %v3319
        %v3332 = vadd.f32 %v3300, %v3319
        %v3333 = vadd.f32 %v3301, %v3319
        %v3334 = vadd.f32 %v3302, %v3319
        %v3335 = vadd.f32 %v3303, %v3319
        %v3336 = vadd.f32 %v3304, %v3319
        %v3337 = vadd.f32 %v3305, %v3319
        %v3338 = vadd.f32 %v3306, %v3319
        %v3339 = vadd.f32 %v3307, %v3319
        %v3340 = vadd.f32 %v3308, %v3319
        %v3341 = vadd.f32 %v3309, %v3319
        %v3342 = vadd.f32 %v3310, %v3319
        %v3343 = vadd.f32 %v3311, %v3319
        %v3344 = vadd.f32 %v3312, %v3319
        %v3345 = vadd.f32 %v3313, %v3319
        %v3346 = vadd.f32 %v3314, %v3319
        %v3347 = vadd.f32 %v3315, %v3319
        %v3348 = vsel %vm2969, 1, 0
        %v3349 = vsel %vm2970, 1, 0
        %v3350 = vsel %vm2971, 1, 0
        %v3351 = vsel %vm2972, 1, 0
        %v3352 = vsel %vm2973, 1, 0
        %v3353 = vsel %vm2974, 1, 0
        %v3354 = vsel %vm2975, 1, 0
        %v3355 = vsel %vm2976, 1, 0
        %v3356 = vsel %vm2977, 1, 0
        %v3357 = vsel %vm2978, 1, 0
        %v3358 = vsel %vm2979, 1, 0
        %v3359 = vsel %vm2980, 1, 0
        %v3360 = vsel %vm2981, 1, 0
        %v3361 = vsel %vm2982, 1, 0
        %v3362 = vsel %vm2983, 1, 0
        %v3363 = vsel %vm2984, 1, 0
        %v3364 = vsel %vm2985, 1, 0
        %v3365 = vsel %vm2986, 1, 0
        %v3366 = vsel %vm2987, 1, 0
        %v3367 = vsel %vm2988, 1, 0
        %v3368 = vsel %vm2989, 1, 0
        %v3369 = vsel %vm2990, 1, 0
        %v3370 = vsel %vm2991, 1, 0
        %v3371 = vsel %vm2992, 1, 0
        %v3372 = vsel %vm2993, 1, 0
        %v3373 = vsel %vm2994, 1, 0
        %v3374 = vsel %vm2995, 1, 0
        %v3375 = vsel %vm2996, 1, 0
        %vm3376 = vcmp.eq.s32.totalorder %v3348, 1
        %vm3377 = vcmp.eq.s32.totalorder %v3349, 1
        %vm3378 = vcmp.eq.s32.totalorder %v3350, 1
        %vm3379 = vcmp.eq.s32.totalorder %v3351, 1
        %vm3380 = vcmp.eq.s32.totalorder %v3352, 1
        %vm3381 = vcmp.eq.s32.totalorder %v3353, 1
        %vm3382 = vcmp.eq.s32.totalorder %v3354, 1
        %vm3383 = vcmp.eq.s32.totalorder %v3355, 1
        %vm3384 = vcmp.eq.s32.totalorder %v3356, 1
        %vm3385 = vcmp.eq.s32.totalorder %v3357, 1
        %vm3386 = vcmp.eq.s32.totalorder %v3358, 1
        %vm3387 = vcmp.eq.s32.totalorder %v3359, 1
        %vm3388 = vcmp.eq.s32.totalorder %v3360, 1
        %vm3389 = vcmp.eq.s32.totalorder %v3361, 1
        %vm3390 = vcmp.eq.s32.totalorder %v3362, 1
        %vm3391 = vcmp.eq.s32.totalorder %v3363, 1
        %vm3392 = vcmp.eq.s32.totalorder %v3364, 1
        %vm3393 = vcmp.eq.s32.totalorder %v3365, 1
        %vm3394 = vcmp.eq.s32.totalorder %v3366, 1
        %vm3395 = vcmp.eq.s32.totalorder %v3367, 1
        %vm3396 = vcmp.eq.s32.totalorder %v3368, 1
        %vm3397 = vcmp.eq.s32.totalorder %v3369, 1
        %vm3398 = vcmp.eq.s32.totalorder %v3370, 1
        %vm3399 = vcmp.eq.s32.totalorder %v3371, 1
        %vm3400 = vcmp.eq.s32.totalorder %v3372, 1
        %vm3401 = vcmp.eq.s32.totalorder %v3373, 1
        %vm3402 = vcmp.eq.s32.totalorder %v3374, 1
        %vm3403 = vcmp.eq.s32.totalorder %v3375, 1
        %v3404 = vsel %vm3376, %v3320, 0.0
        %v3405 = vsel %vm3377, %v3321, 0.0
        %v3406 = vsel %vm3378, %v3322, 0.0
        %v3407 = vsel %vm3379, %v3323, 0.0
        %v3408 = vsel %vm3380, %v3324, 0.0
        %v3409 = vsel %vm3381, %v3325, 0.0
        %v3410 = vsel %vm3382, %v3326, 0.0
        %v3411 = vsel %vm3383, %v3327, 0.0
        %v3412 = vsel %vm3384, %v3328, 0.0
        %v3413 = vsel %vm3385, %v3329, 0.0
        %v3414 = vsel %vm3386, %v3330, 0.0
        %v3415 = vsel %vm3387, %v3331, 0.0
        %v3416 = vsel %vm3388, %v3332, 0.0
        %v3417 = vsel %vm3389, %v3333, 0.0
        %v3418 = vsel %vm3390, %v3334, 0.0
        %v3419 = vsel %vm3391, %v3335, 0.0
        %v3420 = vsel %vm3392, %v3336, 0.0
        %v3421 = vsel %vm3393, %v3337, 0.0
        %v3422 = vsel %vm3394, %v3338, 0.0
        %v3423 = vsel %vm3395, %v3339, 0.0
        %v3424 = vsel %vm3396, %v3340, 0.0
        %v3425 = vsel %vm3397, %v3341, 0.0
        %v3426 = vsel %vm3398, %v3342, 0.0
        %v3427 = vsel %vm3399, %v3343, 0.0
        %v3428 = vsel %vm3400, %v3344, 0.0
        %v3429 = vsel %vm3401, %v3345, 0.0
        %v3430 = vsel %vm3402, %v3346, 0.0
        %v3431 = vsel %vm3403, %v3347, 0.0
        %3432 = vst.msk [vmem:[#allocation3 + $0x11] sm:$0xff] %vm2367, %v3404
        %3433 = vst.msk [vmem:[#allocation3 + $0x19] sm:$0xff] %vm2367, %v3405
        %3434 = vst.msk [vmem:[#allocation3 + $0x21] sm:$0xff] %vm2367, %v3406
        %3435 = vst.msk [vmem:[#allocation3 + $0x29] sm:$0xff] %vm2367, %v3407
        %3436 = vst.msk [vmem:[#allocation3 + $0x31] sm:$0xff] %vm2367, %v3408
        %3437 = vst.msk [vmem:[#allocation3 + $0x39] sm:$0xff] %vm2367, %v3409
        %3438 = vst.msk [vmem:[#allocation3 + $0x41] sm:$0xff] %vm2367, %v3410
        %3439 = vst.msk [vmem:[#allocation3 + $0x49] sm:$0xff] %vm2367, %v3411
        %3440 = vst.msk [vmem:[#allocation3 + $0x51] sm:$0xff] %vm2367, %v3412
        %3441 = vst.msk [vmem:[#allocation3 + $0x59] sm:$0xff] %vm2367, %v3413
        %3442 = vst.msk [vmem:[#allocation3 + $0x61] sm:$0xff] %vm2367, %v3414
        %3443 = vst.msk [vmem:[#allocation3 + $0x69] sm:$0xff] %vm2367, %v3415
        %3444 = vst.msk [vmem:[#allocation3 + $0x71] sm:$0xff] %vm2367, %v3416
        %3445 = vst.msk [vmem:[#allocation3 + $0x79] sm:$0xff] %vm2367, %v3417
        %3446 = vst.msk [vmem:[#allocation3 + $0x81] sm:$0xff] %vm2367, %v3418
        %3447 = vst.msk [vmem:[#allocation3 + $0x89] sm:$0xff] %vm2367, %v3419
        %3448 = vst.msk [vmem:[#allocation3 + $0x91] sm:$0xff] %vm2367, %v3420
        %3449 = vst.msk [vmem:[#allocation3 + $0x99] sm:$0xff] %vm2367, %v3421
        %3450 = vst.msk [vmem:[#allocation3 + $0xa1] sm:$0xff] %vm2367, %v3422
        %3451 = vst.msk [vmem:[#allocation3 + $0xa9] sm:$0xff] %vm2367, %v3423
        %3452 = vst.msk [vmem:[#allocation3 + $0xb1] sm:$0xff] %vm2367, %v3424
        %3453 = vst.msk [vmem:[#allocation3 + $0xb9] sm:$0xff] %vm2367, %v3425
        %3454 = vst.msk [vmem:[#allocation3 + $0xc1] sm:$0xff] %vm2367, %v3426
        %3455 = vst.msk [vmem:[#allocation3 + $0xc9] sm:$0xff] %vm2367, %v3427
        %3456 = vst.msk [vmem:[#allocation3 + $0xd1] sm:$0xff] %vm2367, %v3428
        %3457 = vst.msk [vmem:[#allocation3 + $0xd9] sm:$0xff] %vm2367, %v3429
        %3458 = vst.msk [vmem:[#allocation3 + $0xe1] sm:$0xff] %vm2367, %v3430
        %3459 = vst.msk [vmem:[#allocation3 + $0xe9] sm:$0xff] %vm2367, %v3431
        %v3460 = vld [vmem:[#allocation2 + $0xe0] sm:$0xff]
        %v3461 = vld [vmem:[#allocation2 + $0xe8] sm:$0xff]
        %v3462 = vld [vmem:[#allocation2 + $0xf0] sm:$0xff]
        %v3463 = vld [vmem:[#allocation2 + $0xf8] sm:$0xff]
        %v3464 = vld [vmem:[#allocation2 + $0x100] sm:$0xff]
        %v3465 = vld [vmem:[#allocation2 + $0x108] sm:$0xff]
        %v3466 = vld [vmem:[#allocation2 + $0x110] sm:$0xff]
        %v3467 = vld [vmem:[#allocation2 + $0x118] sm:$0xff]
        %v3468 = vld [vmem:[#allocation2 + $0x120] sm:$0xff]
        %v3469 = vld [vmem:[#allocation2 + $0x128] sm:$0xff]
        %v3470 = vld [vmem:[#allocation2 + $0x130] sm:$0xff]
        %v3471 = vld [vmem:[#allocation2 + $0x138] sm:$0xff]
        %v3472 = vld [vmem:[#allocation2 + $0x140] sm:$0xff]
        %v3473 = vld [vmem:[#allocation2 + $0x148] sm:$0xff]
        %v3474 = vld [vmem:[#allocation2 + $0x150] sm:$0xff]
        %v3475 = vld [vmem:[#allocation2 + $0x158] sm:$0xff]
        %v3476 = vld [vmem:[#allocation2 + $0x160] sm:$0xff]
        %v3477 = vld [vmem:[#allocation2 + $0x168] sm:$0xff]
        %v3478 = vld [vmem:[#allocation2 + $0x170] sm:$0xff]
        %v3479 = vld [vmem:[#allocation2 + $0x178] sm:$0xff]
        %v3480 = vld [vmem:[#allocation2 + $0x180] sm:$0xff]
        %v3481 = vld [vmem:[#allocation2 + $0x188] sm:$0xff]
        %v3482 = vld [vmem:[#allocation2 + $0x190] sm:$0xff]
        %v3483 = vld [vmem:[#allocation2 + $0x198] sm:$0xff]
        %v3484 = vld [vmem:[#allocation2 + $0x1a0] sm:$0xff]
        %v3485 = vld [vmem:[#allocation2 + $0x1a8] sm:$0xff]
        %v3486 = vld [vmem:[#allocation2 + $0x1b0] sm:$0xff]
        %v3487 = vld [vmem:[#allocation2 + $0x1b8] sm:$0xff]
        %v3488 = vld [vmem:[#allocation2 + $0x2a0] sm:$0xff]
        %v3489 = vld [vmem:[#allocation2 + $0x2a8] sm:$0xff]
        %v3490 = vld [vmem:[#allocation2 + $0x2b0] sm:$0xff]
        %v3491 = vld [vmem:[#allocation2 + $0x2b8] sm:$0xff]
        %v3492 = vld [vmem:[#allocation2 + $0x2c0] sm:$0xff]
        %v3493 = vld [vmem:[#allocation2 + $0x2c8] sm:$0xff]
        %v3494 = vld [vmem:[#allocation2 + $0x2d0] sm:$0xff]
        %v3495 = vld [vmem:[#allocation2 + $0x2d8] sm:$0xff]
        %v3496 = vld [vmem:[#allocation2 + $0x2e0] sm:$0xff]
        %v3497 = vld [vmem:[#allocation2 + $0x2e8] sm:$0xff]
        %v3498 = vld [vmem:[#allocation2 + $0x2f0] sm:$0xff]
        %v3499 = vld [vmem:[#allocation2 + $0x2f8] sm:$0xff]
        %v3500 = vld [vmem:[#allocation2 + $0x300] sm:$0xff]
        %v3501 = vld [vmem:[#allocation2 + $0x308] sm:$0xff]
        %v3502 = vld [vmem:[#allocation2 + $0x310] sm:$0xff]
        %v3503 = vld [vmem:[#allocation2 + $0x318] sm:$0xff]
        %v3504 = vld [vmem:[#allocation2 + $0x320] sm:$0xff]
        %v3505 = vld [vmem:[#allocation2 + $0x328] sm:$0xff]
        %v3506 = vld [vmem:[#allocation2 + $0x330] sm:$0xff]
        %v3507 = vld [vmem:[#allocation2 + $0x338] sm:$0xff]
        %v3508 = vld [vmem:[#allocation2 + $0x340] sm:$0xff]
        %v3509 = vld [vmem:[#allocation2 + $0x348] sm:$0xff]
        %v3510 = vld [vmem:[#allocation2 + $0x350] sm:$0xff]
        %v3511 = vld [vmem:[#allocation2 + $0x358] sm:$0xff]
        %v3512 = vld [vmem:[#allocation2 + $0x360] sm:$0xff]
        %v3513 = vld [vmem:[#allocation2 + $0x368] sm:$0xff]
        %v3514 = vld [vmem:[#allocation2 + $0x370] sm:$0xff]
        %v3515 = vld [vmem:[#allocation2 + $0x378] sm:$0xff]
        %v3516 = vmax.f32 %v3460, %v3488
        %v3517 = vmax.f32 %v3461, %v3489
        %v3518 = vmax.f32 %v3462, %v3490
        %v3519 = vmax.f32 %v3463, %v3491
        %v3520 = vmax.f32 %v3464, %v3492
        %v3521 = vmax.f32 %v3465, %v3493
        %v3522 = vmax.f32 %v3466, %v3494
        %v3523 = vmax.f32 %v3467, %v3495
        %v3524 = vmax.f32 %v3468, %v3496
        %v3525 = vmax.f32 %v3469, %v3497
        %v3526 = vmax.f32 %v3470, %v3498
        %v3527 = vmax.f32 %v3471, %v3499
        %v3528 = vmax.f32 %v3472, %v3500
        %v3529 = vmax.f32 %v3473, %v3501
        %v3530 = vmax.f32 %v3474, %v3502
        %v3531 = vmax.f32 %v3475, %v3503
        %v3532 = vmax.f32 %v3476, %v3504
        %v3533 = vmax.f32 %v3477, %v3505
        %v3534 = vmax.f32 %v3478, %v3506
        %v3535 = vmax.f32 %v3479, %v3507
        %v3536 = vmax.f32 %v3480, %v3508
        %v3537 = vmax.f32 %v3481, %v3509
        %v3538 = vmax.f32 %v3482, %v3510
        %v3539 = vmax.f32 %v3483, %v3511
        %v3540 = vmax.f32 %v3484, %v3512
        %v3541 = vmax.f32 %v3485, %v3513
        %v3542 = vmax.f32 %v3486, %v3514
        %v3543 = vmax.f32 %v3487, %v3515
        %v3544 = vld [vmem:[#allocation2 + $0x460] sm:$0xff]
        %v3545 = vld [vmem:[#allocation2 + $0x468] sm:$0xff]
        %v3546 = vld [vmem:[#allocation2 + $0x470] sm:$0xff]
        %v3547 = vld [vmem:[#allocation2 + $0x478] sm:$0xff]
        %v3548 = vld [vmem:[#allocation2 + $0x480] sm:$0xff]
        %v3549 = vld [vmem:[#allocation2 + $0x488] sm:$0xff]
        %v3550 = vld [vmem:[#allocation2 + $0x490] sm:$0xff]
        %v3551 = vld [vmem:[#allocation2 + $0x498] sm:$0xff]
        %v3552 = vld [vmem:[#allocation2 + $0x4a0] sm:$0xff]
        %v3553 = vld [vmem:[#allocation2 + $0x4a8] sm:$0xff]
        %v3554 = vld [vmem:[#allocation2 + $0x4b0] sm:$0xff]
        %v3555 = vld [vmem:[#allocation2 + $0x4b8] sm:$0xff]
        %v3556 = vld [vmem:[#allocation2 + $0x4c0] sm:$0xff]
        %v3557 = vld [vmem:[#allocation2 + $0x4c8] sm:$0xff]
        %v3558 = vld [vmem:[#allocation2 + $0x4d0] sm:$0xff]
        %v3559 = vld [vmem:[#allocation2 + $0x4d8] sm:$0xff]
        %v3560 = vld [vmem:[#allocation2 + $0x4e0] sm:$0xff]
        %v3561 = vld [vmem:[#allocation2 + $0x4e8] sm:$0xff]
        %v3562 = vld [vmem:[#allocation2 + $0x4f0] sm:$0xff]
        %v3563 = vld [vmem:[#allocation2 + $0x4f8] sm:$0xff]
        %v3564 = vld [vmem:[#allocation2 + $0x500] sm:$0xff]
        %v3565 = vld [vmem:[#allocation2 + $0x508] sm:$0xff]
        %v3566 = vld [vmem:[#allocation2 + $0x510] sm:$0xff]
        %v3567 = vld [vmem:[#allocation2 + $0x518] sm:$0xff]
        %v3568 = vld [vmem:[#allocation2 + $0x520] sm:$0xff]
        %v3569 = vld [vmem:[#allocation2 + $0x528] sm:$0xff]
        %v3570 = vld [vmem:[#allocation2 + $0x530] sm:$0xff]
        %v3571 = vld [vmem:[#allocation2 + $0x538] sm:$0xff]
        %v3572 = vmax.f32 %v3516, %v3544
        %v3573 = vmax.f32 %v3517, %v3545
        %v3574 = vmax.f32 %v3518, %v3546
        %v3575 = vmax.f32 %v3519, %v3547
        %v3576 = vmax.f32 %v3520, %v3548
        %v3577 = vmax.f32 %v3521, %v3549
        %v3578 = vmax.f32 %v3522, %v3550
        %v3579 = vmax.f32 %v3523, %v3551
        %v3580 = vmax.f32 %v3524, %v3552
        %v3581 = vmax.f32 %v3525, %v3553
        %v3582 = vmax.f32 %v3526, %v3554
        %v3583 = vmax.f32 %v3527, %v3555
        %v3584 = vmax.f32 %v3528, %v3556
        %v3585 = vmax.f32 %v3529, %v3557
        %v3586 = vmax.f32 %v3530, %v3558
        %v3587 = vmax.f32 %v3531, %v3559
        %v3588 = vmax.f32 %v3532, %v3560
        %v3589 = vmax.f32 %v3533, %v3561
        %v3590 = vmax.f32 %v3534, %v3562
        %v3591 = vmax.f32 %v3535, %v3563
        %v3592 = vmax.f32 %v3536, %v3564
        %v3593 = vmax.f32 %v3537, %v3565
        %v3594 = vmax.f32 %v3538, %v3566
        %v3595 = vmax.f32 %v3539, %v3567
        %v3596 = vmax.f32 %v3540, %v3568
        %v3597 = vmax.f32 %v3541, %v3569
        %v3598 = vmax.f32 %v3542, %v3570
        %v3599 = vmax.f32 %v3543, %v3571
        %v3600 = vld [vmem:[#allocation2 + $0x620] sm:$0xff]
        %v3601 = vld [vmem:[#allocation2 + $0x628] sm:$0xff]
        %v3602 = vld [vmem:[#allocation2 + $0x630] sm:$0xff]
        %v3603 = vld [vmem:[#allocation2 + $0x638] sm:$0xff]
        %v3604 = vld [vmem:[#allocation2 + $0x640] sm:$0xff]
        %v3605 = vld [vmem:[#allocation2 + $0x648] sm:$0xff]
        %v3606 = vld [vmem:[#allocation2 + $0x650] sm:$0xff]
        %v3607 = vld [vmem:[#allocation2 + $0x658] sm:$0xff]
        %v3608 = vld [vmem:[#allocation2 + $0x660] sm:$0xff]
        %v3609 = vld [vmem:[#allocation2 + $0x668] sm:$0xff]
        %v3610 = vld [vmem:[#allocation2 + $0x670] sm:$0xff]
        %v3611 = vld [vmem:[#allocation2 + $0x678] sm:$0xff]
        %v3612 = vld [vmem:[#allocation2 + $0x680] sm:$0xff]
        %v3613 = vld [vmem:[#allocation2 + $0x688] sm:$0xff]
        %v3614 = vld [vmem:[#allocation2 + $0x690] sm:$0xff]
        %v3615 = vld [vmem:[#allocation2 + $0x698] sm:$0xff]
        %v3616 = vld [vmem:[#allocation2 + $0x6a0] sm:$0xff]
        %v3617 = vld [vmem:[#allocation2 + $0x6a8] sm:$0xff]
        %v3618 = vld [vmem:[#allocation2 + $0x6b0] sm:$0xff]
        %v3619 = vld [vmem:[#allocation2 + $0x6b8] sm:$0xff]
        %v3620 = vld [vmem:[#allocation2 + $0x6c0] sm:$0xff]
        %v3621 = vld [vmem:[#allocation2 + $0x6c8] sm:$0xff]
        %v3622 = vld [vmem:[#allocation2 + $0x6d0] sm:$0xff]
        %v3623 = vld [vmem:[#allocation2 + $0x6d8] sm:$0xff]
        %v3624 = vld [vmem:[#allocation2 + $0x6e0] sm:$0xff]
        %v3625 = vld [vmem:[#allocation2 + $0x6e8] sm:$0xff]
        %v3626 = vld [vmem:[#allocation2 + $0x6f0] sm:$0xff]
        %v3627 = vld [vmem:[#allocation2 + $0x6f8] sm:$0xff]
        %v3628 = vmax.f32 %v3572, %v3600
        %v3629 = vmax.f32 %v3573, %v3601
        %v3630 = vmax.f32 %v3574, %v3602
        %v3631 = vmax.f32 %v3575, %v3603
        %v3632 = vmax.f32 %v3576, %v3604
        %v3633 = vmax.f32 %v3577, %v3605
        %v3634 = vmax.f32 %v3578, %v3606
        %v3635 = vmax.f32 %v3579, %v3607
        %v3636 = vmax.f32 %v3580, %v3608
        %v3637 = vmax.f32 %v3581, %v3609
        %v3638 = vmax.f32 %v3582, %v3610
        %v3639 = vmax.f32 %v3583, %v3611
        %v3640 = vmax.f32 %v3584, %v3612
        %v3641 = vmax.f32 %v3585, %v3613
        %v3642 = vmax.f32 %v3586, %v3614
        %v3643 = vmax.f32 %v3587, %v3615
        %v3644 = vmax.f32 %v3588, %v3616
        %v3645 = vmax.f32 %v3589, %v3617
        %v3646 = vmax.f32 %v3590, %v3618
        %v3647 = vmax.f32 %v3591, %v3619
        %v3648 = vmax.f32 %v3592, %v3620
        %v3649 = vmax.f32 %v3593, %v3621
        %v3650 = vmax.f32 %v3594, %v3622
        %v3651 = vmax.f32 %v3595, %v3623
        %v3652 = vmax.f32 %v3596, %v3624
        %v3653 = vmax.f32 %v3597, %v3625
        %v3654 = vmax.f32 %v3598, %v3626
        %v3655 = vmax.f32 %v3599, %v3627
        %v3656 = vadd.f32 %v3628, %v3196
        %v3657 = vadd.f32 %v3629, %v3196
        %v3658 = vadd.f32 %v3630, %v3196
        %v3659 = vadd.f32 %v3631, %v3196
        %v3660 = vadd.f32 %v3632, %v3196
        %v3661 = vadd.f32 %v3633, %v3196
        %v3662 = vadd.f32 %v3634, %v3196
        %v3663 = vadd.f32 %v3635, %v3196
        %v3664 = vadd.f32 %v3636, %v3196
        %v3665 = vadd.f32 %v3637, %v3196
        %v3666 = vadd.f32 %v3638, %v3196
        %v3667 = vadd.f32 %v3639, %v3196
        %v3668 = vadd.f32 %v3640, %v3196
        %v3669 = vadd.f32 %v3641, %v3196
        %v3670 = vadd.f32 %v3642, %v3196
        %v3671 = vadd.f32 %v3643, %v3196
        %v3672 = vadd.f32 %v3644, %v3196
        %v3673 = vadd.f32 %v3645, %v3196
        %v3674 = vadd.f32 %v3646, %v3196
        %v3675 = vadd.f32 %v3647, %v3196
        %v3676 = vadd.f32 %v3648, %v3196
        %v3677 = vadd.f32 %v3649, %v3196
        %v3678 = vadd.f32 %v3650, %v3196
        %v3679 = vadd.f32 %v3651, %v3196
        %v3680 = vadd.f32 %v3652, %v3196
        %v3681 = vadd.f32 %v3653, %v3196
        %v3682 = vadd.f32 %v3654, %v3196
        %v3683 = vadd.f32 %v3655, %v3196
        %v3684 = vmax.f32 %v3656, 0.0
        %v3685 = vmax.f32 %v3657, 0.0
        %v3686 = vmax.f32 %v3658, 0.0
        %v3687 = vmax.f32 %v3659, 0.0
        %v3688 = vmax.f32 %v3660, 0.0
        %v3689 = vmax.f32 %v3661, 0.0
        %v3690 = vmax.f32 %v3662, 0.0
        %v3691 = vmax.f32 %v3663, 0.0
        %v3692 = vmax.f32 %v3664, 0.0
        %v3693 = vmax.f32 %v3665, 0.0
        %v3694 = vmax.f32 %v3666, 0.0
        %v3695 = vmax.f32 %v3667, 0.0
        %v3696 = vmax.f32 %v3668, 0.0
        %v3697 = vmax.f32 %v3669, 0.0
        %v3698 = vmax.f32 %v3670, 0.0
        %v3699 = vmax.f32 %v3671, 0.0
        %v3700 = vmax.f32 %v3672, 0.0
        %v3701 = vmax.f32 %v3673, 0.0
        %v3702 = vmax.f32 %v3674, 0.0
        %v3703 = vmax.f32 %v3675, 0.0
        %v3704 = vmax.f32 %v3676, 0.0
        %v3705 = vmax.f32 %v3677, 0.0
        %v3706 = vmax.f32 %v3678, 0.0
        %v3707 = vmax.f32 %v3679, 0.0
        %v3708 = vmax.f32 %v3680, 0.0
        %v3709 = vmax.f32 %v3681, 0.0
        %v3710 = vmax.f32 %v3682, 0.0
        %v3711 = vmax.f32 %v3683, 0.0
        %v3712 = vmin.f32 %v3656, 0.0
        %v3713 = vmin.f32 %v3657, 0.0
        %v3714 = vmin.f32 %v3658, 0.0
        %v3715 = vmin.f32 %v3659, 0.0
        %v3716 = vmin.f32 %v3660, 0.0
        %v3717 = vmin.f32 %v3661, 0.0
        %v3718 = vmin.f32 %v3662, 0.0
        %v3719 = vmin.f32 %v3663, 0.0
        %v3720 = vmin.f32 %v3664, 0.0
        %v3721 = vmin.f32 %v3665, 0.0
        %v3722 = vmin.f32 %v3666, 0.0
        %v3723 = vmin.f32 %v3667, 0.0
        %v3724 = vmin.f32 %v3668, 0.0
        %v3725 = vmin.f32 %v3669, 0.0
        %v3726 = vmin.f32 %v3670, 0.0
        %v3727 = vmin.f32 %v3671, 0.0
        %v3728 = vmin.f32 %v3672, 0.0
        %v3729 = vmin.f32 %v3673, 0.0
        %v3730 = vmin.f32 %v3674, 0.0
        %v3731 = vmin.f32 %v3675, 0.0
        %v3732 = vmin.f32 %v3676, 0.0
        %v3733 = vmin.f32 %v3677, 0.0
        %v3734 = vmin.f32 %v3678, 0.0
        %v3735 = vmin.f32 %v3679, 0.0
        %v3736 = vmin.f32 %v3680, 0.0
        %v3737 = vmin.f32 %v3681, 0.0
        %v3738 = vmin.f32 %v3682, 0.0
        %v3739 = vmin.f32 %v3683, 0.0
        %v3740 = vsel %vm3287, %v3684, %v3712
        %v3741 = vsel %vm3287, %v3685, %v3713
        %v3742 = vsel %vm3287, %v3686, %v3714
        %v3743 = vsel %vm3287, %v3687, %v3715
        %v3744 = vsel %vm3287, %v3688, %v3716
        %v3745 = vsel %vm3287, %v3689, %v3717
        %v3746 = vsel %vm3287, %v3690, %v3718
        %v3747 = vsel %vm3287, %v3691, %v3719
        %v3748 = vsel %vm3287, %v3692, %v3720
        %v3749 = vsel %vm3287, %v3693, %v3721
        %v3750 = vsel %vm3287, %v3694, %v3722
        %v3751 = vsel %vm3287, %v3695, %v3723
        %v3752 = vsel %vm3287, %v3696, %v3724
        %v3753 = vsel %vm3287, %v3697, %v3725
        %v3754 = vsel %vm3287, %v3698, %v3726
        %v3755 = vsel %vm3287, %v3699, %v3727
        %v3756 = vsel %vm3287, %v3700, %v3728
        %v3757 = vsel %vm3287, %v3701, %v3729
        %v3758 = vsel %vm3287, %v3702, %v3730
        %v3759 = vsel %vm3287, %v3703, %v3731
        %v3760 = vsel %vm3287, %v3704, %v3732
        %v3761 = vsel %vm3287, %v3705, %v3733
        %v3762 = vsel %vm3287, %v3706, %v3734
        %v3763 = vsel %vm3287, %v3707, %v3735
        %v3764 = vsel %vm3287, %v3708, %v3736
        %v3765 = vsel %vm3287, %v3709, %v3737
        %v3766 = vsel %vm3287, %v3710, %v3738
        %v3767 = vsel %vm3287, %v3711, %v3739
        %v3768 = vadd.f32 %v3740, %v3319
        %v3769 = vadd.f32 %v3741, %v3319
        %v3770 = vadd.f32 %v3742, %v3319
        %v3771 = vadd.f32 %v3743, %v3319
        %v3772 = vadd.f32 %v3744, %v3319
        %v3773 = vadd.f32 %v3745, %v3319
        %v3774 = vadd.f32 %v3746, %v3319
        %v3775 = vadd.f32 %v3747, %v3319
        %v3776 = vadd.f32 %v3748, %v3319
        %v3777 = vadd.f32 %v3749, %v3319
        %v3778 = vadd.f32 %v3750, %v3319
        %v3779 = vadd.f32 %v3751, %v3319
        %v3780 = vadd.f32 %v3752, %v3319
        %v3781 = vadd.f32 %v3753, %v3319
        %v3782 = vadd.f32 %v3754, %v3319
        %v3783 = vadd.f32 %v3755, %v3319
        %v3784 = vadd.f32 %v3756, %v3319
        %v3785 = vadd.f32 %v3757, %v3319
        %v3786 = vadd.f32 %v3758, %v3319
        %v3787 = vadd.f32 %v3759, %v3319
        %v3788 = vadd.f32 %v3760, %v3319
        %v3789 = vadd.f32 %v3761, %v3319
        %v3790 = vadd.f32 %v3762, %v3319
        %v3791 = vadd.f32 %v3763, %v3319
        %v3792 = vadd.f32 %v3764, %v3319
        %v3793 = vadd.f32 %v3765, %v3319
        %v3794 = vadd.f32 %v3766, %v3319
        %v3795 = vadd.f32 %v3767, %v3319
        %v3796 = vsel %vm3376, %v3768, 0.0
        %v3797 = vsel %vm3377, %v3769, 0.0
        %v3798 = vsel %vm3378, %v3770, 0.0
        %v3799 = vsel %vm3379, %v3771, 0.0
        %v3800 = vsel %vm3380, %v3772, 0.0
        %v3801 = vsel %vm3381, %v3773, 0.0
        %v3802 = vsel %vm3382, %v3774, 0.0
        %v3803 = vsel %vm3383, %v3775, 0.0
        %v3804 = vsel %vm3384, %v3776, 0.0
        %v3805 = vsel %vm3385, %v3777, 0.0
        %v3806 = vsel %vm3386, %v3778, 0.0
        %v3807 = vsel %vm3387, %v3779, 0.0
        %v3808 = vsel %vm3388, %v3780, 0.0
        %v3809 = vsel %vm3389, %v3781, 0.0
        %v3810 = vsel %vm3390, %v3782, 0.0
        %v3811 = vsel %vm3391, %v3783, 0.0
        %v3812 = vsel %vm3392, %v3784, 0.0
        %v3813 = vsel %vm3393, %v3785, 0.0
        %v3814 = vsel %vm3394, %v3786, 0.0
        %v3815 = vsel %vm3395, %v3787, 0.0
        %v3816 = vsel %vm3396, %v3788, 0.0
        %v3817 = vsel %vm3397, %v3789, 0.0
        %v3818 = vsel %vm3398, %v3790, 0.0
        %v3819 = vsel %vm3399, %v3791, 0.0
        %v3820 = vsel %vm3400, %v3792, 0.0
        %v3821 = vsel %vm3401, %v3793, 0.0
        %v3822 = vsel %vm3402, %v3794, 0.0
        %v3823 = vsel %vm3403, %v3795, 0.0
        %3824 = vst.msk [vmem:[#allocation3 + $0x111] sm:$0xff] %vm2367, %v3796
        %3825 = vst.msk [vmem:[#allocation3 + $0x119] sm:$0xff] %vm2367, %v3797
        %3826 = vst.msk [vmem:[#allocation3 + $0x121] sm:$0xff] %vm2367, %v3798
        %3827 = vst.msk [vmem:[#allocation3 + $0x129] sm:$0xff] %vm2367, %v3799
        %3828 = vst.msk [vmem:[#allocation3 + $0x131] sm:$0xff] %vm2367, %v3800
        %3829 = vst.msk [vmem:[#allocation3 + $0x139] sm:$0xff] %vm2367, %v3801
        %3830 = vst.msk [vmem:[#allocation3 + $0x141] sm:$0xff] %vm2367, %v3802
        %3831 = vst.msk [vmem:[#allocation3 + $0x149] sm:$0xff] %vm2367, %v3803
        %3832 = vst.msk [vmem:[#allocation3 + $0x151] sm:$0xff] %vm2367, %v3804
        %3833 = vst.msk [vmem:[#allocation3 + $0x159] sm:$0xff] %vm2367, %v3805
        %3834 = vst.msk [vmem:[#allocation3 + $0x161] sm:$0xff] %vm2367, %v3806
        %3835 = vst.msk [vmem:[#allocation3 + $0x169] sm:$0xff] %vm2367, %v3807
        %3836 = vst.msk [vmem:[#allocation3 + $0x171] sm:$0xff] %vm2367, %v3808
        %3837 = vst.msk [vmem:[#allocation3 + $0x179] sm:$0xff] %vm2367, %v3809
        %3838 = vst.msk [vmem:[#allocation3 + $0x181] sm:$0xff] %vm2367, %v3810
        %3839 = vst.msk [vmem:[#allocation3 + $0x189] sm:$0xff] %vm2367, %v3811
        %3840 = vst.msk [vmem:[#allocation3 + $0x191] sm:$0xff] %vm2367, %v3812
        %3841 = vst.msk [vmem:[#allocation3 + $0x199] sm:$0xff] %vm2367, %v3813
        %3842 = vst.msk [vmem:[#allocation3 + $0x1a1] sm:$0xff] %vm2367, %v3814
        %3843 = vst.msk [vmem:[#allocation3 + $0x1a9] sm:$0xff] %vm2367, %v3815
        %3844 = vst.msk [vmem:[#allocation3 + $0x1b1] sm:$0xff] %vm2367, %v3816
        %3845 = vst.msk [vmem:[#allocation3 + $0x1b9] sm:$0xff] %vm2367, %v3817
        %3846 = vst.msk [vmem:[#allocation3 + $0x1c1] sm:$0xff] %vm2367, %v3818
        %3847 = vst.msk [vmem:[#allocation3 + $0x1c9] sm:$0xff] %vm2367, %v3819
        %3848 = vst.msk [vmem:[#allocation3 + $0x1d1] sm:$0xff] %vm2367, %v3820
        %3849 = vst.msk [vmem:[#allocation3 + $0x1d9] sm:$0xff] %vm2367, %v3821
        %3850 = vst.msk [vmem:[#allocation3 + $0x1e1] sm:$0xff] %vm2367, %v3822
        %3851 = vst.msk [vmem:[#allocation3 + $0x1e9] sm:$0xff] %vm2367, %v3823
        %v3852 = vld [vmem:[#allocation3] sm:$0xff]
        %v3853 = vld [vmem:[#allocation3 + $0x8] sm:$0xff]
        %v3854 = vld [vmem:[#allocation3 + $0x10] sm:$0xff]
        %v3855 = vld [vmem:[#allocation3 + $0x18] sm:$0xff]
        %v3856 = vld [vmem:[#allocation3 + $0x20] sm:$0xff]
        %v3857 = vld [vmem:[#allocation3 + $0x28] sm:$0xff]
        %v3858 = vld [vmem:[#allocation3 + $0x30] sm:$0xff]
        %v3859 = vld [vmem:[#allocation3 + $0x38] sm:$0xff]
        %v3860 = vld [vmem:[#allocation3 + $0x40] sm:$0xff]
        %v3861 = vld [vmem:[#allocation3 + $0x48] sm:$0xff]
        %v3862 = vld [vmem:[#allocation3 + $0x50] sm:$0xff]
        %v3863 = vld [vmem:[#allocation3 + $0x58] sm:$0xff]
        %v3864 = vld [vmem:[#allocation3 + $0x60] sm:$0xff]
        %v3865 = vld [vmem:[#allocation3 + $0x68] sm:$0xff]
        %v3866 = vld [vmem:[#allocation3 + $0x70] sm:$0xff]
        %v3867 = vld [vmem:[#allocation3 + $0x78] sm:$0xff]
        %v3868 = vld [vmem:[#allocation3 + $0x80] sm:$0xff]
        %v3869 = vld [vmem:[#allocation3 + $0x88] sm:$0xff]
        %v3870 = vld [vmem:[#allocation3 + $0x90] sm:$0xff]
        %v3871 = vld [vmem:[#allocation3 + $0x98] sm:$0xff]
        %v3872 = vld [vmem:[#allocation3 + $0xa0] sm:$0xff]
        %v3873 = vld [vmem:[#allocation3 + $0xa8] sm:$0xff]
        %v3874 = vld [vmem:[#allocation3 + $0xb0] sm:$0xff]
        %v3875 = vld [vmem:[#allocation3 + $0xb8] sm:$0xff]
        %v3876 = vld [vmem:[#allocation3 + $0xc0] sm:$0xff]
        %v3877 = vld [vmem:[#allocation3 + $0xc8] sm:$0xff]
        %v3878 = vld [vmem:[#allocation3 + $0xd0] sm:$0xff]
        %v3879 = vld [vmem:[#allocation3 + $0xd8] sm:$0xff]
        %3880 = vst.msk [vmem:[#allocation4] sm:$0xff] %vm2367, %v3852
        %3881 = vst.msk [vmem:[#allocation4 + $0x28] sm:$0xff] %vm2367, %v3853
        %3882 = vst.msk [vmem:[#allocation4 + $0x50] sm:$0xff] %vm2367, %v3854
        %3883 = vst.msk [vmem:[#allocation4 + $0x78] sm:$0xff] %vm2367, %v3855
        %3884 = vst.msk [vmem:[#allocation4 + $0xa0] sm:$0xff] %vm2367, %v3856
        %3885 = vst.msk [vmem:[#allocation4 + $0xc8] sm:$0xff] %vm2367, %v3857
        %3886 = vst.msk [vmem:[#allocation4 + $0xf0] sm:$0xff] %vm2367, %v3858
        %3887 = vst.msk [vmem:[#allocation4 + $0x118] sm:$0xff] %vm2367, %v3859
        %3888 = vst.msk [vmem:[#allocation4 + $0x140] sm:$0xff] %vm2367, %v3860
        %3889 = vst.msk [vmem:[#allocation4 + $0x168] sm:$0xff] %vm2367, %v3861
        %3890 = vst.msk [vmem:[#allocation4 + $0x190] sm:$0xff] %vm2367, %v3862
        %3891 = vst.msk [vmem:[#allocation4 + $0x1b8] sm:$0xff] %vm2367, %v3863
        %3892 = vst.msk [vmem:[#allocation4 + $0x1e0] sm:$0xff] %vm2367, %v3864
        %3893 = vst.msk [vmem:[#allocation4 + $0x208] sm:$0xff] %vm2367, %v3865
        %3894 = vst.msk [vmem:[#allocation4 + $0x230] sm:$0xff] %vm2367, %v3866
        %3895 = vst.msk [vmem:[#allocation4 + $0x258] sm:$0xff] %vm2367, %v3867
        %3896 = vst.msk [vmem:[#allocation4 + $0x280] sm:$0xff] %vm2367, %v3868
        %3897 = vst.msk [vmem:[#allocation4 + $0x2a8] sm:$0xff] %vm2367, %v3869
        %3898 = vst.msk [vmem:[#allocation4 + $0x2d0] sm:$0xff] %vm2367, %v3870
        %3899 = vst.msk [vmem:[#allocation4 + $0x2f8] sm:$0xff] %vm2367, %v3871
        %3900 = vst.msk [vmem:[#allocation4 + $0x320] sm:$0xff] %vm2367, %v3872
        %3901 = vst.msk [vmem:[#allocation4 + $0x348] sm:$0xff] %vm2367, %v3873
        %3902 = vst.msk [vmem:[#allocation4 + $0x370] sm:$0xff] %vm2367, %v3874
        %3903 = vst.msk [vmem:[#allocation4 + $0x398] sm:$0xff] %vm2367, %v3875
        %3904 = vst.msk [vmem:[#allocation4 + $0x3c0] sm:$0xff] %vm2367, %v3876
        %3905 = vst.msk [vmem:[#allocation4 + $0x3e8] sm:$0xff] %vm2367, %v3877
        %3906 = vst.msk [vmem:[#allocation4 + $0x410] sm:$0xff] %vm2367, %v3878
        %3907 = vst.msk [vmem:[#allocation4 + $0x438] sm:$0xff] %vm2367, %v3879
        %v3908 = vld [vmem:[#allocation3 + $0x1] sm:$0xff]
        %v3909 = vld [vmem:[#allocation3 + $0x9] sm:$0xff]
        %v3910 = vld [vmem:[#allocation3 + $0x11] sm:$0xff]
        %v3911 = vld [vmem:[#allocation3 + $0x19] sm:$0xff]
        %v3912 = vld [vmem:[#allocation3 + $0x21] sm:$0xff]
        %v3913 = vld [vmem:[#allocation3 + $0x29] sm:$0xff]
        %v3914 = vld [vmem:[#allocation3 + $0x31] sm:$0xff]
        %v3915 = vld [vmem:[#allocation3 + $0x39] sm:$0xff]
        %v3916 = vld [vmem:[#allocation3 + $0x41] sm:$0xff]
        %v3917 = vld [vmem:[#allocation3 + $0x49] sm:$0xff]
        %v3918 = vld [vmem:[#allocation3 + $0x51] sm:$0xff]
        %v3919 = vld [vmem:[#allocation3 + $0x59] sm:$0xff]
        %v3920 = vld [vmem:[#allocation3 + $0x61] sm:$0xff]
        %v3921 = vld [vmem:[#allocation3 + $0x69] sm:$0xff]
        %v3922 = vld [vmem:[#allocation3 + $0x71] sm:$0xff]
        %v3923 = vld [vmem:[#allocation3 + $0x79] sm:$0xff]
        %v3924 = vld [vmem:[#allocation3 + $0x81] sm:$0xff]
        %v3925 = vld [vmem:[#allocation3 + $0x89] sm:$0xff]
        %v3926 = vld [vmem:[#allocation3 + $0x91] sm:$0xff]
        %v3927 = vld [vmem:[#allocation3 + $0x99] sm:$0xff]
        %v3928 = vld [vmem:[#allocation3 + $0xa1] sm:$0xff]
        %v3929 = vld [vmem:[#allocation3 + $0xa9] sm:$0xff]
        %v3930 = vld [vmem:[#allocation3 + $0xb1] sm:$0xff]
        %v3931 = vld [vmem:[#allocation3 + $0xb9] sm:$0xff]
        %v3932 = vld [vmem:[#allocation3 + $0xc1] sm:$0xff]
        %v3933 = vld [vmem:[#allocation3 + $0xc9] sm:$0xff]
        %v3934 = vld [vmem:[#allocation3 + $0xd1] sm:$0xff]
        %v3935 = vld [vmem:[#allocation3 + $0xd9] sm:$0xff]
        %3964 = vrot.lane.b32.xlu0 %v3908, 64
        %v3965 = vpop.permute.xlu0 %3964
        %3966 = vrot.lane.b32.xlu0 %v3909, 64
        %v3967 = vpop.permute.xlu0 %3966
        %3968 = vrot.lane.b32.xlu0 %v3910, 64
        %v3969 = vpop.permute.xlu0 %3968
        %3970 = vrot.lane.b32.xlu0 %v3911, 64
        %v3971 = vpop.permute.xlu0 %3970
        %3972 = vrot.lane.b32.xlu0 %v3912, 64
        %v3973 = vpop.permute.xlu0 %3972
        %3974 = vrot.lane.b32.xlu0 %v3913, 64
        %v3975 = vpop.permute.xlu0 %3974
        %3976 = vrot.lane.b32.xlu0 %v3914, 64
        %v3977 = vpop.permute.xlu0 %3976
        %3978 = vrot.lane.b32.xlu0 %v3915, 64
        %v3979 = vpop.permute.xlu0 %3978
        %3980 = vrot.lane.b32.xlu0 %v3916, 64
        %v3981 = vpop.permute.xlu0 %3980
        %3982 = vrot.lane.b32.xlu0 %v3917, 64
        %v3983 = vpop.permute.xlu0 %3982
        %3984 = vrot.lane.b32.xlu0 %v3918, 64
        %v3985 = vpop.permute.xlu0 %3984
        %3986 = vrot.lane.b32.xlu0 %v3919, 64
        %v3987 = vpop.permute.xlu0 %3986
        %3988 = vrot.lane.b32.xlu0 %v3920, 64
        %v3989 = vpop.permute.xlu0 %3988
        %3990 = vrot.lane.b32.xlu0 %v3921, 64
        %v3991 = vpop.permute.xlu0 %3990
        %3992 = vrot.lane.b32.xlu0 %v3922, 64
        %v3993 = vpop.permute.xlu0 %3992
        %3994 = vrot.lane.b32.xlu0 %v3923, 64
        %v3995 = vpop.permute.xlu0 %3994
        %3996 = vrot.lane.b32.xlu0 %v3924, 64
        %v3997 = vpop.permute.xlu0 %3996
        %3998 = vrot.lane.b32.xlu0 %v3925, 64
        %v3999 = vpop.permute.xlu0 %3998
        %4000 = vrot.lane.b32.xlu0 %v3926, 64
        %v4001 = vpop.permute.xlu0 %4000
        %4002 = vrot.lane.b32.xlu0 %v3927, 64
        %v4003 = vpop.permute.xlu0 %4002
        %4004 = vrot.lane.b32.xlu0 %v3928, 64
        %v4005 = vpop.permute.xlu0 %4004
        %4006 = vrot.lane.b32.xlu0 %v3929, 64
        %v4007 = vpop.permute.xlu0 %4006
        %4008 = vrot.lane.b32.xlu0 %v3930, 64
        %v4009 = vpop.permute.xlu0 %4008
        %4010 = vrot.lane.b32.xlu0 %v3931, 64
        %v4011 = vpop.permute.xlu0 %4010
        %4012 = vrot.lane.b32.xlu0 %v3932, 64
        %v4013 = vpop.permute.xlu0 %4012
        %4014 = vrot.lane.b32.xlu0 %v3933, 64
        %v4015 = vpop.permute.xlu0 %4014
        %4016 = vrot.lane.b32.xlu0 %v3934, 64
        %v4017 = vpop.permute.xlu0 %4016
        %4018 = vrot.lane.b32.xlu0 %v3935, 64
        %v4019 = vpop.permute.xlu0 %4018
        %vm4048 = vcmask 1048064
        %4049 = vst.msk [vmem:[#allocation4] sm:$0xff] %vm4048, %v3965
        %4050 = vst.msk [vmem:[#allocation4 + $0x28] sm:$0xff] %vm4048, %v3967
        %4051 = vst.msk [vmem:[#allocation4 + $0x50] sm:$0xff] %vm4048, %v3969
        %4052 = vst.msk [vmem:[#allocation4 + $0x78] sm:$0xff] %vm4048, %v3971
        %4053 = vst.msk [vmem:[#allocation4 + $0xa0] sm:$0xff] %vm4048, %v3973
        %4054 = vst.msk [vmem:[#allocation4 + $0xc8] sm:$0xff] %vm4048, %v3975
        %4055 = vst.msk [vmem:[#allocation4 + $0xf0] sm:$0xff] %vm4048, %v3977
        %4056 = vst.msk [vmem:[#allocation4 + $0x118] sm:$0xff] %vm4048, %v3979
        %4057 = vst.msk [vmem:[#allocation4 + $0x140] sm:$0xff] %vm4048, %v3981
        %4058 = vst.msk [vmem:[#allocation4 + $0x168] sm:$0xff] %vm4048, %v3983
        %4059 = vst.msk [vmem:[#allocation4 + $0x190] sm:$0xff] %vm4048, %v3985
        %4060 = vst.msk [vmem:[#allocation4 + $0x1b8] sm:$0xff] %vm4048, %v3987
        %4061 = vst.msk [vmem:[#allocation4 + $0x1e0] sm:$0xff] %vm4048, %v3989
        %4062 = vst.msk [vmem:[#allocation4 + $0x208] sm:$0xff] %vm4048, %v3991
        %4063 = vst.msk [vmem:[#allocation4 + $0x230] sm:$0xff] %vm4048, %v3993
        %4064 = vst.msk [vmem:[#allocation4 + $0x258] sm:$0xff] %vm4048, %v3995
        %4065 = vst.msk [vmem:[#allocation4 + $0x280] sm:$0xff] %vm4048, %v3997
        %4066 = vst.msk [vmem:[#allocation4 + $0x2a8] sm:$0xff] %vm4048, %v3999
        %4067 = vst.msk [vmem:[#allocation4 + $0x2d0] sm:$0xff] %vm4048, %v4001
        %4068 = vst.msk [vmem:[#allocation4 + $0x2f8] sm:$0xff] %vm4048, %v4003
        %4069 = vst.msk [vmem:[#allocation4 + $0x320] sm:$0xff] %vm4048, %v4005
        %4070 = vst.msk [vmem:[#allocation4 + $0x348] sm:$0xff] %vm4048, %v4007
        %4071 = vst.msk [vmem:[#allocation4 + $0x370] sm:$0xff] %vm4048, %v4009
        %4072 = vst.msk [vmem:[#allocation4 + $0x398] sm:$0xff] %vm4048, %v4011
        %4073 = vst.msk [vmem:[#allocation4 + $0x3c0] sm:$0xff] %vm4048, %v4013
        %4074 = vst.msk [vmem:[#allocation4 + $0x3e8] sm:$0xff] %vm4048, %v4015
        %4075 = vst.msk [vmem:[#allocation4 + $0x410] sm:$0xff] %vm4048, %v4017
        %4076 = vst.msk [vmem:[#allocation4 + $0x438] sm:$0xff] %vm4048, %v4019
        %v4077 = vld [vmem:[#allocation3 + $0x2] sm:$0xff]
        %v4078 = vld [vmem:[#allocation3 + $0xa] sm:$0xff]
        %v4079 = vld [vmem:[#allocation3 + $0x12] sm:$0xff]
        %v4080 = vld [vmem:[#allocation3 + $0x1a] sm:$0xff]
        %v4081 = vld [vmem:[#allocation3 + $0x22] sm:$0xff]
        %v4082 = vld [vmem:[#allocation3 + $0x2a] sm:$0xff]
        %v4083 = vld [vmem:[#allocation3 + $0x32] sm:$0xff]
        %v4084 = vld [vmem:[#allocation3 + $0x3a] sm:$0xff]
        %v4085 = vld [vmem:[#allocation3 + $0x42] sm:$0xff]
        %v4086 = vld [vmem:[#allocation3 + $0x4a] sm:$0xff]
        %v4087 = vld [vmem:[#allocation3 + $0x52] sm:$0xff]
        %v4088 = vld [vmem:[#allocation3 + $0x5a] sm:$0xff]
        %v4089 = vld [vmem:[#allocation3 + $0x62] sm:$0xff]
        %v4090 = vld [vmem:[#allocation3 + $0x6a] sm:$0xff]
        %v4091 = vld [vmem:[#allocation3 + $0x72] sm:$0xff]
        %v4092 = vld [vmem:[#allocation3 + $0x7a] sm:$0xff]
        %v4093 = vld [vmem:[#allocation3 + $0x82] sm:$0xff]
        %v4094 = vld [vmem:[#allocation3 + $0x8a] sm:$0xff]
        %v4095 = vld [vmem:[#allocation3 + $0x92] sm:$0xff]
        %v4096 = vld [vmem:[#allocation3 + $0x9a] sm:$0xff]
        %v4097 = vld [vmem:[#allocation3 + $0xa2] sm:$0xff]
        %v4098 = vld [vmem:[#allocation3 + $0xaa] sm:$0xff]
        %v4099 = vld [vmem:[#allocation3 + $0xb2] sm:$0xff]
        %v4100 = vld [vmem:[#allocation3 + $0xba] sm:$0xff]
        %v4101 = vld [vmem:[#allocation3 + $0xc2] sm:$0xff]
        %v4102 = vld [vmem:[#allocation3 + $0xca] sm:$0xff]
        %v4103 = vld [vmem:[#allocation3 + $0xd2] sm:$0xff]
        %v4104 = vld [vmem:[#allocation3 + $0xda] sm:$0xff]
        %4105 = vst.msk [vmem:[#allocation4 + $0x8] sm:$0xff] %vm2367, %v4077
        %4106 = vst.msk [vmem:[#allocation4 + $0x30] sm:$0xff] %vm2367, %v4078
        %4107 = vst.msk [vmem:[#allocation4 + $0x58] sm:$0xff] %vm2367, %v4079
        %4108 = vst.msk [vmem:[#allocation4 + $0x80] sm:$0xff] %vm2367, %v4080
        %4109 = vst.msk [vmem:[#allocation4 + $0xa8] sm:$0xff] %vm2367, %v4081
        %4110 = vst.msk [vmem:[#allocation4 + $0xd0] sm:$0xff] %vm2367, %v4082
        %4111 = vst.msk [vmem:[#allocation4 + $0xf8] sm:$0xff] %vm2367, %v4083
        %4112 = vst.msk [vmem:[#allocation4 + $0x120] sm:$0xff] %vm2367, %v4084
        %4113 = vst.msk [vmem:[#allocation4 + $0x148] sm:$0xff] %vm2367, %v4085
        %4114 = vst.msk [vmem:[#allocation4 + $0x170] sm:$0xff] %vm2367, %v4086
        %4115 = vst.msk [vmem:[#allocation4 + $0x198] sm:$0xff] %vm2367, %v4087
        %4116 = vst.msk [vmem:[#allocation4 + $0x1c0] sm:$0xff] %vm2367, %v4088
        %4117 = vst.msk [vmem:[#allocation4 + $0x1e8] sm:$0xff] %vm2367, %v4089
        %4118 = vst.msk [vmem:[#allocation4 + $0x210] sm:$0xff] %vm2367, %v4090
        %4119 = vst.msk [vmem:[#allocation4 + $0x238] sm:$0xff] %vm2367, %v4091
        %4120 = vst.msk [vmem:[#allocation4 + $0x260] sm:$0xff] %vm2367, %v4092
        %4121 = vst.msk [vmem:[#allocation4 + $0x288] sm:$0xff] %vm2367, %v4093
        %4122 = vst.msk [vmem:[#allocation4 + $0x2b0] sm:$0xff] %vm2367, %v4094
        %4123 = vst.msk [vmem:[#allocation4 + $0x2d8] sm:$0xff] %vm2367, %v4095
        %4124 = vst.msk [vmem:[#allocation4 + $0x300] sm:$0xff] %vm2367, %v4096
        %4125 = vst.msk [vmem:[#allocation4 + $0x328] sm:$0xff] %vm2367, %v4097
        %4126 = vst.msk [vmem:[#allocation4 + $0x350] sm:$0xff] %vm2367, %v4098
        %4127 = vst.msk [vmem:[#allocation4 + $0x378] sm:$0xff] %vm2367, %v4099
        %4128 = vst.msk [vmem:[#allocation4 + $0x3a0] sm:$0xff] %vm2367, %v4100
        %4129 = vst.msk [vmem:[#allocation4 + $0x3c8] sm:$0xff] %vm2367, %v4101
        %4130 = vst.msk [vmem:[#allocation4 + $0x3f0] sm:$0xff] %vm2367, %v4102
        %4131 = vst.msk [vmem:[#allocation4 + $0x418] sm:$0xff] %vm2367, %v4103
        %4132 = vst.msk [vmem:[#allocation4 + $0x440] sm:$0xff] %vm2367, %v4104
        %v4133 = vld [vmem:[#allocation3 + $0x10] sm:$0xff]
        %v4134 = vld [vmem:[#allocation3 + $0x18] sm:$0xff]
        %v4135 = vld [vmem:[#allocation3 + $0x20] sm:$0xff]
        %v4136 = vld [vmem:[#allocation3 + $0x28] sm:$0xff]
        %v4137 = vld [vmem:[#allocation3 + $0x30] sm:$0xff]
        %v4138 = vld [vmem:[#allocation3 + $0x38] sm:$0xff]
        %v4139 = vld [vmem:[#allocation3 + $0x40] sm:$0xff]
        %v4140 = vld [vmem:[#allocation3 + $0x48] sm:$0xff]
        %v4141 = vld [vmem:[#allocation3 + $0x50] sm:$0xff]
        %v4142 = vld [vmem:[#allocation3 + $0x58] sm:$0xff]
        %v4143 = vld [vmem:[#allocation3 + $0x60] sm:$0xff]
        %v4144 = vld [vmem:[#allocation3 + $0x68] sm:$0xff]
        %v4145 = vld [vmem:[#allocation3 + $0x70] sm:$0xff]
        %v4146 = vld [vmem:[#allocation3 + $0x78] sm:$0xff]
        %v4147 = vld [vmem:[#allocation3 + $0x80] sm:$0xff]
        %v4148 = vld [vmem:[#allocation3 + $0x88] sm:$0xff]
        %v4149 = vld [vmem:[#allocation3 + $0x90] sm:$0xff]
        %v4150 = vld [vmem:[#allocation3 + $0x98] sm:$0xff]
        %v4151 = vld [vmem:[#allocation3 + $0xa0] sm:$0xff]
        %v4152 = vld [vmem:[#allocation3 + $0xa8] sm:$0xff]
        %v4153 = vld [vmem:[#allocation3 + $0xb0] sm:$0xff]
        %v4154 = vld [vmem:[#allocation3 + $0xb8] sm:$0xff]
        %v4155 = vld [vmem:[#allocation3 + $0xc0] sm:$0xff]
        %v4156 = vld [vmem:[#allocation3 + $0xc8] sm:$0xff]
        %v4157 = vld [vmem:[#allocation3 + $0xd0] sm:$0xff]
        %v4158 = vld [vmem:[#allocation3 + $0xd8] sm:$0xff]
        %v4159 = vld [vmem:[#allocation3 + $0xe0] sm:$0xff]
        %v4160 = vld [vmem:[#allocation3 + $0xe8] sm:$0xff]
        %4189 = vrot.lane.b32.xlu0 %v4133, 64
        %v4190 = vpop.permute.xlu0 %4189
        %4191 = vrot.lane.b32.xlu0 %v4134, 64
        %v4192 = vpop.permute.xlu0 %4191
        %4193 = vrot.lane.b32.xlu0 %v4135, 64
        %v4194 = vpop.permute.xlu0 %4193
        %4195 = vrot.lane.b32.xlu0 %v4136, 64
        %v4196 = vpop.permute.xlu0 %4195
        %4197 = vrot.lane.b32.xlu0 %v4137, 64
        %v4198 = vpop.permute.xlu0 %4197
        %4199 = vrot.lane.b32.xlu0 %v4138, 64
        %v4200 = vpop.permute.xlu0 %4199
        %4201 = vrot.lane.b32.xlu0 %v4139, 64
        %v4202 = vpop.permute.xlu0 %4201
        %4203 = vrot.lane.b32.xlu0 %v4140, 64
        %v4204 = vpop.permute.xlu0 %4203
        %4205 = vrot.lane.b32.xlu0 %v4141, 64
        %v4206 = vpop.permute.xlu0 %4205
        %4207 = vrot.lane.b32.xlu0 %v4142, 64
        %v4208 = vpop.permute.xlu0 %4207
        %4209 = vrot.lane.b32.xlu0 %v4143, 64
        %v4210 = vpop.permute.xlu0 %4209
        %4211 = vrot.lane.b32.xlu0 %v4144, 64
        %v4212 = vpop.permute.xlu0 %4211
        %4213 = vrot.lane.b32.xlu0 %v4145, 64
        %v4214 = vpop.permute.xlu0 %4213
        %4215 = vrot.lane.b32.xlu0 %v4146, 64
        %v4216 = vpop.permute.xlu0 %4215
        %4217 = vrot.lane.b32.xlu0 %v4147, 64
        %v4218 = vpop.permute.xlu0 %4217
        %4219 = vrot.lane.b32.xlu0 %v4148, 64
        %v4220 = vpop.permute.xlu0 %4219
        %4221 = vrot.lane.b32.xlu0 %v4149, 64
        %v4222 = vpop.permute.xlu0 %4221
        %4223 = vrot.lane.b32.xlu0 %v4150, 64
        %v4224 = vpop.permute.xlu0 %4223
        %4225 = vrot.lane.b32.xlu0 %v4151, 64
        %v4226 = vpop.permute.xlu0 %4225
        %4227 = vrot.lane.b32.xlu0 %v4152, 64
        %v4228 = vpop.permute.xlu0 %4227
        %4229 = vrot.lane.b32.xlu0 %v4153, 64
        %v4230 = vpop.permute.xlu0 %4229
        %4231 = vrot.lane.b32.xlu0 %v4154, 64
        %v4232 = vpop.permute.xlu0 %4231
        %4233 = vrot.lane.b32.xlu0 %v4155, 64
        %v4234 = vpop.permute.xlu0 %4233
        %4235 = vrot.lane.b32.xlu0 %v4156, 64
        %v4236 = vpop.permute.xlu0 %4235
        %4237 = vrot.lane.b32.xlu0 %v4157, 64
        %v4238 = vpop.permute.xlu0 %4237
        %4239 = vrot.lane.b32.xlu0 %v4158, 64
        %v4240 = vpop.permute.xlu0 %4239
        %4241 = vrot.lane.b32.xlu0 %v4159, 64
        %v4242 = vpop.permute.xlu0 %4241
        %4243 = vrot.lane.b32.xlu0 %v4160, 64
        %v4244 = vpop.permute.xlu0 %4243
        %4273 = vst.msk [vmem:[#allocation4 + $0x8] sm:$0xff] %vm4048, %v4190
        %4274 = vst.msk [vmem:[#allocation4 + $0x30] sm:$0xff] %vm4048, %v4192
        %4275 = vst.msk [vmem:[#allocation4 + $0x58] sm:$0xff] %vm4048, %v4194
        %4276 = vst.msk [vmem:[#allocation4 + $0x80] sm:$0xff] %vm4048, %v4196
        %4277 = vst.msk [vmem:[#allocation4 + $0xa8] sm:$0xff] %vm4048, %v4198
        %4278 = vst.msk [vmem:[#allocation4 + $0xd0] sm:$0xff] %vm4048, %v4200
        %4279 = vst.msk [vmem:[#allocation4 + $0xf8] sm:$0xff] %vm4048, %v4202
        %4280 = vst.msk [vmem:[#allocation4 + $0x120] sm:$0xff] %vm4048, %v4204
        %4281 = vst.msk [vmem:[#allocation4 + $0x148] sm:$0xff] %vm4048, %v4206
        %4282 = vst.msk [vmem:[#allocation4 + $0x170] sm:$0xff] %vm4048, %v4208
        %4283 = vst.msk [vmem:[#allocation4 + $0x198] sm:$0xff] %vm4048, %v4210
        %4284 = vst.msk [vmem:[#allocation4 + $0x1c0] sm:$0xff] %vm4048, %v4212
        %4285 = vst.msk [vmem:[#allocation4 + $0x1e8] sm:$0xff] %vm4048, %v4214
        %4286 = vst.msk [vmem:[#allocation4 + $0x210] sm:$0xff] %vm4048, %v4216
        %4287 = vst.msk [vmem:[#allocation4 + $0x238] sm:$0xff] %vm4048, %v4218
        %4288 = vst.msk [vmem:[#allocation4 + $0x260] sm:$0xff] %vm4048, %v4220
        %4289 = vst.msk [vmem:[#allocation4 + $0x288] sm:$0xff] %vm4048, %v4222
        %4290 = vst.msk [vmem:[#allocation4 + $0x2b0] sm:$0xff] %vm4048, %v4224
        %4291 = vst.msk [vmem:[#allocation4 + $0x2d8] sm:$0xff] %vm4048, %v4226
        %4292 = vst.msk [vmem:[#allocation4 + $0x300] sm:$0xff] %vm4048, %v4228
        %4293 = vst.msk [vmem:[#allocation4 + $0x328] sm:$0xff] %vm4048, %v4230
        %4294 = vst.msk [vmem:[#allocation4 + $0x350] sm:$0xff] %vm4048, %v4232
        %4295 = vst.msk [vmem:[#allocation4 + $0x378] sm:$0xff] %vm4048, %v4234
        %4296 = vst.msk [vmem:[#allocation4 + $0x3a0] sm:$0xff] %vm4048, %v4236
        %4297 = vst.msk [vmem:[#allocation4 + $0x3c8] sm:$0xff] %vm4048, %v4238
        %4298 = vst.msk [vmem:[#allocation4 + $0x3f0] sm:$0xff] %vm4048, %v4240
        %4299 = vst.msk [vmem:[#allocation4 + $0x418] sm:$0xff] %vm4048, %v4242
        %4300 = vst.msk [vmem:[#allocation4 + $0x440] sm:$0xff] %vm4048, %v4244
        %v4301 = vld [vmem:[#allocation3 + $0x11] sm:$0xff]
        %v4302 = vld [vmem:[#allocation3 + $0x19] sm:$0xff]
        %v4303 = vld [vmem:[#allocation3 + $0x21] sm:$0xff]
        %v4304 = vld [vmem:[#allocation3 + $0x29] sm:$0xff]
        %v4305 = vld [vmem:[#allocation3 + $0x31] sm:$0xff]
        %v4306 = vld [vmem:[#allocation3 + $0x39] sm:$0xff]
        %v4307 = vld [vmem:[#allocation3 + $0x41] sm:$0xff]
        %v4308 = vld [vmem:[#allocation3 + $0x49] sm:$0xff]
        %v4309 = vld [vmem:[#allocation3 + $0x51] sm:$0xff]
        %v4310 = vld [vmem:[#allocation3 + $0x59] sm:$0xff]
        %v4311 = vld [vmem:[#allocation3 + $0x61] sm:$0xff]
        %v4312 = vld [vmem:[#allocation3 + $0x69] sm:$0xff]
        %v4313 = vld [vmem:[#allocation3 + $0x71] sm:$0xff]
        %v4314 = vld [vmem:[#allocation3 + $0x79] sm:$0xff]
        %v4315 = vld [vmem:[#allocation3 + $0x81] sm:$0xff]
        %v4316 = vld [vmem:[#allocation3 + $0x89] sm:$0xff]
        %v4317 = vld [vmem:[#allocation3 + $0x91] sm:$0xff]
        %v4318 = vld [vmem:[#allocation3 + $0x99] sm:$0xff]
        %v4319 = vld [vmem:[#allocation3 + $0xa1] sm:$0xff]
        %v4320 = vld [vmem:[#allocation3 + $0xa9] sm:$0xff]
        %v4321 = vld [vmem:[#allocation3 + $0xb1] sm:$0xff]
        %v4322 = vld [vmem:[#allocation3 + $0xb9] sm:$0xff]
        %v4323 = vld [vmem:[#allocation3 + $0xc1] sm:$0xff]
        %v4324 = vld [vmem:[#allocation3 + $0xc9] sm:$0xff]
        %v4325 = vld [vmem:[#allocation3 + $0xd1] sm:$0xff]
        %v4326 = vld [vmem:[#allocation3 + $0xd9] sm:$0xff]
        %v4327 = vld [vmem:[#allocation3 + $0xe1] sm:$0xff]
        %v4328 = vld [vmem:[#allocation3 + $0xe9] sm:$0xff]
        %4329 = vst.msk [vmem:[#allocation4 + $0x10] sm:$0xff] %vm2367, %v4301
        %4330 = vst.msk [vmem:[#allocation4 + $0x38] sm:$0xff] %vm2367, %v4302
        %4331 = vst.msk [vmem:[#allocation4 + $0x60] sm:$0xff] %vm2367, %v4303
        %4332 = vst.msk [vmem:[#allocation4 + $0x88] sm:$0xff] %vm2367, %v4304
        %4333 = vst.msk [vmem:[#allocation4 + $0xb0] sm:$0xff] %vm2367, %v4305
        %4334 = vst.msk [vmem:[#allocation4 + $0xd8] sm:$0xff] %vm2367, %v4306
        %4335 = vst.msk [vmem:[#allocation4 + $0x100] sm:$0xff] %vm2367, %v4307
        %4336 = vst.msk [vmem:[#allocation4 + $0x128] sm:$0xff] %vm2367, %v4308
        %4337 = vst.msk [vmem:[#allocation4 + $0x150] sm:$0xff] %vm2367, %v4309
        %4338 = vst.msk [vmem:[#allocation4 + $0x178] sm:$0xff] %vm2367, %v4310
        %4339 = vst.msk [vmem:[#allocation4 + $0x1a0] sm:$0xff] %vm2367, %v4311
        %4340 = vst.msk [vmem:[#allocation4 + $0x1c8] sm:$0xff] %vm2367, %v4312
        %4341 = vst.msk [vmem:[#allocation4 + $0x1f0] sm:$0xff] %vm2367, %v4313
        %4342 = vst.msk [vmem:[#allocation4 + $0x218] sm:$0xff] %vm2367, %v4314
        %4343 = vst.msk [vmem:[#allocation4 + $0x240] sm:$0xff] %vm2367, %v4315
        %4344 = vst.msk [vmem:[#allocation4 + $0x268] sm:$0xff] %vm2367, %v4316
        %4345 = vst.msk [vmem:[#allocation4 + $0x290] sm:$0xff] %vm2367, %v4317
        %4346 = vst.msk [vmem:[#allocation4 + $0x2b8] sm:$0xff] %vm2367, %v4318
        %4347 = vst.msk [vmem:[#allocation4 + $0x2e0] sm:$0xff] %vm2367, %v4319
        %4348 = vst.msk [vmem:[#allocation4 + $0x308] sm:$0xff] %vm2367, %v4320
        %4349 = vst.msk [vmem:[#allocation4 + $0x330] sm:$0xff] %vm2367, %v4321
        %4350 = vst.msk [vmem:[#allocation4 + $0x358] sm:$0xff] %vm2367, %v4322
        %4351 = vst.msk [vmem:[#allocation4 + $0x380] sm:$0xff] %vm2367, %v4323
        %4352 = vst.msk [vmem:[#allocation4 + $0x3a8] sm:$0xff] %vm2367, %v4324
        %4353 = vst.msk [vmem:[#allocation4 + $0x3d0] sm:$0xff] %vm2367, %v4325
        %4354 = vst.msk [vmem:[#allocation4 + $0x3f8] sm:$0xff] %vm2367, %v4326
        %4355 = vst.msk [vmem:[#allocation4 + $0x420] sm:$0xff] %vm2367, %v4327
        %4356 = vst.msk [vmem:[#allocation4 + $0x448] sm:$0xff] %vm2367, %v4328
        %v4357 = vld [vmem:[#allocation3 + $0x12] sm:$0xff]
        %v4358 = vld [vmem:[#allocation3 + $0x1a] sm:$0xff]
        %v4359 = vld [vmem:[#allocation3 + $0x22] sm:$0xff]
        %v4360 = vld [vmem:[#allocation3 + $0x2a] sm:$0xff]
        %v4361 = vld [vmem:[#allocation3 + $0x32] sm:$0xff]
        %v4362 = vld [vmem:[#allocation3 + $0x3a] sm:$0xff]
        %v4363 = vld [vmem:[#allocation3 + $0x42] sm:$0xff]
        %v4364 = vld [vmem:[#allocation3 + $0x4a] sm:$0xff]
        %v4365 = vld [vmem:[#allocation3 + $0x52] sm:$0xff]
        %v4366 = vld [vmem:[#allocation3 + $0x5a] sm:$0xff]
        %v4367 = vld [vmem:[#allocation3 + $0x62] sm:$0xff]
        %v4368 = vld [vmem:[#allocation3 + $0x6a] sm:$0xff]
        %v4369 = vld [vmem:[#allocation3 + $0x72] sm:$0xff]
        %v4370 = vld [vmem:[#allocation3 + $0x7a] sm:$0xff]
        %v4371 = vld [vmem:[#allocation3 + $0x82] sm:$0xff]
        %v4372 = vld [vmem:[#allocation3 + $0x8a] sm:$0xff]
        %v4373 = vld [vmem:[#allocation3 + $0x92] sm:$0xff]
        %v4374 = vld [vmem:[#allocation3 + $0x9a] sm:$0xff]
        %v4375 = vld [vmem:[#allocation3 + $0xa2] sm:$0xff]
        %v4376 = vld [vmem:[#allocation3 + $0xaa] sm:$0xff]
        %v4377 = vld [vmem:[#allocation3 + $0xb2] sm:$0xff]
        %v4378 = vld [vmem:[#allocation3 + $0xba] sm:$0xff]
        %v4379 = vld [vmem:[#allocation3 + $0xc2] sm:$0xff]
        %v4380 = vld [vmem:[#allocation3 + $0xca] sm:$0xff]
        %v4381 = vld [vmem:[#allocation3 + $0xd2] sm:$0xff]
        %v4382 = vld [vmem:[#allocation3 + $0xda] sm:$0xff]
        %v4383 = vld [vmem:[#allocation3 + $0xe2] sm:$0xff]
        %v4384 = vld [vmem:[#allocation3 + $0xea] sm:$0xff]
        %4413 = vrot.lane.b32.xlu0 %v4357, 64
        %v4414 = vpop.permute.xlu0 %4413
        %4415 = vrot.lane.b32.xlu0 %v4358, 64
        %v4416 = vpop.permute.xlu0 %4415
        %4417 = vrot.lane.b32.xlu0 %v4359, 64
        %v4418 = vpop.permute.xlu0 %4417
        %4419 = vrot.lane.b32.xlu0 %v4360, 64
        %v4420 = vpop.permute.xlu0 %4419
        %4421 = vrot.lane.b32.xlu0 %v4361, 64
        %v4422 = vpop.permute.xlu0 %4421
        %4423 = vrot.lane.b32.xlu0 %v4362, 64
        %v4424 = vpop.permute.xlu0 %4423
        %4425 = vrot.lane.b32.xlu0 %v4363, 64
        %v4426 = vpop.permute.xlu0 %4425
        %4427 = vrot.lane.b32.xlu0 %v4364, 64
        %v4428 = vpop.permute.xlu0 %4427
        %4429 = vrot.lane.b32.xlu0 %v4365, 64
        %v4430 = vpop.permute.xlu0 %4429
        %4431 = vrot.lane.b32.xlu0 %v4366, 64
        %v4432 = vpop.permute.xlu0 %4431
        %4433 = vrot.lane.b32.xlu0 %v4367, 64
        %v4434 = vpop.permute.xlu0 %4433
        %4435 = vrot.lane.b32.xlu0 %v4368, 64
        %v4436 = vpop.permute.xlu0 %4435
        %4437 = vrot.lane.b32.xlu0 %v4369, 64
        %v4438 = vpop.permute.xlu0 %4437
        %4439 = vrot.lane.b32.xlu0 %v4370, 64
        %v4440 = vpop.permute.xlu0 %4439
        %4441 = vrot.lane.b32.xlu0 %v4371, 64
        %v4442 = vpop.permute.xlu0 %4441
        %4443 = vrot.lane.b32.xlu0 %v4372, 64
        %v4444 = vpop.permute.xlu0 %4443
        %4445 = vrot.lane.b32.xlu0 %v4373, 64
        %v4446 = vpop.permute.xlu0 %4445
        %4447 = vrot.lane.b32.xlu0 %v4374, 64
        %v4448 = vpop.permute.xlu0 %4447
        %4449 = vrot.lane.b32.xlu0 %v4375, 64
        %v4450 = vpop.permute.xlu0 %4449
        %4451 = vrot.lane.b32.xlu0 %v4376, 64
        %v4452 = vpop.permute.xlu0 %4451
        %4453 = vrot.lane.b32.xlu0 %v4377, 64
        %v4454 = vpop.permute.xlu0 %4453
        %4455 = vrot.lane.b32.xlu0 %v4378, 64
        %v4456 = vpop.permute.xlu0 %4455
        %4457 = vrot.lane.b32.xlu0 %v4379, 64
        %v4458 = vpop.permute.xlu0 %4457
        %4459 = vrot.lane.b32.xlu0 %v4380, 64
        %v4460 = vpop.permute.xlu0 %4459
        %4461 = vrot.lane.b32.xlu0 %v4381, 64
        %v4462 = vpop.permute.xlu0 %4461
        %4463 = vrot.lane.b32.xlu0 %v4382, 64
        %v4464 = vpop.permute.xlu0 %4463
        %4465 = vrot.lane.b32.xlu0 %v4383, 64
        %v4466 = vpop.permute.xlu0 %4465
        %4467 = vrot.lane.b32.xlu0 %v4384, 64
        %v4468 = vpop.permute.xlu0 %4467
        %4497 = vst.msk [vmem:[#allocation4 + $0x10] sm:$0xff] %vm4048, %v4414
        %4498 = vst.msk [vmem:[#allocation4 + $0x38] sm:$0xff] %vm4048, %v4416
        %4499 = vst.msk [vmem:[#allocation4 + $0x60] sm:$0xff] %vm4048, %v4418
        %4500 = vst.msk [vmem:[#allocation4 + $0x88] sm:$0xff] %vm4048, %v4420
        %4501 = vst.msk [vmem:[#allocation4 + $0xb0] sm:$0xff] %vm4048, %v4422
        %4502 = vst.msk [vmem:[#allocation4 + $0xd8] sm:$0xff] %vm4048, %v4424
        %4503 = vst.msk [vmem:[#allocation4 + $0x100] sm:$0xff] %vm4048, %v4426
        %4504 = vst.msk [vmem:[#allocation4 + $0x128] sm:$0xff] %vm4048, %v4428
        %4505 = vst.msk [vmem:[#allocation4 + $0x150] sm:$0xff] %vm4048, %v4430
        %4506 = vst.msk [vmem:[#allocation4 + $0x178] sm:$0xff] %vm4048, %v4432
        %4507 = vst.msk [vmem:[#allocation4 + $0x1a0] sm:$0xff] %vm4048, %v4434
        %4508 = vst.msk [vmem:[#allocation4 + $0x1c8] sm:$0xff] %vm4048, %v4436
        %4509 = vst.msk [vmem:[#allocation4 + $0x1f0] sm:$0xff] %vm4048, %v4438
        %4510 = vst.msk [vmem:[#allocation4 + $0x218] sm:$0xff] %vm4048, %v4440
        %4511 = vst.msk [vmem:[#allocation4 + $0x240] sm:$0xff] %vm4048, %v4442
        %4512 = vst.msk [vmem:[#allocation4 + $0x268] sm:$0xff] %vm4048, %v4444
        %4513 = vst.msk [vmem:[#allocation4 + $0x290] sm:$0xff] %vm4048, %v4446
        %4514 = vst.msk [vmem:[#allocation4 + $0x2b8] sm:$0xff] %vm4048, %v4448
        %4515 = vst.msk [vmem:[#allocation4 + $0x2e0] sm:$0xff] %vm4048, %v4450
        %4516 = vst.msk [vmem:[#allocation4 + $0x308] sm:$0xff] %vm4048, %v4452
        %4517 = vst.msk [vmem:[#allocation4 + $0x330] sm:$0xff] %vm4048, %v4454
        %4518 = vst.msk [vmem:[#allocation4 + $0x358] sm:$0xff] %vm4048, %v4456
        %4519 = vst.msk [vmem:[#allocation4 + $0x380] sm:$0xff] %vm4048, %v4458
        %4520 = vst.msk [vmem:[#allocation4 + $0x3a8] sm:$0xff] %vm4048, %v4460
        %4521 = vst.msk [vmem:[#allocation4 + $0x3d0] sm:$0xff] %vm4048, %v4462
        %4522 = vst.msk [vmem:[#allocation4 + $0x3f8] sm:$0xff] %vm4048, %v4464
        %4523 = vst.msk [vmem:[#allocation4 + $0x420] sm:$0xff] %vm4048, %v4466
        %4524 = vst.msk [vmem:[#allocation4 + $0x448] sm:$0xff] %vm4048, %v4468
        %v4525 = vld [vmem:[#allocation3 + $0x20] sm:$0xff]
        %v4526 = vld [vmem:[#allocation3 + $0x28] sm:$0xff]
        %v4527 = vld [vmem:[#allocation3 + $0x30] sm:$0xff]
        %v4528 = vld [vmem:[#allocation3 + $0x38] sm:$0xff]
        %v4529 = vld [vmem:[#allocation3 + $0x40] sm:$0xff]
        %v4530 = vld [vmem:[#allocation3 + $0x48] sm:$0xff]
        %v4531 = vld [vmem:[#allocation3 + $0x50] sm:$0xff]
        %v4532 = vld [vmem:[#allocation3 + $0x58] sm:$0xff]
        %v4533 = vld [vmem:[#allocation3 + $0x60] sm:$0xff]
        %v4534 = vld [vmem:[#allocation3 + $0x68] sm:$0xff]
        %v4535 = vld [vmem:[#allocation3 + $0x70] sm:$0xff]
        %v4536 = vld [vmem:[#allocation3 + $0x78] sm:$0xff]
        %v4537 = vld [vmem:[#allocation3 + $0x80] sm:$0xff]
        %v4538 = vld [vmem:[#allocation3 + $0x88] sm:$0xff]
        %v4539 = vld [vmem:[#allocation3 + $0x90] sm:$0xff]
        %v4540 = vld [vmem:[#allocation3 + $0x98] sm:$0xff]
        %v4541 = vld [vmem:[#allocation3 + $0xa0] sm:$0xff]
        %v4542 = vld [vmem:[#allocation3 + $0xa8] sm:$0xff]
        %v4543 = vld [vmem:[#allocation3 + $0xb0] sm:$0xff]
        %v4544 = vld [vmem:[#allocation3 + $0xb8] sm:$0xff]
        %v4545 = vld [vmem:[#allocation3 + $0xc0] sm:$0xff]
        %v4546 = vld [vmem:[#allocation3 + $0xc8] sm:$0xff]
        %v4547 = vld [vmem:[#allocation3 + $0xd0] sm:$0xff]
        %v4548 = vld [vmem:[#allocation3 + $0xd8] sm:$0xff]
        %v4549 = vld [vmem:[#allocation3 + $0xe0] sm:$0xff]
        %v4550 = vld [vmem:[#allocation3 + $0xe8] sm:$0xff]
        %v4551 = vld [vmem:[#allocation3 + $0xf0] sm:$0xff]
        %v4552 = vld [vmem:[#allocation3 + $0xf8] sm:$0xff]
        %4553 = vst.msk [vmem:[#allocation4 + $0x18] sm:$0xff] %vm2367, %v4525
        %4554 = vst.msk [vmem:[#allocation4 + $0x40] sm:$0xff] %vm2367, %v4526
        %4555 = vst.msk [vmem:[#allocation4 + $0x68] sm:$0xff] %vm2367, %v4527
        %4556 = vst.msk [vmem:[#allocation4 + $0x90] sm:$0xff] %vm2367, %v4528
        %4557 = vst.msk [vmem:[#allocation4 + $0xb8] sm:$0xff] %vm2367, %v4529
        %4558 = vst.msk [vmem:[#allocation4 + $0xe0] sm:$0xff] %vm2367, %v4530
        %4559 = vst.msk [vmem:[#allocation4 + $0x108] sm:$0xff] %vm2367, %v4531
        %4560 = vst.msk [vmem:[#allocation4 + $0x130] sm:$0xff] %vm2367, %v4532
        %4561 = vst.msk [vmem:[#allocation4 + $0x158] sm:$0xff] %vm2367, %v4533
        %4562 = vst.msk [vmem:[#allocation4 + $0x180] sm:$0xff] %vm2367, %v4534
        %4563 = vst.msk [vmem:[#allocation4 + $0x1a8] sm:$0xff] %vm2367, %v4535
        %4564 = vst.msk [vmem:[#allocation4 + $0x1d0] sm:$0xff] %vm2367, %v4536
        %4565 = vst.msk [vmem:[#allocation4 + $0x1f8] sm:$0xff] %vm2367, %v4537
        %4566 = vst.msk [vmem:[#allocation4 + $0x220] sm:$0xff] %vm2367, %v4538
        %4567 = vst.msk [vmem:[#allocation4 + $0x248] sm:$0xff] %vm2367, %v4539
        %4568 = vst.msk [vmem:[#allocation4 + $0x270] sm:$0xff] %vm2367, %v4540
        %4569 = vst.msk [vmem:[#allocation4 + $0x298] sm:$0xff] %vm2367, %v4541
        %4570 = vst.msk [vmem:[#allocation4 + $0x2c0] sm:$0xff] %vm2367, %v4542
        %4571 = vst.msk [vmem:[#allocation4 + $0x2e8] sm:$0xff] %vm2367, %v4543
        %4572 = vst.msk [vmem:[#allocation4 + $0x310] sm:$0xff] %vm2367, %v4544
        %4573 = vst.msk [vmem:[#allocation4 + $0x338] sm:$0xff] %vm2367, %v4545
        %4574 = vst.msk [vmem:[#allocation4 + $0x360] sm:$0xff] %vm2367, %v4546
        %4575 = vst.msk [vmem:[#allocation4 + $0x388] sm:$0xff] %vm2367, %v4547
        %4576 = vst.msk [vmem:[#allocation4 + $0x3b0] sm:$0xff] %vm2367, %v4548
        %4577 = vst.msk [vmem:[#allocation4 + $0x3d8] sm:$0xff] %vm2367, %v4549
        %4578 = vst.msk [vmem:[#allocation4 + $0x400] sm:$0xff] %vm2367, %v4550
        %4579 = vst.msk [vmem:[#allocation4 + $0x428] sm:$0xff] %vm2367, %v4551
        %4580 = vst.msk [vmem:[#allocation4 + $0x450] sm:$0xff] %vm2367, %v4552
        %v4581 = vld [vmem:[#allocation3 + $0x21] sm:$0xff]
        %v4582 = vld [vmem:[#allocation3 + $0x29] sm:$0xff]
        %v4583 = vld [vmem:[#allocation3 + $0x31] sm:$0xff]
        %v4584 = vld [vmem:[#allocation3 + $0x39] sm:$0xff]
        %v4585 = vld [vmem:[#allocation3 + $0x41] sm:$0xff]
        %v4586 = vld [vmem:[#allocation3 + $0x49] sm:$0xff]
        %v4587 = vld [vmem:[#allocation3 + $0x51] sm:$0xff]
        %v4588 = vld [vmem:[#allocation3 + $0x59] sm:$0xff]
        %v4589 = vld [vmem:[#allocation3 + $0x61] sm:$0xff]
        %v4590 = vld [vmem:[#allocation3 + $0x69] sm:$0xff]
        %v4591 = vld [vmem:[#allocation3 + $0x71] sm:$0xff]
        %v4592 = vld [vmem:[#allocation3 + $0x79] sm:$0xff]
        %v4593 = vld [vmem:[#allocation3 + $0x81] sm:$0xff]
        %v4594 = vld [vmem:[#allocation3 + $0x89] sm:$0xff]
        %v4595 = vld [vmem:[#allocation3 + $0x91] sm:$0xff]
        %v4596 = vld [vmem:[#allocation3 + $0x99] sm:$0xff]
        %v4597 = vld [vmem:[#allocation3 + $0xa1] sm:$0xff]
        %v4598 = vld [vmem:[#allocation3 + $0xa9] sm:$0xff]
        %v4599 = vld [vmem:[#allocation3 + $0xb1] sm:$0xff]
        %v4600 = vld [vmem:[#allocation3 + $0xb9] sm:$0xff]
        %v4601 = vld [vmem:[#allocation3 + $0xc1] sm:$0xff]
        %v4602 = vld [vmem:[#allocation3 + $0xc9] sm:$0xff]
        %v4603 = vld [vmem:[#allocation3 + $0xd1] sm:$0xff]
        %v4604 = vld [vmem:[#allocation3 + $0xd9] sm:$0xff]
        %v4605 = vld [vmem:[#allocation3 + $0xe1] sm:$0xff]
        %v4606 = vld [vmem:[#allocation3 + $0xe9] sm:$0xff]
        %v4607 = vld [vmem:[#allocation3 + $0xf1] sm:$0xff]
        %v4608 = vld [vmem:[#allocation3 + $0xf9] sm:$0xff]
        %4637 = vrot.lane.b32.xlu0 %v4581, 64
        %v4638 = vpop.permute.xlu0 %4637
        %4639 = vrot.lane.b32.xlu0 %v4582, 64
        %v4640 = vpop.permute.xlu0 %4639
        %4641 = vrot.lane.b32.xlu0 %v4583, 64
        %v4642 = vpop.permute.xlu0 %4641
        %4643 = vrot.lane.b32.xlu0 %v4584, 64
        %v4644 = vpop.permute.xlu0 %4643
        %4645 = vrot.lane.b32.xlu0 %v4585, 64
        %v4646 = vpop.permute.xlu0 %4645
        %4647 = vrot.lane.b32.xlu0 %v4586, 64
        %v4648 = vpop.permute.xlu0 %4647
        %4649 = vrot.lane.b32.xlu0 %v4587, 64
        %v4650 = vpop.permute.xlu0 %4649
        %4651 = vrot.lane.b32.xlu0 %v4588, 64
        %v4652 = vpop.permute.xlu0 %4651
        %4653 = vrot.lane.b32.xlu0 %v4589, 64
        %v4654 = vpop.permute.xlu0 %4653
        %4655 = vrot.lane.b32.xlu0 %v4590, 64
        %v4656 = vpop.permute.xlu0 %4655
        %4657 = vrot.lane.b32.xlu0 %v4591, 64
        %v4658 = vpop.permute.xlu0 %4657
        %4659 = vrot.lane.b32.xlu0 %v4592, 64
        %v4660 = vpop.permute.xlu0 %4659
        %4661 = vrot.lane.b32.xlu0 %v4593, 64
        %v4662 = vpop.permute.xlu0 %4661
        %4663 = vrot.lane.b32.xlu0 %v4594, 64
        %v4664 = vpop.permute.xlu0 %4663
        %4665 = vrot.lane.b32.xlu0 %v4595, 64
        %v4666 = vpop.permute.xlu0 %4665
        %4667 = vrot.lane.b32.xlu0 %v4596, 64
        %v4668 = vpop.permute.xlu0 %4667
        %4669 = vrot.lane.b32.xlu0 %v4597, 64
        %v4670 = vpop.permute.xlu0 %4669
        %4671 = vrot.lane.b32.xlu0 %v4598, 64
        %v4672 = vpop.permute.xlu0 %4671
        %4673 = vrot.lane.b32.xlu0 %v4599, 64
        %v4674 = vpop.permute.xlu0 %4673
        %4675 = vrot.lane.b32.xlu0 %v4600, 64
        %v4676 = vpop.permute.xlu0 %4675
        %4677 = vrot.lane.b32.xlu0 %v4601, 64
        %v4678 = vpop.permute.xlu0 %4677
        %4679 = vrot.lane.b32.xlu0 %v4602, 64
        %v4680 = vpop.permute.xlu0 %4679
        %4681 = vrot.lane.b32.xlu0 %v4603, 64
        %v4682 = vpop.permute.xlu0 %4681
        %4683 = vrot.lane.b32.xlu0 %v4604, 64
        %v4684 = vpop.permute.xlu0 %4683
        %4685 = vrot.lane.b32.xlu0 %v4605, 64
        %v4686 = vpop.permute.xlu0 %4685
        %4687 = vrot.lane.b32.xlu0 %v4606, 64
        %v4688 = vpop.permute.xlu0 %4687
        %4689 = vrot.lane.b32.xlu0 %v4607, 64
        %v4690 = vpop.permute.xlu0 %4689
        %4691 = vrot.lane.b32.xlu0 %v4608, 64
        %v4692 = vpop.permute.xlu0 %4691
        %4721 = vst.msk [vmem:[#allocation4 + $0x18] sm:$0xff] %vm4048, %v4638
        %4722 = vst.msk [vmem:[#allocation4 + $0x40] sm:$0xff] %vm4048, %v4640
        %4723 = vst.msk [vmem:[#allocation4 + $0x68] sm:$0xff] %vm4048, %v4642
        %4724 = vst.msk [vmem:[#allocation4 + $0x90] sm:$0xff] %vm4048, %v4644
        %4725 = vst.msk [vmem:[#allocation4 + $0xb8] sm:$0xff] %vm4048, %v4646
        %4726 = vst.msk [vmem:[#allocation4 + $0xe0] sm:$0xff] %vm4048, %v4648
        %4727 = vst.msk [vmem:[#allocation4 + $0x108] sm:$0xff] %vm4048, %v4650
        %4728 = vst.msk [vmem:[#allocation4 + $0x130] sm:$0xff] %vm4048, %v4652
        %4729 = vst.msk [vmem:[#allocation4 + $0x158] sm:$0xff] %vm4048, %v4654
        %4730 = vst.msk [vmem:[#allocation4 + $0x180] sm:$0xff] %vm4048, %v4656
        %4731 = vst.msk [vmem:[#allocation4 + $0x1a8] sm:$0xff] %vm4048, %v4658
        %4732 = vst.msk [vmem:[#allocation4 + $0x1d0] sm:$0xff] %vm4048, %v4660
        %4733 = vst.msk [vmem:[#allocation4 + $0x1f8] sm:$0xff] %vm4048, %v4662
        %4734 = vst.msk [vmem:[#allocation4 + $0x220] sm:$0xff] %vm4048, %v4664
        %4735 = vst.msk [vmem:[#allocation4 + $0x248] sm:$0xff] %vm4048, %v4666
        %4736 = vst.msk [vmem:[#allocation4 + $0x270] sm:$0xff] %vm4048, %v4668
        %4737 = vst.msk [vmem:[#allocation4 + $0x298] sm:$0xff] %vm4048, %v4670
        %4738 = vst.msk [vmem:[#allocation4 + $0x2c0] sm:$0xff] %vm4048, %v4672
        %4739 = vst.msk [vmem:[#allocation4 + $0x2e8] sm:$0xff] %vm4048, %v4674
        %4740 = vst.msk [vmem:[#allocation4 + $0x310] sm:$0xff] %vm4048, %v4676
        %4741 = vst.msk [vmem:[#allocation4 + $0x338] sm:$0xff] %vm4048, %v4678
        %4742 = vst.msk [vmem:[#allocation4 + $0x360] sm:$0xff] %vm4048, %v4680
        %4743 = vst.msk [vmem:[#allocation4 + $0x388] sm:$0xff] %vm4048, %v4682
        %4744 = vst.msk [vmem:[#allocation4 + $0x3b0] sm:$0xff] %vm4048, %v4684
        %4745 = vst.msk [vmem:[#allocation4 + $0x3d8] sm:$0xff] %vm4048, %v4686
        %4746 = vst.msk [vmem:[#allocation4 + $0x400] sm:$0xff] %vm4048, %v4688
        %4747 = vst.msk [vmem:[#allocation4 + $0x428] sm:$0xff] %vm4048, %v4690
        %4748 = vst.msk [vmem:[#allocation4 + $0x450] sm:$0xff] %vm4048, %v4692
        %v4749 = vld [vmem:[#allocation3 + $0x22] sm:$0xff]
        %v4750 = vld [vmem:[#allocation3 + $0x2a] sm:$0xff]
        %v4751 = vld [vmem:[#allocation3 + $0x32] sm:$0xff]
        %v4752 = vld [vmem:[#allocation3 + $0x3a] sm:$0xff]
        %v4753 = vld [vmem:[#allocation3 + $0x42] sm:$0xff]
        %v4754 = vld [vmem:[#allocation3 + $0x4a] sm:$0xff]
        %v4755 = vld [vmem:[#allocation3 + $0x52] sm:$0xff]
        %v4756 = vld [vmem:[#allocation3 + $0x5a] sm:$0xff]
        %v4757 = vld [vmem:[#allocation3 + $0x62] sm:$0xff]
        %v4758 = vld [vmem:[#allocation3 + $0x6a] sm:$0xff]
        %v4759 = vld [vmem:[#allocation3 + $0x72] sm:$0xff]
        %v4760 = vld [vmem:[#allocation3 + $0x7a] sm:$0xff]
        %v4761 = vld [vmem:[#allocation3 + $0x82] sm:$0xff]
        %v4762 = vld [vmem:[#allocation3 + $0x8a] sm:$0xff]
        %v4763 = vld [vmem:[#allocation3 + $0x92] sm:$0xff]
        %v4764 = vld [vmem:[#allocation3 + $0x9a] sm:$0xff]
        %v4765 = vld [vmem:[#allocation3 + $0xa2] sm:$0xff]
        %v4766 = vld [vmem:[#allocation3 + $0xaa] sm:$0xff]
        %v4767 = vld [vmem:[#allocation3 + $0xb2] sm:$0xff]
        %v4768 = vld [vmem:[#allocation3 + $0xba] sm:$0xff]
        %v4769 = vld [vmem:[#allocation3 + $0xc2] sm:$0xff]
        %v4770 = vld [vmem:[#allocation3 + $0xca] sm:$0xff]
        %v4771 = vld [vmem:[#allocation3 + $0xd2] sm:$0xff]
        %v4772 = vld [vmem:[#allocation3 + $0xda] sm:$0xff]
        %v4773 = vld [vmem:[#allocation3 + $0xe2] sm:$0xff]
        %v4774 = vld [vmem:[#allocation3 + $0xea] sm:$0xff]
        %v4775 = vld [vmem:[#allocation3 + $0xf2] sm:$0xff]
        %v4776 = vld [vmem:[#allocation3 + $0xfa] sm:$0xff]
        %4777 = vst.msk [vmem:[#allocation4 + $0x20] sm:$0xff] %vm2367, %v4749
        %4778 = vst.msk [vmem:[#allocation4 + $0x48] sm:$0xff] %vm2367, %v4750
        %4779 = vst.msk [vmem:[#allocation4 + $0x70] sm:$0xff] %vm2367, %v4751
        %4780 = vst.msk [vmem:[#allocation4 + $0x98] sm:$0xff] %vm2367, %v4752
        %4781 = vst.msk [vmem:[#allocation4 + $0xc0] sm:$0xff] %vm2367, %v4753
        %4782 = vst.msk [vmem:[#allocation4 + $0xe8] sm:$0xff] %vm2367, %v4754
        %4783 = vst.msk [vmem:[#allocation4 + $0x110] sm:$0xff] %vm2367, %v4755
        %4784 = vst.msk [vmem:[#allocation4 + $0x138] sm:$0xff] %vm2367, %v4756
        %4785 = vst.msk [vmem:[#allocation4 + $0x160] sm:$0xff] %vm2367, %v4757
        %4786 = vst.msk [vmem:[#allocation4 + $0x188] sm:$0xff] %vm2367, %v4758
        %4787 = vst.msk [vmem:[#allocation4 + $0x1b0] sm:$0xff] %vm2367, %v4759
        %4788 = vst.msk [vmem:[#allocation4 + $0x1d8] sm:$0xff] %vm2367, %v4760
        %4789 = vst.msk [vmem:[#allocation4 + $0x200] sm:$0xff] %vm2367, %v4761
        %4790 = vst.msk [vmem:[#allocation4 + $0x228] sm:$0xff] %vm2367, %v4762
        %4791 = vst.msk [vmem:[#allocation4 + $0x250] sm:$0xff] %vm2367, %v4763
        %4792 = vst.msk [vmem:[#allocation4 + $0x278] sm:$0xff] %vm2367, %v4764
        %4793 = vst.msk [vmem:[#allocation4 + $0x2a0] sm:$0xff] %vm2367, %v4765
        %4794 = vst.msk [vmem:[#allocation4 + $0x2c8] sm:$0xff] %vm2367, %v4766
        %4795 = vst.msk [vmem:[#allocation4 + $0x2f0] sm:$0xff] %vm2367, %v4767
        %4796 = vst.msk [vmem:[#allocation4 + $0x318] sm:$0xff] %vm2367, %v4768
        %4797 = vst.msk [vmem:[#allocation4 + $0x340] sm:$0xff] %vm2367, %v4769
        %4798 = vst.msk [vmem:[#allocation4 + $0x368] sm:$0xff] %vm2367, %v4770
        %4799 = vst.msk [vmem:[#allocation4 + $0x390] sm:$0xff] %vm2367, %v4771
        %4800 = vst.msk [vmem:[#allocation4 + $0x3b8] sm:$0xff] %vm2367, %v4772
        %4801 = vst.msk [vmem:[#allocation4 + $0x3e0] sm:$0xff] %vm2367, %v4773
        %4802 = vst.msk [vmem:[#allocation4 + $0x408] sm:$0xff] %vm2367, %v4774
        %4803 = vst.msk [vmem:[#allocation4 + $0x430] sm:$0xff] %vm2367, %v4775
        %4804 = vst.msk [vmem:[#allocation4 + $0x458] sm:$0xff] %vm2367, %v4776
        %v4805 = vld [vmem:[#allocation3 + $0x100] sm:$0xff]
        %v4806 = vld [vmem:[#allocation3 + $0x108] sm:$0xff]
        %v4807 = vld [vmem:[#allocation3 + $0x110] sm:$0xff]
        %v4808 = vld [vmem:[#allocation3 + $0x118] sm:$0xff]
        %v4809 = vld [vmem:[#allocation3 + $0x120] sm:$0xff]
        %v4810 = vld [vmem:[#allocation3 + $0x128] sm:$0xff]
        %v4811 = vld [vmem:[#allocation3 + $0x130] sm:$0xff]
        %v4812 = vld [vmem:[#allocation3 + $0x138] sm:$0xff]
        %v4813 = vld [vmem:[#allocation3 + $0x140] sm:$0xff]
        %v4814 = vld [vmem:[#allocation3 + $0x148] sm:$0xff]
        %v4815 = vld [vmem:[#allocation3 + $0x150] sm:$0xff]
        %v4816 = vld [vmem:[#allocation3 + $0x158] sm:$0xff]
        %v4817 = vld [vmem:[#allocation3 + $0x160] sm:$0xff]
        %v4818 = vld [vmem:[#allocation3 + $0x168] sm:$0xff]
        %v4819 = vld [vmem:[#allocation3 + $0x170] sm:$0xff]
        %v4820 = vld [vmem:[#allocation3 + $0x178] sm:$0xff]
        %v4821 = vld [vmem:[#allocation3 + $0x180] sm:$0xff]
        %v4822 = vld [vmem:[#allocation3 + $0x188] sm:$0xff]
        %v4823 = vld [vmem:[#allocation3 + $0x190] sm:$0xff]
        %v4824 = vld [vmem:[#allocation3 + $0x198] sm:$0xff]
        %v4825 = vld [vmem:[#allocation3 + $0x1a0] sm:$0xff]
        %v4826 = vld [vmem:[#allocation3 + $0x1a8] sm:$0xff]
        %v4827 = vld [vmem:[#allocation3 + $0x1b0] sm:$0xff]
        %v4828 = vld [vmem:[#allocation3 + $0x1b8] sm:$0xff]
        %v4829 = vld [vmem:[#allocation3 + $0x1c0] sm:$0xff]
        %v4830 = vld [vmem:[#allocation3 + $0x1c8] sm:$0xff]
        %v4831 = vld [vmem:[#allocation3 + $0x1d0] sm:$0xff]
        %v4832 = vld [vmem:[#allocation3 + $0x1d8] sm:$0xff]
        %4833 = vst.msk [vmem:[#allocation4 + $0x460] sm:$0xff] %vm2367, %v4805
        %4834 = vst.msk [vmem:[#allocation4 + $0x488] sm:$0xff] %vm2367, %v4806
        %4835 = vst.msk [vmem:[#allocation4 + $0x4b0] sm:$0xff] %vm2367, %v4807
        %4836 = vst.msk [vmem:[#allocation4 + $0x4d8] sm:$0xff] %vm2367, %v4808
        %4837 = vst.msk [vmem:[#allocation4 + $0x500] sm:$0xff] %vm2367, %v4809
        %4838 = vst.msk [vmem:[#allocation4 + $0x528] sm:$0xff] %vm2367, %v4810
        %4839 = vst.msk [vmem:[#allocation4 + $0x550] sm:$0xff] %vm2367, %v4811
        %4840 = vst.msk [vmem:[#allocation4 + $0x578] sm:$0xff] %vm2367, %v4812
        %4841 = vst.msk [vmem:[#allocation4 + $0x5a0] sm:$0xff] %vm2367, %v4813
        %4842 = vst.msk [vmem:[#allocation4 + $0x5c8] sm:$0xff] %vm2367, %v4814
        %4843 = vst.msk [vmem:[#allocation4 + $0x5f0] sm:$0xff] %vm2367, %v4815
        %4844 = vst.msk [vmem:[#allocation4 + $0x618] sm:$0xff] %vm2367, %v4816
        %4845 = vst.msk [vmem:[#allocation4 + $0x640] sm:$0xff] %vm2367, %v4817
        %4846 = vst.msk [vmem:[#allocation4 + $0x668] sm:$0xff] %vm2367, %v4818
        %4847 = vst.msk [vmem:[#allocation4 + $0x690] sm:$0xff] %vm2367, %v4819
        %4848 = vst.msk [vmem:[#allocation4 + $0x6b8] sm:$0xff] %vm2367, %v4820
        %4849 = vst.msk [vmem:[#allocation4 + $0x6e0] sm:$0xff] %vm2367, %v4821
        %4850 = vst.msk [vmem:[#allocation4 + $0x708] sm:$0xff] %vm2367, %v4822
        %4851 = vst.msk [vmem:[#allocation4 + $0x730] sm:$0xff] %vm2367, %v4823
        %4852 = vst.msk [vmem:[#allocation4 + $0x758] sm:$0xff] %vm2367, %v4824
        %4853 = vst.msk [vmem:[#allocation4 + $0x780] sm:$0xff] %vm2367, %v4825
        %4854 = vst.msk [vmem:[#allocation4 + $0x7a8] sm:$0xff] %vm2367, %v4826
        %4855 = vst.msk [vmem:[#allocation4 + $0x7d0] sm:$0xff] %vm2367, %v4827
        %4856 = vst.msk [vmem:[#allocation4 + $0x7f8] sm:$0xff] %vm2367, %v4828
        %4857 = vst.msk [vmem:[#allocation4 + $0x820] sm:$0xff] %vm2367, %v4829
        %4858 = vst.msk [vmem:[#allocation4 + $0x848] sm:$0xff] %vm2367, %v4830
        %4859 = vst.msk [vmem:[#allocation4 + $0x870] sm:$0xff] %vm2367, %v4831
        %4860 = vst.msk [vmem:[#allocation4 + $0x898] sm:$0xff] %vm2367, %v4832
        %v4861 = vld [vmem:[#allocation3 + $0x101] sm:$0xff]
        %v4862 = vld [vmem:[#allocation3 + $0x109] sm:$0xff]
        %v4863 = vld [vmem:[#allocation3 + $0x111] sm:$0xff]
        %v4864 = vld [vmem:[#allocation3 + $0x119] sm:$0xff]
        %v4865 = vld [vmem:[#allocation3 + $0x121] sm:$0xff]
        %v4866 = vld [vmem:[#allocation3 + $0x129] sm:$0xff]
        %v4867 = vld [vmem:[#allocation3 + $0x131] sm:$0xff]
        %v4868 = vld [vmem:[#allocation3 + $0x139] sm:$0xff]
        %v4869 = vld [vmem:[#allocation3 + $0x141] sm:$0xff]
        %v4870 = vld [vmem:[#allocation3 + $0x149] sm:$0xff]
        %v4871 = vld [vmem:[#allocation3 + $0x151] sm:$0xff]
        %v4872 = vld [vmem:[#allocation3 + $0x159] sm:$0xff]
        %v4873 = vld [vmem:[#allocation3 + $0x161] sm:$0xff]
        %v4874 = vld [vmem:[#allocation3 + $0x169] sm:$0xff]
        %v4875 = vld [vmem:[#allocation3 + $0x171] sm:$0xff]
        %v4876 = vld [vmem:[#allocation3 + $0x179] sm:$0xff]
        %v4877 = vld [vmem:[#allocation3 + $0x181] sm:$0xff]
        %v4878 = vld [vmem:[#allocation3 + $0x189] sm:$0xff]
        %v4879 = vld [vmem:[#allocation3 + $0x191] sm:$0xff]
        %v4880 = vld [vmem:[#allocation3 + $0x199] sm:$0xff]
        %v4881 = vld [vmem:[#allocation3 + $0x1a1] sm:$0xff]
        %v4882 = vld [vmem:[#allocation3 + $0x1a9] sm:$0xff]
        %v4883 = vld [vmem:[#allocation3 + $0x1b1] sm:$0xff]
        %v4884 = vld [vmem:[#allocation3 + $0x1b9] sm:$0xff]
        %v4885 = vld [vmem:[#allocation3 + $0x1c1] sm:$0xff]
        %v4886 = vld [vmem:[#allocation3 + $0x1c9] sm:$0xff]
        %v4887 = vld [vmem:[#allocation3 + $0x1d1] sm:$0xff]
        %v4888 = vld [vmem:[#allocation3 + $0x1d9] sm:$0xff]
        %4917 = vrot.lane.b32.xlu0 %v4861, 64
        %v4918 = vpop.permute.xlu0 %4917
        %4919 = vrot.lane.b32.xlu0 %v4862, 64
        %v4920 = vpop.permute.xlu0 %4919
        %4921 = vrot.lane.b32.xlu0 %v4863, 64
        %v4922 = vpop.permute.xlu0 %4921
        %4923 = vrot.lane.b32.xlu0 %v4864, 64
        %v4924 = vpop.permute.xlu0 %4923
        %4925 = vrot.lane.b32.xlu0 %v4865, 64
        %v4926 = vpop.permute.xlu0 %4925
        %4927 = vrot.lane.b32.xlu0 %v4866, 64
        %v4928 = vpop.permute.xlu0 %4927
        %4929 = vrot.lane.b32.xlu0 %v4867, 64
        %v4930 = vpop.permute.xlu0 %4929
        %4931 = vrot.lane.b32.xlu0 %v4868, 64
        %v4932 = vpop.permute.xlu0 %4931
        %4933 = vrot.lane.b32.xlu0 %v4869, 64
        %v4934 = vpop.permute.xlu0 %4933
        %4935 = vrot.lane.b32.xlu0 %v4870, 64
        %v4936 = vpop.permute.xlu0 %4935
        %4937 = vrot.lane.b32.xlu0 %v4871, 64
        %v4938 = vpop.permute.xlu0 %4937
        %4939 = vrot.lane.b32.xlu0 %v4872, 64
        %v4940 = vpop.permute.xlu0 %4939
        %4941 = vrot.lane.b32.xlu0 %v4873, 64
        %v4942 = vpop.permute.xlu0 %4941
        %4943 = vrot.lane.b32.xlu0 %v4874, 64
        %v4944 = vpop.permute.xlu0 %4943
        %4945 = vrot.lane.b32.xlu0 %v4875, 64
        %v4946 = vpop.permute.xlu0 %4945
        %4947 = vrot.lane.b32.xlu0 %v4876, 64
        %v4948 = vpop.permute.xlu0 %4947
        %4949 = vrot.lane.b32.xlu0 %v4877, 64
        %v4950 = vpop.permute.xlu0 %4949
        %4951 = vrot.lane.b32.xlu0 %v4878, 64
        %v4952 = vpop.permute.xlu0 %4951
        %4953 = vrot.lane.b32.xlu0 %v4879, 64
        %v4954 = vpop.permute.xlu0 %4953
        %4955 = vrot.lane.b32.xlu0 %v4880, 64
        %v4956 = vpop.permute.xlu0 %4955
        %4957 = vrot.lane.b32.xlu0 %v4881, 64
        %v4958 = vpop.permute.xlu0 %4957
        %4959 = vrot.lane.b32.xlu0 %v4882, 64
        %v4960 = vpop.permute.xlu0 %4959
        %4961 = vrot.lane.b32.xlu0 %v4883, 64
        %v4962 = vpop.permute.xlu0 %4961
        %4963 = vrot.lane.b32.xlu0 %v4884, 64
        %v4964 = vpop.permute.xlu0 %4963
        %4965 = vrot.lane.b32.xlu0 %v4885, 64
        %v4966 = vpop.permute.xlu0 %4965
        %4967 = vrot.lane.b32.xlu0 %v4886, 64
        %v4968 = vpop.permute.xlu0 %4967
        %4969 = vrot.lane.b32.xlu0 %v4887, 64
        %v4970 = vpop.permute.xlu0 %4969
        %4971 = vrot.lane.b32.xlu0 %v4888, 64
        %v4972 = vpop.permute.xlu0 %4971
        %5001 = vst.msk [vmem:[#allocation4 + $0x460] sm:$0xff] %vm4048, %v4918
        %5002 = vst.msk [vmem:[#allocation4 + $0x488] sm:$0xff] %vm4048, %v4920
        %5003 = vst.msk [vmem:[#allocation4 + $0x4b0] sm:$0xff] %vm4048, %v4922
        %5004 = vst.msk [vmem:[#allocation4 + $0x4d8] sm:$0xff] %vm4048, %v4924
        %5005 = vst.msk [vmem:[#allocation4 + $0x500] sm:$0xff] %vm4048, %v4926
        %5006 = vst.msk [vmem:[#allocation4 + $0x528] sm:$0xff] %vm4048, %v4928
        %5007 = vst.msk [vmem:[#allocation4 + $0x550] sm:$0xff] %vm4048, %v4930
        %5008 = vst.msk [vmem:[#allocation4 + $0x578] sm:$0xff] %vm4048, %v4932
        %5009 = vst.msk [vmem:[#allocation4 + $0x5a0] sm:$0xff] %vm4048, %v4934
        %5010 = vst.msk [vmem:[#allocation4 + $0x5c8] sm:$0xff] %vm4048, %v4936
        %5011 = vst.msk [vmem:[#allocation4 + $0x5f0] sm:$0xff] %vm4048, %v4938
        %5012 = vst.msk [vmem:[#allocation4 + $0x618] sm:$0xff] %vm4048, %v4940
        %5013 = vst.msk [vmem:[#allocation4 + $0x640] sm:$0xff] %vm4048, %v4942
        %5014 = vst.msk [vmem:[#allocation4 + $0x668] sm:$0xff] %vm4048, %v4944
        %5015 = vst.msk [vmem:[#allocation4 + $0x690] sm:$0xff] %vm4048, %v4946
        %5016 = vst.msk [vmem:[#allocation4 + $0x6b8] sm:$0xff] %vm4048, %v4948
        %5017 = vst.msk [vmem:[#allocation4 + $0x6e0] sm:$0xff] %vm4048, %v4950
        %5018 = vst.msk [vmem:[#allocation4 + $0x708] sm:$0xff] %vm4048, %v4952
        %5019 = vst.msk [vmem:[#allocation4 + $0x730] sm:$0xff] %vm4048, %v4954
        %5020 = vst.msk [vmem:[#allocation4 + $0x758] sm:$0xff] %vm4048, %v4956
        %5021 = vst.msk [vmem:[#allocation4 + $0x780] sm:$0xff] %vm4048, %v4958
        %5022 = vst.msk [vmem:[#allocation4 + $0x7a8] sm:$0xff] %vm4048, %v4960
        %5023 = vst.msk [vmem:[#allocation4 + $0x7d0] sm:$0xff] %vm4048, %v4962
        %5024 = vst.msk [vmem:[#allocation4 + $0x7f8] sm:$0xff] %vm4048, %v4964
        %5025 = vst.msk [vmem:[#allocation4 + $0x820] sm:$0xff] %vm4048, %v4966
        %5026 = vst.msk [vmem:[#allocation4 + $0x848] sm:$0xff] %vm4048, %v4968
        %5027 = vst.msk [vmem:[#allocation4 + $0x870] sm:$0xff] %vm4048, %v4970
        %5028 = vst.msk [vmem:[#allocation4 + $0x898] sm:$0xff] %vm4048, %v4972
        %v5029 = vld [vmem:[#allocation3 + $0x102] sm:$0xff]
        %v5030 = vld [vmem:[#allocation3 + $0x10a] sm:$0xff]
        %v5031 = vld [vmem:[#allocation3 + $0x112] sm:$0xff]
        %v5032 = vld [vmem:[#allocation3 + $0x11a] sm:$0xff]
        %v5033 = vld [vmem:[#allocation3 + $0x122] sm:$0xff]
        %v5034 = vld [vmem:[#allocation3 + $0x12a] sm:$0xff]
        %v5035 = vld [vmem:[#allocation3 + $0x132] sm:$0xff]
        %v5036 = vld [vmem:[#allocation3 + $0x13a] sm:$0xff]
        %v5037 = vld [vmem:[#allocation3 + $0x142] sm:$0xff]
        %v5038 = vld [vmem:[#allocation3 + $0x14a] sm:$0xff]
        %v5039 = vld [vmem:[#allocation3 + $0x152] sm:$0xff]
        %v5040 = vld [vmem:[#allocation3 + $0x15a] sm:$0xff]
        %v5041 = vld [vmem:[#allocation3 + $0x162] sm:$0xff]
        %v5042 = vld [vmem:[#allocation3 + $0x16a] sm:$0xff]
        %v5043 = vld [vmem:[#allocation3 + $0x172] sm:$0xff]
        %v5044 = vld [vmem:[#allocation3 + $0x17a] sm:$0xff]
        %v5045 = vld [vmem:[#allocation3 + $0x182] sm:$0xff]
        %v5046 = vld [vmem:[#allocation3 + $0x18a] sm:$0xff]
        %v5047 = vld [vmem:[#allocation3 + $0x192] sm:$0xff]
        %v5048 = vld [vmem:[#allocation3 + $0x19a] sm:$0xff]
        %v5049 = vld [vmem:[#allocation3 + $0x1a2] sm:$0xff]
        %v5050 = vld [vmem:[#allocation3 + $0x1aa] sm:$0xff]
        %v5051 = vld [vmem:[#allocation3 + $0x1b2] sm:$0xff]
        %v5052 = vld [vmem:[#allocation3 + $0x1ba] sm:$0xff]
        %v5053 = vld [vmem:[#allocation3 + $0x1c2] sm:$0xff]
        %v5054 = vld [vmem:[#allocation3 + $0x1ca] sm:$0xff]
        %v5055 = vld [vmem:[#allocation3 + $0x1d2] sm:$0xff]
        %v5056 = vld [vmem:[#allocation3 + $0x1da] sm:$0xff]
        %5057 = vst.msk [vmem:[#allocation4 + $0x468] sm:$0xff] %vm2367, %v5029
        %5058 = vst.msk [vmem:[#allocation4 + $0x490] sm:$0xff] %vm2367, %v5030
        %5059 = vst.msk [vmem:[#allocation4 + $0x4b8] sm:$0xff] %vm2367, %v5031
        %5060 = vst.msk [vmem:[#allocation4 + $0x4e0] sm:$0xff] %vm2367, %v5032
        %5061 = vst.msk [vmem:[#allocation4 + $0x508] sm:$0xff] %vm2367, %v5033
        %5062 = vst.msk [vmem:[#allocation4 + $0x530] sm:$0xff] %vm2367, %v5034
        %5063 = vst.msk [vmem:[#allocation4 + $0x558] sm:$0xff] %vm2367, %v5035
        %5064 = vst.msk [vmem:[#allocation4 + $0x580] sm:$0xff] %vm2367, %v5036
        %5065 = vst.msk [vmem:[#allocation4 + $0x5a8] sm:$0xff] %vm2367, %v5037
        %5066 = vst.msk [vmem:[#allocation4 + $0x5d0] sm:$0xff] %vm2367, %v5038
        %5067 = vst.msk [vmem:[#allocation4 + $0x5f8] sm:$0xff] %vm2367, %v5039
        %5068 = vst.msk [vmem:[#allocation4 + $0x620] sm:$0xff] %vm2367, %v5040
        %5069 = vst.msk [vmem:[#allocation4 + $0x648] sm:$0xff] %vm2367, %v5041
        %5070 = vst.msk [vmem:[#allocation4 + $0x670] sm:$0xff] %vm2367, %v5042
        %5071 = vst.msk [vmem:[#allocation4 + $0x698] sm:$0xff] %vm2367, %v5043
        %5072 = vst.msk [vmem:[#allocation4 + $0x6c0] sm:$0xff] %vm2367, %v5044
        %5073 = vst.msk [vmem:[#allocation4 + $0x6e8] sm:$0xff] %vm2367, %v5045
        %5074 = vst.msk [vmem:[#allocation4 + $0x710] sm:$0xff] %vm2367, %v5046
        %5075 = vst.msk [vmem:[#allocation4 + $0x738] sm:$0xff] %vm2367, %v5047
        %5076 = vst.msk [vmem:[#allocation4 + $0x760] sm:$0xff] %vm2367, %v5048
        %5077 = vst.msk [vmem:[#allocation4 + $0x788] sm:$0xff] %vm2367, %v5049
        %5078 = vst.msk [vmem:[#allocation4 + $0x7b0] sm:$0xff] %vm2367, %v5050
        %5079 = vst.msk [vmem:[#allocation4 + $0x7d8] sm:$0xff] %vm2367, %v5051
        %5080 = vst.msk [vmem:[#allocation4 + $0x800] sm:$0xff] %vm2367, %v5052
        %5081 = vst.msk [vmem:[#allocation4 + $0x828] sm:$0xff] %vm2367, %v5053
        %5082 = vst.msk [vmem:[#allocation4 + $0x850] sm:$0xff] %vm2367, %v5054
        %5083 = vst.msk [vmem:[#allocation4 + $0x878] sm:$0xff] %vm2367, %v5055
        %5084 = vst.msk [vmem:[#allocation4 + $0x8a0] sm:$0xff] %vm2367, %v5056
        %v5085 = vld [vmem:[#allocation3 + $0x110] sm:$0xff]
        %v5086 = vld [vmem:[#allocation3 + $0x118] sm:$0xff]
        %v5087 = vld [vmem:[#allocation3 + $0x120] sm:$0xff]
        %v5088 = vld [vmem:[#allocation3 + $0x128] sm:$0xff]
        %v5089 = vld [vmem:[#allocation3 + $0x130] sm:$0xff]
        %v5090 = vld [vmem:[#allocation3 + $0x138] sm:$0xff]
        %v5091 = vld [vmem:[#allocation3 + $0x140] sm:$0xff]
        %v5092 = vld [vmem:[#allocation3 + $0x148] sm:$0xff]
        %v5093 = vld [vmem:[#allocation3 + $0x150] sm:$0xff]
        %v5094 = vld [vmem:[#allocation3 + $0x158] sm:$0xff]
        %v5095 = vld [vmem:[#allocation3 + $0x160] sm:$0xff]
        %v5096 = vld [vmem:[#allocation3 + $0x168] sm:$0xff]
        %v5097 = vld [vmem:[#allocation3 + $0x170] sm:$0xff]
        %v5098 = vld [vmem:[#allocation3 + $0x178] sm:$0xff]
        %v5099 = vld [vmem:[#allocation3 + $0x180] sm:$0xff]
        %v5100 = vld [vmem:[#allocation3 + $0x188] sm:$0xff]
        %v5101 = vld [vmem:[#allocation3 + $0x190] sm:$0xff]
        %v5102 = vld [vmem:[#allocation3 + $0x198] sm:$0xff]
        %v5103 = vld [vmem:[#allocation3 + $0x1a0] sm:$0xff]
        %v5104 = vld [vmem:[#allocation3 + $0x1a8] sm:$0xff]
        %v5105 = vld [vmem:[#allocation3 + $0x1b0] sm:$0xff]
        %v5106 = vld [vmem:[#allocation3 + $0x1b8] sm:$0xff]
        %v5107 = vld [vmem:[#allocation3 + $0x1c0] sm:$0xff]
        %v5108 = vld [vmem:[#allocation3 + $0x1c8] sm:$0xff]
        %v5109 = vld [vmem:[#allocation3 + $0x1d0] sm:$0xff]
        %v5110 = vld [vmem:[#allocation3 + $0x1d8] sm:$0xff]
        %v5111 = vld [vmem:[#allocation3 + $0x1e0] sm:$0xff]
        %v5112 = vld [vmem:[#allocation3 + $0x1e8] sm:$0xff]
        %5141 = vrot.lane.b32.xlu0 %v5085, 64
        %v5142 = vpop.permute.xlu0 %5141
        %5143 = vrot.lane.b32.xlu0 %v5086, 64
        %v5144 = vpop.permute.xlu0 %5143
        %5145 = vrot.lane.b32.xlu0 %v5087, 64
        %v5146 = vpop.permute.xlu0 %5145
        %5147 = vrot.lane.b32.xlu0 %v5088, 64
        %v5148 = vpop.permute.xlu0 %5147
        %5149 = vrot.lane.b32.xlu0 %v5089, 64
        %v5150 = vpop.permute.xlu0 %5149
        %5151 = vrot.lane.b32.xlu0 %v5090, 64
        %v5152 = vpop.permute.xlu0 %5151
        %5153 = vrot.lane.b32.xlu0 %v5091, 64
        %v5154 = vpop.permute.xlu0 %5153
        %5155 = vrot.lane.b32.xlu0 %v5092, 64
        %v5156 = vpop.permute.xlu0 %5155
        %5157 = vrot.lane.b32.xlu0 %v5093, 64
        %v5158 = vpop.permute.xlu0 %5157
        %5159 = vrot.lane.b32.xlu0 %v5094, 64
        %v5160 = vpop.permute.xlu0 %5159
        %5161 = vrot.lane.b32.xlu0 %v5095, 64
        %v5162 = vpop.permute.xlu0 %5161
        %5163 = vrot.lane.b32.xlu0 %v5096, 64
        %v5164 = vpop.permute.xlu0 %5163
        %5165 = vrot.lane.b32.xlu0 %v5097, 64
        %v5166 = vpop.permute.xlu0 %5165
        %5167 = vrot.lane.b32.xlu0 %v5098, 64
        %v5168 = vpop.permute.xlu0 %5167
        %5169 = vrot.lane.b32.xlu0 %v5099, 64
        %v5170 = vpop.permute.xlu0 %5169
        %5171 = vrot.lane.b32.xlu0 %v5100, 64
        %v5172 = vpop.permute.xlu0 %5171
        %5173 = vrot.lane.b32.xlu0 %v5101, 64
        %v5174 = vpop.permute.xlu0 %5173
        %5175 = vrot.lane.b32.xlu0 %v5102, 64
        %v5176 = vpop.permute.xlu0 %5175
        %5177 = vrot.lane.b32.xlu0 %v5103, 64
        %v5178 = vpop.permute.xlu0 %5177
        %5179 = vrot.lane.b32.xlu0 %v5104, 64
        %v5180 = vpop.permute.xlu0 %5179
        %5181 = vrot.lane.b32.xlu0 %v5105, 64
        %v5182 = vpop.permute.xlu0 %5181
        %5183 = vrot.lane.b32.xlu0 %v5106, 64
        %v5184 = vpop.permute.xlu0 %5183
        %5185 = vrot.lane.b32.xlu0 %v5107, 64
        %v5186 = vpop.permute.xlu0 %5185
        %5187 = vrot.lane.b32.xlu0 %v5108, 64
        %v5188 = vpop.permute.xlu0 %5187
        %5189 = vrot.lane.b32.xlu0 %v5109, 64
        %v5190 = vpop.permute.xlu0 %5189
        %5191 = vrot.lane.b32.xlu0 %v5110, 64
        %v5192 = vpop.permute.xlu0 %5191
        %5193 = vrot.lane.b32.xlu0 %v5111, 64
        %v5194 = vpop.permute.xlu0 %5193
        %5195 = vrot.lane.b32.xlu0 %v5112, 64
        %v5196 = vpop.permute.xlu0 %5195
        %5225 = vst.msk [vmem:[#allocation4 + $0x468] sm:$0xff] %vm4048, %v5142
        %5226 = vst.msk [vmem:[#allocation4 + $0x490] sm:$0xff] %vm4048, %v5144
        %5227 = vst.msk [vmem:[#allocation4 + $0x4b8] sm:$0xff] %vm4048, %v5146
        %5228 = vst.msk [vmem:[#allocation4 + $0x4e0] sm:$0xff] %vm4048, %v5148
        %5229 = vst.msk [vmem:[#allocation4 + $0x508] sm:$0xff] %vm4048, %v5150
        %5230 = vst.msk [vmem:[#allocation4 + $0x530] sm:$0xff] %vm4048, %v5152
        %5231 = vst.msk [vmem:[#allocation4 + $0x558] sm:$0xff] %vm4048, %v5154
        %5232 = vst.msk [vmem:[#allocation4 + $0x580] sm:$0xff] %vm4048, %v5156
        %5233 = vst.msk [vmem:[#allocation4 + $0x5a8] sm:$0xff] %vm4048, %v5158
        %5234 = vst.msk [vmem:[#allocation4 + $0x5d0] sm:$0xff] %vm4048, %v5160
        %5235 = vst.msk [vmem:[#allocation4 + $0x5f8] sm:$0xff] %vm4048, %v5162
        %5236 = vst.msk [vmem:[#allocation4 + $0x620] sm:$0xff] %vm4048, %v5164
        %5237 = vst.msk [vmem:[#allocation4 + $0x648] sm:$0xff] %vm4048, %v5166
        %5238 = vst.msk [vmem:[#allocation4 + $0x670] sm:$0xff] %vm4048, %v5168
        %5239 = vst.msk [vmem:[#allocation4 + $0x698] sm:$0xff] %vm4048, %v5170
        %5240 = vst.msk [vmem:[#allocation4 + $0x6c0] sm:$0xff] %vm4048, %v5172
        %5241 = vst.msk [vmem:[#allocation4 + $0x6e8] sm:$0xff] %vm4048, %v5174
        %5242 = vst.msk [vmem:[#allocation4 + $0x710] sm:$0xff] %vm4048, %v5176
        %5243 = vst.msk [vmem:[#allocation4 + $0x738] sm:$0xff] %vm4048, %v5178
        %5244 = vst.msk [vmem:[#allocation4 + $0x760] sm:$0xff] %vm4048, %v5180
        %5245 = vst.msk [vmem:[#allocation4 + $0x788] sm:$0xff] %vm4048, %v5182
        %5246 = vst.msk [vmem:[#allocation4 + $0x7b0] sm:$0xff] %vm4048, %v5184
        %5247 = vst.msk [vmem:[#allocation4 + $0x7d8] sm:$0xff] %vm4048, %v5186
        %5248 = vst.msk [vmem:[#allocation4 + $0x800] sm:$0xff] %vm4048, %v5188
        %5249 = vst.msk [vmem:[#allocation4 + $0x828] sm:$0xff] %vm4048, %v5190
        %5250 = vst.msk [vmem:[#allocation4 + $0x850] sm:$0xff] %vm4048, %v5192
        %5251 = vst.msk [vmem:[#allocation4 + $0x878] sm:$0xff] %vm4048, %v5194
        %5252 = vst.msk [vmem:[#allocation4 + $0x8a0] sm:$0xff] %vm4048, %v5196
        %v5253 = vld [vmem:[#allocation3 + $0x111] sm:$0xff]
        %v5254 = vld [vmem:[#allocation3 + $0x119] sm:$0xff]
        %v5255 = vld [vmem:[#allocation3 + $0x121] sm:$0xff]
        %v5256 = vld [vmem:[#allocation3 + $0x129] sm:$0xff]
        %v5257 = vld [vmem:[#allocation3 + $0x131] sm:$0xff]
        %v5258 = vld [vmem:[#allocation3 + $0x139] sm:$0xff]
        %v5259 = vld [vmem:[#allocation3 + $0x141] sm:$0xff]
        %v5260 = vld [vmem:[#allocation3 + $0x149] sm:$0xff]
        %v5261 = vld [vmem:[#allocation3 + $0x151] sm:$0xff]
        %v5262 = vld [vmem:[#allocation3 + $0x159] sm:$0xff]
        %v5263 = vld [vmem:[#allocation3 + $0x161] sm:$0xff]
        %v5264 = vld [vmem:[#allocation3 + $0x169] sm:$0xff]
        %v5265 = vld [vmem:[#allocation3 + $0x171] sm:$0xff]
        %v5266 = vld [vmem:[#allocation3 + $0x179] sm:$0xff]
        %v5267 = vld [vmem:[#allocation3 + $0x181] sm:$0xff]
        %v5268 = vld [vmem:[#allocation3 + $0x189] sm:$0xff]
        %v5269 = vld [vmem:[#allocation3 + $0x191] sm:$0xff]
        %v5270 = vld [vmem:[#allocation3 + $0x199] sm:$0xff]
        %v5271 = vld [vmem:[#allocation3 + $0x1a1] sm:$0xff]
        %v5272 = vld [vmem:[#allocation3 + $0x1a9] sm:$0xff]
        %v5273 = vld [vmem:[#allocation3 + $0x1b1] sm:$0xff]
        %v5274 = vld [vmem:[#allocation3 + $0x1b9] sm:$0xff]
        %v5275 = vld [vmem:[#allocation3 + $0x1c1] sm:$0xff]
        %v5276 = vld [vmem:[#allocation3 + $0x1c9] sm:$0xff]
        %v5277 = vld [vmem:[#allocation3 + $0x1d1] sm:$0xff]
        %v5278 = vld [vmem:[#allocation3 + $0x1d9] sm:$0xff]
        %v5279 = vld [vmem:[#allocation3 + $0x1e1] sm:$0xff]
        %v5280 = vld [vmem:[#allocation3 + $0x1e9] sm:$0xff]
        %5281 = vst.msk [vmem:[#allocation4 + $0x470] sm:$0xff] %vm2367, %v5253
        %5282 = vst.msk [vmem:[#allocation4 + $0x498] sm:$0xff] %vm2367, %v5254
        %5283 = vst.msk [vmem:[#allocation4 + $0x4c0] sm:$0xff] %vm2367, %v5255
        %5284 = vst.msk [vmem:[#allocation4 + $0x4e8] sm:$0xff] %vm2367, %v5256
        %5285 = vst.msk [vmem:[#allocation4 + $0x510] sm:$0xff] %vm2367, %v5257
        %5286 = vst.msk [vmem:[#allocation4 + $0x538] sm:$0xff] %vm2367, %v5258
        %5287 = vst.msk [vmem:[#allocation4 + $0x560] sm:$0xff] %vm2367, %v5259
        %5288 = vst.msk [vmem:[#allocation4 + $0x588] sm:$0xff] %vm2367, %v5260
        %5289 = vst.msk [vmem:[#allocation4 + $0x5b0] sm:$0xff] %vm2367, %v5261
        %5290 = vst.msk [vmem:[#allocation4 + $0x5d8] sm:$0xff] %vm2367, %v5262
        %5291 = vst.msk [vmem:[#allocation4 + $0x600] sm:$0xff] %vm2367, %v5263
        %5292 = vst.msk [vmem:[#allocation4 + $0x628] sm:$0xff] %vm2367, %v5264
        %5293 = vst.msk [vmem:[#allocation4 + $0x650] sm:$0xff] %vm2367, %v5265
        %5294 = vst.msk [vmem:[#allocation4 + $0x678] sm:$0xff] %vm2367, %v5266
        %5295 = vst.msk [vmem:[#allocation4 + $0x6a0] sm:$0xff] %vm2367, %v5267
        %5296 = vst.msk [vmem:[#allocation4 + $0x6c8] sm:$0xff] %vm2367, %v5268
        %5297 = vst.msk [vmem:[#allocation4 + $0x6f0] sm:$0xff] %vm2367, %v5269
        %5298 = vst.msk [vmem:[#allocation4 + $0x718] sm:$0xff] %vm2367, %v5270
        %5299 = vst.msk [vmem:[#allocation4 + $0x740] sm:$0xff] %vm2367, %v5271
        %5300 = vst.msk [vmem:[#allocation4 + $0x768] sm:$0xff] %vm2367, %v5272
        %5301 = vst.msk [vmem:[#allocation4 + $0x790] sm:$0xff] %vm2367, %v5273
        %5302 = vst.msk [vmem:[#allocation4 + $0x7b8] sm:$0xff] %vm2367, %v5274
        %5303 = vst.msk [vmem:[#allocation4 + $0x7e0] sm:$0xff] %vm2367, %v5275
        %5304 = vst.msk [vmem:[#allocation4 + $0x808] sm:$0xff] %vm2367, %v5276
        %5305 = vst.msk [vmem:[#allocation4 + $0x830] sm:$0xff] %vm2367, %v5277
        %5306 = vst.msk [vmem:[#allocation4 + $0x858] sm:$0xff] %vm2367, %v5278
        %5307 = vst.msk [vmem:[#allocation4 + $0x880] sm:$0xff] %vm2367, %v5279
        %5308 = vst.msk [vmem:[#allocation4 + $0x8a8] sm:$0xff] %vm2367, %v5280
        %v5309 = vld [vmem:[#allocation3 + $0x112] sm:$0xff]
        %v5310 = vld [vmem:[#allocation3 + $0x11a] sm:$0xff]
        %v5311 = vld [vmem:[#allocation3 + $0x122] sm:$0xff]
        %v5312 = vld [vmem:[#allocation3 + $0x12a] sm:$0xff]
        %v5313 = vld [vmem:[#allocation3 + $0x132] sm:$0xff]
        %v5314 = vld [vmem:[#allocation3 + $0x13a] sm:$0xff]
        %v5315 = vld [vmem:[#allocation3 + $0x142] sm:$0xff]
        %v5316 = vld [vmem:[#allocation3 + $0x14a] sm:$0xff]
        %v5317 = vld [vmem:[#allocation3 + $0x152] sm:$0xff]
        %v5318 = vld [vmem:[#allocation3 + $0x15a] sm:$0xff]
        %v5319 = vld [vmem:[#allocation3 + $0x162] sm:$0xff]
        %v5320 = vld [vmem:[#allocation3 + $0x16a] sm:$0xff]
        %v5321 = vld [vmem:[#allocation3 + $0x172] sm:$0xff]
        %v5322 = vld [vmem:[#allocation3 + $0x17a] sm:$0xff]
        %v5323 = vld [vmem:[#allocation3 + $0x182] sm:$0xff]
        %v5324 = vld [vmem:[#allocation3 + $0x18a] sm:$0xff]
        %v5325 = vld [vmem:[#allocation3 + $0x192] sm:$0xff]
        %v5326 = vld [vmem:[#allocation3 + $0x19a] sm:$0xff]
        %v5327 = vld [vmem:[#allocation3 + $0x1a2] sm:$0xff]
        %v5328 = vld [vmem:[#allocation3 + $0x1aa] sm:$0xff]
        %v5329 = vld [vmem:[#allocation3 + $0x1b2] sm:$0xff]
        %v5330 = vld [vmem:[#allocation3 + $0x1ba] sm:$0xff]
        %v5331 = vld [vmem:[#allocation3 + $0x1c2] sm:$0xff]
        %v5332 = vld [vmem:[#allocation3 + $0x1ca] sm:$0xff]
        %v5333 = vld [vmem:[#allocation3 + $0x1d2] sm:$0xff]
        %v5334 = vld [vmem:[#allocation3 + $0x1da] sm:$0xff]
        %v5335 = vld [vmem:[#allocation3 + $0x1e2] sm:$0xff]
        %v5336 = vld [vmem:[#allocation3 + $0x1ea] sm:$0xff]
        %5365 = vrot.lane.b32.xlu0 %v5309, 64
        %v5366 = vpop.permute.xlu0 %5365
        %5367 = vrot.lane.b32.xlu0 %v5310, 64
        %v5368 = vpop.permute.xlu0 %5367
        %5369 = vrot.lane.b32.xlu0 %v5311, 64
        %v5370 = vpop.permute.xlu0 %5369
        %5371 = vrot.lane.b32.xlu0 %v5312, 64
        %v5372 = vpop.permute.xlu0 %5371
        %5373 = vrot.lane.b32.xlu0 %v5313, 64
        %v5374 = vpop.permute.xlu0 %5373
        %5375 = vrot.lane.b32.xlu0 %v5314, 64
        %v5376 = vpop.permute.xlu0 %5375
        %5377 = vrot.lane.b32.xlu0 %v5315, 64
        %v5378 = vpop.permute.xlu0 %5377
        %5379 = vrot.lane.b32.xlu0 %v5316, 64
        %v5380 = vpop.permute.xlu0 %5379
        %5381 = vrot.lane.b32.xlu0 %v5317, 64
        %v5382 = vpop.permute.xlu0 %5381
        %5383 = vrot.lane.b32.xlu0 %v5318, 64
        %v5384 = vpop.permute.xlu0 %5383
        %5385 = vrot.lane.b32.xlu0 %v5319, 64
        %v5386 = vpop.permute.xlu0 %5385
        %5387 = vrot.lane.b32.xlu0 %v5320, 64
        %v5388 = vpop.permute.xlu0 %5387
        %5389 = vrot.lane.b32.xlu0 %v5321, 64
        %v5390 = vpop.permute.xlu0 %5389
        %5391 = vrot.lane.b32.xlu0 %v5322, 64
        %v5392 = vpop.permute.xlu0 %5391
        %5393 = vrot.lane.b32.xlu0 %v5323, 64
        %v5394 = vpop.permute.xlu0 %5393
        %5395 = vrot.lane.b32.xlu0 %v5324, 64
        %v5396 = vpop.permute.xlu0 %5395
        %5397 = vrot.lane.b32.xlu0 %v5325, 64
        %v5398 = vpop.permute.xlu0 %5397
        %5399 = vrot.lane.b32.xlu0 %v5326, 64
        %v5400 = vpop.permute.xlu0 %5399
        %5401 = vrot.lane.b32.xlu0 %v5327, 64
        %v5402 = vpop.permute.xlu0 %5401
        %5403 = vrot.lane.b32.xlu0 %v5328, 64
        %v5404 = vpop.permute.xlu0 %5403
        %5405 = vrot.lane.b32.xlu0 %v5329, 64
        %v5406 = vpop.permute.xlu0 %5405
        %5407 = vrot.lane.b32.xlu0 %v5330, 64
        %v5408 = vpop.permute.xlu0 %5407
        %5409 = vrot.lane.b32.xlu0 %v5331, 64
        %v5410 = vpop.permute.xlu0 %5409
        %5411 = vrot.lane.b32.xlu0 %v5332, 64
        %v5412 = vpop.permute.xlu0 %5411
        %5413 = vrot.lane.b32.xlu0 %v5333, 64
        %v5414 = vpop.permute.xlu0 %5413
        %5415 = vrot.lane.b32.xlu0 %v5334, 64
        %v5416 = vpop.permute.xlu0 %5415
        %5417 = vrot.lane.b32.xlu0 %v5335, 64
        %v5418 = vpop.permute.xlu0 %5417
        %5419 = vrot.lane.b32.xlu0 %v5336, 64
        %v5420 = vpop.permute.xlu0 %5419
        %5449 = vst.msk [vmem:[#allocation4 + $0x470] sm:$0xff] %vm4048, %v5366
        %5450 = vst.msk [vmem:[#allocation4 + $0x498] sm:$0xff] %vm4048, %v5368
        %5451 = vst.msk [vmem:[#allocation4 + $0x4c0] sm:$0xff] %vm4048, %v5370
        %5452 = vst.msk [vmem:[#allocation4 + $0x4e8] sm:$0xff] %vm4048, %v5372
        %5453 = vst.msk [vmem:[#allocation4 + $0x510] sm:$0xff] %vm4048, %v5374
        %5454 = vst.msk [vmem:[#allocation4 + $0x538] sm:$0xff] %vm4048, %v5376
        %5455 = vst.msk [vmem:[#allocation4 + $0x560] sm:$0xff] %vm4048, %v5378
        %5456 = vst.msk [vmem:[#allocation4 + $0x588] sm:$0xff] %vm4048, %v5380
        %5457 = vst.msk [vmem:[#allocation4 + $0x5b0] sm:$0xff] %vm4048, %v5382
        %5458 = vst.msk [vmem:[#allocation4 + $0x5d8] sm:$0xff] %vm4048, %v5384
        %5459 = vst.msk [vmem:[#allocation4 + $0x600] sm:$0xff] %vm4048, %v5386
        %5460 = vst.msk [vmem:[#allocation4 + $0x628] sm:$0xff] %vm4048, %v5388
        %5461 = vst.msk [vmem:[#allocation4 + $0x650] sm:$0xff] %vm4048, %v5390
        %5462 = vst.msk [vmem:[#allocation4 + $0x678] sm:$0xff] %vm4048, %v5392
        %5463 = vst.msk [vmem:[#allocation4 + $0x6a0] sm:$0xff] %vm4048, %v5394
        %5464 = vst.msk [vmem:[#allocation4 + $0x6c8] sm:$0xff] %vm4048, %v5396
        %5465 = vst.msk [vmem:[#allocation4 + $0x6f0] sm:$0xff] %vm4048, %v5398
        %5466 = vst.msk [vmem:[#allocation4 + $0x718] sm:$0xff] %vm4048, %v5400
        %5467 = vst.msk [vmem:[#allocation4 + $0x740] sm:$0xff] %vm4048, %v5402
        %5468 = vst.msk [vmem:[#allocation4 + $0x768] sm:$0xff] %vm4048, %v5404
        %5469 = vst.msk [vmem:[#allocation4 + $0x790] sm:$0xff] %vm4048, %v5406
        %5470 = vst.msk [vmem:[#allocation4 + $0x7b8] sm:$0xff] %vm4048, %v5408
        %5471 = vst.msk [vmem:[#allocation4 + $0x7e0] sm:$0xff] %vm4048, %v5410
        %5472 = vst.msk [vmem:[#allocation4 + $0x808] sm:$0xff] %vm4048, %v5412
        %5473 = vst.msk [vmem:[#allocation4 + $0x830] sm:$0xff] %vm4048, %v5414
        %5474 = vst.msk [vmem:[#allocation4 + $0x858] sm:$0xff] %vm4048, %v5416
        %5475 = vst.msk [vmem:[#allocation4 + $0x880] sm:$0xff] %vm4048, %v5418
        %5476 = vst.msk [vmem:[#allocation4 + $0x8a8] sm:$0xff] %vm4048, %v5420
        %v5477 = vld [vmem:[#allocation3 + $0x120] sm:$0xff]
        %v5478 = vld [vmem:[#allocation3 + $0x128] sm:$0xff]
        %v5479 = vld [vmem:[#allocation3 + $0x130] sm:$0xff]
        %v5480 = vld [vmem:[#allocation3 + $0x138] sm:$0xff]
        %v5481 = vld [vmem:[#allocation3 + $0x140] sm:$0xff]
        %v5482 = vld [vmem:[#allocation3 + $0x148] sm:$0xff]
        %v5483 = vld [vmem:[#allocation3 + $0x150] sm:$0xff]
        %v5484 = vld [vmem:[#allocation3 + $0x158] sm:$0xff]
        %v5485 = vld [vmem:[#allocation3 + $0x160] sm:$0xff]
        %v5486 = vld [vmem:[#allocation3 + $0x168] sm:$0xff]
        %v5487 = vld [vmem:[#allocation3 + $0x170] sm:$0xff]
        %v5488 = vld [vmem:[#allocation3 + $0x178] sm:$0xff]
        %v5489 = vld [vmem:[#allocation3 + $0x180] sm:$0xff]
        %v5490 = vld [vmem:[#allocation3 + $0x188] sm:$0xff]
        %v5491 = vld [vmem:[#allocation3 + $0x190] sm:$0xff]
        %v5492 = vld [vmem:[#allocation3 + $0x198] sm:$0xff]
        %v5493 = vld [vmem:[#allocation3 + $0x1a0] sm:$0xff]
        %v5494 = vld [vmem:[#allocation3 + $0x1a8] sm:$0xff]
        %v5495 = vld [vmem:[#allocation3 + $0x1b0] sm:$0xff]
        %v5496 = vld [vmem:[#allocation3 + $0x1b8] sm:$0xff]
        %v5497 = vld [vmem:[#allocation3 + $0x1c0] sm:$0xff]
        %v5498 = vld [vmem:[#allocation3 + $0x1c8] sm:$0xff]
        %v5499 = vld [vmem:[#allocation3 + $0x1d0] sm:$0xff]
        %v5500 = vld [vmem:[#allocation3 + $0x1d8] sm:$0xff]
        %v5501 = vld [vmem:[#allocation3 + $0x1e0] sm:$0xff]
        %v5502 = vld [vmem:[#allocation3 + $0x1e8] sm:$0xff]
        %v5503 = vld [vmem:[#allocation3 + $0x1f0] sm:$0xff]
        %v5504 = vld [vmem:[#allocation3 + $0x1f8] sm:$0xff]
        %5505 = vst.msk [vmem:[#allocation4 + $0x478] sm:$0xff] %vm2367, %v5477
        %5506 = vst.msk [vmem:[#allocation4 + $0x4a0] sm:$0xff] %vm2367, %v5478
        %5507 = vst.msk [vmem:[#allocation4 + $0x4c8] sm:$0xff] %vm2367, %v5479
        %5508 = vst.msk [vmem:[#allocation4 + $0x4f0] sm:$0xff] %vm2367, %v5480
        %5509 = vst.msk [vmem:[#allocation4 + $0x518] sm:$0xff] %vm2367, %v5481
        %5510 = vst.msk [vmem:[#allocation4 + $0x540] sm:$0xff] %vm2367, %v5482
        %5511 = vst.msk [vmem:[#allocation4 + $0x568] sm:$0xff] %vm2367, %v5483
        %5512 = vst.msk [vmem:[#allocation4 + $0x590] sm:$0xff] %vm2367, %v5484
        %5513 = vst.msk [vmem:[#allocation4 + $0x5b8] sm:$0xff] %vm2367, %v5485
        %5514 = vst.msk [vmem:[#allocation4 + $0x5e0] sm:$0xff] %vm2367, %v5486
        %5515 = vst.msk [vmem:[#allocation4 + $0x608] sm:$0xff] %vm2367, %v5487
        %5516 = vst.msk [vmem:[#allocation4 + $0x630] sm:$0xff] %vm2367, %v5488
        %5517 = vst.msk [vmem:[#allocation4 + $0x658] sm:$0xff] %vm2367, %v5489
        %5518 = vst.msk [vmem:[#allocation4 + $0x680] sm:$0xff] %vm2367, %v5490
        %5519 = vst.msk [vmem:[#allocation4 + $0x6a8] sm:$0xff] %vm2367, %v5491
        %5520 = vst.msk [vmem:[#allocation4 + $0x6d0] sm:$0xff] %vm2367, %v5492
        %5521 = vst.msk [vmem:[#allocation4 + $0x6f8] sm:$0xff] %vm2367, %v5493
        %5522 = vst.msk [vmem:[#allocation4 + $0x720] sm:$0xff] %vm2367, %v5494
        %5523 = vst.msk [vmem:[#allocation4 + $0x748] sm:$0xff] %vm2367, %v5495
        %5524 = vst.msk [vmem:[#allocation4 + $0x770] sm:$0xff] %vm2367, %v5496
        %5525 = vst.msk [vmem:[#allocation4 + $0x798] sm:$0xff] %vm2367, %v5497
        %5526 = vst.msk [vmem:[#allocation4 + $0x7c0] sm:$0xff] %vm2367, %v5498
        %5527 = vst.msk [vmem:[#allocation4 + $0x7e8] sm:$0xff] %vm2367, %v5499
        %5528 = vst.msk [vmem:[#allocation4 + $0x810] sm:$0xff] %vm2367, %v5500
        %5529 = vst.msk [vmem:[#allocation4 + $0x838] sm:$0xff] %vm2367, %v5501
        %5530 = vst.msk [vmem:[#allocation4 + $0x860] sm:$0xff] %vm2367, %v5502
        %5531 = vst.msk [vmem:[#allocation4 + $0x888] sm:$0xff] %vm2367, %v5503
        %5532 = vst.msk [vmem:[#allocation4 + $0x8b0] sm:$0xff] %vm2367, %v5504
        %v5533 = vld [vmem:[#allocation3 + $0x121] sm:$0xff]
        %v5534 = vld [vmem:[#allocation3 + $0x129] sm:$0xff]
        %v5535 = vld [vmem:[#allocation3 + $0x131] sm:$0xff]
        %v5536 = vld [vmem:[#allocation3 + $0x139] sm:$0xff]
        %v5537 = vld [vmem:[#allocation3 + $0x141] sm:$0xff]
        %v5538 = vld [vmem:[#allocation3 + $0x149] sm:$0xff]
        %v5539 = vld [vmem:[#allocation3 + $0x151] sm:$0xff]
        %v5540 = vld [vmem:[#allocation3 + $0x159] sm:$0xff]
        %v5541 = vld [vmem:[#allocation3 + $0x161] sm:$0xff]
        %v5542 = vld [vmem:[#allocation3 + $0x169] sm:$0xff]
        %v5543 = vld [vmem:[#allocation3 + $0x171] sm:$0xff]
        %v5544 = vld [vmem:[#allocation3 + $0x179] sm:$0xff]
        %v5545 = vld [vmem:[#allocation3 + $0x181] sm:$0xff]
        %v5546 = vld [vmem:[#allocation3 + $0x189] sm:$0xff]
        %v5547 = vld [vmem:[#allocation3 + $0x191] sm:$0xff]
        %v5548 = vld [vmem:[#allocation3 + $0x199] sm:$0xff]
        %v5549 = vld [vmem:[#allocation3 + $0x1a1] sm:$0xff]
        %v5550 = vld [vmem:[#allocation3 + $0x1a9] sm:$0xff]
        %v5551 = vld [vmem:[#allocation3 + $0x1b1] sm:$0xff]
        %v5552 = vld [vmem:[#allocation3 + $0x1b9] sm:$0xff]
        %v5553 = vld [vmem:[#allocation3 + $0x1c1] sm:$0xff]
        %v5554 = vld [vmem:[#allocation3 + $0x1c9] sm:$0xff]
        %v5555 = vld [vmem:[#allocation3 + $0x1d1] sm:$0xff]
        %v5556 = vld [vmem:[#allocation3 + $0x1d9] sm:$0xff]
        %v5557 = vld [vmem:[#allocation3 + $0x1e1] sm:$0xff]
        %v5558 = vld [vmem:[#allocation3 + $0x1e9] sm:$0xff]
        %v5559 = vld [vmem:[#allocation3 + $0x1f1] sm:$0xff]
        %v5560 = vld [vmem:[#allocation3 + $0x1f9] sm:$0xff]
        %5589 = vrot.lane.b32.xlu0 %v5533, 64
        %v5590 = vpop.permute.xlu0 %5589
        %5591 = vrot.lane.b32.xlu0 %v5534, 64
        %v5592 = vpop.permute.xlu0 %5591
        %5593 = vrot.lane.b32.xlu0 %v5535, 64
        %v5594 = vpop.permute.xlu0 %5593
        %5595 = vrot.lane.b32.xlu0 %v5536, 64
        %v5596 = vpop.permute.xlu0 %5595
        %5597 = vrot.lane.b32.xlu0 %v5537, 64
        %v5598 = vpop.permute.xlu0 %5597
        %5599 = vrot.lane.b32.xlu0 %v5538, 64
        %v5600 = vpop.permute.xlu0 %5599
        %5601 = vrot.lane.b32.xlu0 %v5539, 64
        %v5602 = vpop.permute.xlu0 %5601
        %5603 = vrot.lane.b32.xlu0 %v5540, 64
        %v5604 = vpop.permute.xlu0 %5603
        %5605 = vrot.lane.b32.xlu0 %v5541, 64
        %v5606 = vpop.permute.xlu0 %5605
        %5607 = vrot.lane.b32.xlu0 %v5542, 64
        %v5608 = vpop.permute.xlu0 %5607
        %5609 = vrot.lane.b32.xlu0 %v5543, 64
        %v5610 = vpop.permute.xlu0 %5609
        %5611 = vrot.lane.b32.xlu0 %v5544, 64
        %v5612 = vpop.permute.xlu0 %5611
        %5613 = vrot.lane.b32.xlu0 %v5545, 64
        %v5614 = vpop.permute.xlu0 %5613
        %5615 = vrot.lane.b32.xlu0 %v5546, 64
        %v5616 = vpop.permute.xlu0 %5615
        %5617 = vrot.lane.b32.xlu0 %v5547, 64
        %v5618 = vpop.permute.xlu0 %5617
        %5619 = vrot.lane.b32.xlu0 %v5548, 64
        %v5620 = vpop.permute.xlu0 %5619
        %5621 = vrot.lane.b32.xlu0 %v5549, 64
        %v5622 = vpop.permute.xlu0 %5621
        %5623 = vrot.lane.b32.xlu0 %v5550, 64
        %v5624 = vpop.permute.xlu0 %5623
        %5625 = vrot.lane.b32.xlu0 %v5551, 64
        %v5626 = vpop.permute.xlu0 %5625
        %5627 = vrot.lane.b32.xlu0 %v5552, 64
        %v5628 = vpop.permute.xlu0 %5627
        %5629 = vrot.lane.b32.xlu0 %v5553, 64
        %v5630 = vpop.permute.xlu0 %5629
        %5631 = vrot.lane.b32.xlu0 %v5554, 64
        %v5632 = vpop.permute.xlu0 %5631
        %5633 = vrot.lane.b32.xlu0 %v5555, 64
        %v5634 = vpop.permute.xlu0 %5633
        %5635 = vrot.lane.b32.xlu0 %v5556, 64
        %v5636 = vpop.permute.xlu0 %5635
        %5637 = vrot.lane.b32.xlu0 %v5557, 64
        %v5638 = vpop.permute.xlu0 %5637
        %5639 = vrot.lane.b32.xlu0 %v5558, 64
        %v5640 = vpop.permute.xlu0 %5639
        %5641 = vrot.lane.b32.xlu0 %v5559, 64
        %v5642 = vpop.permute.xlu0 %5641
        %5643 = vrot.lane.b32.xlu0 %v5560, 64
        %v5644 = vpop.permute.xlu0 %5643
        %5673 = vst.msk [vmem:[#allocation4 + $0x478] sm:$0xff] %vm4048, %v5590
        %5674 = vst.msk [vmem:[#allocation4 + $0x4a0] sm:$0xff] %vm4048, %v5592
        %5675 = vst.msk [vmem:[#allocation4 + $0x4c8] sm:$0xff] %vm4048, %v5594
        %5676 = vst.msk [vmem:[#allocation4 + $0x4f0] sm:$0xff] %vm4048, %v5596
        %5677 = vst.msk [vmem:[#allocation4 + $0x518] sm:$0xff] %vm4048, %v5598
        %5678 = vst.msk [vmem:[#allocation4 + $0x540] sm:$0xff] %vm4048, %v5600
        %5679 = vst.msk [vmem:[#allocation4 + $0x568] sm:$0xff] %vm4048, %v5602
        %5680 = vst.msk [vmem:[#allocation4 + $0x590] sm:$0xff] %vm4048, %v5604
        %5681 = vst.msk [vmem:[#allocation4 + $0x5b8] sm:$0xff] %vm4048, %v5606
        %5682 = vst.msk [vmem:[#allocation4 + $0x5e0] sm:$0xff] %vm4048, %v5608
        %5683 = vst.msk [vmem:[#allocation4 + $0x608] sm:$0xff] %vm4048, %v5610
        %5684 = vst.msk [vmem:[#allocation4 + $0x630] sm:$0xff] %vm4048, %v5612
        %5685 = vst.msk [vmem:[#allocation4 + $0x658] sm:$0xff] %vm4048, %v5614
        %5686 = vst.msk [vmem:[#allocation4 + $0x680] sm:$0xff] %vm4048, %v5616
        %5687 = vst.msk [vmem:[#allocation4 + $0x6a8] sm:$0xff] %vm4048, %v5618
        %5688 = vst.msk [vmem:[#allocation4 + $0x6d0] sm:$0xff] %vm4048, %v5620
        %5689 = vst.msk [vmem:[#allocation4 + $0x6f8] sm:$0xff] %vm4048, %v5622
        %5690 = vst.msk [vmem:[#allocation4 + $0x720] sm:$0xff] %vm4048, %v5624
        %5691 = vst.msk [vmem:[#allocation4 + $0x748] sm:$0xff] %vm4048, %v5626
        %5692 = vst.msk [vmem:[#allocation4 + $0x770] sm:$0xff] %vm4048, %v5628
        %5693 = vst.msk [vmem:[#allocation4 + $0x798] sm:$0xff] %vm4048, %v5630
        %5694 = vst.msk [vmem:[#allocation4 + $0x7c0] sm:$0xff] %vm4048, %v5632
        %5695 = vst.msk [vmem:[#allocation4 + $0x7e8] sm:$0xff] %vm4048, %v5634
        %5696 = vst.msk [vmem:[#allocation4 + $0x810] sm:$0xff] %vm4048, %v5636
        %5697 = vst.msk [vmem:[#allocation4 + $0x838] sm:$0xff] %vm4048, %v5638
        %5698 = vst.msk [vmem:[#allocation4 + $0x860] sm:$0xff] %vm4048, %v5640
        %5699 = vst.msk [vmem:[#allocation4 + $0x888] sm:$0xff] %vm4048, %v5642
        %5700 = vst.msk [vmem:[#allocation4 + $0x8b0] sm:$0xff] %vm4048, %v5644
        %v5701 = vld [vmem:[#allocation3 + $0x122] sm:$0xff]
        %v5702 = vld [vmem:[#allocation3 + $0x12a] sm:$0xff]
        %v5703 = vld [vmem:[#allocation3 + $0x132] sm:$0xff]
        %v5704 = vld [vmem:[#allocation3 + $0x13a] sm:$0xff]
        %v5705 = vld [vmem:[#allocation3 + $0x142] sm:$0xff]
        %v5706 = vld [vmem:[#allocation3 + $0x14a] sm:$0xff]
        %v5707 = vld [vmem:[#allocation3 + $0x152] sm:$0xff]
        %v5708 = vld [vmem:[#allocation3 + $0x15a] sm:$0xff]
        %v5709 = vld [vmem:[#allocation3 + $0x162] sm:$0xff]
        %v5710 = vld [vmem:[#allocation3 + $0x16a] sm:$0xff]
        %v5711 = vld [vmem:[#allocation3 + $0x172] sm:$0xff]
        %v5712 = vld [vmem:[#allocation3 + $0x17a] sm:$0xff]
        %v5713 = vld [vmem:[#allocation3 + $0x182] sm:$0xff]
        %v5714 = vld [vmem:[#allocation3 + $0x18a] sm:$0xff]
        %v5715 = vld [vmem:[#allocation3 + $0x192] sm:$0xff]
        %v5716 = vld [vmem:[#allocation3 + $0x19a] sm:$0xff]
        %v5717 = vld [vmem:[#allocation3 + $0x1a2] sm:$0xff]
        %v5718 = vld [vmem:[#allocation3 + $0x1aa] sm:$0xff]
        %v5719 = vld [vmem:[#allocation3 + $0x1b2] sm:$0xff]
        %v5720 = vld [vmem:[#allocation3 + $0x1ba] sm:$0xff]
        %v5721 = vld [vmem:[#allocation3 + $0x1c2] sm:$0xff]
        %v5722 = vld [vmem:[#allocation3 + $0x1ca] sm:$0xff]
        %v5723 = vld [vmem:[#allocation3 + $0x1d2] sm:$0xff]
        %v5724 = vld [vmem:[#allocation3 + $0x1da] sm:$0xff]
        %v5725 = vld [vmem:[#allocation3 + $0x1e2] sm:$0xff]
        %v5726 = vld [vmem:[#allocation3 + $0x1ea] sm:$0xff]
        %v5727 = vld [vmem:[#allocation3 + $0x1f2] sm:$0xff]
        %v5728 = vld [vmem:[#allocation3 + $0x1fa] sm:$0xff]
        %5729 = vst.msk [vmem:[#allocation4 + $0x480] sm:$0xff] %vm2367, %v5701
        %5730 = vst.msk [vmem:[#allocation4 + $0x4a8] sm:$0xff] %vm2367, %v5702
        %5731 = vst.msk [vmem:[#allocation4 + $0x4d0] sm:$0xff] %vm2367, %v5703
        %5732 = vst.msk [vmem:[#allocation4 + $0x4f8] sm:$0xff] %vm2367, %v5704
        %5733 = vst.msk [vmem:[#allocation4 + $0x520] sm:$0xff] %vm2367, %v5705
        %5734 = vst.msk [vmem:[#allocation4 + $0x548] sm:$0xff] %vm2367, %v5706
        %5735 = vst.msk [vmem:[#allocation4 + $0x570] sm:$0xff] %vm2367, %v5707
        %5736 = vst.msk [vmem:[#allocation4 + $0x598] sm:$0xff] %vm2367, %v5708
        %5737 = vst.msk [vmem:[#allocation4 + $0x5c0] sm:$0xff] %vm2367, %v5709
        %5738 = vst.msk [vmem:[#allocation4 + $0x5e8] sm:$0xff] %vm2367, %v5710
        %5739 = vst.msk [vmem:[#allocation4 + $0x610] sm:$0xff] %vm2367, %v5711
        %5740 = vst.msk [vmem:[#allocation4 + $0x638] sm:$0xff] %vm2367, %v5712
        %5741 = vst.msk [vmem:[#allocation4 + $0x660] sm:$0xff] %vm2367, %v5713
        %5742 = vst.msk [vmem:[#allocation4 + $0x688] sm:$0xff] %vm2367, %v5714
        %5743 = vst.msk [vmem:[#allocation4 + $0x6b0] sm:$0xff] %vm2367, %v5715
        %5744 = vst.msk [vmem:[#allocation4 + $0x6d8] sm:$0xff] %vm2367, %v5716
        %5745 = vst.msk [vmem:[#allocation4 + $0x700] sm:$0xff] %vm2367, %v5717
        %5746 = vst.msk [vmem:[#allocation4 + $0x728] sm:$0xff] %vm2367, %v5718
        %5747 = vst.msk [vmem:[#allocation4 + $0x750] sm:$0xff] %vm2367, %v5719
        %5748 = vst.msk [vmem:[#allocation4 + $0x778] sm:$0xff] %vm2367, %v5720
        %5749 = vst.msk [vmem:[#allocation4 + $0x7a0] sm:$0xff] %vm2367, %v5721
        %5750 = vst.msk [vmem:[#allocation4 + $0x7c8] sm:$0xff] %vm2367, %v5722
        %5751 = vst.msk [vmem:[#allocation4 + $0x7f0] sm:$0xff] %vm2367, %v5723
        %5752 = vst.msk [vmem:[#allocation4 + $0x818] sm:$0xff] %vm2367, %v5724
        %5753 = vst.msk [vmem:[#allocation4 + $0x840] sm:$0xff] %vm2367, %v5725
        %5754 = vst.msk [vmem:[#allocation4 + $0x868] sm:$0xff] %vm2367, %v5726
        %5755 = vst.msk [vmem:[#allocation4 + $0x890] sm:$0xff] %vm2367, %v5727
        %5756 = vst.msk [vmem:[#allocation4 + $0x8b8] sm:$0xff] %vm2367, %v5728
        %v5757 = vld [vmem:[#allocation4] sm:$0xff]
        %v5758 = vld [vmem:[#allocation4 + $0x8] sm:$0xff]
        %v5759 = vld [vmem:[#allocation4 + $0x10] sm:$0xff]
        %v5760 = vld [vmem:[#allocation4 + $0x18] sm:$0xff]
        %v5761 = vld [vmem:[#allocation4 + $0x20] sm:$0xff]
        %v5762 = vld [vmem:[#allocation4 + $0x28] sm:$0xff]
        %v5763 = vld [vmem:[#allocation4 + $0x30] sm:$0xff]
        %v5764 = vld [vmem:[#allocation4 + $0x38] sm:$0xff]
        %v5765 = vld [vmem:[#allocation4 + $0x40] sm:$0xff]
        %v5766 = vld [vmem:[#allocation4 + $0x48] sm:$0xff]
        %v5767 = vld [vmem:[#allocation4 + $0x50] sm:$0xff]
        %v5768 = vld [vmem:[#allocation4 + $0x58] sm:$0xff]
        %v5769 = vld [vmem:[#allocation4 + $0x60] sm:$0xff]
        %v5770 = vld [vmem:[#allocation4 + $0x68] sm:$0xff]
        %v5771 = vld [vmem:[#allocation4 + $0x70] sm:$0xff]
        %v5772 = vld [vmem:[#allocation4 + $0x78] sm:$0xff]
        %v5773 = vld [vmem:[#allocation4 + $0x80] sm:$0xff]
        %v5774 = vld [vmem:[#allocation4 + $0x88] sm:$0xff]
        %v5775 = vld [vmem:[#allocation4 + $0x90] sm:$0xff]
        %v5776 = vld [vmem:[#allocation4 + $0x98] sm:$0xff]
        %v5777 = vld [vmem:[#allocation4 + $0xa0] sm:$0xff]
        %v5778 = vld [vmem:[#allocation4 + $0xa8] sm:$0xff]
        %v5779 = vld [vmem:[#allocation4 + $0xb0] sm:$0xff]
        %v5780 = vld [vmem:[#allocation4 + $0xb8] sm:$0xff]
        %v5781 = vld [vmem:[#allocation4 + $0xc0] sm:$0xff]
        %v5782 = vld [vmem:[#allocation4 + $0xc8] sm:$0xff]
        %v5783 = vld [vmem:[#allocation4 + $0xd0] sm:$0xff]
        %v5784 = vld [vmem:[#allocation4 + $0xd8] sm:$0xff]
        %v5785 = vld [vmem:[#allocation4 + $0xe0] sm:$0xff]
        %v5786 = vld [vmem:[#allocation4 + $0xe8] sm:$0xff]
        %v5787 = vld [vmem:[#allocation4 + $0xf0] sm:$0xff]
        %v5788 = vld [vmem:[#allocation4 + $0xf8] sm:$0xff]
        %v5789 = vld [vmem:[#allocation4 + $0x100] sm:$0xff]
        %v5790 = vld [vmem:[#allocation4 + $0x108] sm:$0xff]
        %v5791 = vld [vmem:[#allocation4 + $0x110] sm:$0xff]
        %v5792 = vld [vmem:[#allocation4 + $0x118] sm:$0xff]
        %v5793 = vld [vmem:[#allocation4 + $0x120] sm:$0xff]
        %v5794 = vld [vmem:[#allocation4 + $0x128] sm:$0xff]
        %v5795 = vld [vmem:[#allocation4 + $0x130] sm:$0xff]
        %v5796 = vld [vmem:[#allocation4 + $0x138] sm:$0xff]
        %v5797 = vld [vmem:[#allocation4 + $0x140] sm:$0xff]
        %v5798 = vld [vmem:[#allocation4 + $0x148] sm:$0xff]
        %v5799 = vld [vmem:[#allocation4 + $0x150] sm:$0xff]
        %v5800 = vld [vmem:[#allocation4 + $0x158] sm:$0xff]
        %v5801 = vld [vmem:[#allocation4 + $0x160] sm:$0xff]
        %v5802 = vld [vmem:[#allocation4 + $0x168] sm:$0xff]
        %v5803 = vld [vmem:[#allocation4 + $0x170] sm:$0xff]
        %v5804 = vld [vmem:[#allocation4 + $0x178] sm:$0xff]
        %v5805 = vld [vmem:[#allocation4 + $0x180] sm:$0xff]
        %v5806 = vld [vmem:[#allocation4 + $0x188] sm:$0xff]
        %v5807 = vld [vmem:[#allocation4 + $0x190] sm:$0xff]
        %v5808 = vld [vmem:[#allocation4 + $0x198] sm:$0xff]
        %v5809 = vld [vmem:[#allocation4 + $0x1a0] sm:$0xff]
        %v5810 = vld [vmem:[#allocation4 + $0x1a8] sm:$0xff]
        %v5811 = vld [vmem:[#allocation4 + $0x1b0] sm:$0xff]
        %v5812 = vld [vmem:[#allocation4 + $0x1b8] sm:$0xff]
        %v5813 = vld [vmem:[#allocation4 + $0x1c0] sm:$0xff]
        %v5814 = vld [vmem:[#allocation4 + $0x1c8] sm:$0xff]
        %v5815 = vld [vmem:[#allocation4 + $0x1d0] sm:$0xff]
        %v5816 = vld [vmem:[#allocation4 + $0x1d8] sm:$0xff]
        %v5817 = vld [vmem:[#allocation4 + $0x1e0] sm:$0xff]
        %v5818 = vld [vmem:[#allocation4 + $0x1e8] sm:$0xff]
        %v5819 = vld [vmem:[#allocation4 + $0x1f0] sm:$0xff]
        %v5820 = vld [vmem:[#allocation4 + $0x1f8] sm:$0xff]
        %v5821 = vld [vmem:[#allocation4 + $0x200] sm:$0xff]
        %v5822 = vld [vmem:[#allocation4 + $0x208] sm:$0xff]
        %v5823 = vld [vmem:[#allocation4 + $0x210] sm:$0xff]
        %v5824 = vld [vmem:[#allocation4 + $0x218] sm:$0xff]
        %v5825 = vld [vmem:[#allocation4 + $0x220] sm:$0xff]
        %v5826 = vld [vmem:[#allocation4 + $0x228] sm:$0xff]
        %v5827 = vld [vmem:[#allocation4 + $0x230] sm:$0xff]
        %v5828 = vld [vmem:[#allocation4 + $0x238] sm:$0xff]
        %v5829 = vld [vmem:[#allocation4 + $0x240] sm:$0xff]
        %v5830 = vld [vmem:[#allocation4 + $0x248] sm:$0xff]
        %v5831 = vld [vmem:[#allocation4 + $0x250] sm:$0xff]
        %v5832 = vld [vmem:[#allocation4 + $0x258] sm:$0xff]
        %v5833 = vld [vmem:[#allocation4 + $0x260] sm:$0xff]
        %v5834 = vld [vmem:[#allocation4 + $0x268] sm:$0xff]
        %v5835 = vld [vmem:[#allocation4 + $0x270] sm:$0xff]
        %v5836 = vld [vmem:[#allocation4 + $0x278] sm:$0xff]
        %v5837 = vld [vmem:[#allocation4 + $0x280] sm:$0xff]
        %v5838 = vld [vmem:[#allocation4 + $0x288] sm:$0xff]
        %v5839 = vld [vmem:[#allocation4 + $0x290] sm:$0xff]
        %v5840 = vld [vmem:[#allocation4 + $0x298] sm:$0xff]
        %v5841 = vld [vmem:[#allocation4 + $0x2a0] sm:$0xff]
        %v5842 = vld [vmem:[#allocation4 + $0x2a8] sm:$0xff]
        %v5843 = vld [vmem:[#allocation4 + $0x2b0] sm:$0xff]
        %v5844 = vld [vmem:[#allocation4 + $0x2b8] sm:$0xff]
        %v5845 = vld [vmem:[#allocation4 + $0x2c0] sm:$0xff]
        %v5846 = vld [vmem:[#allocation4 + $0x2c8] sm:$0xff]
        %v5847 = vld [vmem:[#allocation4 + $0x2d0] sm:$0xff]
        %v5848 = vld [vmem:[#allocation4 + $0x2d8] sm:$0xff]
        %v5849 = vld [vmem:[#allocation4 + $0x2e0] sm:$0xff]
        %v5850 = vld [vmem:[#allocation4 + $0x2e8] sm:$0xff]
        %v5851 = vld [vmem:[#allocation4 + $0x2f0] sm:$0xff]
        %v5852 = vld [vmem:[#allocation4 + $0x2f8] sm:$0xff]
        %v5853 = vld [vmem:[#allocation4 + $0x300] sm:$0xff]
        %v5854 = vld [vmem:[#allocation4 + $0x308] sm:$0xff]
        %v5855 = vld [vmem:[#allocation4 + $0x310] sm:$0xff]
        %v5856 = vld [vmem:[#allocation4 + $0x318] sm:$0xff]
        %v5857 = vld [vmem:[#allocation4 + $0x320] sm:$0xff]
        %v5858 = vld [vmem:[#allocation4 + $0x328] sm:$0xff]
        %v5859 = vld [vmem:[#allocation4 + $0x330] sm:$0xff]
        %v5860 = vld [vmem:[#allocation4 + $0x338] sm:$0xff]
        %v5861 = vld [vmem:[#allocation4 + $0x340] sm:$0xff]
        %v5862 = vld [vmem:[#allocation4 + $0x348] sm:$0xff]
        %v5863 = vld [vmem:[#allocation4 + $0x350] sm:$0xff]
        %v5864 = vld [vmem:[#allocation4 + $0x358] sm:$0xff]
        %v5865 = vld [vmem:[#allocation4 + $0x360] sm:$0xff]
        %v5866 = vld [vmem:[#allocation4 + $0x368] sm:$0xff]
        %v5867 = vld [vmem:[#allocation4 + $0x370] sm:$0xff]
        %v5868 = vld [vmem:[#allocation4 + $0x378] sm:$0xff]
        %v5869 = vld [vmem:[#allocation4 + $0x380] sm:$0xff]
        %v5870 = vld [vmem:[#allocation4 + $0x388] sm:$0xff]
        %v5871 = vld [vmem:[#allocation4 + $0x390] sm:$0xff]
        %v5872 = vld [vmem:[#allocation4 + $0x398] sm:$0xff]
        %v5873 = vld [vmem:[#allocation4 + $0x3a0] sm:$0xff]
        %v5874 = vld [vmem:[#allocation4 + $0x3a8] sm:$0xff]
        %v5875 = vld [vmem:[#allocation4 + $0x3b0] sm:$0xff]
        %v5876 = vld [vmem:[#allocation4 + $0x3b8] sm:$0xff]
        %v5877 = vld [vmem:[#allocation4 + $0x3c0] sm:$0xff]
        %v5878 = vld [vmem:[#allocation4 + $0x3c8] sm:$0xff]
        %v5879 = vld [vmem:[#allocation4 + $0x3d0] sm:$0xff]
        %v5880 = vld [vmem:[#allocation4 + $0x3d8] sm:$0xff]
        %v5881 = vld [vmem:[#allocation4 + $0x3e0] sm:$0xff]
        %v5882 = vld [vmem:[#allocation4 + $0x3e8] sm:$0xff]
        %v5883 = vld [vmem:[#allocation4 + $0x3f0] sm:$0xff]
        %v5884 = vld [vmem:[#allocation4 + $0x3f8] sm:$0xff]
        %v5885 = vld [vmem:[#allocation4 + $0x400] sm:$0xff]
        %v5886 = vld [vmem:[#allocation4 + $0x408] sm:$0xff]
        %v5887 = vld [vmem:[#allocation4 + $0x410] sm:$0xff]
        %v5888 = vld [vmem:[#allocation4 + $0x418] sm:$0xff]
        %v5889 = vld [vmem:[#allocation4 + $0x420] sm:$0xff]
        %v5890 = vld [vmem:[#allocation4 + $0x428] sm:$0xff]
        %v5891 = vld [vmem:[#allocation4 + $0x430] sm:$0xff]
        %v5892 = vld [vmem:[#allocation4 + $0x438] sm:$0xff]
        %v5893 = vld [vmem:[#allocation4 + $0x440] sm:$0xff]
        %v5894 = vld [vmem:[#allocation4 + $0x448] sm:$0xff]
        %v5895 = vld [vmem:[#allocation4 + $0x450] sm:$0xff]
        %v5896 = vld [vmem:[#allocation4 + $0x458] sm:$0xff]
        %v5897 = vld [vmem:[#allocation4 + $0x460] sm:$0xff]
        %v5898 = vld [vmem:[#allocation4 + $0x468] sm:$0xff]
        %v5899 = vld [vmem:[#allocation4 + $0x470] sm:$0xff]
        %v5900 = vld [vmem:[#allocation4 + $0x478] sm:$0xff]
        %v5901 = vld [vmem:[#allocation4 + $0x480] sm:$0xff]
        %v5902 = vld [vmem:[#allocation4 + $0x488] sm:$0xff]
        %v5903 = vld [vmem:[#allocation4 + $0x490] sm:$0xff]
        %v5904 = vld [vmem:[#allocation4 + $0x498] sm:$0xff]
        %v5905 = vld [vmem:[#allocation4 + $0x4a0] sm:$0xff]
        %v5906 = vld [vmem:[#allocation4 + $0x4a8] sm:$0xff]
        %v5907 = vld [vmem:[#allocation4 + $0x4b0] sm:$0xff]
        %v5908 = vld [vmem:[#allocation4 + $0x4b8] sm:$0xff]
        %v5909 = vld [vmem:[#allocation4 + $0x4c0] sm:$0xff]
        %v5910 = vld [vmem:[#allocation4 + $0x4c8] sm:$0xff]
        %v5911 = vld [vmem:[#allocation4 + $0x4d0] sm:$0xff]
        %v5912 = vld [vmem:[#allocation4 + $0x4d8] sm:$0xff]
        %v5913 = vld [vmem:[#allocation4 + $0x4e0] sm:$0xff]
        %v5914 = vld [vmem:[#allocation4 + $0x4e8] sm:$0xff]
        %v5915 = vld [vmem:[#allocation4 + $0x4f0] sm:$0xff]
        %v5916 = vld [vmem:[#allocation4 + $0x4f8] sm:$0xff]
        %v5917 = vld [vmem:[#allocation4 + $0x500] sm:$0xff]
        %v5918 = vld [vmem:[#allocation4 + $0x508] sm:$0xff]
        %v5919 = vld [vmem:[#allocation4 + $0x510] sm:$0xff]
        %v5920 = vld [vmem:[#allocation4 + $0x518] sm:$0xff]
        %v5921 = vld [vmem:[#allocation4 + $0x520] sm:$0xff]
        %v5922 = vld [vmem:[#allocation4 + $0x528] sm:$0xff]
        %v5923 = vld [vmem:[#allocation4 + $0x530] sm:$0xff]
        %v5924 = vld [vmem:[#allocation4 + $0x538] sm:$0xff]
        %v5925 = vld [vmem:[#allocation4 + $0x540] sm:$0xff]
        %v5926 = vld [vmem:[#allocation4 + $0x548] sm:$0xff]
        %v5927 = vld [vmem:[#allocation4 + $0x550] sm:$0xff]
        %v5928 = vld [vmem:[#allocation4 + $0x558] sm:$0xff]
        %v5929 = vld [vmem:[#allocation4 + $0x560] sm:$0xff]
        %v5930 = vld [vmem:[#allocation4 + $0x568] sm:$0xff]
        %v5931 = vld [vmem:[#allocation4 + $0x570] sm:$0xff]
        %v5932 = vld [vmem:[#allocation4 + $0x578] sm:$0xff]
        %v5933 = vld [vmem:[#allocation4 + $0x580] sm:$0xff]
        %v5934 = vld [vmem:[#allocation4 + $0x588] sm:$0xff]
        %v5935 = vld [vmem:[#allocation4 + $0x590] sm:$0xff]
        %v5936 = vld [vmem:[#allocation4 + $0x598] sm:$0xff]
        %v5937 = vld [vmem:[#allocation4 + $0x5a0] sm:$0xff]
        %v5938 = vld [vmem:[#allocation4 + $0x5a8] sm:$0xff]
        %v5939 = vld [vmem:[#allocation4 + $0x5b0] sm:$0xff]
        %v5940 = vld [vmem:[#allocation4 + $0x5b8] sm:$0xff]
        %v5941 = vld [vmem:[#allocation4 + $0x5c0] sm:$0xff]
        %v5942 = vld [vmem:[#allocation4 + $0x5c8] sm:$0xff]
        %v5943 = vld [vmem:[#allocation4 + $0x5d0] sm:$0xff]
        %v5944 = vld [vmem:[#allocation4 + $0x5d8] sm:$0xff]
        %v5945 = vld [vmem:[#allocation4 + $0x5e0] sm:$0xff]
        %v5946 = vld [vmem:[#allocation4 + $0x5e8] sm:$0xff]
        %v5947 = vld [vmem:[#allocation4 + $0x5f0] sm:$0xff]
        %v5948 = vld [vmem:[#allocation4 + $0x5f8] sm:$0xff]
        %v5949 = vld [vmem:[#allocation4 + $0x600] sm:$0xff]
        %v5950 = vld [vmem:[#allocation4 + $0x608] sm:$0xff]
        %v5951 = vld [vmem:[#allocation4 + $0x610] sm:$0xff]
        %v5952 = vld [vmem:[#allocation4 + $0x618] sm:$0xff]
        %v5953 = vld [vmem:[#allocation4 + $0x620] sm:$0xff]
        %v5954 = vld [vmem:[#allocation4 + $0x628] sm:$0xff]
        %v5955 = vld [vmem:[#allocation4 + $0x630] sm:$0xff]
        %v5956 = vld [vmem:[#allocation4 + $0x638] sm:$0xff]
        %v5957 = vld [vmem:[#allocation4 + $0x640] sm:$0xff]
        %v5958 = vld [vmem:[#allocation4 + $0x648] sm:$0xff]
        %v5959 = vld [vmem:[#allocation4 + $0x650] sm:$0xff]
        %v5960 = vld [vmem:[#allocation4 + $0x658] sm:$0xff]
        %v5961 = vld [vmem:[#allocation4 + $0x660] sm:$0xff]
        %v5962 = vld [vmem:[#allocation4 + $0x668] sm:$0xff]
        %v5963 = vld [vmem:[#allocation4 + $0x670] sm:$0xff]
        %v5964 = vld [vmem:[#allocation4 + $0x678] sm:$0xff]
        %v5965 = vld [vmem:[#allocation4 + $0x680] sm:$0xff]
        %v5966 = vld [vmem:[#allocation4 + $0x688] sm:$0xff]
        %v5967 = vld [vmem:[#allocation4 + $0x690] sm:$0xff]
        %v5968 = vld [vmem:[#allocation4 + $0x698] sm:$0xff]
        %v5969 = vld [vmem:[#allocation4 + $0x6a0] sm:$0xff]
        %v5970 = vld [vmem:[#allocation4 + $0x6a8] sm:$0xff]
        %v5971 = vld [vmem:[#allocation4 + $0x6b0] sm:$0xff]
        %v5972 = vld [vmem:[#allocation4 + $0x6b8] sm:$0xff]
        %v5973 = vld [vmem:[#allocation4 + $0x6c0] sm:$0xff]
        %v5974 = vld [vmem:[#allocation4 + $0x6c8] sm:$0xff]
        %v5975 = vld [vmem:[#allocation4 + $0x6d0] sm:$0xff]
        %v5976 = vld [vmem:[#allocation4 + $0x6d8] sm:$0xff]
        %v5977 = vld [vmem:[#allocation4 + $0x6e0] sm:$0xff]
        %v5978 = vld [vmem:[#allocation4 + $0x6e8] sm:$0xff]
        %v5979 = vld [vmem:[#allocation4 + $0x6f0] sm:$0xff]
        %v5980 = vld [vmem:[#allocation4 + $0x6f8] sm:$0xff]
        %v5981 = vld [vmem:[#allocation4 + $0x700] sm:$0xff]
        %v5982 = vld [vmem:[#allocation4 + $0x708] sm:$0xff]
        %v5983 = vld [vmem:[#allocation4 + $0x710] sm:$0xff]
        %v5984 = vld [vmem:[#allocation4 + $0x718] sm:$0xff]
        %v5985 = vld [vmem:[#allocation4 + $0x720] sm:$0xff]
        %v5986 = vld [vmem:[#allocation4 + $0x728] sm:$0xff]
        %v5987 = vld [vmem:[#allocation4 + $0x730] sm:$0xff]
        %v5988 = vld [vmem:[#allocation4 + $0x738] sm:$0xff]
        %v5989 = vld [vmem:[#allocation4 + $0x740] sm:$0xff]
        %v5990 = vld [vmem:[#allocation4 + $0x748] sm:$0xff]
        %v5991 = vld [vmem:[#allocation4 + $0x750] sm:$0xff]
        %v5992 = vld [vmem:[#allocation4 + $0x758] sm:$0xff]
        %v5993 = vld [vmem:[#allocation4 + $0x760] sm:$0xff]
        %v5994 = vld [vmem:[#allocation4 + $0x768] sm:$0xff]
        %v5995 = vld [vmem:[#allocation4 + $0x770] sm:$0xff]
        %v5996 = vld [vmem:[#allocation4 + $0x778] sm:$0xff]
        %v5997 = vld [vmem:[#allocation4 + $0x780] sm:$0xff]
        %v5998 = vld [vmem:[#allocation4 + $0x788] sm:$0xff]
        %v5999 = vld [vmem:[#allocation4 + $0x790] sm:$0xff]
        %v6000 = vld [vmem:[#allocation4 + $0x798] sm:$0xff]
        %v6001 = vld [vmem:[#allocation4 + $0x7a0] sm:$0xff]
        %v6002 = vld [vmem:[#allocation4 + $0x7a8] sm:$0xff]
        %v6003 = vld [vmem:[#allocation4 + $0x7b0] sm:$0xff]
        %v6004 = vld [vmem:[#allocation4 + $0x7b8] sm:$0xff]
        %v6005 = vld [vmem:[#allocation4 + $0x7c0] sm:$0xff]
        %v6006 = vld [vmem:[#allocation4 + $0x7c8] sm:$0xff]
        %v6007 = vld [vmem:[#allocation4 + $0x7d0] sm:$0xff]
        %v6008 = vld [vmem:[#allocation4 + $0x7d8] sm:$0xff]
        %v6009 = vld [vmem:[#allocation4 + $0x7e0] sm:$0xff]
        %v6010 = vld [vmem:[#allocation4 + $0x7e8] sm:$0xff]
        %v6011 = vld [vmem:[#allocation4 + $0x7f0] sm:$0xff]
        %v6012 = vld [vmem:[#allocation4 + $0x7f8] sm:$0xff]
        %v6013 = vld [vmem:[#allocation4 + $0x800] sm:$0xff]
        %v6014 = vld [vmem:[#allocation4 + $0x808] sm:$0xff]
        %v6015 = vld [vmem:[#allocation4 + $0x810] sm:$0xff]
        %v6016 = vld [vmem:[#allocation4 + $0x818] sm:$0xff]
        %v6017 = vld [vmem:[#allocation4 + $0x820] sm:$0xff]
        %v6018 = vld [vmem:[#allocation4 + $0x828] sm:$0xff]
        %v6019 = vld [vmem:[#allocation4 + $0x830] sm:$0xff]
        %v6020 = vld [vmem:[#allocation4 + $0x838] sm:$0xff]
        %v6021 = vld [vmem:[#allocation4 + $0x840] sm:$0xff]
        %v6022 = vld [vmem:[#allocation4 + $0x848] sm:$0xff]
        %v6023 = vld [vmem:[#allocation4 + $0x850] sm:$0xff]
        %v6024 = vld [vmem:[#allocation4 + $0x858] sm:$0xff]
        %v6025 = vld [vmem:[#allocation4 + $0x860] sm:$0xff]
        %v6026 = vld [vmem:[#allocation4 + $0x868] sm:$0xff]
        %v6027 = vld [vmem:[#allocation4 + $0x870] sm:$0xff]
        %v6028 = vld [vmem:[#allocation4 + $0x878] sm:$0xff]
        %v6029 = vld [vmem:[#allocation4 + $0x880] sm:$0xff]
        %v6030 = vld [vmem:[#allocation4 + $0x888] sm:$0xff]
        %v6031 = vld [vmem:[#allocation4 + $0x890] sm:$0xff]
        %v6032 = vld [vmem:[#allocation4 + $0x898] sm:$0xff]
        %v6033 = vld [vmem:[#allocation4 + $0x8a0] sm:$0xff]
        %v6034 = vld [vmem:[#allocation4 + $0x8a8] sm:$0xff]
        %v6035 = vld [vmem:[#allocation4 + $0x8b0] sm:$0xff]
        %v6036 = vld [vmem:[#allocation4 + $0x8b8] sm:$0xff]
        %v6037 = vld [vmem:[%s3] sm:$0xff]
        %v6038 = vld [vmem:[%s3 + $0x8] sm:$0xff]
        %v6039 = vld [vmem:[%s3 + $0x10] sm:$0xff]
        %v6040 = vld [vmem:[%s3 + $0x18] sm:$0xff]
        %v6041 = vld [vmem:[%s3 + $0x20] sm:$0xff]
        %v6042 = vld [vmem:[%s3 + $0x28] sm:$0xff]
        %v6043 = vld [vmem:[%s3 + $0x30] sm:$0xff]
        %v6044 = vld [vmem:[%s3 + $0x38] sm:$0xff]
        %v6045 = vld [vmem:[%s3 + $0x40] sm:$0xff]
        %v6046 = vld [vmem:[%s3 + $0x48] sm:$0xff]
        %v6047 = vld [vmem:[%s3 + $0x50] sm:$0xff]
        %v6048 = vld [vmem:[%s3 + $0x58] sm:$0xff]
        %v6049 = vld [vmem:[%s3 + $0x60] sm:$0xff]
        %v6050 = vld [vmem:[%s3 + $0x68] sm:$0xff]
        %v6051 = vld [vmem:[%s3 + $0x70] sm:$0xff]
        %v6052 = vld [vmem:[%s3 + $0x78] sm:$0xff]
        %v6053 = vld [vmem:[%s3 + $0x80] sm:$0xff]
        %v6054 = vld [vmem:[%s3 + $0x88] sm:$0xff]
        %v6055 = vld [vmem:[%s3 + $0x90] sm:$0xff]
        %v6056 = vld [vmem:[%s3 + $0x98] sm:$0xff]
        %v6057 = vld [vmem:[%s3 + $0xa0] sm:$0xff]
        %v6058 = vld [vmem:[%s3 + $0xa8] sm:$0xff]
        %v6059 = vld [vmem:[%s3 + $0xb0] sm:$0xff]
        %v6060 = vld [vmem:[%s3 + $0xb8] sm:$0xff]
        %v6061 = vld [vmem:[%s3 + $0xc0] sm:$0xff]
        %v6062 = vld [vmem:[%s3 + $0xc8] sm:$0xff]
        %v6063 = vld [vmem:[%s3 + $0xd0] sm:$0xff]
        %v6064 = vld [vmem:[%s3 + $0xd8] sm:$0xff]
        %v6065 = vld [vmem:[%s3 + $0xe0] sm:$0xff]
        %v6066 = vld [vmem:[%s3 + $0xe8] sm:$0xff]
        %v6067 = vld [vmem:[%s3 + $0xf0] sm:$0xff]
        %v6068 = vld [vmem:[%s3 + $0xf8] sm:$0xff]
        %v6069 = vld [vmem:[%s3 + $0x100] sm:$0xff]
        %v6070 = vld [vmem:[%s3 + $0x108] sm:$0xff]
        %v6071 = vld [vmem:[%s3 + $0x110] sm:$0xff]
        %v6072 = vld [vmem:[%s3 + $0x118] sm:$0xff]
        %v6073 = vld [vmem:[%s3 + $0x120] sm:$0xff]
        %v6074 = vld [vmem:[%s3 + $0x128] sm:$0xff]
        %v6075 = vld [vmem:[%s3 + $0x130] sm:$0xff]
        %v6076 = vld [vmem:[%s3 + $0x138] sm:$0xff]
        %v6077 = vld [vmem:[%s3 + $0x140] sm:$0xff]
        %v6078 = vld [vmem:[%s3 + $0x148] sm:$0xff]
        %v6079 = vld [vmem:[%s3 + $0x150] sm:$0xff]
        %v6080 = vld [vmem:[%s3 + $0x158] sm:$0xff]
        %v6081 = vld [vmem:[%s3 + $0x160] sm:$0xff]
        %v6082 = vld [vmem:[%s3 + $0x168] sm:$0xff]
        %v6083 = vld [vmem:[%s3 + $0x170] sm:$0xff]
        %v6084 = vld [vmem:[%s3 + $0x178] sm:$0xff]
        %v6085 = vld [vmem:[%s3 + $0x180] sm:$0xff]
        %v6086 = vld [vmem:[%s3 + $0x188] sm:$0xff]
        %v6087 = vld [vmem:[%s3 + $0x190] sm:$0xff]
        %v6088 = vld [vmem:[%s3 + $0x198] sm:$0xff]
        %v6089 = vld [vmem:[%s3 + $0x1a0] sm:$0xff]
        %v6090 = vld [vmem:[%s3 + $0x1a8] sm:$0xff]
        %v6091 = vld [vmem:[%s3 + $0x1b0] sm:$0xff]
        %v6092 = vld [vmem:[%s3 + $0x1b8] sm:$0xff]
        %v6093 = vld [vmem:[%s3 + $0x1c0] sm:$0xff]
        %v6094 = vld [vmem:[%s3 + $0x1c8] sm:$0xff]
        %v6095 = vld [vmem:[%s3 + $0x1d0] sm:$0xff]
        %v6096 = vld [vmem:[%s3 + $0x1d8] sm:$0xff]
        %v6097 = vld [vmem:[%s3 + $0x1e0] sm:$0xff]
        %v6098 = vld [vmem:[%s3 + $0x1e8] sm:$0xff]
        %v6099 = vld [vmem:[%s3 + $0x1f0] sm:$0xff]
        %v6100 = vld [vmem:[%s3 + $0x1f8] sm:$0xff]
        %v6101 = vld [vmem:[%s3 + $0x200] sm:$0xff]
        %v6102 = vld [vmem:[%s3 + $0x208] sm:$0xff]
        %v6103 = vld [vmem:[%s3 + $0x210] sm:$0xff]
        %v6104 = vld [vmem:[%s3 + $0x218] sm:$0xff]
        %v6105 = vld [vmem:[%s3 + $0x220] sm:$0xff]
        %v6106 = vld [vmem:[%s3 + $0x228] sm:$0xff]
        %v6107 = vld [vmem:[%s3 + $0x230] sm:$0xff]
        %v6108 = vld [vmem:[%s3 + $0x238] sm:$0xff]
        %v6109 = vlaneseq
        %v6110 = vshrl.u32 %v6109, 7
        %v6111 = vsub.s32 0, %v6110
        %v6112 = vrot.slane %v280, %v6111
        %v6114 = vsel %vm2367, %v5761, 0
        %v6117 = vsel %vm2367, %v5766, 0
        %v6120 = vsel %vm2367, %v5771, 0
        %v6123 = vsel %vm2367, %v5776, 0
        %v6126 = vsel %vm2367, %v5781, 0
        %v6129 = vsel %vm2367, %v5786, 0
        %v6132 = vsel %vm2367, %v5791, 0
        %v6135 = vsel %vm2367, %v5796, 0
        %v6138 = vsel %vm2367, %v5801, 0
        %v6141 = vsel %vm2367, %v5806, 0
        %v6144 = vsel %vm2367, %v5811, 0
        %v6147 = vsel %vm2367, %v5816, 0
        %v6150 = vsel %vm2367, %v5821, 0
        %v6153 = vsel %vm2367, %v5826, 0
        %v6156 = vsel %vm2367, %v5831, 0
        %v6159 = vsel %vm2367, %v5836, 0
        %v6162 = vsel %vm2367, %v5841, 0
        %v6165 = vsel %vm2367, %v5846, 0
        %v6168 = vsel %vm2367, %v5851, 0
        %v6171 = vsel %vm2367, %v5856, 0
        %v6174 = vsel %vm2367, %v5861, 0
        %v6177 = vsel %vm2367, %v5866, 0
        %v6180 = vsel %vm2367, %v5871, 0
        %v6183 = vsel %vm2367, %v5876, 0
        %v6186 = vsel %vm2367, %v5881, 0
        %v6189 = vsel %vm2367, %v5886, 0
        %v6192 = vsel %vm2367, %v5891, 0
        %v6195 = vsel %vm2367, %v5896, 0
        %v6198 = vsel %vm2367, %v5901, 0
        %v6201 = vsel %vm2367, %v5906, 0
        %v6204 = vsel %vm2367, %v5911, 0
        %v6207 = vsel %vm2367, %v5916, 0
        %v6210 = vsel %vm2367, %v5921, 0
        %v6213 = vsel %vm2367, %v5926, 0
        %v6216 = vsel %vm2367, %v5931, 0
        %v6219 = vsel %vm2367, %v5936, 0
        %v6222 = vsel %vm2367, %v5941, 0
        %v6225 = vsel %vm2367, %v5946, 0
        %v6228 = vsel %vm2367, %v5951, 0
        %v6231 = vsel %vm2367, %v5956, 0
        %v6234 = vsel %vm2367, %v5961, 0
        %v6237 = vsel %vm2367, %v5966, 0
        %v6240 = vsel %vm2367, %v5971, 0
        %v6243 = vsel %vm2367, %v5976, 0
        %v6246 = vsel %vm2367, %v5981, 0
        %v6249 = vsel %vm2367, %v5986, 0
        %v6252 = vsel %vm2367, %v5991, 0
        %v6255 = vsel %vm2367, %v5996, 0
        %v6258 = vsel %vm2367, %v6001, 0
        %v6261 = vsel %vm2367, %v6006, 0
        %v6264 = vsel %vm2367, %v6011, 0
        %v6267 = vsel %vm2367, %v6016, 0
        %v6270 = vsel %vm2367, %v6021, 0
        %v6273 = vsel %vm2367, %v6026, 0
        %v6276 = vsel %vm2367, %v6031, 0
        %v6279 = vsel %vm2367, %v6036, 0
        %6281 = vmatprep.subr.mxu0 0.0
        %6282 = vmatpush1.msra.mxu0 %v6052
        %6283 = vmatprep.subr.mxu0 0.0
        %6284 = vmatpush1.msra.mxu0 %v6051
        %6285 = vmatprep.subr.mxu0 0.0
        %6286 = vmatpush1.msra.mxu0 %v6050
        %6287 = vmatprep.subr.mxu0 0.0
        %6288 = vmatpush1.msra.mxu0 %v6049
        %6289 = vmatprep.subr.mxu0 0.0
        %6290 = vmatpush1.msra.mxu0 %v6048
        %6291 = vmatprep.subr.mxu0 0.0
        %6292 = vmatpush1.msra.mxu0 %v6047
        %6293 = vmatprep.subr.mxu0 0.0
        %6294 = vmatpush1.msra.mxu0 %v6046
        %6295 = vmatprep.subr.mxu0 0.0
        %6296 = vmatpush1.msra.mxu0 %v6045
        %6297 = vmatprep.subr.mxu0 0.0
        %6298 = vmatpush1.msra.mxu0 %v6044
        %6299 = vmatprep.subr.mxu0 0.0
        %6300 = vmatpush1.msra.mxu0 %v6043
        %6301 = vmatprep.subr.mxu0 0.0
        %6302 = vmatpush1.msra.mxu0 %v6042
        %6303 = vmatprep.subr.mxu0 0.0
        %6304 = vmatpush1.msra.mxu0 %v6041
        %6305 = vmatprep.subr.mxu0 0.0
        %6306 = vmatpush1.msra.mxu0 %v6040
        %6307 = vmatprep.subr.mxu0 0.0
        %6308 = vmatpush1.msra.mxu0 %v6039
        %6309 = vmatprep.subr.mxu0 0.0
        %6310 = vmatpush1.msra.mxu0 %v6038
        %6311 = vmatprep.subr.mxu0 0.0
        %6312 = vmatpush1.msra.mxu0 %v6037
        %6313 = vmatprep.subr.mxu0 0.0
        %6314 = vmatpush2.msra.mxu0 %v6068
        %6315 = vmatprep.subr.mxu0 0.0
        %6316 = vmatpush2.msra.mxu0 %v6067
        %6317 = vmatprep.subr.mxu0 0.0
        %6318 = vmatpush2.msra.mxu0 %v6066
        %6319 = vmatprep.subr.mxu0 0.0
        %6320 = vmatpush2.msra.mxu0 %v6065
        %6321 = vmatprep.subr.mxu0 0.0
        %6322 = vmatpush2.msra.mxu0 %v6064
        %6323 = vmatprep.subr.mxu0 0.0
        %6324 = vmatpush2.msra.mxu0 %v6063
        %6325 = vmatprep.subr.mxu0 0.0
        %6326 = vmatpush2.msra.mxu0 %v6062
        %6327 = vmatprep.subr.mxu0 0.0
        %6328 = vmatpush2.msra.mxu0 %v6061
        %6329 = vmatprep.subr.mxu0 0.0
        %6330 = vmatpush2.msra.mxu0 %v6060
        %6331 = vmatprep.subr.mxu0 0.0
        %6332 = vmatpush2.msra.mxu0 %v6059
        %6333 = vmatprep.subr.mxu0 0.0
        %6334 = vmatpush2.msra.mxu0 %v6058
        %6335 = vmatprep.subr.mxu0 0.0
        %6336 = vmatpush2.msra.mxu0 %v6057
        %6337 = vmatprep.subr.mxu0 0.0
        %6338 = vmatpush2.msra.mxu0 %v6056
        %6339 = vmatprep.subr.mxu0 0.0
        %6340 = vmatpush2.msra.mxu0 %v6055
        %6341 = vmatprep.subr.mxu0 0.0
        %6342 = vmatpush2.msra.mxu0 %v6054
        %6343 = vmatprep.subr.mxu0 0.0
        %6344 = vmatpush2.msra.mxu0 %v6053
        %6345 = vmatprep.mubr.f32.mxu0 %v5758
        %6346 = vmatmul.mubr.f32.gmra.mxu0 %v5757
        %v6347 = vpop.f32.mrf.mxu0
        %v6348 = vadd.f32 %v6112, %v6347
        %v6349 = vpop.f32.mrf.mxu0
        %6350 = vmatprep.mubr.f32.mxu0 %v5763
        %6351 = vmatmul.mubr.f32.gmra.mxu0 %v5762
        %v6352 = vpop.f32.mrf.mxu0
        %v6353 = vadd.f32 %v6112, %v6352
        %v6354 = vpop.f32.mrf.mxu0
        %6355 = vmatprep.mubr.f32.mxu0 %v5768
        %6356 = vmatmul.mubr.f32.gmra.mxu0 %v5767
        %v6357 = vpop.f32.mrf.mxu0
        %v6358 = vadd.f32 %v6112, %v6357
        %v6359 = vpop.f32.mrf.mxu0
        %6360 = vmatprep.mubr.f32.mxu0 %v5773
        %6361 = vmatmul.mubr.f32.gmra.mxu0 %v5772
        %v6362 = vpop.f32.mrf.mxu0
        %v6363 = vadd.f32 %v6112, %v6362
        %v6364 = vpop.f32.mrf.mxu0
        %6365 = vmatprep.mubr.f32.mxu0 %v5778
        %6366 = vmatmul.mubr.f32.gmra.mxu0 %v5777
        %v6367 = vpop.f32.mrf.mxu0
        %v6368 = vadd.f32 %v6112, %v6367
        %v6369 = vpop.f32.mrf.mxu0
        %6370 = vmatprep.mubr.f32.mxu0 %v5783
        %6371 = vmatmul.mubr.f32.gmra.mxu0 %v5782
        %v6372 = vpop.f32.mrf.mxu0
        %v6373 = vadd.f32 %v6112, %v6372
        %v6374 = vpop.f32.mrf.mxu0
        %6375 = vmatprep.mubr.f32.mxu0 %v5788
        %6376 = vmatmul.mubr.f32.gmra.mxu0 %v5787
        %v6377 = vpop.f32.mrf.mxu0
        %v6378 = vadd.f32 %v6112, %v6377
        %v6379 = vpop.f32.mrf.mxu0
        %6380 = vmatprep.mubr.f32.mxu0 %v5793
        %6381 = vmatmul.mubr.f32.gmra.mxu0 %v5792
        %v6382 = vpop.f32.mrf.mxu0
        %v6383 = vadd.f32 %v6112, %v6382
        %v6384 = vpop.f32.mrf.mxu0
        %6385 = vmatprep.mubr.f32.mxu0 %v5798
        %6386 = vmatmul.mubr.f32.gmra.mxu0 %v5797
        %v6387 = vpop.f32.mrf.mxu0
        %v6388 = vadd.f32 %v6112, %v6387
        %v6389 = vpop.f32.mrf.mxu0
        %6390 = vmatprep.mubr.f32.mxu0 %v5803
        %6391 = vmatmul.mubr.f32.gmra.mxu0 %v5802
        %v6392 = vpop.f32.mrf.mxu0
        %v6393 = vadd.f32 %v6112, %v6392
        %v6394 = vpop.f32.mrf.mxu0
        %6395 = vmatprep.mubr.f32.mxu0 %v5808
        %6396 = vmatmul.mubr.f32.gmra.mxu0 %v5807
        %v6397 = vpop.f32.mrf.mxu0
        %v6398 = vadd.f32 %v6112, %v6397
        %v6399 = vpop.f32.mrf.mxu0
        %6400 = vmatprep.mubr.f32.mxu0 %v5813
        %6401 = vmatmul.mubr.f32.gmra.mxu0 %v5812
        %v6402 = vpop.f32.mrf.mxu0
        %v6403 = vadd.f32 %v6112, %v6402
        %v6404 = vpop.f32.mrf.mxu0
        %6405 = vmatprep.mubr.f32.mxu0 %v5818
        %6406 = vmatmul.mubr.f32.gmra.mxu0 %v5817
        %v6407 = vpop.f32.mrf.mxu0
        %v6408 = vadd.f32 %v6112, %v6407
        %v6409 = vpop.f32.mrf.mxu0
        %6410 = vmatprep.mubr.f32.mxu0 %v5823
        %6411 = vmatmul.mubr.f32.gmra.mxu0 %v5822
        %v6412 = vpop.f32.mrf.mxu0
        %v6413 = vadd.f32 %v6112, %v6412
        %v6414 = vpop.f32.mrf.mxu0
        %6415 = vmatprep.mubr.f32.mxu0 %v5828
        %6416 = vmatmul.mubr.f32.gmra.mxu0 %v5827
        %v6417 = vpop.f32.mrf.mxu0
        %v6418 = vadd.f32 %v6112, %v6417
        %v6419 = vpop.f32.mrf.mxu0
        %6420 = vmatprep.mubr.f32.mxu0 %v5833
        %6421 = vmatmul.mubr.f32.gmra.mxu0 %v5832
        %v6422 = vpop.f32.mrf.mxu0
        %v6423 = vadd.f32 %v6112, %v6422
        %v6424 = vpop.f32.mrf.mxu0
        %6425 = vmatprep.mubr.f32.mxu0 %v5838
        %6426 = vmatmul.mubr.f32.gmra.mxu0 %v5837
        %v6427 = vpop.f32.mrf.mxu0
        %v6428 = vadd.f32 %v6112, %v6427
        %v6429 = vpop.f32.mrf.mxu0
        %6430 = vmatprep.mubr.f32.mxu0 %v5843
        %6431 = vmatmul.mubr.f32.gmra.mxu0 %v5842
        %v6432 = vpop.f32.mrf.mxu0
        %v6433 = vadd.f32 %v6112, %v6432
        %v6434 = vpop.f32.mrf.mxu0
        %6435 = vmatprep.mubr.f32.mxu0 %v5848
        %6436 = vmatmul.mubr.f32.gmra.mxu0 %v5847
        %v6437 = vpop.f32.mrf.mxu0
        %v6438 = vadd.f32 %v6112, %v6437
        %v6439 = vpop.f32.mrf.mxu0
        %6440 = vmatprep.mubr.f32.mxu0 %v5853
        %6441 = vmatmul.mubr.f32.gmra.mxu0 %v5852
        %v6442 = vpop.f32.mrf.mxu0
        %v6443 = vadd.f32 %v6112, %v6442
        %v6444 = vpop.f32.mrf.mxu0
        %6445 = vmatprep.mubr.f32.mxu0 %v5858
        %6446 = vmatmul.mubr.f32.gmra.mxu0 %v5857
        %v6447 = vpop.f32.mrf.mxu0
        %v6448 = vadd.f32 %v6112, %v6447
        %v6449 = vpop.f32.mrf.mxu0
        %6450 = vmatprep.mubr.f32.mxu0 %v5863
        %6451 = vmatmul.mubr.f32.gmra.mxu0 %v5862
        %v6452 = vpop.f32.mrf.mxu0
        %v6453 = vadd.f32 %v6112, %v6452
        %v6454 = vpop.f32.mrf.mxu0
        %6455 = vmatprep.mubr.f32.mxu0 %v5868
        %6456 = vmatmul.mubr.f32.gmra.mxu0 %v5867
        %v6457 = vpop.f32.mrf.mxu0
        %v6458 = vadd.f32 %v6112, %v6457
        %v6459 = vpop.f32.mrf.mxu0
        %6460 = vmatprep.mubr.f32.mxu0 %v5873
        %6461 = vmatmul.mubr.f32.gmra.mxu0 %v5872
        %v6462 = vpop.f32.mrf.mxu0
        %v6463 = vadd.f32 %v6112, %v6462
        %v6464 = vpop.f32.mrf.mxu0
        %6465 = vmatprep.mubr.f32.mxu0 %v5878
        %6466 = vmatmul.mubr.f32.gmra.mxu0 %v5877
        %v6467 = vpop.f32.mrf.mxu0
        %v6468 = vadd.f32 %v6112, %v6467
        %v6469 = vpop.f32.mrf.mxu0
        %6470 = vmatprep.mubr.f32.mxu0 %v5883
        %6471 = vmatmul.mubr.f32.gmra.mxu0 %v5882
        %v6472 = vpop.f32.mrf.mxu0
        %v6473 = vadd.f32 %v6112, %v6472
        %v6474 = vpop.f32.mrf.mxu0
        %6475 = vmatprep.mubr.f32.mxu0 %v5888
        %6476 = vmatmul.mubr.f32.gmra.mxu0 %v5887
        %v6477 = vpop.f32.mrf.mxu0
        %v6478 = vadd.f32 %v6112, %v6477
        %v6479 = vpop.f32.mrf.mxu0
        %6480 = vmatprep.mubr.f32.mxu0 %v5893
        %6481 = vmatmul.mubr.f32.gmra.mxu0 %v5892
        %v6482 = vpop.f32.mrf.mxu0
        %v6483 = vadd.f32 %v6112, %v6482
        %v6484 = vpop.f32.mrf.mxu0
        %6485 = vmatprep.mubr.f32.mxu0 %v5898
        %6486 = vmatmul.mubr.f32.gmra.mxu0 %v5897
        %v6487 = vpop.f32.mrf.mxu0
        %v6488 = vadd.f32 %v6112, %v6487
        %v6489 = vpop.f32.mrf.mxu0
        %6490 = vmatprep.mubr.f32.mxu0 %v5903
        %6491 = vmatmul.mubr.f32.gmra.mxu0 %v5902
        %v6492 = vpop.f32.mrf.mxu0
        %v6493 = vadd.f32 %v6112, %v6492
        %v6494 = vpop.f32.mrf.mxu0
        %6495 = vmatprep.mubr.f32.mxu0 %v5908
        %6496 = vmatmul.mubr.f32.gmra.mxu0 %v5907
        %v6497 = vpop.f32.mrf.mxu0
        %v6498 = vadd.f32 %v6112, %v6497
        %v6499 = vpop.f32.mrf.mxu0
        %6500 = vmatprep.mubr.f32.mxu0 %v5913
        %6501 = vmatmul.mubr.f32.gmra.mxu0 %v5912
        %v6502 = vpop.f32.mrf.mxu0
        %v6503 = vadd.f32 %v6112, %v6502
        %v6504 = vpop.f32.mrf.mxu0
        %6505 = vmatprep.mubr.f32.mxu0 %v5918
        %6506 = vmatmul.mubr.f32.gmra.mxu0 %v5917
        %v6507 = vpop.f32.mrf.mxu0
        %v6508 = vadd.f32 %v6112, %v6507
        %v6509 = vpop.f32.mrf.mxu0
        %6510 = vmatprep.mubr.f32.mxu0 %v5923
        %6511 = vmatmul.mubr.f32.gmra.mxu0 %v5922
        %v6512 = vpop.f32.mrf.mxu0
        %v6513 = vadd.f32 %v6112, %v6512
        %v6514 = vpop.f32.mrf.mxu0
        %6515 = vmatprep.mubr.f32.mxu0 %v5928
        %6516 = vmatmul.mubr.f32.gmra.mxu0 %v5927
        %v6517 = vpop.f32.mrf.mxu0
        %v6518 = vadd.f32 %v6112, %v6517
        %v6519 = vpop.f32.mrf.mxu0
        %6520 = vmatprep.mubr.f32.mxu0 %v5933
        %6521 = vmatmul.mubr.f32.gmra.mxu0 %v5932
        %v6522 = vpop.f32.mrf.mxu0
        %v6523 = vadd.f32 %v6112, %v6522
        %v6524 = vpop.f32.mrf.mxu0
        %6525 = vmatprep.mubr.f32.mxu0 %v5938
        %6526 = vmatmul.mubr.f32.gmra.mxu0 %v5937
        %v6527 = vpop.f32.mrf.mxu0
        %v6528 = vadd.f32 %v6112, %v6527
        %v6529 = vpop.f32.mrf.mxu0
        %6530 = vmatprep.mubr.f32.mxu0 %v5943
        %6531 = vmatmul.mubr.f32.gmra.mxu0 %v5942
        %v6532 = vpop.f32.mrf.mxu0
        %v6533 = vadd.f32 %v6112, %v6532
        %v6534 = vpop.f32.mrf.mxu0
        %6535 = vmatprep.mubr.f32.mxu0 %v5948
        %6536 = vmatmul.mubr.f32.gmra.mxu0 %v5947
        %v6537 = vpop.f32.mrf.mxu0
        %v6538 = vadd.f32 %v6112, %v6537
        %v6539 = vpop.f32.mrf.mxu0
        %6540 = vmatprep.mubr.f32.mxu0 %v5953
        %6541 = vmatmul.mubr.f32.gmra.mxu0 %v5952
        %v6542 = vpop.f32.mrf.mxu0
        %v6543 = vadd.f32 %v6112, %v6542
        %v6544 = vpop.f32.mrf.mxu0
        %6545 = vmatprep.mubr.f32.mxu0 %v5958
        %6546 = vmatmul.mubr.f32.gmra.mxu0 %v5957
        %v6547 = vpop.f32.mrf.mxu0
        %v6548 = vadd.f32 %v6112, %v6547
        %v6549 = vpop.f32.mrf.mxu0
        %6550 = vmatprep.mubr.f32.mxu0 %v5963
        %6551 = vmatmul.mubr.f32.gmra.mxu0 %v5962
        %v6552 = vpop.f32.mrf.mxu0
        %v6553 = vadd.f32 %v6112, %v6552
        %v6554 = vpop.f32.mrf.mxu0
        %6555 = vmatprep.mubr.f32.mxu0 %v5968
        %6556 = vmatmul.mubr.f32.gmra.mxu0 %v5967
        %v6557 = vpop.f32.mrf.mxu0
        %v6558 = vadd.f32 %v6112, %v6557
        %v6559 = vpop.f32.mrf.mxu0
        %6560 = vmatprep.mubr.f32.mxu0 %v5973
        %6561 = vmatmul.mubr.f32.gmra.mxu0 %v5972
        %v6562 = vpop.f32.mrf.mxu0
        %v6563 = vadd.f32 %v6112, %v6562
        %v6564 = vpop.f32.mrf.mxu0
        %6565 = vmatprep.mubr.f32.mxu0 %v5978
        %6566 = vmatmul.mubr.f32.gmra.mxu0 %v5977
        %v6567 = vpop.f32.mrf.mxu0
        %v6568 = vadd.f32 %v6112, %v6567
        %v6569 = vpop.f32.mrf.mxu0
        %6570 = vmatprep.mubr.f32.mxu0 %v5983
        %6571 = vmatmul.mubr.f32.gmra.mxu0 %v5982
        %v6572 = vpop.f32.mrf.mxu0
        %v6573 = vadd.f32 %v6112, %v6572
        %v6574 = vpop.f32.mrf.mxu0
        %6575 = vmatprep.mubr.f32.mxu0 %v5988
        %6576 = vmatmul.mubr.f32.gmra.mxu0 %v5987
        %v6577 = vpop.f32.mrf.mxu0
        %v6578 = vadd.f32 %v6112, %v6577
        %v6579 = vpop.f32.mrf.mxu0
        %6580 = vmatprep.mubr.f32.mxu0 %v5993
        %6581 = vmatmul.mubr.f32.gmra.mxu0 %v5992
        %v6582 = vpop.f32.mrf.mxu0
        %v6583 = vadd.f32 %v6112, %v6582
        %v6584 = vpop.f32.mrf.mxu0
        %6585 = vmatprep.mubr.f32.mxu0 %v5998
        %6586 = vmatmul.mubr.f32.gmra.mxu0 %v5997
        %v6587 = vpop.f32.mrf.mxu0
        %v6588 = vadd.f32 %v6112, %v6587
        %v6589 = vpop.f32.mrf.mxu0
        %6590 = vmatprep.mubr.f32.mxu0 %v6003
        %6591 = vmatmul.mubr.f32.gmra.mxu0 %v6002
        %v6592 = vpop.f32.mrf.mxu0
        %v6593 = vadd.f32 %v6112, %v6592
        %v6594 = vpop.f32.mrf.mxu0
        %6595 = vmatprep.mubr.f32.mxu0 %v6008
        %6596 = vmatmul.mubr.f32.gmra.mxu0 %v6007
        %v6597 = vpop.f32.mrf.mxu0
        %v6598 = vadd.f32 %v6112, %v6597
        %v6599 = vpop.f32.mrf.mxu0
        %6600 = vmatprep.mubr.f32.mxu0 %v6013
        %6601 = vmatmul.mubr.f32.gmra.mxu0 %v6012
        %v6602 = vpop.f32.mrf.mxu0
        %v6603 = vadd.f32 %v6112, %v6602
        %v6604 = vpop.f32.mrf.mxu0
        %6605 = vmatprep.mubr.f32.mxu0 %v6018
        %6606 = vmatmul.mubr.f32.gmra.mxu0 %v6017
        %v6607 = vpop.f32.mrf.mxu0
        %v6608 = vadd.f32 %v6112, %v6607
        %v6609 = vpop.f32.mrf.mxu0
        %6610 = vmatprep.mubr.f32.mxu0 %v6023
        %6611 = vmatmul.mubr.f32.gmra.mxu0 %v6022
        %v6612 = vpop.f32.mrf.mxu0
        %v6613 = vadd.f32 %v6112, %v6612
        %v6614 = vpop.f32.mrf.mxu0
        %6615 = vmatprep.mubr.f32.mxu0 %v6028
        %6616 = vmatmul.mubr.f32.gmra.mxu0 %v6027
        %v6617 = vpop.f32.mrf.mxu0
        %v6618 = vadd.f32 %v6112, %v6617
        %v6619 = vpop.f32.mrf.mxu0
        %6620 = vmatprep.mubr.f32.mxu0 %v6033
        %6621 = vmatmul.mubr.f32.gmra.mxu0 %v6032
        %v6622 = vpop.f32.mrf.mxu0
        %v6623 = vadd.f32 %v6112, %v6622
        %v6624 = vpop.f32.mrf.mxu0
        %6625 = vdwg.mxu0
        %6626 = vmatprep.subr.mxu0 0.0
        %6627 = vmatpush1.msra.mxu0 %v6084
        %6628 = vmatprep.subr.mxu0 0.0
        %6629 = vmatpush1.msra.mxu0 %v6083
        %6630 = vmatprep.subr.mxu0 0.0
        %6631 = vmatpush1.msra.mxu0 %v6082
        %6632 = vmatprep.subr.mxu0 0.0
        %6633 = vmatpush1.msra.mxu0 %v6081
        %6634 = vmatprep.subr.mxu0 0.0
        %6635 = vmatpush1.msra.mxu0 %v6080
        %6636 = vmatprep.subr.mxu0 0.0
        %6637 = vmatpush1.msra.mxu0 %v6079
        %6638 = vmatprep.subr.mxu0 0.0
        %6639 = vmatpush1.msra.mxu0 %v6078
        %6640 = vmatprep.subr.mxu0 0.0
        %6641 = vmatpush1.msra.mxu0 %v6077
        %6642 = vmatprep.subr.mxu0 0.0
        %6643 = vmatpush1.msra.mxu0 %v6076
        %6644 = vmatprep.subr.mxu0 0.0
        %6645 = vmatpush1.msra.mxu0 %v6075
        %6646 = vmatprep.subr.mxu0 0.0
        %6647 = vmatpush1.msra.mxu0 %v6074
        %6648 = vmatprep.subr.mxu0 0.0
        %6649 = vmatpush1.msra.mxu0 %v6073
        %6650 = vmatprep.subr.mxu0 0.0
        %6651 = vmatpush1.msra.mxu0 %v6072
        %6652 = vmatprep.subr.mxu0 0.0
        %6653 = vmatpush1.msra.mxu0 %v6071
        %6654 = vmatprep.subr.mxu0 0.0
        %6655 = vmatpush1.msra.mxu0 %v6070
        %6656 = vmatprep.subr.mxu0 0.0
        %6657 = vmatpush1.msra.mxu0 %v6069
        %6658 = vmatprep.subr.mxu0 0.0
        %6659 = vmatpush2.msra.mxu0 %v6100
        %6660 = vmatprep.subr.mxu0 0.0
        %6661 = vmatpush2.msra.mxu0 %v6099
        %6662 = vmatprep.subr.mxu0 0.0
        %6663 = vmatpush2.msra.mxu0 %v6098
        %6664 = vmatprep.subr.mxu0 0.0
        %6665 = vmatpush2.msra.mxu0 %v6097
        %6666 = vmatprep.subr.mxu0 0.0
        %6667 = vmatpush2.msra.mxu0 %v6096
        %6668 = vmatprep.subr.mxu0 0.0
        %6669 = vmatpush2.msra.mxu0 %v6095
        %6670 = vmatprep.subr.mxu0 0.0
        %6671 = vmatpush2.msra.mxu0 %v6094
        %6672 = vmatprep.subr.mxu0 0.0
        %6673 = vmatpush2.msra.mxu0 %v6093
        %6674 = vmatprep.subr.mxu0 0.0
        %6675 = vmatpush2.msra.mxu0 %v6092
        %6676 = vmatprep.subr.mxu0 0.0
        %6677 = vmatpush2.msra.mxu0 %v6091
        %6678 = vmatprep.subr.mxu0 0.0
        %6679 = vmatpush2.msra.mxu0 %v6090
        %6680 = vmatprep.subr.mxu0 0.0
        %6681 = vmatpush2.msra.mxu0 %v6089
        %6682 = vmatprep.subr.mxu0 0.0
        %6683 = vmatpush2.msra.mxu0 %v6088
        %6684 = vmatprep.subr.mxu0 0.0
        %6685 = vmatpush2.msra.mxu0 %v6087
        %6686 = vmatprep.subr.mxu0 0.0
        %6687 = vmatpush2.msra.mxu0 %v6086
        %6688 = vmatprep.subr.mxu0 0.0
        %6689 = vmatpush2.msra.mxu0 %v6085
        %6690 = vmatprep.mubr.f32.mxu0 %v5760
        %6691 = vmatmul.mubr.f32.gmra.mxu0 %v5759
        %v6692 = vpop.f32.mrf.mxu0
        %v6693 = vadd.f32 %v6348, %v6692
        %v6694 = vpop.f32.mrf.mxu0
        %6695 = vmatprep.mubr.f32.mxu0 %v5765
        %6696 = vmatmul.mubr.f32.gmra.mxu0 %v5764
        %v6697 = vpop.f32.mrf.mxu0
        %v6698 = vadd.f32 %v6353, %v6697
        %v6699 = vpop.f32.mrf.mxu0
        %6700 = vmatprep.mubr.f32.mxu0 %v5770
        %6701 = vmatmul.mubr.f32.gmra.mxu0 %v5769
        %v6702 = vpop.f32.mrf.mxu0
        %v6703 = vadd.f32 %v6358, %v6702
        %v6704 = vpop.f32.mrf.mxu0
        %6705 = vmatprep.mubr.f32.mxu0 %v5775
        %6706 = vmatmul.mubr.f32.gmra.mxu0 %v5774
        %v6707 = vpop.f32.mrf.mxu0
        %v6708 = vadd.f32 %v6363, %v6707
        %v6709 = vpop.f32.mrf.mxu0
        %6710 = vmatprep.mubr.f32.mxu0 %v5780
        %6711 = vmatmul.mubr.f32.gmra.mxu0 %v5779
        %v6712 = vpop.f32.mrf.mxu0
        %v6713 = vadd.f32 %v6368, %v6712
        %v6714 = vpop.f32.mrf.mxu0
        %6715 = vmatprep.mubr.f32.mxu0 %v5785
        %6716 = vmatmul.mubr.f32.gmra.mxu0 %v5784
        %v6717 = vpop.f32.mrf.mxu0
        %v6718 = vadd.f32 %v6373, %v6717
        %v6719 = vpop.f32.mrf.mxu0
        %6720 = vmatprep.mubr.f32.mxu0 %v5790
        %6721 = vmatmul.mubr.f32.gmra.mxu0 %v5789
        %v6722 = vpop.f32.mrf.mxu0
        %v6723 = vadd.f32 %v6378, %v6722
        %v6724 = vpop.f32.mrf.mxu0
        %6725 = vmatprep.mubr.f32.mxu0 %v5795
        %6726 = vmatmul.mubr.f32.gmra.mxu0 %v5794
        %v6727 = vpop.f32.mrf.mxu0
        %v6728 = vadd.f32 %v6383, %v6727
        %v6729 = vpop.f32.mrf.mxu0
        %6730 = vmatprep.mubr.f32.mxu0 %v5800
        %6731 = vmatmul.mubr.f32.gmra.mxu0 %v5799
        %v6732 = vpop.f32.mrf.mxu0
        %v6733 = vadd.f32 %v6388, %v6732
        %v6734 = vpop.f32.mrf.mxu0
        %6735 = vmatprep.mubr.f32.mxu0 %v5805
        %6736 = vmatmul.mubr.f32.gmra.mxu0 %v5804
        %v6737 = vpop.f32.mrf.mxu0
        %v6738 = vadd.f32 %v6393, %v6737
        %v6739 = vpop.f32.mrf.mxu0
        %6740 = vmatprep.mubr.f32.mxu0 %v5810
        %6741 = vmatmul.mubr.f32.gmra.mxu0 %v5809
        %v6742 = vpop.f32.mrf.mxu0
        %v6743 = vadd.f32 %v6398, %v6742
        %v6744 = vpop.f32.mrf.mxu0
        %6745 = vmatprep.mubr.f32.mxu0 %v5815
        %6746 = vmatmul.mubr.f32.gmra.mxu0 %v5814
        %v6747 = vpop.f32.mrf.mxu0
        %v6748 = vadd.f32 %v6403, %v6747
        %v6749 = vpop.f32.mrf.mxu0
        %6750 = vmatprep.mubr.f32.mxu0 %v5820
        %6751 = vmatmul.mubr.f32.gmra.mxu0 %v5819
        %v6752 = vpop.f32.mrf.mxu0
        %v6753 = vadd.f32 %v6408, %v6752
        %v6754 = vpop.f32.mrf.mxu0
        %6755 = vmatprep.mubr.f32.mxu0 %v5825
        %6756 = vmatmul.mubr.f32.gmra.mxu0 %v5824
        %v6757 = vpop.f32.mrf.mxu0
        %v6758 = vadd.f32 %v6413, %v6757
        %v6759 = vpop.f32.mrf.mxu0
        %6760 = vmatprep.mubr.f32.mxu0 %v5830
        %6761 = vmatmul.mubr.f32.gmra.mxu0 %v5829
        %v6762 = vpop.f32.mrf.mxu0
        %v6763 = vadd.f32 %v6418, %v6762
        %v6764 = vpop.f32.mrf.mxu0
        %6765 = vmatprep.mubr.f32.mxu0 %v5835
        %6766 = vmatmul.mubr.f32.gmra.mxu0 %v5834
        %v6767 = vpop.f32.mrf.mxu0
        %v6768 = vadd.f32 %v6423, %v6767
        %v6769 = vpop.f32.mrf.mxu0
        %6770 = vmatprep.mubr.f32.mxu0 %v5840
        %6771 = vmatmul.mubr.f32.gmra.mxu0 %v5839
        %v6772 = vpop.f32.mrf.mxu0
        %v6773 = vadd.f32 %v6428, %v6772
        %v6774 = vpop.f32.mrf.mxu0
        %6775 = vmatprep.mubr.f32.mxu0 %v5845
        %6776 = vmatmul.mubr.f32.gmra.mxu0 %v5844
        %v6777 = vpop.f32.mrf.mxu0
        %v6778 = vadd.f32 %v6433, %v6777
        %v6779 = vpop.f32.mrf.mxu0
        %6780 = vmatprep.mubr.f32.mxu0 %v5850
        %6781 = vmatmul.mubr.f32.gmra.mxu0 %v5849
        %v6782 = vpop.f32.mrf.mxu0
        %v6783 = vadd.f32 %v6438, %v6782
        %v6784 = vpop.f32.mrf.mxu0
        %6785 = vmatprep.mubr.f32.mxu0 %v5855
        %6786 = vmatmul.mubr.f32.gmra.mxu0 %v5854
        %v6787 = vpop.f32.mrf.mxu0
        %v6788 = vadd.f32 %v6443, %v6787
        %v6789 = vpop.f32.mrf.mxu0
        %6790 = vmatprep.mubr.f32.mxu0 %v5860
        %6791 = vmatmul.mubr.f32.gmra.mxu0 %v5859
        %v6792 = vpop.f32.mrf.mxu0
        %v6793 = vadd.f32 %v6448, %v6792
        %v6794 = vpop.f32.mrf.mxu0
        %6795 = vmatprep.mubr.f32.mxu0 %v5865
        %6796 = vmatmul.mubr.f32.gmra.mxu0 %v5864
        %v6797 = vpop.f32.mrf.mxu0
        %v6798 = vadd.f32 %v6453, %v6797
        %v6799 = vpop.f32.mrf.mxu0
        %6800 = vmatprep.mubr.f32.mxu0 %v5870
        %6801 = vmatmul.mubr.f32.gmra.mxu0 %v5869
        %v6802 = vpop.f32.mrf.mxu0
        %v6803 = vadd.f32 %v6458, %v6802
        %v6804 = vpop.f32.mrf.mxu0
        %6805 = vmatprep.mubr.f32.mxu0 %v5875
        %6806 = vmatmul.mubr.f32.gmra.mxu0 %v5874
        %v6807 = vpop.f32.mrf.mxu0
        %v6808 = vadd.f32 %v6463, %v6807
        %v6809 = vpop.f32.mrf.mxu0
        %6810 = vmatprep.mubr.f32.mxu0 %v5880
        %6811 = vmatmul.mubr.f32.gmra.mxu0 %v5879
        %v6812 = vpop.f32.mrf.mxu0
        %v6813 = vadd.f32 %v6468, %v6812
        %v6814 = vpop.f32.mrf.mxu0
        %6815 = vmatprep.mubr.f32.mxu0 %v5885
        %6816 = vmatmul.mubr.f32.gmra.mxu0 %v5884
        %v6817 = vpop.f32.mrf.mxu0
        %v6818 = vadd.f32 %v6473, %v6817
        %v6819 = vpop.f32.mrf.mxu0
        %6820 = vmatprep.mubr.f32.mxu0 %v5890
        %6821 = vmatmul.mubr.f32.gmra.mxu0 %v5889
        %v6822 = vpop.f32.mrf.mxu0
        %v6823 = vadd.f32 %v6478, %v6822
        %v6824 = vpop.f32.mrf.mxu0
        %6825 = vmatprep.mubr.f32.mxu0 %v5895
        %6826 = vmatmul.mubr.f32.gmra.mxu0 %v5894
        %v6827 = vpop.f32.mrf.mxu0
        %v6828 = vadd.f32 %v6483, %v6827
        %v6829 = vpop.f32.mrf.mxu0
        %6830 = vmatprep.mubr.f32.mxu0 %v5900
        %6831 = vmatmul.mubr.f32.gmra.mxu0 %v5899
        %v6832 = vpop.f32.mrf.mxu0
        %v6833 = vadd.f32 %v6488, %v6832
        %v6834 = vpop.f32.mrf.mxu0
        %6835 = vmatprep.mubr.f32.mxu0 %v5905
        %6836 = vmatmul.mubr.f32.gmra.mxu0 %v5904
        %v6837 = vpop.f32.mrf.mxu0
        %v6838 = vadd.f32 %v6493, %v6837
        %v6839 = vpop.f32.mrf.mxu0
        %6840 = vmatprep.mubr.f32.mxu0 %v5910
        %6841 = vmatmul.mubr.f32.gmra.mxu0 %v5909
        %v6842 = vpop.f32.mrf.mxu0
        %v6843 = vadd.f32 %v6498, %v6842
        %v6844 = vpop.f32.mrf.mxu0
        %6845 = vmatprep.mubr.f32.mxu0 %v5915
        %6846 = vmatmul.mubr.f32.gmra.mxu0 %v5914
        %v6847 = vpop.f32.mrf.mxu0
        %v6848 = vadd.f32 %v6503, %v6847
        %v6849 = vpop.f32.mrf.mxu0
        %6850 = vmatprep.mubr.f32.mxu0 %v5920
        %6851 = vmatmul.mubr.f32.gmra.mxu0 %v5919
        %v6852 = vpop.f32.mrf.mxu0
        %v6853 = vadd.f32 %v6508, %v6852
        %v6854 = vpop.f32.mrf.mxu0
        %6855 = vmatprep.mubr.f32.mxu0 %v5925
        %6856 = vmatmul.mubr.f32.gmra.mxu0 %v5924
        %v6857 = vpop.f32.mrf.mxu0
        %v6858 = vadd.f32 %v6513, %v6857
        %v6859 = vpop.f32.mrf.mxu0
        %6860 = vmatprep.mubr.f32.mxu0 %v5930
        %6861 = vmatmul.mubr.f32.gmra.mxu0 %v5929
        %v6862 = vpop.f32.mrf.mxu0
        %v6863 = vadd.f32 %v6518, %v6862
        %v6864 = vpop.f32.mrf.mxu0
        %6865 = vmatprep.mubr.f32.mxu0 %v5935
        %6866 = vmatmul.mubr.f32.gmra.mxu0 %v5934
        %v6867 = vpop.f32.mrf.mxu0
        %v6868 = vadd.f32 %v6523, %v6867
        %v6869 = vpop.f32.mrf.mxu0
        %6870 = vmatprep.mubr.f32.mxu0 %v5940
        %6871 = vmatmul.mubr.f32.gmra.mxu0 %v5939
        %v6872 = vpop.f32.mrf.mxu0
        %v6873 = vadd.f32 %v6528, %v6872
        %v6874 = vpop.f32.mrf.mxu0
        %6875 = vmatprep.mubr.f32.mxu0 %v5945
        %6876 = vmatmul.mubr.f32.gmra.mxu0 %v5944
        %v6877 = vpop.f32.mrf.mxu0
        %v6878 = vadd.f32 %v6533, %v6877
        %v6879 = vpop.f32.mrf.mxu0
        %6880 = vmatprep.mubr.f32.mxu0 %v5950
        %6881 = vmatmul.mubr.f32.gmra.mxu0 %v5949
        %v6882 = vpop.f32.mrf.mxu0
        %v6883 = vadd.f32 %v6538, %v6882
        %v6884 = vpop.f32.mrf.mxu0
        %6885 = vmatprep.mubr.f32.mxu0 %v5955
        %6886 = vmatmul.mubr.f32.gmra.mxu0 %v5954
        %v6887 = vpop.f32.mrf.mxu0
        %v6888 = vadd.f32 %v6543, %v6887
        %v6889 = vpop.f32.mrf.mxu0
        %6890 = vmatprep.mubr.f32.mxu0 %v5960
        %6891 = vmatmul.mubr.f32.gmra.mxu0 %v5959
        %v6892 = vpop.f32.mrf.mxu0
        %v6893 = vadd.f32 %v6548, %v6892
        %v6894 = vpop.f32.mrf.mxu0
        %6895 = vmatprep.mubr.f32.mxu0 %v5965
        %6896 = vmatmul.mubr.f32.gmra.mxu0 %v5964
        %v6897 = vpop.f32.mrf.mxu0
        %v6898 = vadd.f32 %v6553, %v6897
        %v6899 = vpop.f32.mrf.mxu0
        %6900 = vmatprep.mubr.f32.mxu0 %v5970
        %6901 = vmatmul.mubr.f32.gmra.mxu0 %v5969
        %v6902 = vpop.f32.mrf.mxu0
        %v6903 = vadd.f32 %v6558, %v6902
        %v6904 = vpop.f32.mrf.mxu0
        %6905 = vmatprep.mubr.f32.mxu0 %v5975
        %6906 = vmatmul.mubr.f32.gmra.mxu0 %v5974
        %v6907 = vpop.f32.mrf.mxu0
        %v6908 = vadd.f32 %v6563, %v6907
        %v6909 = vpop.f32.mrf.mxu0
        %6910 = vmatprep.mubr.f32.mxu0 %v5980
        %6911 = vmatmul.mubr.f32.gmra.mxu0 %v5979
        %v6912 = vpop.f32.mrf.mxu0
        %v6913 = vadd.f32 %v6568, %v6912
        %v6914 = vpop.f32.mrf.mxu0
        %6915 = vmatprep.mubr.f32.mxu0 %v5985
        %6916 = vmatmul.mubr.f32.gmra.mxu0 %v5984
        %v6917 = vpop.f32.mrf.mxu0
        %v6918 = vadd.f32 %v6573, %v6917
        %v6919 = vpop.f32.mrf.mxu0
        %6920 = vmatprep.mubr.f32.mxu0 %v5990
        %6921 = vmatmul.mubr.f32.gmra.mxu0 %v5989
        %v6922 = vpop.f32.mrf.mxu0
        %v6923 = vadd.f32 %v6578, %v6922
        %v6924 = vpop.f32.mrf.mxu0
        %6925 = vmatprep.mubr.f32.mxu0 %v5995
        %6926 = vmatmul.mubr.f32.gmra.mxu0 %v5994
        %v6927 = vpop.f32.mrf.mxu0
        %v6928 = vadd.f32 %v6583, %v6927
        %v6929 = vpop.f32.mrf.mxu0
        %6930 = vmatprep.mubr.f32.mxu0 %v6000
        %6931 = vmatmul.mubr.f32.gmra.mxu0 %v5999
        %v6932 = vpop.f32.mrf.mxu0
        %v6933 = vadd.f32 %v6588, %v6932
        %v6934 = vpop.f32.mrf.mxu0
        %6935 = vmatprep.mubr.f32.mxu0 %v6005
        %6936 = vmatmul.mubr.f32.gmra.mxu0 %v6004
        %v6937 = vpop.f32.mrf.mxu0
        %v6938 = vadd.f32 %v6593, %v6937
        %v6939 = vpop.f32.mrf.mxu0
        %6940 = vmatprep.mubr.f32.mxu0 %v6010
        %6941 = vmatmul.mubr.f32.gmra.mxu0 %v6009
        %v6942 = vpop.f32.mrf.mxu0
        %v6943 = vadd.f32 %v6598, %v6942
        %v6944 = vpop.f32.mrf.mxu0
        %6945 = vmatprep.mubr.f32.mxu0 %v6015
        %6946 = vmatmul.mubr.f32.gmra.mxu0 %v6014
        %v6947 = vpop.f32.mrf.mxu0
        %v6948 = vadd.f32 %v6603, %v6947
        %v6949 = vpop.f32.mrf.mxu0
        %6950 = vmatprep.mubr.f32.mxu0 %v6020
        %6951 = vmatmul.mubr.f32.gmra.mxu0 %v6019
        %v6952 = vpop.f32.mrf.mxu0
        %v6953 = vadd.f32 %v6608, %v6952
        %v6954 = vpop.f32.mrf.mxu0
        %6955 = vmatprep.mubr.f32.mxu0 %v6025
        %6956 = vmatmul.mubr.f32.gmra.mxu0 %v6024
        %v6957 = vpop.f32.mrf.mxu0
        %v6958 = vadd.f32 %v6613, %v6957
        %v6959 = vpop.f32.mrf.mxu0
        %6960 = vmatprep.mubr.f32.mxu0 %v6030
        %6961 = vmatmul.mubr.f32.gmra.mxu0 %v6029
        %v6962 = vpop.f32.mrf.mxu0
        %v6963 = vadd.f32 %v6618, %v6962
        %v6964 = vpop.f32.mrf.mxu0
        %6965 = vmatprep.mubr.f32.mxu0 %v6035
        %6966 = vmatmul.mubr.f32.gmra.mxu0 %v6034
        %v6967 = vpop.f32.mrf.mxu0
        %v6968 = vadd.f32 %v6623, %v6967
        %v6969 = vpop.f32.mrf.mxu0
        %6970 = vdwg.mxu0
        %6971 = vmatprep.subr.mxu0 0.0
        %6972 = vmatpush1.msra.mxu0 0.0
        %6973 = vmatprep.subr.mxu0 0.0
        %6974 = vmatpush1.msra.mxu0 0.0
        %6975 = vmatprep.subr.mxu0 0.0
        %6976 = vmatpush1.msra.mxu0 0.0
        %6977 = vmatprep.subr.mxu0 0.0
        %6978 = vmatpush1.msra.mxu0 0.0
        %6979 = vmatprep.subr.mxu0 0.0
        %6980 = vmatpush1.msra.mxu0 0.0
        %6981 = vmatprep.subr.mxu0 0.0
        %6982 = vmatpush1.msra.mxu0 0.0
        %6983 = vmatprep.subr.mxu0 0.0
        %6984 = vmatpush1.msra.mxu0 0.0
        %6985 = vmatprep.subr.mxu0 0.0
        %6986 = vmatpush1.msra.mxu0 0.0
        %6987 = vmatprep.subr.mxu0 0.0
        %6988 = vmatpush1.msra.mxu0 %v6108
        %6989 = vmatprep.subr.mxu0 0.0
        %6990 = vmatpush1.msra.mxu0 %v6107
        %6991 = vmatprep.subr.mxu0 0.0
        %6992 = vmatpush1.msra.mxu0 %v6106
        %6993 = vmatprep.subr.mxu0 0.0
        %6994 = vmatpush1.msra.mxu0 %v6105
        %6995 = vmatprep.subr.mxu0 0.0
        %6996 = vmatpush1.msra.mxu0 %v6104
        %6997 = vmatprep.subr.mxu0 0.0
        %6998 = vmatpush1.msra.mxu0 %v6103
        %6999 = vmatprep.subr.mxu0 0.0
        %7000 = vmatpush1.msra.mxu0 %v6102
        %7001 = vmatprep.subr.mxu0 0.0
        %7002 = vmatpush1.msra.mxu0 %v6101
        %7003 = vmatprep.subr.mxu0 0.0
        %7004 = vmatpush2.msra.mxu0 0.0
        %7005 = vmatprep.subr.mxu0 0.0
        %7006 = vmatpush2.msra.mxu0 0.0
        %7007 = vmatprep.subr.mxu0 0.0
        %7008 = vmatpush2.msra.mxu0 0.0
        %7009 = vmatprep.subr.mxu0 0.0
        %7010 = vmatpush2.msra.mxu0 0.0
        %7011 = vmatprep.subr.mxu0 0.0
        %7012 = vmatpush2.msra.mxu0 0.0
        %7013 = vmatprep.subr.mxu0 0.0
        %7014 = vmatpush2.msra.mxu0 0.0
        %7015 = vmatprep.subr.mxu0 0.0
        %7016 = vmatpush2.msra.mxu0 0.0
        %7017 = vmatprep.subr.mxu0 0.0
        %7018 = vmatpush2.msra.mxu0 0.0
        %7019 = vmatprep.subr.mxu0 0.0
        %7020 = vmatpush2.msra.mxu0 0.0
        %7021 = vmatprep.subr.mxu0 0.0
        %7022 = vmatpush2.msra.mxu0 0.0
        %7023 = vmatprep.subr.mxu0 0.0
        %7024 = vmatpush2.msra.mxu0 0.0
        %7025 = vmatprep.subr.mxu0 0.0
        %7026 = vmatpush2.msra.mxu0 0.0
        %7027 = vmatprep.subr.mxu0 0.0
        %7028 = vmatpush2.msra.mxu0 0.0
        %7029 = vmatprep.subr.mxu0 0.0
        %7030 = vmatpush2.msra.mxu0 0.0
        %7031 = vmatprep.subr.mxu0 0.0
        %7032 = vmatpush2.msra.mxu0 0.0
        %7033 = vmatprep.subr.mxu0 0.0
        %7034 = vmatpush2.msra.mxu0 0.0
        %7035 = vmatprep.mubr.f32.mxu0 0.0
        %7036 = vmatmul.mubr.f32.gmra.mxu0 %v6114
        %v7037 = vpop.f32.mrf.mxu0
        %v7038 = vadd.f32 %v6693, %v7037
        %v7039 = vpop.f32.mrf.mxu0
        %7040 = vmatprep.mubr.f32.mxu0 0.0
        %7041 = vmatmul.mubr.f32.gmra.mxu0 %v6117
        %v7042 = vpop.f32.mrf.mxu0
        %v7043 = vadd.f32 %v6698, %v7042
        %v7044 = vpop.f32.mrf.mxu0
        %7045 = vmatprep.mubr.f32.mxu0 0.0
        %7046 = vmatmul.mubr.f32.gmra.mxu0 %v6120
        %v7047 = vpop.f32.mrf.mxu0
        %v7048 = vadd.f32 %v6703, %v7047
        %v7049 = vpop.f32.mrf.mxu0
        %7050 = vmatprep.mubr.f32.mxu0 0.0
        %7051 = vmatmul.mubr.f32.gmra.mxu0 %v6123
        %v7052 = vpop.f32.mrf.mxu0
        %v7053 = vadd.f32 %v6708, %v7052
        %v7054 = vpop.f32.mrf.mxu0
        %7055 = vmatprep.mubr.f32.mxu0 0.0
        %7056 = vmatmul.mubr.f32.gmra.mxu0 %v6126
        %v7057 = vpop.f32.mrf.mxu0
        %v7058 = vadd.f32 %v6713, %v7057
        %v7059 = vpop.f32.mrf.mxu0
        %7060 = vmatprep.mubr.f32.mxu0 0.0
        %7061 = vmatmul.mubr.f32.gmra.mxu0 %v6129
        %v7062 = vpop.f32.mrf.mxu0
        %v7063 = vadd.f32 %v6718, %v7062
        %v7064 = vpop.f32.mrf.mxu0
        %7065 = vmatprep.mubr.f32.mxu0 0.0
        %7066 = vmatmul.mubr.f32.gmra.mxu0 %v6132
        %v7067 = vpop.f32.mrf.mxu0
        %v7068 = vadd.f32 %v6723, %v7067
        %v7069 = vpop.f32.mrf.mxu0
        %7070 = vmatprep.mubr.f32.mxu0 0.0
        %7071 = vmatmul.mubr.f32.gmra.mxu0 %v6135
        %v7072 = vpop.f32.mrf.mxu0
        %v7073 = vadd.f32 %v6728, %v7072
        %v7074 = vpop.f32.mrf.mxu0
        %7075 = vmatprep.mubr.f32.mxu0 0.0
        %7076 = vmatmul.mubr.f32.gmra.mxu0 %v6138
        %v7077 = vpop.f32.mrf.mxu0
        %v7078 = vadd.f32 %v6733, %v7077
        %v7079 = vpop.f32.mrf.mxu0
        %7080 = vmatprep.mubr.f32.mxu0 0.0
        %7081 = vmatmul.mubr.f32.gmra.mxu0 %v6141
        %v7082 = vpop.f32.mrf.mxu0
        %v7083 = vadd.f32 %v6738, %v7082
        %v7084 = vpop.f32.mrf.mxu0
        %7085 = vmatprep.mubr.f32.mxu0 0.0
        %7086 = vmatmul.mubr.f32.gmra.mxu0 %v6144
        %v7087 = vpop.f32.mrf.mxu0
        %v7088 = vadd.f32 %v6743, %v7087
        %v7089 = vpop.f32.mrf.mxu0
        %7090 = vmatprep.mubr.f32.mxu0 0.0
        %7091 = vmatmul.mubr.f32.gmra.mxu0 %v6147
        %v7092 = vpop.f32.mrf.mxu0
        %v7093 = vadd.f32 %v6748, %v7092
        %v7094 = vpop.f32.mrf.mxu0
        %7095 = vmatprep.mubr.f32.mxu0 0.0
        %7096 = vmatmul.mubr.f32.gmra.mxu0 %v6150
        %v7097 = vpop.f32.mrf.mxu0
        %v7098 = vadd.f32 %v6753, %v7097
        %v7099 = vpop.f32.mrf.mxu0
        %7100 = vmatprep.mubr.f32.mxu0 0.0
        %7101 = vmatmul.mubr.f32.gmra.mxu0 %v6153
        %v7102 = vpop.f32.mrf.mxu0
        %v7103 = vadd.f32 %v6758, %v7102
        %v7104 = vpop.f32.mrf.mxu0
        %7105 = vmatprep.mubr.f32.mxu0 0.0
        %7106 = vmatmul.mubr.f32.gmra.mxu0 %v6156
        %v7107 = vpop.f32.mrf.mxu0
        %v7108 = vadd.f32 %v6763, %v7107
        %v7109 = vpop.f32.mrf.mxu0
        %7110 = vmatprep.mubr.f32.mxu0 0.0
        %7111 = vmatmul.mubr.f32.gmra.mxu0 %v6159
        %v7112 = vpop.f32.mrf.mxu0
        %v7113 = vadd.f32 %v6768, %v7112
        %v7114 = vpop.f32.mrf.mxu0
        %7115 = vmatprep.mubr.f32.mxu0 0.0
        %7116 = vmatmul.mubr.f32.gmra.mxu0 %v6162
        %v7117 = vpop.f32.mrf.mxu0
        %v7118 = vadd.f32 %v6773, %v7117
        %v7119 = vpop.f32.mrf.mxu0
        %7120 = vmatprep.mubr.f32.mxu0 0.0
        %7121 = vmatmul.mubr.f32.gmra.mxu0 %v6165
        %v7122 = vpop.f32.mrf.mxu0
        %v7123 = vadd.f32 %v6778, %v7122
        %v7124 = vpop.f32.mrf.mxu0
        %7125 = vmatprep.mubr.f32.mxu0 0.0
        %7126 = vmatmul.mubr.f32.gmra.mxu0 %v6168
        %v7127 = vpop.f32.mrf.mxu0
        %v7128 = vadd.f32 %v6783, %v7127
        %v7129 = vpop.f32.mrf.mxu0
        %7130 = vmatprep.mubr.f32.mxu0 0.0
        %7131 = vmatmul.mubr.f32.gmra.mxu0 %v6171
        %v7132 = vpop.f32.mrf.mxu0
        %v7133 = vadd.f32 %v6788, %v7132
        %v7134 = vpop.f32.mrf.mxu0
        %7135 = vmatprep.mubr.f32.mxu0 0.0
        %7136 = vmatmul.mubr.f32.gmra.mxu0 %v6174
        %v7137 = vpop.f32.mrf.mxu0
        %v7138 = vadd.f32 %v6793, %v7137
        %v7139 = vpop.f32.mrf.mxu0
        %7140 = vmatprep.mubr.f32.mxu0 0.0
        %7141 = vmatmul.mubr.f32.gmra.mxu0 %v6177
        %v7142 = vpop.f32.mrf.mxu0
        %v7143 = vadd.f32 %v6798, %v7142
        %v7144 = vpop.f32.mrf.mxu0
        %7145 = vmatprep.mubr.f32.mxu0 0.0
        %7146 = vmatmul.mubr.f32.gmra.mxu0 %v6180
        %v7147 = vpop.f32.mrf.mxu0
        %v7148 = vadd.f32 %v6803, %v7147
        %v7149 = vpop.f32.mrf.mxu0
        %7150 = vmatprep.mubr.f32.mxu0 0.0
        %7151 = vmatmul.mubr.f32.gmra.mxu0 %v6183
        %v7152 = vpop.f32.mrf.mxu0
        %v7153 = vadd.f32 %v6808, %v7152
        %v7154 = vpop.f32.mrf.mxu0
        %7155 = vmatprep.mubr.f32.mxu0 0.0
        %7156 = vmatmul.mubr.f32.gmra.mxu0 %v6186
        %v7157 = vpop.f32.mrf.mxu0
        %v7158 = vadd.f32 %v6813, %v7157
        %v7159 = vpop.f32.mrf.mxu0
        %7160 = vmatprep.mubr.f32.mxu0 0.0
        %7161 = vmatmul.mubr.f32.gmra.mxu0 %v6189
        %v7162 = vpop.f32.mrf.mxu0
        %v7163 = vadd.f32 %v6818, %v7162
        %v7164 = vpop.f32.mrf.mxu0
        %7165 = vmatprep.mubr.f32.mxu0 0.0
        %7166 = vmatmul.mubr.f32.gmra.mxu0 %v6192
        %v7167 = vpop.f32.mrf.mxu0
        %v7168 = vadd.f32 %v6823, %v7167
        %v7169 = vpop.f32.mrf.mxu0
        %7170 = vmatprep.mubr.f32.mxu0 0.0
        %7171 = vmatmul.mubr.f32.gmra.mxu0 %v6195
        %v7172 = vpop.f32.mrf.mxu0
        %v7173 = vadd.f32 %v6828, %v7172
        %v7174 = vpop.f32.mrf.mxu0
        %7175 = vmatprep.mubr.f32.mxu0 0.0
        %7176 = vmatmul.mubr.f32.gmra.mxu0 %v6198
        %v7177 = vpop.f32.mrf.mxu0
        %v7178 = vadd.f32 %v6833, %v7177
        %v7179 = vpop.f32.mrf.mxu0
        %7180 = vmatprep.mubr.f32.mxu0 0.0
        %7181 = vmatmul.mubr.f32.gmra.mxu0 %v6201
        %v7182 = vpop.f32.mrf.mxu0
        %v7183 = vadd.f32 %v6838, %v7182
        %v7184 = vpop.f32.mrf.mxu0
        %7185 = vmatprep.mubr.f32.mxu0 0.0
        %7186 = vmatmul.mubr.f32.gmra.mxu0 %v6204
        %v7187 = vpop.f32.mrf.mxu0
        %v7188 = vadd.f32 %v6843, %v7187
        %v7189 = vpop.f32.mrf.mxu0
        %7190 = vmatprep.mubr.f32.mxu0 0.0
        %7191 = vmatmul.mubr.f32.gmra.mxu0 %v6207
        %v7192 = vpop.f32.mrf.mxu0
        %v7193 = vadd.f32 %v6848, %v7192
        %v7194 = vpop.f32.mrf.mxu0
        %7195 = vmatprep.mubr.f32.mxu0 0.0
        %7196 = vmatmul.mubr.f32.gmra.mxu0 %v6210
        %v7197 = vpop.f32.mrf.mxu0
        %v7198 = vadd.f32 %v6853, %v7197
        %v7199 = vpop.f32.mrf.mxu0
        %7200 = vmatprep.mubr.f32.mxu0 0.0
        %7201 = vmatmul.mubr.f32.gmra.mxu0 %v6213
        %v7202 = vpop.f32.mrf.mxu0
        %v7203 = vadd.f32 %v6858, %v7202
        %v7204 = vpop.f32.mrf.mxu0
        %7205 = vmatprep.mubr.f32.mxu0 0.0
        %7206 = vmatmul.mubr.f32.gmra.mxu0 %v6216
        %v7207 = vpop.f32.mrf.mxu0
        %v7208 = vadd.f32 %v6863, %v7207
        %v7209 = vpop.f32.mrf.mxu0
        %7210 = vmatprep.mubr.f32.mxu0 0.0
        %7211 = vmatmul.mubr.f32.gmra.mxu0 %v6219
        %v7212 = vpop.f32.mrf.mxu0
        %v7213 = vadd.f32 %v6868, %v7212
        %v7214 = vpop.f32.mrf.mxu0
        %7215 = vmatprep.mubr.f32.mxu0 0.0
        %7216 = vmatmul.mubr.f32.gmra.mxu0 %v6222
        %v7217 = vpop.f32.mrf.mxu0
        %v7218 = vadd.f32 %v6873, %v7217
        %v7219 = vpop.f32.mrf.mxu0
        %7220 = vmatprep.mubr.f32.mxu0 0.0
        %7221 = vmatmul.mubr.f32.gmra.mxu0 %v6225
        %v7222 = vpop.f32.mrf.mxu0
        %v7223 = vadd.f32 %v6878, %v7222
        %v7224 = vpop.f32.mrf.mxu0
        %7225 = vmatprep.mubr.f32.mxu0 0.0
        %7226 = vmatmul.mubr.f32.gmra.mxu0 %v6228
        %v7227 = vpop.f32.mrf.mxu0
        %v7228 = vadd.f32 %v6883, %v7227
        %v7229 = vpop.f32.mrf.mxu0
        %7230 = vmatprep.mubr.f32.mxu0 0.0
        %7231 = vmatmul.mubr.f32.gmra.mxu0 %v6231
        %v7232 = vpop.f32.mrf.mxu0
        %v7233 = vadd.f32 %v6888, %v7232
        %v7234 = vpop.f32.mrf.mxu0
        %7235 = vmatprep.mubr.f32.mxu0 0.0
        %7236 = vmatmul.mubr.f32.gmra.mxu0 %v6234
        %v7237 = vpop.f32.mrf.mxu0
        %v7238 = vadd.f32 %v6893, %v7237
        %v7239 = vpop.f32.mrf.mxu0
        %7240 = vmatprep.mubr.f32.mxu0 0.0
        %7241 = vmatmul.mubr.f32.gmra.mxu0 %v6237
        %v7242 = vpop.f32.mrf.mxu0
        %v7243 = vadd.f32 %v6898, %v7242
        %v7244 = vpop.f32.mrf.mxu0
        %7245 = vmatprep.mubr.f32.mxu0 0.0
        %7246 = vmatmul.mubr.f32.gmra.mxu0 %v6240
        %v7247 = vpop.f32.mrf.mxu0
        %v7248 = vadd.f32 %v6903, %v7247
        %v7249 = vpop.f32.mrf.mxu0
        %7250 = vmatprep.mubr.f32.mxu0 0.0
        %7251 = vmatmul.mubr.f32.gmra.mxu0 %v6243
        %v7252 = vpop.f32.mrf.mxu0
        %v7253 = vadd.f32 %v6908, %v7252
        %v7254 = vpop.f32.mrf.mxu0
        %7255 = vmatprep.mubr.f32.mxu0 0.0
        %7256 = vmatmul.mubr.f32.gmra.mxu0 %v6246
        %v7257 = vpop.f32.mrf.mxu0
        %v7258 = vadd.f32 %v6913, %v7257
        %v7259 = vpop.f32.mrf.mxu0
        %7260 = vmatprep.mubr.f32.mxu0 0.0
        %7261 = vmatmul.mubr.f32.gmra.mxu0 %v6249
        %v7262 = vpop.f32.mrf.mxu0
        %v7263 = vadd.f32 %v6918, %v7262
        %v7264 = vpop.f32.mrf.mxu0
        %7265 = vmatprep.mubr.f32.mxu0 0.0
        %7266 = vmatmul.mubr.f32.gmra.mxu0 %v6252
        %v7267 = vpop.f32.mrf.mxu0
        %v7268 = vadd.f32 %v6923, %v7267
        %v7269 = vpop.f32.mrf.mxu0
        %7270 = vmatprep.mubr.f32.mxu0 0.0
        %7271 = vmatmul.mubr.f32.gmra.mxu0 %v6255
        %v7272 = vpop.f32.mrf.mxu0
        %v7273 = vadd.f32 %v6928, %v7272
        %v7274 = vpop.f32.mrf.mxu0
        %7275 = vmatprep.mubr.f32.mxu0 0.0
        %7276 = vmatmul.mubr.f32.gmra.mxu0 %v6258
        %v7277 = vpop.f32.mrf.mxu0
        %v7278 = vadd.f32 %v6933, %v7277
        %v7279 = vpop.f32.mrf.mxu0
        %7280 = vmatprep.mubr.f32.mxu0 0.0
        %7281 = vmatmul.mubr.f32.gmra.mxu0 %v6261
        %v7282 = vpop.f32.mrf.mxu0
        %v7283 = vadd.f32 %v6938, %v7282
        %v7284 = vpop.f32.mrf.mxu0
        %7285 = vmatprep.mubr.f32.mxu0 0.0
        %7286 = vmatmul.mubr.f32.gmra.mxu0 %v6264
        %v7287 = vpop.f32.mrf.mxu0
        %v7288 = vadd.f32 %v6943, %v7287
        %v7289 = vpop.f32.mrf.mxu0
        %7290 = vmatprep.mubr.f32.mxu0 0.0
        %7291 = vmatmul.mubr.f32.gmra.mxu0 %v6267
        %v7292 = vpop.f32.mrf.mxu0
        %v7293 = vadd.f32 %v6948, %v7292
        %v7294 = vpop.f32.mrf.mxu0
        %7295 = vmatprep.mubr.f32.mxu0 0.0
        %7296 = vmatmul.mubr.f32.gmra.mxu0 %v6270
        %v7297 = vpop.f32.mrf.mxu0
        %v7298 = vadd.f32 %v6953, %v7297
        %v7299 = vpop.f32.mrf.mxu0
        %7300 = vmatprep.mubr.f32.mxu0 0.0
        %7301 = vmatmul.mubr.f32.gmra.mxu0 %v6273
        %v7302 = vpop.f32.mrf.mxu0
        %v7303 = vadd.f32 %v6958, %v7302
        %v7304 = vpop.f32.mrf.mxu0
        %7305 = vmatprep.mubr.f32.mxu0 0.0
        %7306 = vmatmul.mubr.f32.gmra.mxu0 %v6276
        %v7307 = vpop.f32.mrf.mxu0
        %v7308 = vadd.f32 %v6963, %v7307
        %v7309 = vpop.f32.mrf.mxu0
        %7310 = vmatprep.mubr.f32.mxu0 0.0
        %7311 = vmatmul.mubr.f32.gmra.mxu0 %v6279
        %v7312 = vpop.f32.mrf.mxu0
        %v7313 = vadd.f32 %v6968, %v7312
        %v7314 = vpop.f32.mrf.mxu0
        %7315 = vdwg.mxu0
        %v7316 = vmax.f32 %v7038, 0.0
        %v7317 = vmax.f32 %v7043, 0.0
        %v7318 = vmax.f32 %v7048, 0.0
        %v7319 = vmax.f32 %v7053, 0.0
        %v7320 = vmax.f32 %v7058, 0.0
        %v7321 = vmax.f32 %v7063, 0.0
        %v7322 = vmax.f32 %v7068, 0.0
        %v7323 = vmax.f32 %v7073, 0.0
        %v7324 = vmax.f32 %v7078, 0.0
        %v7325 = vmax.f32 %v7083, 0.0
        %v7326 = vmax.f32 %v7088, 0.0
        %v7327 = vmax.f32 %v7093, 0.0
        %v7328 = vmax.f32 %v7098, 0.0
        %v7329 = vmax.f32 %v7103, 0.0
        %v7330 = vmax.f32 %v7108, 0.0
        %v7331 = vmax.f32 %v7113, 0.0
        %v7332 = vmax.f32 %v7118, 0.0
        %v7333 = vmax.f32 %v7123, 0.0
        %v7334 = vmax.f32 %v7128, 0.0
        %v7335 = vmax.f32 %v7133, 0.0
        %v7336 = vmax.f32 %v7138, 0.0
        %v7337 = vmax.f32 %v7143, 0.0
        %v7338 = vmax.f32 %v7148, 0.0
        %v7339 = vmax.f32 %v7153, 0.0
        %v7340 = vmax.f32 %v7158, 0.0
        %v7341 = vmax.f32 %v7163, 0.0
        %v7342 = vmax.f32 %v7168, 0.0
        %v7343 = vmax.f32 %v7173, 0.0
        %v7344 = vmax.f32 %v7178, 0.0
        %v7345 = vmax.f32 %v7183, 0.0
        %v7346 = vmax.f32 %v7188, 0.0
        %v7347 = vmax.f32 %v7193, 0.0
        %v7348 = vmax.f32 %v7198, 0.0
        %v7349 = vmax.f32 %v7203, 0.0
        %v7350 = vmax.f32 %v7208, 0.0
        %v7351 = vmax.f32 %v7213, 0.0
        %v7352 = vmax.f32 %v7218, 0.0
        %v7353 = vmax.f32 %v7223, 0.0
        %v7354 = vmax.f32 %v7228, 0.0
        %v7355 = vmax.f32 %v7233, 0.0
        %v7356 = vmax.f32 %v7238, 0.0
        %v7357 = vmax.f32 %v7243, 0.0
        %v7358 = vmax.f32 %v7248, 0.0
        %v7359 = vmax.f32 %v7253, 0.0
        %v7360 = vmax.f32 %v7258, 0.0
        %v7361 = vmax.f32 %v7263, 0.0
        %v7362 = vmax.f32 %v7268, 0.0
        %v7363 = vmax.f32 %v7273, 0.0
        %v7364 = vmax.f32 %v7278, 0.0
        %v7365 = vmax.f32 %v7283, 0.0
        %v7366 = vmax.f32 %v7288, 0.0
        %v7367 = vmax.f32 %v7293, 0.0
        %v7368 = vmax.f32 %v7298, 0.0
        %v7369 = vmax.f32 %v7303, 0.0
        %v7370 = vmax.f32 %v7308, 0.0
        %v7371 = vmax.f32 %v7313, 0.0
        %v7372 = vlaneseq
        %v7373 = vshrl.u32 %v7372, 7
        %v7374 = vsub.s32 0, %v7373
        %v7375 = vrot.slane %v281, %v7374
        %v7376 = vmul.f32 %v7316, %v7375
        %v7377 = vmul.f32 %v7317, %v7375
        %v7378 = vmul.f32 %v7318, %v7375
        %v7379 = vmul.f32 %v7319, %v7375
        %v7380 = vmul.f32 %v7320, %v7375
        %v7381 = vmul.f32 %v7321, %v7375
        %v7382 = vmul.f32 %v7322, %v7375
        %v7383 = vmul.f32 %v7323, %v7375
        %v7384 = vmul.f32 %v7324, %v7375
        %v7385 = vmul.f32 %v7325, %v7375
        %v7386 = vmul.f32 %v7326, %v7375
        %v7387 = vmul.f32 %v7327, %v7375
        %v7388 = vmul.f32 %v7328, %v7375
        %v7389 = vmul.f32 %v7329, %v7375
        %v7390 = vmul.f32 %v7330, %v7375
        %v7391 = vmul.f32 %v7331, %v7375
        %v7392 = vmul.f32 %v7332, %v7375
        %v7393 = vmul.f32 %v7333, %v7375
        %v7394 = vmul.f32 %v7334, %v7375
        %v7395 = vmul.f32 %v7335, %v7375
        %v7396 = vmul.f32 %v7336, %v7375
        %v7397 = vmul.f32 %v7337, %v7375
        %v7398 = vmul.f32 %v7338, %v7375
        %v7399 = vmul.f32 %v7339, %v7375
        %v7400 = vmul.f32 %v7340, %v7375
        %v7401 = vmul.f32 %v7341, %v7375
        %v7402 = vmul.f32 %v7342, %v7375
        %v7403 = vmul.f32 %v7343, %v7375
        %v7404 = vmul.f32 %v7344, %v7375
        %v7405 = vmul.f32 %v7345, %v7375
        %v7406 = vmul.f32 %v7346, %v7375
        %v7407 = vmul.f32 %v7347, %v7375
        %v7408 = vmul.f32 %v7348, %v7375
        %v7409 = vmul.f32 %v7349, %v7375
        %v7410 = vmul.f32 %v7350, %v7375
        %v7411 = vmul.f32 %v7351, %v7375
        %v7412 = vmul.f32 %v7352, %v7375
        %v7413 = vmul.f32 %v7353, %v7375
        %v7414 = vmul.f32 %v7354, %v7375
        %v7415 = vmul.f32 %v7355, %v7375
        %v7416 = vmul.f32 %v7356, %v7375
        %v7417 = vmul.f32 %v7357, %v7375
        %v7418 = vmul.f32 %v7358, %v7375
        %v7419 = vmul.f32 %v7359, %v7375
        %v7420 = vmul.f32 %v7360, %v7375
        %v7421 = vmul.f32 %v7361, %v7375
        %v7422 = vmul.f32 %v7362, %v7375
        %v7423 = vmul.f32 %v7363, %v7375
        %v7424 = vmul.f32 %v7364, %v7375
        %v7425 = vmul.f32 %v7365, %v7375
        %v7426 = vmul.f32 %v7366, %v7375
        %v7427 = vmul.f32 %v7367, %v7375
        %v7428 = vmul.f32 %v7368, %v7375
        %v7429 = vmul.f32 %v7369, %v7375
        %v7430 = vmul.f32 %v7370, %v7375
        %v7431 = vmul.f32 %v7371, %v7375
        %v7432 = vlaneseq
        %v7433 = vshrl.u32 %v7432, 7
        %v7434 = vsub.s32 0, %v7433
        %v7435 = vrot.slane %v282, %v7434
        %v7436 = vadd.f32 %v7376, %v7435
        %v7437 = vadd.f32 %v7377, %v7435
        %v7438 = vadd.f32 %v7378, %v7435
        %v7439 = vadd.f32 %v7379, %v7435
        %v7440 = vadd.f32 %v7380, %v7435
        %v7441 = vadd.f32 %v7381, %v7435
        %v7442 = vadd.f32 %v7382, %v7435
        %v7443 = vadd.f32 %v7383, %v7435
        %v7444 = vadd.f32 %v7384, %v7435
        %v7445 = vadd.f32 %v7385, %v7435
        %v7446 = vadd.f32 %v7386, %v7435
        %v7447 = vadd.f32 %v7387, %v7435
        %v7448 = vadd.f32 %v7388, %v7435
        %v7449 = vadd.f32 %v7389, %v7435
        %v7450 = vadd.f32 %v7390, %v7435
        %v7451 = vadd.f32 %v7391, %v7435
        %v7452 = vadd.f32 %v7392, %v7435
        %v7453 = vadd.f32 %v7393, %v7435
        %v7454 = vadd.f32 %v7394, %v7435
        %v7455 = vadd.f32 %v7395, %v7435
        %v7456 = vadd.f32 %v7396, %v7435
        %v7457 = vadd.f32 %v7397, %v7435
        %v7458 = vadd.f32 %v7398, %v7435
        %v7459 = vadd.f32 %v7399, %v7435
        %v7460 = vadd.f32 %v7400, %v7435
        %v7461 = vadd.f32 %v7401, %v7435
        %v7462 = vadd.f32 %v7402, %v7435
        %v7463 = vadd.f32 %v7403, %v7435
        %v7464 = vadd.f32 %v7404, %v7435
        %v7465 = vadd.f32 %v7405, %v7435
        %v7466 = vadd.f32 %v7406, %v7435
        %v7467 = vadd.f32 %v7407, %v7435
        %v7468 = vadd.f32 %v7408, %v7435
        %v7469 = vadd.f32 %v7409, %v7435
        %v7470 = vadd.f32 %v7410, %v7435
        %v7471 = vadd.f32 %v7411, %v7435
        %v7472 = vadd.f32 %v7412, %v7435
        %v7473 = vadd.f32 %v7413, %v7435
        %v7474 = vadd.f32 %v7414, %v7435
        %v7475 = vadd.f32 %v7415, %v7435
        %v7476 = vadd.f32 %v7416, %v7435
        %v7477 = vadd.f32 %v7417, %v7435
        %v7478 = vadd.f32 %v7418, %v7435
        %v7479 = vadd.f32 %v7419, %v7435
        %v7480 = vadd.f32 %v7420, %v7435
        %v7481 = vadd.f32 %v7421, %v7435
        %v7482 = vadd.f32 %v7422, %v7435
        %v7483 = vadd.f32 %v7423, %v7435
        %v7484 = vadd.f32 %v7424, %v7435
        %v7485 = vadd.f32 %v7425, %v7435
        %v7486 = vadd.f32 %v7426, %v7435
        %v7487 = vadd.f32 %v7427, %v7435
        %v7488 = vadd.f32 %v7428, %v7435
        %v7489 = vadd.f32 %v7429, %v7435
        %v7490 = vadd.f32 %v7430, %v7435
        %v7491 = vadd.f32 %v7431, %v7435
        %7492 = vst.msk [vmem:[#allocation5] sm:$0xff] %vm2367, %v7436
        %7493 = vst.msk [vmem:[#allocation5 + $0x8] sm:$0xff] %vm2367, %v7437
        %7494 = vst.msk [vmem:[#allocation5 + $0x10] sm:$0xff] %vm2367, %v7438
        %7495 = vst.msk [vmem:[#allocation5 + $0x18] sm:$0xff] %vm2367, %v7439
        %7496 = vst.msk [vmem:[#allocation5 + $0x20] sm:$0xff] %vm2367, %v7440
        %7497 = vst.msk [vmem:[#allocation5 + $0x28] sm:$0xff] %vm2367, %v7441
        %7498 = vst.msk [vmem:[#allocation5 + $0x30] sm:$0xff] %vm2367, %v7442
        %7499 = vst.msk [vmem:[#allocation5 + $0x38] sm:$0xff] %vm2367, %v7443
        %7500 = vst.msk [vmem:[#allocation5 + $0x40] sm:$0xff] %vm2367, %v7444
        %7501 = vst.msk [vmem:[#allocation5 + $0x48] sm:$0xff] %vm2367, %v7445
        %7502 = vst.msk [vmem:[#allocation5 + $0x50] sm:$0xff] %vm2367, %v7446
        %7503 = vst.msk [vmem:[#allocation5 + $0x58] sm:$0xff] %vm2367, %v7447
        %7504 = vst.msk [vmem:[#allocation5 + $0x60] sm:$0xff] %vm2367, %v7448
        %7505 = vst.msk [vmem:[#allocation5 + $0x68] sm:$0xff] %vm2367, %v7449
        %7506 = vst.msk [vmem:[#allocation5 + $0x70] sm:$0xff] %vm2367, %v7450
        %7507 = vst.msk [vmem:[#allocation5 + $0x78] sm:$0xff] %vm2367, %v7451
        %7508 = vst.msk [vmem:[#allocation5 + $0x80] sm:$0xff] %vm2367, %v7452
        %7509 = vst.msk [vmem:[#allocation5 + $0x88] sm:$0xff] %vm2367, %v7453
        %7510 = vst.msk [vmem:[#allocation5 + $0x90] sm:$0xff] %vm2367, %v7454
        %7511 = vst.msk [vmem:[#allocation5 + $0x98] sm:$0xff] %vm2367, %v7455
        %7512 = vst.msk [vmem:[#allocation5 + $0xa0] sm:$0xff] %vm2367, %v7456
        %7513 = vst.msk [vmem:[#allocation5 + $0xa8] sm:$0xff] %vm2367, %v7457
        %7514 = vst.msk [vmem:[#allocation5 + $0xb0] sm:$0xff] %vm2367, %v7458
        %7515 = vst.msk [vmem:[#allocation5 + $0xb8] sm:$0xff] %vm2367, %v7459
        %7516 = vst.msk [vmem:[#allocation5 + $0xc0] sm:$0xff] %vm2367, %v7460
        %7517 = vst.msk [vmem:[#allocation5 + $0xc8] sm:$0xff] %vm2367, %v7461
        %7518 = vst.msk [vmem:[#allocation5 + $0xd0] sm:$0xff] %vm2367, %v7462
        %7519 = vst.msk [vmem:[#allocation5 + $0xd8] sm:$0xff] %vm2367, %v7463
        %7520 = vst.msk [vmem:[#allocation5 + $0xe0] sm:$0xff] %vm2367, %v7464
        %7521 = vst.msk [vmem:[#allocation5 + $0xe8] sm:$0xff] %vm2367, %v7465
        %7522 = vst.msk [vmem:[#allocation5 + $0xf0] sm:$0xff] %vm2367, %v7466
        %7523 = vst.msk [vmem:[#allocation5 + $0xf8] sm:$0xff] %vm2367, %v7467
        %7524 = vst.msk [vmem:[#allocation5 + $0x100] sm:$0xff] %vm2367, %v7468
        %7525 = vst.msk [vmem:[#allocation5 + $0x108] sm:$0xff] %vm2367, %v7469
        %7526 = vst.msk [vmem:[#allocation5 + $0x110] sm:$0xff] %vm2367, %v7470
        %7527 = vst.msk [vmem:[#allocation5 + $0x118] sm:$0xff] %vm2367, %v7471
        %7528 = vst.msk [vmem:[#allocation5 + $0x120] sm:$0xff] %vm2367, %v7472
        %7529 = vst.msk [vmem:[#allocation5 + $0x128] sm:$0xff] %vm2367, %v7473
        %7530 = vst.msk [vmem:[#allocation5 + $0x130] sm:$0xff] %vm2367, %v7474
        %7531 = vst.msk [vmem:[#allocation5 + $0x138] sm:$0xff] %vm2367, %v7475
        %7532 = vst.msk [vmem:[#allocation5 + $0x140] sm:$0xff] %vm2367, %v7476
        %7533 = vst.msk [vmem:[#allocation5 + $0x148] sm:$0xff] %vm2367, %v7477
        %7534 = vst.msk [vmem:[#allocation5 + $0x150] sm:$0xff] %vm2367, %v7478
        %7535 = vst.msk [vmem:[#allocation5 + $0x158] sm:$0xff] %vm2367, %v7479
        %7536 = vst.msk [vmem:[#allocation5 + $0x160] sm:$0xff] %vm2367, %v7480
        %7537 = vst.msk [vmem:[#allocation5 + $0x168] sm:$0xff] %vm2367, %v7481
        %7538 = vst.msk [vmem:[#allocation5 + $0x170] sm:$0xff] %vm2367, %v7482
        %7539 = vst.msk [vmem:[#allocation5 + $0x178] sm:$0xff] %vm2367, %v7483
        %7540 = vst.msk [vmem:[#allocation5 + $0x180] sm:$0xff] %vm2367, %v7484
        %7541 = vst.msk [vmem:[#allocation5 + $0x188] sm:$0xff] %vm2367, %v7485
        %7542 = vst.msk [vmem:[#allocation5 + $0x190] sm:$0xff] %vm2367, %v7486
        %7543 = vst.msk [vmem:[#allocation5 + $0x198] sm:$0xff] %vm2367, %v7487
        %7544 = vst.msk [vmem:[#allocation5 + $0x1a0] sm:$0xff] %vm2367, %v7488
        %7545 = vst.msk [vmem:[#allocation5 + $0x1a8] sm:$0xff] %vm2367, %v7489
        %7546 = vst.msk [vmem:[#allocation5 + $0x1b0] sm:$0xff] %vm2367, %v7490
        %7547 = vst.msk [vmem:[#allocation5 + $0x1b8] sm:$0xff] %vm2367, %v7491
        %v7548 = vld [vmem:[%s6] sm:$0x1]
        %v7550 = vlaneseq
        %v7551 = vshrl.u32 %v7550, 7
        %v7552 = vsub.s32 0, %v7551
        %v7553 = vrot.slane %v7548, %v7552
        %v7555 = vadd.f32 %v7553, 0.0
        %v7556 = vld [vmem:[#allocation5] ss:$2 sm:$0xff]
        %s7557 = scalar_lea.vmem [#allocation5], 16
        %v7558 = vld [vmem:[%s7557] ss:$2 sm:$0xff]
        %s7559 = scalar_lea.vmem [#allocation5], 32
        %v7560 = vld [vmem:[%s7559] ss:$2 sm:$0xff]
        %s7561 = scalar_lea.vmem [#allocation5], 48
        %v7562 = vld [vmem:[%s7561] ss:$2 sm:$0xff]
        %s7563 = scalar_lea.vmem [#allocation5], 64
        %v7564 = vld [vmem:[%s7563] ss:$2 sm:$0xff]
        %s7565 = scalar_lea.vmem [#allocation5], 80
        %v7566 = vld [vmem:[%s7565] ss:$2 sm:$0xff]
        %s7567 = scalar_lea.vmem [#allocation5], 96
        %v7568 = vld [vmem:[%s7567] ss:$2 sm:$0xff]
        %s7569 = scalar_lea.vmem [#allocation5], 112
        %v7570 = vld [vmem:[%s7569] ss:$2 sm:$0xff]
        %s7571 = scalar_lea.vmem [#allocation5], 128
        %v7572 = vld [vmem:[%s7571] ss:$2 sm:$0xff]
        %s7573 = scalar_lea.vmem [#allocation5], 144
        %v7574 = vld [vmem:[%s7573] ss:$2 sm:$0xff]
        %s7575 = scalar_lea.vmem [#allocation5], 160
        %v7576 = vld [vmem:[%s7575] ss:$2 sm:$0xff]
        %s7577 = scalar_lea.vmem [#allocation5], 176
        %v7578 = vld [vmem:[%s7577] ss:$2 sm:$0xff]
        %s7579 = scalar_lea.vmem [#allocation5], 192
        %v7580 = vld [vmem:[%s7579] ss:$2 sm:$0xff]
        %s7581 = scalar_lea.vmem [#allocation5], 208
        %v7582 = vld [vmem:[%s7581] ss:$2 sm:$0xff]
        %s7583 = scalar_lea.vmem [#allocation5], 1
        %v7584 = vld [vmem:[%s7583] ss:$2 sm:$0xff]
        %s7585 = scalar_lea.vmem [#allocation5], 17
        %v7586 = vld [vmem:[%s7585] ss:$2 sm:$0xff]
        %s7587 = scalar_lea.vmem [#allocation5], 33
        %v7588 = vld [vmem:[%s7587] ss:$2 sm:$0xff]
        %s7589 = scalar_lea.vmem [#allocation5], 49
        %v7590 = vld [vmem:[%s7589] ss:$2 sm:$0xff]
        %s7591 = scalar_lea.vmem [#allocation5], 65
        %v7592 = vld [vmem:[%s7591] ss:$2 sm:$0xff]
        %s7593 = scalar_lea.vmem [#allocation5], 81
        %v7594 = vld [vmem:[%s7593] ss:$2 sm:$0xff]
        %s7595 = scalar_lea.vmem [#allocation5], 97
        %v7596 = vld [vmem:[%s7595] ss:$2 sm:$0xff]
        %s7597 = scalar_lea.vmem [#allocation5], 113
        %v7598 = vld [vmem:[%s7597] ss:$2 sm:$0xff]
        %s7599 = scalar_lea.vmem [#allocation5], 129
        %v7600 = vld [vmem:[%s7599] ss:$2 sm:$0xff]
        %s7601 = scalar_lea.vmem [#allocation5], 145
        %v7602 = vld [vmem:[%s7601] ss:$2 sm:$0xff]
        %s7603 = scalar_lea.vmem [#allocation5], 161
        %v7604 = vld [vmem:[%s7603] ss:$2 sm:$0xff]
        %s7605 = scalar_lea.vmem [#allocation5], 177
        %v7606 = vld [vmem:[%s7605] ss:$2 sm:$0xff]
        %s7607 = scalar_lea.vmem [#allocation5], 193
        %v7608 = vld [vmem:[%s7607] ss:$2 sm:$0xff]
        %s7609 = scalar_lea.vmem [#allocation5], 209
        %v7610 = vld [vmem:[%s7609] ss:$2 sm:$0xff]
        %v7611 = vmax.f32 %v7556, %v7584
        %v7612 = vmax.f32 %v7558, %v7586
        %v7613 = vmax.f32 %v7560, %v7588
        %v7614 = vmax.f32 %v7562, %v7590
        %v7615 = vmax.f32 %v7564, %v7592
        %v7616 = vmax.f32 %v7566, %v7594
        %v7617 = vmax.f32 %v7568, %v7596
        %v7618 = vmax.f32 %v7570, %v7598
        %v7619 = vmax.f32 %v7572, %v7600
        %v7620 = vmax.f32 %v7574, %v7602
        %v7621 = vmax.f32 %v7576, %v7604
        %v7622 = vmax.f32 %v7578, %v7606
        %v7623 = vmax.f32 %v7580, %v7608
        %v7624 = vmax.f32 %v7582, %v7610
        %v7625 = vmax.f32 %v7611, %v7612
        %v7626 = vmax.f32 %v7612, %v7613
        %v7627 = vmax.f32 %v7613, %v7614
        %v7628 = vmax.f32 %v7614, %v7615
        %v7629 = vmax.f32 %v7615, %v7616
        %v7630 = vmax.f32 %v7616, %v7617
        %v7631 = vmax.f32 %v7617, %v7618
        %v7632 = vmax.f32 %v7618, %v7619
        %v7633 = vmax.f32 %v7619, %v7620
        %v7634 = vmax.f32 %v7620, %v7621
        %v7635 = vmax.f32 %v7621, %v7622
        %v7636 = vmax.f32 %v7622, %v7623
        %v7637 = vmax.f32 %v7623, %v7624
        %v7638 = vld [vmem:[%s5] sm:$0xff]
        %v7639 = vld [vmem:[%s5 + $0x8] sm:$0xff]
        %v7640 = vld [vmem:[%s5 + $0x10] sm:$0xff]
        %v7641 = vld [vmem:[%s5 + $0x18] sm:$0xff]
        %v7642 = vld [vmem:[%s5 + $0x20] sm:$0xff]
        %v7643 = vld [vmem:[%s5 + $0x28] sm:$0xff]
        %v7644 = vld [vmem:[%s5 + $0x30] sm:$0xff]
        %v7645 = vld [vmem:[%s5 + $0x38] sm:$0xff]
        %v7646 = vld [vmem:[%s5 + $0x40] sm:$0xff]
        %v7647 = vld [vmem:[%s5 + $0x48] sm:$0xff]
        %v7648 = vld [vmem:[%s5 + $0x50] sm:$0xff]
        %v7649 = vld [vmem:[%s5 + $0x58] sm:$0xff]
        %v7650 = vld [vmem:[%s5 + $0x60] sm:$0xff]
        %v7651 = vld [vmem:[%s5 + $0x68] sm:$0xff]
        %v7652 = vld [vmem:[%s5 + $0x70] sm:$0xff]
        %v7653 = vld [vmem:[%s5 + $0x78] sm:$0xff]
        %v7654 = vld [vmem:[%s5 + $0x80] sm:$0xff]
        %v7655 = vld [vmem:[%s5 + $0x88] sm:$0xff]
        %v7656 = vld [vmem:[%s5 + $0x90] sm:$0xff]
        %v7657 = vld [vmem:[%s5 + $0x98] sm:$0xff]
        %v7658 = vld [vmem:[%s5 + $0xa0] sm:$0xff]
        %v7659 = vld [vmem:[%s5 + $0xa8] sm:$0xff]
        %v7660 = vld [vmem:[%s5 + $0xb0] sm:$0xff]
        %v7661 = vld [vmem:[%s5 + $0xb8] sm:$0xff]
        %v7662 = vld [vmem:[%s5 + $0xc0] sm:$0xff]
        %v7663 = vld [vmem:[%s5 + $0xc8] sm:$0xff]
        %v7664 = vld [vmem:[%s5 + $0xd0] sm:$0xff]
        %v7665 = vld [vmem:[%s5 + $0xd8] sm:$0xff]
        %v7666 = vld [vmem:[%s5 + $0xe0] sm:$0xff]
        %v7667 = vld [vmem:[%s5 + $0xe8] sm:$0xff]
        %v7668 = vld [vmem:[%s5 + $0xf0] sm:$0xff]
        %v7669 = vld [vmem:[%s5 + $0xf8] sm:$0xff]
        %v7670 = vld [vmem:[%s5 + $0x100] sm:$0xff]
        %v7671 = vld [vmem:[%s5 + $0x108] sm:$0xff]
        %v7672 = vld [vmem:[%s5 + $0x110] sm:$0xff]
        %v7673 = vld [vmem:[%s5 + $0x118] sm:$0xff]
        %v7674 = vld [vmem:[%s5 + $0x120] sm:$0xff]
        %v7675 = vld [vmem:[%s5 + $0x128] sm:$0xff]
        %v7676 = vld [vmem:[%s5 + $0x130] sm:$0xff]
        %v7677 = vld [vmem:[%s5 + $0x138] sm:$0xff]
        %v7678 = vld [vmem:[%s5 + $0x140] sm:$0xff]
        %v7679 = vld [vmem:[%s5 + $0x148] sm:$0xff]
        %v7680 = vld [vmem:[%s5 + $0x150] sm:$0xff]
        %v7681 = vld [vmem:[%s5 + $0x158] sm:$0xff]
        %v7682 = vld [vmem:[%s5 + $0x160] sm:$0xff]
        %v7683 = vld [vmem:[%s5 + $0x168] sm:$0xff]
        %v7684 = vld [vmem:[%s5 + $0x170] sm:$0xff]
        %v7685 = vld [vmem:[%s5 + $0x178] sm:$0xff]
        %v7686 = vld [vmem:[%s5 + $0x180] sm:$0xff]
        %v7687 = vld [vmem:[%s5 + $0x188] sm:$0xff]
        %v7688 = vld [vmem:[%s5 + $0x190] sm:$0xff]
        %v7689 = vld [vmem:[%s5 + $0x198] sm:$0xff]
        %v7690 = vld [vmem:[%s5 + $0x1a0] sm:$0xff]
        %v7691 = vld [vmem:[%s5 + $0x1a8] sm:$0xff]
        %v7692 = vld [vmem:[%s5 + $0x1b0] sm:$0xff]
        %v7693 = vld [vmem:[%s5 + $0x1b8] sm:$0xff]
        %v7694 = vld [vmem:[%s5 + $0x1c0] sm:$0xff]
        %v7695 = vld [vmem:[%s5 + $0x1c8] sm:$0xff]
        %v7696 = vld [vmem:[%s5 + $0x1d0] sm:$0xff]
        %v7697 = vld [vmem:[%s5 + $0x1d8] sm:$0xff]
        %v7698 = vld [vmem:[%s5 + $0x1e0] sm:$0xff]
        %v7699 = vld [vmem:[%s5 + $0x1e8] sm:$0xff]
        %v7700 = vld [vmem:[%s5 + $0x1f0] sm:$0xff]
        %v7701 = vld [vmem:[%s5 + $0x1f8] sm:$0xff]
        %v7702 = vld [vmem:[%s5 + $0x200] sm:$0xff]
        %v7703 = vld [vmem:[%s5 + $0x208] sm:$0xff]
        %v7704 = vld [vmem:[%s5 + $0x210] sm:$0xff]
        %v7705 = vld [vmem:[%s5 + $0x218] sm:$0xff]
        %v7706 = vld [vmem:[%s5 + $0x220] sm:$0xff]
        %v7707 = vld [vmem:[%s5 + $0x228] sm:$0xff]
        %v7708 = vld [vmem:[%s5 + $0x230] sm:$0xff]
        %v7709 = vld [vmem:[%s5 + $0x238] sm:$0xff]
        %v7710 = vld [vmem:[%s5 + $0x240] sm:$0xff]
        %v7711 = vld [vmem:[%s5 + $0x248] sm:$0xff]
        %v7712 = vld [vmem:[%s5 + $0x250] sm:$0xff]
        %v7713 = vld [vmem:[%s5 + $0x258] sm:$0xff]
        %v7714 = vld [vmem:[%s5 + $0x260] sm:$0xff]
        %v7715 = vld [vmem:[%s5 + $0x268] sm:$0xff]
        %v7716 = vld [vmem:[%s5 + $0x270] sm:$0xff]
        %v7717 = vld [vmem:[%s5 + $0x278] sm:$0xff]
        %v7718 = vld [vmem:[%s5 + $0x280] sm:$0xff]
        %v7719 = vld [vmem:[%s5 + $0x288] sm:$0xff]
        %v7720 = vld [vmem:[%s5 + $0x290] sm:$0xff]
        %v7721 = vld [vmem:[%s5 + $0x298] sm:$0xff]
        %v7722 = vld [vmem:[%s5 + $0x2a0] sm:$0xff]
        %v7723 = vld [vmem:[%s5 + $0x2a8] sm:$0xff]
        %v7724 = vld [vmem:[%s5 + $0x2b0] sm:$0xff]
        %v7725 = vld [vmem:[%s5 + $0x2b8] sm:$0xff]
        %v7726 = vld [vmem:[%s5 + $0x2c0] sm:$0xff]
        %v7727 = vld [vmem:[%s5 + $0x2c8] sm:$0xff]
        %v7728 = vld [vmem:[%s5 + $0x2d0] sm:$0xff]
        %v7729 = vld [vmem:[%s5 + $0x2d8] sm:$0xff]
        %v7730 = vld [vmem:[%s5 + $0x2e0] sm:$0xff]
        %v7731 = vld [vmem:[%s5 + $0x2e8] sm:$0xff]
        %v7732 = vld [vmem:[%s5 + $0x2f0] sm:$0xff]
        %v7733 = vld [vmem:[%s5 + $0x2f8] sm:$0xff]
        %v7734 = vld [vmem:[%s5 + $0x300] sm:$0xff]
        %v7735 = vld [vmem:[%s5 + $0x308] sm:$0xff]
        %v7736 = vld [vmem:[%s5 + $0x310] sm:$0xff]
        %v7737 = vld [vmem:[%s5 + $0x318] sm:$0xff]
        %v7738 = vld [vmem:[%s5 + $0x320] sm:$0xff]
        %v7739 = vld [vmem:[%s5 + $0x328] sm:$0xff]
        %v7740 = vld [vmem:[%s5 + $0x330] sm:$0xff]
        %v7741 = vld [vmem:[%s5 + $0x338] sm:$0xff]
        %v7742 = vmul.f32 %v7625, %v7638
        %v7743 = vmul.f32 %v7626, %v7639
        %v7744 = vmul.f32 %v7627, %v7640
        %v7745 = vmul.f32 %v7628, %v7641
        %v7746 = vmul.f32 %v7629, %v7642
        %v7747 = vmul.f32 %v7630, %v7643
        %v7748 = vmul.f32 %v7631, %v7644
        %v7749 = vmul.f32 %v7632, %v7645
        %v7750 = vmul.f32 %v7633, %v7646
        %v7751 = vmul.f32 %v7634, %v7647
        %v7752 = vmul.f32 %v7635, %v7648
        %v7753 = vmul.f32 %v7636, %v7649
        %v7754 = vmul.f32 %v7637, %v7650
        %v7755 = vmul.f32 %v7625, %v7651
        %v7756 = vmul.f32 %v7626, %v7652
        %v7757 = vmul.f32 %v7627, %v7653
        %v7758 = vmul.f32 %v7628, %v7654
        %v7759 = vmul.f32 %v7629, %v7655
        %v7760 = vmul.f32 %v7630, %v7656
        %v7761 = vmul.f32 %v7631, %v7657
        %v7762 = vmul.f32 %v7632, %v7658
        %v7763 = vmul.f32 %v7633, %v7659
        %v7764 = vmul.f32 %v7634, %v7660
        %v7765 = vmul.f32 %v7635, %v7661
        %v7766 = vmul.f32 %v7636, %v7662
        %v7767 = vmul.f32 %v7637, %v7663
        %v7768 = vmul.f32 %v7625, %v7664
        %v7769 = vmul.f32 %v7626, %v7665
        %v7770 = vmul.f32 %v7627, %v7666
        %v7771 = vmul.f32 %v7628, %v7667
        %v7772 = vmul.f32 %v7629, %v7668
        %v7773 = vmul.f32 %v7630, %v7669
        %v7774 = vmul.f32 %v7631, %v7670
        %v7775 = vmul.f32 %v7632, %v7671
        %v7776 = vmul.f32 %v7633, %v7672
        %v7777 = vmul.f32 %v7634, %v7673
        %v7778 = vmul.f32 %v7635, %v7674
        %v7779 = vmul.f32 %v7636, %v7675
        %v7780 = vmul.f32 %v7637, %v7676
        %v7781 = vmul.f32 %v7625, %v7677
        %v7782 = vmul.f32 %v7626, %v7678
        %v7783 = vmul.f32 %v7627, %v7679
        %v7784 = vmul.f32 %v7628, %v7680
        %v7785 = vmul.f32 %v7629, %v7681
        %v7786 = vmul.f32 %v7630, %v7682
        %v7787 = vmul.f32 %v7631, %v7683
        %v7788 = vmul.f32 %v7632, %v7684
        %v7789 = vmul.f32 %v7633, %v7685
        %v7790 = vmul.f32 %v7634, %v7686
        %v7791 = vmul.f32 %v7635, %v7687
        %v7792 = vmul.f32 %v7636, %v7688
        %v7793 = vmul.f32 %v7637, %v7689
        %v7794 = vmul.f32 %v7625, %v7690
        %v7795 = vmul.f32 %v7626, %v7691
        %v7796 = vmul.f32 %v7627, %v7692
        %v7797 = vmul.f32 %v7628, %v7693
        %v7798 = vmul.f32 %v7629, %v7694
        %v7799 = vmul.f32 %v7630, %v7695
        %v7800 = vmul.f32 %v7631, %v7696
        %v7801 = vmul.f32 %v7632, %v7697
        %v7802 = vmul.f32 %v7633, %v7698
        %v7803 = vmul.f32 %v7634, %v7699
        %v7804 = vmul.f32 %v7635, %v7700
        %v7805 = vmul.f32 %v7636, %v7701
        %v7806 = vmul.f32 %v7637, %v7702
        %v7807 = vmul.f32 %v7625, %v7703
        %v7808 = vmul.f32 %v7626, %v7704
        %v7809 = vmul.f32 %v7627, %v7705
        %v7810 = vmul.f32 %v7628, %v7706
        %v7811 = vmul.f32 %v7629, %v7707
        %v7812 = vmul.f32 %v7630, %v7708
        %v7813 = vmul.f32 %v7631, %v7709
        %v7814 = vmul.f32 %v7632, %v7710
        %v7815 = vmul.f32 %v7633, %v7711
        %v7816 = vmul.f32 %v7634, %v7712
        %v7817 = vmul.f32 %v7635, %v7713
        %v7818 = vmul.f32 %v7636, %v7714
        %v7819 = vmul.f32 %v7637, %v7715
        %v7820 = vmul.f32 %v7625, %v7716
        %v7821 = vmul.f32 %v7626, %v7717
        %v7822 = vmul.f32 %v7627, %v7718
        %v7823 = vmul.f32 %v7628, %v7719
        %v7824 = vmul.f32 %v7629, %v7720
        %v7825 = vmul.f32 %v7630, %v7721
        %v7826 = vmul.f32 %v7631, %v7722
        %v7827 = vmul.f32 %v7632, %v7723
        %v7828 = vmul.f32 %v7633, %v7724
        %v7829 = vmul.f32 %v7634, %v7725
        %v7830 = vmul.f32 %v7635, %v7726
        %v7831 = vmul.f32 %v7636, %v7727
        %v7832 = vmul.f32 %v7637, %v7728
        %v7833 = vmul.f32 %v7625, %v7729
        %v7834 = vmul.f32 %v7626, %v7730
        %v7835 = vmul.f32 %v7627, %v7731
        %v7836 = vmul.f32 %v7628, %v7732
        %v7837 = vmul.f32 %v7629, %v7733
        %v7838 = vmul.f32 %v7630, %v7734
        %v7839 = vmul.f32 %v7631, %v7735
        %v7840 = vmul.f32 %v7632, %v7736
        %v7841 = vmul.f32 %v7633, %v7737
        %v7842 = vmul.f32 %v7634, %v7738
        %v7843 = vmul.f32 %v7635, %v7739
        %v7844 = vmul.f32 %v7636, %v7740
        %v7845 = vmul.f32 %v7637, %v7741
        %v7846 = vsel %vm2367, %v7742, 0.0
        %7847 = vadd.xlane.f32.xlu0 %v7846
        %v7848 = vpop.xlane.xlu0 %7847
        %v7849 = vsel %vm2367, %v7743, 0.0
        %7850 = vadd.xlane.f32.xlu0 %v7849
        %v7851 = vpop.xlane.xlu0 %7850
        %v7852 = vsel %vm2367, %v7744, 0.0
        %7853 = vadd.xlane.f32.xlu0 %v7852
        %v7854 = vpop.xlane.xlu0 %7853
        %v7855 = vsel %vm2367, %v7745, 0.0
        %7856 = vadd.xlane.f32.xlu0 %v7855
        %v7857 = vpop.xlane.xlu0 %7856
        %v7858 = vsel %vm2367, %v7746, 0.0
        %7859 = vadd.xlane.f32.xlu0 %v7858
        %v7860 = vpop.xlane.xlu0 %7859
        %v7861 = vsel %vm2367, %v7747, 0.0
        %7862 = vadd.xlane.f32.xlu0 %v7861
        %v7863 = vpop.xlane.xlu0 %7862
        %v7864 = vsel %vm2367, %v7748, 0.0
        %7865 = vadd.xlane.f32.xlu0 %v7864
        %v7866 = vpop.xlane.xlu0 %7865
        %v7867 = vsel %vm2367, %v7749, 0.0
        %7868 = vadd.xlane.f32.xlu0 %v7867
        %v7869 = vpop.xlane.xlu0 %7868
        %v7870 = vsel %vm2367, %v7750, 0.0
        %7871 = vadd.xlane.f32.xlu0 %v7870
        %v7872 = vpop.xlane.xlu0 %7871
        %v7873 = vsel %vm2367, %v7751, 0.0
        %7874 = vadd.xlane.f32.xlu0 %v7873
        %v7875 = vpop.xlane.xlu0 %7874
        %v7876 = vsel %vm2367, %v7752, 0.0
        %7877 = vadd.xlane.f32.xlu0 %v7876
        %v7878 = vpop.xlane.xlu0 %7877
        %v7879 = vsel %vm2367, %v7753, 0.0
        %7880 = vadd.xlane.f32.xlu0 %v7879
        %v7881 = vpop.xlane.xlu0 %7880
        %v7882 = vsel %vm2367, %v7754, 0.0
        %7883 = vadd.xlane.f32.xlu0 %v7882
        %v7884 = vpop.xlane.xlu0 %7883
        %v7885 = vsel %vm2367, %v7755, 0.0
        %7886 = vadd.xlane.f32.xlu0 %v7885
        %v7887 = vpop.xlane.xlu0 %7886
        %v7888 = vsel %vm2367, %v7756, 0.0
        %7889 = vadd.xlane.f32.xlu0 %v7888
        %v7890 = vpop.xlane.xlu0 %7889
        %v7891 = vsel %vm2367, %v7757, 0.0
        %7892 = vadd.xlane.f32.xlu0 %v7891
        %v7893 = vpop.xlane.xlu0 %7892
        %v7894 = vsel %vm2367, %v7758, 0.0
        %7895 = vadd.xlane.f32.xlu0 %v7894
        %v7896 = vpop.xlane.xlu0 %7895
        %v7897 = vsel %vm2367, %v7759, 0.0
        %7898 = vadd.xlane.f32.xlu0 %v7897
        %v7899 = vpop.xlane.xlu0 %7898
        %v7900 = vsel %vm2367, %v7760, 0.0
        %7901 = vadd.xlane.f32.xlu0 %v7900
        %v7902 = vpop.xlane.xlu0 %7901
        %v7903 = vsel %vm2367, %v7761, 0.0
        %7904 = vadd.xlane.f32.xlu0 %v7903
        %v7905 = vpop.xlane.xlu0 %7904
        %v7906 = vsel %vm2367, %v7762, 0.0
        %7907 = vadd.xlane.f32.xlu0 %v7906
        %v7908 = vpop.xlane.xlu0 %7907
        %v7909 = vsel %vm2367, %v7763, 0.0
        %7910 = vadd.xlane.f32.xlu0 %v7909
        %v7911 = vpop.xlane.xlu0 %7910
        %v7912 = vsel %vm2367, %v7764, 0.0
        %7913 = vadd.xlane.f32.xlu0 %v7912
        %v7914 = vpop.xlane.xlu0 %7913
        %v7915 = vsel %vm2367, %v7765, 0.0
        %7916 = vadd.xlane.f32.xlu0 %v7915
        %v7917 = vpop.xlane.xlu0 %7916
        %v7918 = vsel %vm2367, %v7766, 0.0
        %7919 = vadd.xlane.f32.xlu0 %v7918
        %v7920 = vpop.xlane.xlu0 %7919
        %v7921 = vsel %vm2367, %v7767, 0.0
        %7922 = vadd.xlane.f32.xlu0 %v7921
        %v7923 = vpop.xlane.xlu0 %7922
        %v7924 = vsel %vm2367, %v7768, 0.0
        %7925 = vadd.xlane.f32.xlu0 %v7924
        %v7926 = vpop.xlane.xlu0 %7925
        %v7927 = vsel %vm2367, %v7769, 0.0
        %7928 = vadd.xlane.f32.xlu0 %v7927
        %v7929 = vpop.xlane.xlu0 %7928
        %v7930 = vsel %vm2367, %v7770, 0.0
        %7931 = vadd.xlane.f32.xlu0 %v7930
        %v7932 = vpop.xlane.xlu0 %7931
        %v7933 = vsel %vm2367, %v7771, 0.0
        %7934 = vadd.xlane.f32.xlu0 %v7933
        %v7935 = vpop.xlane.xlu0 %7934
        %v7936 = vsel %vm2367, %v7772, 0.0
        %7937 = vadd.xlane.f32.xlu0 %v7936
        %v7938 = vpop.xlane.xlu0 %7937
        %v7939 = vsel %vm2367, %v7773, 0.0
        %7940 = vadd.xlane.f32.xlu0 %v7939
        %v7941 = vpop.xlane.xlu0 %7940
        %v7942 = vsel %vm2367, %v7774, 0.0
        %7943 = vadd.xlane.f32.xlu0 %v7942
        %v7944 = vpop.xlane.xlu0 %7943
        %v7945 = vsel %vm2367, %v7775, 0.0
        %7946 = vadd.xlane.f32.xlu0 %v7945
        %v7947 = vpop.xlane.xlu0 %7946
        %v7948 = vsel %vm2367, %v7776, 0.0
        %7949 = vadd.xlane.f32.xlu0 %v7948
        %v7950 = vpop.xlane.xlu0 %7949
        %v7951 = vsel %vm2367, %v7777, 0.0
        %7952 = vadd.xlane.f32.xlu0 %v7951
        %v7953 = vpop.xlane.xlu0 %7952
        %v7954 = vsel %vm2367, %v7778, 0.0
        %7955 = vadd.xlane.f32.xlu0 %v7954
        %v7956 = vpop.xlane.xlu0 %7955
        %v7957 = vsel %vm2367, %v7779, 0.0
        %7958 = vadd.xlane.f32.xlu0 %v7957
        %v7959 = vpop.xlane.xlu0 %7958
        %v7960 = vsel %vm2367, %v7780, 0.0
        %7961 = vadd.xlane.f32.xlu0 %v7960
        %v7962 = vpop.xlane.xlu0 %7961
        %v7963 = vsel %vm2367, %v7781, 0.0
        %7964 = vadd.xlane.f32.xlu0 %v7963
        %v7965 = vpop.xlane.xlu0 %7964
        %v7966 = vsel %vm2367, %v7782, 0.0
        %7967 = vadd.xlane.f32.xlu0 %v7966
        %v7968 = vpop.xlane.xlu0 %7967
        %v7969 = vsel %vm2367, %v7783, 0.0
        %7970 = vadd.xlane.f32.xlu0 %v7969
        %v7971 = vpop.xlane.xlu0 %7970
        %v7972 = vsel %vm2367, %v7784, 0.0
        %7973 = vadd.xlane.f32.xlu0 %v7972
        %v7974 = vpop.xlane.xlu0 %7973
        %v7975 = vsel %vm2367, %v7785, 0.0
        %7976 = vadd.xlane.f32.xlu0 %v7975
        %v7977 = vpop.xlane.xlu0 %7976
        %v7978 = vsel %vm2367, %v7786, 0.0
        %7979 = vadd.xlane.f32.xlu0 %v7978
        %v7980 = vpop.xlane.xlu0 %7979
        %v7981 = vsel %vm2367, %v7787, 0.0
        %7982 = vadd.xlane.f32.xlu0 %v7981
        %v7983 = vpop.xlane.xlu0 %7982
        %v7984 = vsel %vm2367, %v7788, 0.0
        %7985 = vadd.xlane.f32.xlu0 %v7984
        %v7986 = vpop.xlane.xlu0 %7985
        %v7987 = vsel %vm2367, %v7789, 0.0
        %7988 = vadd.xlane.f32.xlu0 %v7987
        %v7989 = vpop.xlane.xlu0 %7988
        %v7990 = vsel %vm2367, %v7790, 0.0
        %7991 = vadd.xlane.f32.xlu0 %v7990
        %v7992 = vpop.xlane.xlu0 %7991
        %v7993 = vsel %vm2367, %v7791, 0.0
        %7994 = vadd.xlane.f32.xlu0 %v7993
        %v7995 = vpop.xlane.xlu0 %7994
        %v7996 = vsel %vm2367, %v7792, 0.0
        %7997 = vadd.xlane.f32.xlu0 %v7996
        %v7998 = vpop.xlane.xlu0 %7997
        %v7999 = vsel %vm2367, %v7793, 0.0
        %8000 = vadd.xlane.f32.xlu0 %v7999
        %v8001 = vpop.xlane.xlu0 %8000
        %v8002 = vsel %vm2367, %v7794, 0.0
        %8003 = vadd.xlane.f32.xlu0 %v8002
        %v8004 = vpop.xlane.xlu0 %8003
        %v8005 = vsel %vm2367, %v7795, 0.0
        %8006 = vadd.xlane.f32.xlu0 %v8005
        %v8007 = vpop.xlane.xlu0 %8006
        %v8008 = vsel %vm2367, %v7796, 0.0
        %8009 = vadd.xlane.f32.xlu0 %v8008
        %v8010 = vpop.xlane.xlu0 %8009
        %v8011 = vsel %vm2367, %v7797, 0.0
        %8012 = vadd.xlane.f32.xlu0 %v8011
        %v8013 = vpop.xlane.xlu0 %8012
        %v8014 = vsel %vm2367, %v7798, 0.0
        %8015 = vadd.xlane.f32.xlu0 %v8014
        %v8016 = vpop.xlane.xlu0 %8015
        %v8017 = vsel %vm2367, %v7799, 0.0
        %8018 = vadd.xlane.f32.xlu0 %v8017
        %v8019 = vpop.xlane.xlu0 %8018
        %v8020 = vsel %vm2367, %v7800, 0.0
        %8021 = vadd.xlane.f32.xlu0 %v8020
        %v8022 = vpop.xlane.xlu0 %8021
        %v8023 = vsel %vm2367, %v7801, 0.0
        %8024 = vadd.xlane.f32.xlu0 %v8023
        %v8025 = vpop.xlane.xlu0 %8024
        %v8026 = vsel %vm2367, %v7802, 0.0
        %8027 = vadd.xlane.f32.xlu0 %v8026
        %v8028 = vpop.xlane.xlu0 %8027
        %v8029 = vsel %vm2367, %v7803, 0.0
        %8030 = vadd.xlane.f32.xlu0 %v8029
        %v8031 = vpop.xlane.xlu0 %8030
        %v8032 = vsel %vm2367, %v7804, 0.0
        %8033 = vadd.xlane.f32.xlu0 %v8032
        %v8034 = vpop.xlane.xlu0 %8033
        %v8035 = vsel %vm2367, %v7805, 0.0
        %8036 = vadd.xlane.f32.xlu0 %v8035
        %v8037 = vpop.xlane.xlu0 %8036
        %v8038 = vsel %vm2367, %v7806, 0.0
        %8039 = vadd.xlane.f32.xlu0 %v8038
        %v8040 = vpop.xlane.xlu0 %8039
        %v8041 = vsel %vm2367, %v7807, 0.0
        %8042 = vadd.xlane.f32.xlu0 %v8041
        %v8043 = vpop.xlane.xlu0 %8042
        %v8044 = vsel %vm2367, %v7808, 0.0
        %8045 = vadd.xlane.f32.xlu0 %v8044
        %v8046 = vpop.xlane.xlu0 %8045
        %v8047 = vsel %vm2367, %v7809, 0.0
        %8048 = vadd.xlane.f32.xlu0 %v8047
        %v8049 = vpop.xlane.xlu0 %8048
        %v8050 = vsel %vm2367, %v7810, 0.0
        %8051 = vadd.xlane.f32.xlu0 %v8050
        %v8052 = vpop.xlane.xlu0 %8051
        %v8053 = vsel %vm2367, %v7811, 0.0
        %8054 = vadd.xlane.f32.xlu0 %v8053
        %v8055 = vpop.xlane.xlu0 %8054
        %v8056 = vsel %vm2367, %v7812, 0.0
        %8057 = vadd.xlane.f32.xlu0 %v8056
        %v8058 = vpop.xlane.xlu0 %8057
        %v8059 = vsel %vm2367, %v7813, 0.0
        %8060 = vadd.xlane.f32.xlu0 %v8059
        %v8061 = vpop.xlane.xlu0 %8060
        %v8062 = vsel %vm2367, %v7814, 0.0
        %8063 = vadd.xlane.f32.xlu0 %v8062
        %v8064 = vpop.xlane.xlu0 %8063
        %v8065 = vsel %vm2367, %v7815, 0.0
        %8066 = vadd.xlane.f32.xlu0 %v8065
        %v8067 = vpop.xlane.xlu0 %8066
        %v8068 = vsel %vm2367, %v7816, 0.0
        %8069 = vadd.xlane.f32.xlu0 %v8068
        %v8070 = vpop.xlane.xlu0 %8069
        %v8071 = vsel %vm2367, %v7817, 0.0
        %8072 = vadd.xlane.f32.xlu0 %v8071
        %v8073 = vpop.xlane.xlu0 %8072
        %v8074 = vsel %vm2367, %v7818, 0.0
        %8075 = vadd.xlane.f32.xlu0 %v8074
        %v8076 = vpop.xlane.xlu0 %8075
        %v8077 = vsel %vm2367, %v7819, 0.0
        %8078 = vadd.xlane.f32.xlu0 %v8077
        %v8079 = vpop.xlane.xlu0 %8078
        %v8080 = vsel %vm2367, %v7820, 0.0
        %8081 = vadd.xlane.f32.xlu0 %v8080
        %v8082 = vpop.xlane.xlu0 %8081
        %v8083 = vsel %vm2367, %v7821, 0.0
        %8084 = vadd.xlane.f32.xlu0 %v8083
        %v8085 = vpop.xlane.xlu0 %8084
        %v8086 = vsel %vm2367, %v7822, 0.0
        %8087 = vadd.xlane.f32.xlu0 %v8086
        %v8088 = vpop.xlane.xlu0 %8087
        %v8089 = vsel %vm2367, %v7823, 0.0
        %8090 = vadd.xlane.f32.xlu0 %v8089
        %v8091 = vpop.xlane.xlu0 %8090
        %v8092 = vsel %vm2367, %v7824, 0.0
        %8093 = vadd.xlane.f32.xlu0 %v8092
        %v8094 = vpop.xlane.xlu0 %8093
        %v8095 = vsel %vm2367, %v7825, 0.0
        %8096 = vadd.xlane.f32.xlu0 %v8095
        %v8097 = vpop.xlane.xlu0 %8096
        %v8098 = vsel %vm2367, %v7826, 0.0
        %8099 = vadd.xlane.f32.xlu0 %v8098
        %v8100 = vpop.xlane.xlu0 %8099
        %v8101 = vsel %vm2367, %v7827, 0.0
        %8102 = vadd.xlane.f32.xlu0 %v8101
        %v8103 = vpop.xlane.xlu0 %8102
        %v8104 = vsel %vm2367, %v7828, 0.0
        %8105 = vadd.xlane.f32.xlu0 %v8104
        %v8106 = vpop.xlane.xlu0 %8105
        %v8107 = vsel %vm2367, %v7829, 0.0
        %8108 = vadd.xlane.f32.xlu0 %v8107
        %v8109 = vpop.xlane.xlu0 %8108
        %v8110 = vsel %vm2367, %v7830, 0.0
        %8111 = vadd.xlane.f32.xlu0 %v8110
        %v8112 = vpop.xlane.xlu0 %8111
        %v8113 = vsel %vm2367, %v7831, 0.0
        %8114 = vadd.xlane.f32.xlu0 %v8113
        %v8115 = vpop.xlane.xlu0 %8114
        %v8116 = vsel %vm2367, %v7832, 0.0
        %8117 = vadd.xlane.f32.xlu0 %v8116
        %v8118 = vpop.xlane.xlu0 %8117
        %v8119 = vsel %vm2367, %v7833, 0.0
        %8120 = vadd.xlane.f32.xlu0 %v8119
        %v8121 = vpop.xlane.xlu0 %8120
        %v8122 = vsel %vm2367, %v7834, 0.0
        %8123 = vadd.xlane.f32.xlu0 %v8122
        %v8124 = vpop.xlane.xlu0 %8123
        %v8125 = vsel %vm2367, %v7835, 0.0
        %8126 = vadd.xlane.f32.xlu0 %v8125
        %v8127 = vpop.xlane.xlu0 %8126
        %v8128 = vsel %vm2367, %v7836, 0.0
        %8129 = vadd.xlane.f32.xlu0 %v8128
        %v8130 = vpop.xlane.xlu0 %8129
        %v8131 = vsel %vm2367, %v7837, 0.0
        %8132 = vadd.xlane.f32.xlu0 %v8131
        %v8133 = vpop.xlane.xlu0 %8132
        %v8134 = vsel %vm2367, %v7838, 0.0
        %8135 = vadd.xlane.f32.xlu0 %v8134
        %v8136 = vpop.xlane.xlu0 %8135
        %v8137 = vsel %vm2367, %v7839, 0.0
        %8138 = vadd.xlane.f32.xlu0 %v8137
        %v8139 = vpop.xlane.xlu0 %8138
        %v8140 = vsel %vm2367, %v7840, 0.0
        %8141 = vadd.xlane.f32.xlu0 %v8140
        %v8142 = vpop.xlane.xlu0 %8141
        %v8143 = vsel %vm2367, %v7841, 0.0
        %8144 = vadd.xlane.f32.xlu0 %v8143
        %v8145 = vpop.xlane.xlu0 %8144
        %v8146 = vsel %vm2367, %v7842, 0.0
        %8147 = vadd.xlane.f32.xlu0 %v8146
        %v8148 = vpop.xlane.xlu0 %8147
        %v8149 = vsel %vm2367, %v7843, 0.0
        %8150 = vadd.xlane.f32.xlu0 %v8149
        %v8151 = vpop.xlane.xlu0 %8150
        %v8152 = vsel %vm2367, %v7844, 0.0
        %8153 = vadd.xlane.f32.xlu0 %v8152
        %v8154 = vpop.xlane.xlu0 %8153
        %v8155 = vsel %vm2367, %v7845, 0.0
        %8156 = vadd.xlane.f32.xlu0 %v8155
        %v8157 = vpop.xlane.xlu0 %8156
        %v8262 = vlaneseq
        %v8263 = vand.u32 %v8262, 127
        %v8264 = vlaneseq
        %v8265 = vshrl.u32 %v8264, 7
        %v8266 = vsub.s32 %v8263, %v8265
        %v8267 = vrot.slane %v7848, %v8266
        %v8268 = vadd.s32 %v8263, 4294967288
        %v8269 = vlaneseq
        %v8270 = vshrl.u32 %v8269, 7
        %v8271 = vsub.s32 %v8268, %v8270
        %v8272 = vrot.slane %v7851, %v8271
        %vm8273 = vcmask 130112
        %v8274 = vsel %vm8273, %v8272, %v8267
        %v8275 = vadd.s32 %v8263, 4294967280
        %v8276 = vlaneseq
        %v8277 = vshrl.u32 %v8276, 7
        %v8278 = vsub.s32 %v8275, %v8277
        %v8279 = vrot.slane %v7854, %v8278
        %vm8280 = vcmask 195712
        %v8281 = vsel %vm8280, %v8279, %v8274
        %v8282 = vadd.s32 %v8263, 4294967272
        %v8283 = vlaneseq
        %v8284 = vshrl.u32 %v8283, 7
        %v8285 = vsub.s32 %v8282, %v8284
        %v8286 = vrot.slane %v7857, %v8285
        %vm8287 = vcmask 261312
        %v8288 = vsel %vm8287, %v8286, %v8281
        %v8289 = vadd.s32 %v8263, 4294967264
        %v8290 = vlaneseq
        %v8291 = vshrl.u32 %v8290, 7
        %v8292 = vsub.s32 %v8289, %v8291
        %v8293 = vrot.slane %v7860, %v8292
        %vm8294 = vcmask 326912
        %v8295 = vsel %vm8294, %v8293, %v8288
        %v8296 = vadd.s32 %v8263, 4294967256
        %v8297 = vlaneseq
        %v8298 = vshrl.u32 %v8297, 7
        %v8299 = vsub.s32 %v8296, %v8298
        %v8300 = vrot.slane %v7863, %v8299
        %vm8301 = vcmask 392512
        %v8302 = vsel %vm8301, %v8300, %v8295
        %v8303 = vadd.s32 %v8263, 4294967248
        %v8304 = vlaneseq
        %v8305 = vshrl.u32 %v8304, 7
        %v8306 = vsub.s32 %v8303, %v8305
        %v8307 = vrot.slane %v7866, %v8306
        %vm8308 = vcmask 458112
        %v8309 = vsel %vm8308, %v8307, %v8302
        %v8310 = vadd.s32 %v8263, 4294967240
        %v8311 = vlaneseq
        %v8312 = vshrl.u32 %v8311, 7
        %v8313 = vsub.s32 %v8310, %v8312
        %v8314 = vrot.slane %v7869, %v8313
        %vm8315 = vcmask 523712
        %v8316 = vsel %vm8315, %v8314, %v8309
        %v8317 = vadd.s32 %v8263, 4294967232
        %v8318 = vlaneseq
        %v8319 = vshrl.u32 %v8318, 7
        %v8320 = vsub.s32 %v8317, %v8319
        %v8321 = vrot.slane %v7872, %v8320
        %vm8322 = vcmask 589312
        %v8323 = vsel %vm8322, %v8321, %v8316
        %v8324 = vadd.s32 %v8263, 4294967224
        %v8325 = vlaneseq
        %v8326 = vshrl.u32 %v8325, 7
        %v8327 = vsub.s32 %v8324, %v8326
        %v8328 = vrot.slane %v7875, %v8327
        %vm8329 = vcmask 654912
        %v8330 = vsel %vm8329, %v8328, %v8323
        %v8331 = vadd.s32 %v8263, 4294967216
        %v8332 = vlaneseq
        %v8333 = vshrl.u32 %v8332, 7
        %v8334 = vsub.s32 %v8331, %v8333
        %v8335 = vrot.slane %v7878, %v8334
        %vm8336 = vcmask 720512
        %v8337 = vsel %vm8336, %v8335, %v8330
        %v8338 = vadd.s32 %v8263, 4294967208
        %v8339 = vlaneseq
        %v8340 = vshrl.u32 %v8339, 7
        %v8341 = vsub.s32 %v8338, %v8340
        %v8342 = vrot.slane %v7881, %v8341
        %vm8343 = vcmask 786112
        %v8344 = vsel %vm8343, %v8342, %v8337
        %v8345 = vadd.s32 %v8263, 4294967200
        %v8346 = vlaneseq
        %v8347 = vshrl.u32 %v8346, 7
        %v8348 = vsub.s32 %v8345, %v8347
        %v8349 = vrot.slane %v7884, %v8348
        %vm8350 = vcmask 851712
        %v8351 = vsel %vm8350, %v8349, %v8344
        %v8352 = vlaneseq
        %v8353 = vshrl.u32 %v8352, 7
        %v8354 = vsub.s32 %v8263, %v8353
        %v8355 = vrot.slane %v7887, %v8354
        %v8356 = vlaneseq
        %v8357 = vshrl.u32 %v8356, 7
        %v8358 = vsub.s32 %v8268, %v8357
        %v8359 = vrot.slane %v7890, %v8358
        %v8360 = vsel %vm8273, %v8359, %v8355
        %v8361 = vlaneseq
        %v8362 = vshrl.u32 %v8361, 7
        %v8363 = vsub.s32 %v8275, %v8362
        %v8364 = vrot.slane %v7893, %v8363
        %v8365 = vsel %vm8280, %v8364, %v8360
        %v8366 = vlaneseq
        %v8367 = vshrl.u32 %v8366, 7
        %v8368 = vsub.s32 %v8282, %v8367
        %v8369 = vrot.slane %v7896, %v8368
        %v8370 = vsel %vm8287, %v8369, %v8365
        %v8371 = vlaneseq
        %v8372 = vshrl.u32 %v8371, 7
        %v8373 = vsub.s32 %v8289, %v8372
        %v8374 = vrot.slane %v7899, %v8373
        %v8375 = vsel %vm8294, %v8374, %v8370
        %v8376 = vlaneseq
        %v8377 = vshrl.u32 %v8376, 7
        %v8378 = vsub.s32 %v8296, %v8377
        %v8379 = vrot.slane %v7902, %v8378
        %v8380 = vsel %vm8301, %v8379, %v8375
        %v8381 = vlaneseq
        %v8382 = vshrl.u32 %v8381, 7
        %v8383 = vsub.s32 %v8303, %v8382
        %v8384 = vrot.slane %v7905, %v8383
        %v8385 = vsel %vm8308, %v8384, %v8380
        %v8386 = vlaneseq
        %v8387 = vshrl.u32 %v8386, 7
        %v8388 = vsub.s32 %v8310, %v8387
        %v8389 = vrot.slane %v7908, %v8388
        %v8390 = vsel %vm8315, %v8389, %v8385
        %v8391 = vlaneseq
        %v8392 = vshrl.u32 %v8391, 7
        %v8393 = vsub.s32 %v8317, %v8392
        %v8394 = vrot.slane %v7911, %v8393
        %v8395 = vsel %vm8322, %v8394, %v8390
        %v8396 = vlaneseq
        %v8397 = vshrl.u32 %v8396, 7
        %v8398 = vsub.s32 %v8324, %v8397
        %v8399 = vrot.slane %v7914, %v8398
        %v8400 = vsel %vm8329, %v8399, %v8395
        %v8401 = vlaneseq
        %v8402 = vshrl.u32 %v8401, 7
        %v8403 = vsub.s32 %v8331, %v8402
        %v8404 = vrot.slane %v7917, %v8403
        %v8405 = vsel %vm8336, %v8404, %v8400
        %v8406 = vlaneseq
        %v8407 = vshrl.u32 %v8406, 7
        %v8408 = vsub.s32 %v8338, %v8407
        %v8409 = vrot.slane %v7920, %v8408
        %v8410 = vsel %vm8343, %v8409, %v8405
        %v8411 = vlaneseq
        %v8412 = vshrl.u32 %v8411, 7
        %v8413 = vsub.s32 %v8345, %v8412
        %v8414 = vrot.slane %v7923, %v8413
        %v8415 = vsel %vm8350, %v8414, %v8410
        %v8416 = vlaneseq
        %v8417 = vshrl.u32 %v8416, 7
        %v8418 = vsub.s32 %v8263, %v8417
        %v8419 = vrot.slane %v7926, %v8418
        %v8420 = vlaneseq
        %v8421 = vshrl.u32 %v8420, 7
        %v8422 = vsub.s32 %v8268, %v8421
        %v8423 = vrot.slane %v7929, %v8422
        %v8424 = vsel %vm8273, %v8423, %v8419
        %v8425 = vlaneseq
        %v8426 = vshrl.u32 %v8425, 7
        %v8427 = vsub.s32 %v8275, %v8426
        %v8428 = vrot.slane %v7932, %v8427
        %v8429 = vsel %vm8280, %v8428, %v8424
        %v8430 = vlaneseq
        %v8431 = vshrl.u32 %v8430, 7
        %v8432 = vsub.s32 %v8282, %v8431
        %v8433 = vrot.slane %v7935, %v8432
        %v8434 = vsel %vm8287, %v8433, %v8429
        %v8435 = vlaneseq
        %v8436 = vshrl.u32 %v8435, 7
        %v8437 = vsub.s32 %v8289, %v8436
        %v8438 = vrot.slane %v7938, %v8437
        %v8439 = vsel %vm8294, %v8438, %v8434
        %v8440 = vlaneseq
        %v8441 = vshrl.u32 %v8440, 7
        %v8442 = vsub.s32 %v8296, %v8441
        %v8443 = vrot.slane %v7941, %v8442
        %v8444 = vsel %vm8301, %v8443, %v8439
        %v8445 = vlaneseq
        %v8446 = vshrl.u32 %v8445, 7
        %v8447 = vsub.s32 %v8303, %v8446
        %v8448 = vrot.slane %v7944, %v8447
        %v8449 = vsel %vm8308, %v8448, %v8444
        %v8450 = vlaneseq
        %v8451 = vshrl.u32 %v8450, 7
        %v8452 = vsub.s32 %v8310, %v8451
        %v8453 = vrot.slane %v7947, %v8452
        %v8454 = vsel %vm8315, %v8453, %v8449
        %v8455 = vlaneseq
        %v8456 = vshrl.u32 %v8455, 7
        %v8457 = vsub.s32 %v8317, %v8456
        %v8458 = vrot.slane %v7950, %v8457
        %v8459 = vsel %vm8322, %v8458, %v8454
        %v8460 = vlaneseq
        %v8461 = vshrl.u32 %v8460, 7
        %v8462 = vsub.s32 %v8324, %v8461
        %v8463 = vrot.slane %v7953, %v8462
        %v8464 = vsel %vm8329, %v8463, %v8459
        %v8465 = vlaneseq
        %v8466 = vshrl.u32 %v8465, 7
        %v8467 = vsub.s32 %v8331, %v8466
        %v8468 = vrot.slane %v7956, %v8467
        %v8469 = vsel %vm8336, %v8468, %v8464
        %v8470 = vlaneseq
        %v8471 = vshrl.u32 %v8470, 7
        %v8472 = vsub.s32 %v8338, %v8471
        %v8473 = vrot.slane %v7959, %v8472
        %v8474 = vsel %vm8343, %v8473, %v8469
        %v8475 = vlaneseq
        %v8476 = vshrl.u32 %v8475, 7
        %v8477 = vsub.s32 %v8345, %v8476
        %v8478 = vrot.slane %v7962, %v8477
        %v8479 = vsel %vm8350, %v8478, %v8474
        %v8480 = vlaneseq
        %v8481 = vshrl.u32 %v8480, 7
        %v8482 = vsub.s32 %v8263, %v8481
        %v8483 = vrot.slane %v7965, %v8482
        %v8484 = vlaneseq
        %v8485 = vshrl.u32 %v8484, 7
        %v8486 = vsub.s32 %v8268, %v8485
        %v8487 = vrot.slane %v7968, %v8486
        %v8488 = vsel %vm8273, %v8487, %v8483
        %v8489 = vlaneseq
        %v8490 = vshrl.u32 %v8489, 7
        %v8491 = vsub.s32 %v8275, %v8490
        %v8492 = vrot.slane %v7971, %v8491
        %v8493 = vsel %vm8280, %v8492, %v8488
        %v8494 = vlaneseq
        %v8495 = vshrl.u32 %v8494, 7
        %v8496 = vsub.s32 %v8282, %v8495
        %v8497 = vrot.slane %v7974, %v8496
        %v8498 = vsel %vm8287, %v8497, %v8493
        %v8499 = vlaneseq
        %v8500 = vshrl.u32 %v8499, 7
        %v8501 = vsub.s32 %v8289, %v8500
        %v8502 = vrot.slane %v7977, %v8501
        %v8503 = vsel %vm8294, %v8502, %v8498
        %v8504 = vlaneseq
        %v8505 = vshrl.u32 %v8504, 7
        %v8506 = vsub.s32 %v8296, %v8505
        %v8507 = vrot.slane %v7980, %v8506
        %v8508 = vsel %vm8301, %v8507, %v8503
        %v8509 = vlaneseq
        %v8510 = vshrl.u32 %v8509, 7
        %v8511 = vsub.s32 %v8303, %v8510
        %v8512 = vrot.slane %v7983, %v8511
        %v8513 = vsel %vm8308, %v8512, %v8508
        %v8514 = vlaneseq
        %v8515 = vshrl.u32 %v8514, 7
        %v8516 = vsub.s32 %v8310, %v8515
        %v8517 = vrot.slane %v7986, %v8516
        %v8518 = vsel %vm8315, %v8517, %v8513
        %v8519 = vlaneseq
        %v8520 = vshrl.u32 %v8519, 7
        %v8521 = vsub.s32 %v8317, %v8520
        %v8522 = vrot.slane %v7989, %v8521
        %v8523 = vsel %vm8322, %v8522, %v8518
        %v8524 = vlaneseq
        %v8525 = vshrl.u32 %v8524, 7
        %v8526 = vsub.s32 %v8324, %v8525
        %v8527 = vrot.slane %v7992, %v8526
        %v8528 = vsel %vm8329, %v8527, %v8523
        %v8529 = vlaneseq
        %v8530 = vshrl.u32 %v8529, 7
        %v8531 = vsub.s32 %v8331, %v8530
        %v8532 = vrot.slane %v7995, %v8531
        %v8533 = vsel %vm8336, %v8532, %v8528
        %v8534 = vlaneseq
        %v8535 = vshrl.u32 %v8534, 7
        %v8536 = vsub.s32 %v8338, %v8535
        %v8537 = vrot.slane %v7998, %v8536
        %v8538 = vsel %vm8343, %v8537, %v8533
        %v8539 = vlaneseq
        %v8540 = vshrl.u32 %v8539, 7
        %v8541 = vsub.s32 %v8345, %v8540
        %v8542 = vrot.slane %v8001, %v8541
        %v8543 = vsel %vm8350, %v8542, %v8538
        %v8544 = vlaneseq
        %v8545 = vshrl.u32 %v8544, 7
        %v8546 = vsub.s32 %v8263, %v8545
        %v8547 = vrot.slane %v8004, %v8546
        %v8548 = vlaneseq
        %v8549 = vshrl.u32 %v8548, 7
        %v8550 = vsub.s32 %v8268, %v8549
        %v8551 = vrot.slane %v8007, %v8550
        %v8552 = vsel %vm8273, %v8551, %v8547
        %v8553 = vlaneseq
        %v8554 = vshrl.u32 %v8553, 7
        %v8555 = vsub.s32 %v8275, %v8554
        %v8556 = vrot.slane %v8010, %v8555
        %v8557 = vsel %vm8280, %v8556, %v8552
        %v8558 = vlaneseq
        %v8559 = vshrl.u32 %v8558, 7
        %v8560 = vsub.s32 %v8282, %v8559
        %v8561 = vrot.slane %v8013, %v8560
        %v8562 = vsel %vm8287, %v8561, %v8557
        %v8563 = vlaneseq
        %v8564 = vshrl.u32 %v8563, 7
        %v8565 = vsub.s32 %v8289, %v8564
        %v8566 = vrot.slane %v8016, %v8565
        %v8567 = vsel %vm8294, %v8566, %v8562
        %v8568 = vlaneseq
        %v8569 = vshrl.u32 %v8568, 7
        %v8570 = vsub.s32 %v8296, %v8569
        %v8571 = vrot.slane %v8019, %v8570
        %v8572 = vsel %vm8301, %v8571, %v8567
        %v8573 = vlaneseq
        %v8574 = vshrl.u32 %v8573, 7
        %v8575 = vsub.s32 %v8303, %v8574
        %v8576 = vrot.slane %v8022, %v8575
        %v8577 = vsel %vm8308, %v8576, %v8572
        %v8578 = vlaneseq
        %v8579 = vshrl.u32 %v8578, 7
        %v8580 = vsub.s32 %v8310, %v8579
        %v8581 = vrot.slane %v8025, %v8580
        %v8582 = vsel %vm8315, %v8581, %v8577
        %v8583 = vlaneseq
        %v8584 = vshrl.u32 %v8583, 7
        %v8585 = vsub.s32 %v8317, %v8584
        %v8586 = vrot.slane %v8028, %v8585
        %v8587 = vsel %vm8322, %v8586, %v8582
        %v8588 = vlaneseq
        %v8589 = vshrl.u32 %v8588, 7
        %v8590 = vsub.s32 %v8324, %v8589
        %v8591 = vrot.slane %v8031, %v8590
        %v8592 = vsel %vm8329, %v8591, %v8587
        %v8593 = vlaneseq
        %v8594 = vshrl.u32 %v8593, 7
        %v8595 = vsub.s32 %v8331, %v8594
        %v8596 = vrot.slane %v8034, %v8595
        %v8597 = vsel %vm8336, %v8596, %v8592
        %v8598 = vlaneseq
        %v8599 = vshrl.u32 %v8598, 7
        %v8600 = vsub.s32 %v8338, %v8599
        %v8601 = vrot.slane %v8037, %v8600
        %v8602 = vsel %vm8343, %v8601, %v8597
        %v8603 = vlaneseq
        %v8604 = vshrl.u32 %v8603, 7
        %v8605 = vsub.s32 %v8345, %v8604
        %v8606 = vrot.slane %v8040, %v8605
        %v8607 = vsel %vm8350, %v8606, %v8602
        %v8608 = vlaneseq
        %v8609 = vshrl.u32 %v8608, 7
        %v8610 = vsub.s32 %v8263, %v8609
        %v8611 = vrot.slane %v8043, %v8610
        %v8612 = vlaneseq
        %v8613 = vshrl.u32 %v8612, 7
        %v8614 = vsub.s32 %v8268, %v8613
        %v8615 = vrot.slane %v8046, %v8614
        %v8616 = vsel %vm8273, %v8615, %v8611
        %v8617 = vlaneseq
        %v8618 = vshrl.u32 %v8617, 7
        %v8619 = vsub.s32 %v8275, %v8618
        %v8620 = vrot.slane %v8049, %v8619
        %v8621 = vsel %vm8280, %v8620, %v8616
        %v8622 = vlaneseq
        %v8623 = vshrl.u32 %v8622, 7
        %v8624 = vsub.s32 %v8282, %v8623
        %v8625 = vrot.slane %v8052, %v8624
        %v8626 = vsel %vm8287, %v8625, %v8621
        %v8627 = vlaneseq
        %v8628 = vshrl.u32 %v8627, 7
        %v8629 = vsub.s32 %v8289, %v8628
        %v8630 = vrot.slane %v8055, %v8629
        %v8631 = vsel %vm8294, %v8630, %v8626
        %v8632 = vlaneseq
        %v8633 = vshrl.u32 %v8632, 7
        %v8634 = vsub.s32 %v8296, %v8633
        %v8635 = vrot.slane %v8058, %v8634
        %v8636 = vsel %vm8301, %v8635, %v8631
        %v8637 = vlaneseq
        %v8638 = vshrl.u32 %v8637, 7
        %v8639 = vsub.s32 %v8303, %v8638
        %v8640 = vrot.slane %v8061, %v8639
        %v8641 = vsel %vm8308, %v8640, %v8636
        %v8642 = vlaneseq
        %v8643 = vshrl.u32 %v8642, 7
        %v8644 = vsub.s32 %v8310, %v8643
        %v8645 = vrot.slane %v8064, %v8644
        %v8646 = vsel %vm8315, %v8645, %v8641
        %v8647 = vlaneseq
        %v8648 = vshrl.u32 %v8647, 7
        %v8649 = vsub.s32 %v8317, %v8648
        %v8650 = vrot.slane %v8067, %v8649
        %v8651 = vsel %vm8322, %v8650, %v8646
        %v8652 = vlaneseq
        %v8653 = vshrl.u32 %v8652, 7
        %v8654 = vsub.s32 %v8324, %v8653
        %v8655 = vrot.slane %v8070, %v8654
        %v8656 = vsel %vm8329, %v8655, %v8651
        %v8657 = vlaneseq
        %v8658 = vshrl.u32 %v8657, 7
        %v8659 = vsub.s32 %v8331, %v8658
        %v8660 = vrot.slane %v8073, %v8659
        %v8661 = vsel %vm8336, %v8660, %v8656
        %v8662 = vlaneseq
        %v8663 = vshrl.u32 %v8662, 7
        %v8664 = vsub.s32 %v8338, %v8663
        %v8665 = vrot.slane %v8076, %v8664
        %v8666 = vsel %vm8343, %v8665, %v8661
        %v8667 = vlaneseq
        %v8668 = vshrl.u32 %v8667, 7
        %v8669 = vsub.s32 %v8345, %v8668
        %v8670 = vrot.slane %v8079, %v8669
        %v8671 = vsel %vm8350, %v8670, %v8666
        %v8672 = vlaneseq
        %v8673 = vshrl.u32 %v8672, 7
        %v8674 = vsub.s32 %v8263, %v8673
        %v8675 = vrot.slane %v8082, %v8674
        %v8676 = vlaneseq
        %v8677 = vshrl.u32 %v8676, 7
        %v8678 = vsub.s32 %v8268, %v8677
        %v8679 = vrot.slane %v8085, %v8678
        %v8680 = vsel %vm8273, %v8679, %v8675
        %v8681 = vlaneseq
        %v8682 = vshrl.u32 %v8681, 7
        %v8683 = vsub.s32 %v8275, %v8682
        %v8684 = vrot.slane %v8088, %v8683
        %v8685 = vsel %vm8280, %v8684, %v8680
        %v8686 = vlaneseq
        %v8687 = vshrl.u32 %v8686, 7
        %v8688 = vsub.s32 %v8282, %v8687
        %v8689 = vrot.slane %v8091, %v8688
        %v8690 = vsel %vm8287, %v8689, %v8685
        %v8691 = vlaneseq
        %v8692 = vshrl.u32 %v8691, 7
        %v8693 = vsub.s32 %v8289, %v8692
        %v8694 = vrot.slane %v8094, %v8693
        %v8695 = vsel %vm8294, %v8694, %v8690
        %v8696 = vlaneseq
        %v8697 = vshrl.u32 %v8696, 7
        %v8698 = vsub.s32 %v8296, %v8697
        %v8699 = vrot.slane %v8097, %v8698
        %v8700 = vsel %vm8301, %v8699, %v8695
        %v8701 = vlaneseq
        %v8702 = vshrl.u32 %v8701, 7
        %v8703 = vsub.s32 %v8303, %v8702
        %v8704 = vrot.slane %v8100, %v8703
        %v8705 = vsel %vm8308, %v8704, %v8700
        %v8706 = vlaneseq
        %v8707 = vshrl.u32 %v8706, 7
        %v8708 = vsub.s32 %v8310, %v8707
        %v8709 = vrot.slane %v8103, %v8708
        %v8710 = vsel %vm8315, %v8709, %v8705
        %v8711 = vlaneseq
        %v8712 = vshrl.u32 %v8711, 7
        %v8713 = vsub.s32 %v8317, %v8712
        %v8714 = vrot.slane %v8106, %v8713
        %v8715 = vsel %vm8322, %v8714, %v8710
        %v8716 = vlaneseq
        %v8717 = vshrl.u32 %v8716, 7
        %v8718 = vsub.s32 %v8324, %v8717
        %v8719 = vrot.slane %v8109, %v8718
        %v8720 = vsel %vm8329, %v8719, %v8715
        %v8721 = vlaneseq
        %v8722 = vshrl.u32 %v8721, 7
        %v8723 = vsub.s32 %v8331, %v8722
        %v8724 = vrot.slane %v8112, %v8723
        %v8725 = vsel %vm8336, %v8724, %v8720
        %v8726 = vlaneseq
        %v8727 = vshrl.u32 %v8726, 7
        %v8728 = vsub.s32 %v8338, %v8727
        %v8729 = vrot.slane %v8115, %v8728
        %v8730 = vsel %vm8343, %v8729, %v8725
        %v8731 = vlaneseq
        %v8732 = vshrl.u32 %v8731, 7
        %v8733 = vsub.s32 %v8345, %v8732
        %v8734 = vrot.slane %v8118, %v8733
        %v8735 = vsel %vm8350, %v8734, %v8730
        %v8736 = vlaneseq
        %v8737 = vshrl.u32 %v8736, 7
        %v8738 = vsub.s32 %v8263, %v8737
        %v8739 = vrot.slane %v8121, %v8738
        %v8740 = vlaneseq
        %v8741 = vshrl.u32 %v8740, 7
        %v8742 = vsub.s32 %v8268, %v8741
        %v8743 = vrot.slane %v8124, %v8742
        %v8744 = vsel %vm8273, %v8743, %v8739
        %v8745 = vlaneseq
        %v8746 = vshrl.u32 %v8745, 7
        %v8747 = vsub.s32 %v8275, %v8746
        %v8748 = vrot.slane %v8127, %v8747
        %v8749 = vsel %vm8280, %v8748, %v8744
        %v8750 = vlaneseq
        %v8751 = vshrl.u32 %v8750, 7
        %v8752 = vsub.s32 %v8282, %v8751
        %v8753 = vrot.slane %v8130, %v8752
        %v8754 = vsel %vm8287, %v8753, %v8749
        %v8755 = vlaneseq
        %v8756 = vshrl.u32 %v8755, 7
        %v8757 = vsub.s32 %v8289, %v8756
        %v8758 = vrot.slane %v8133, %v8757
        %v8759 = vsel %vm8294, %v8758, %v8754
        %v8760 = vlaneseq
        %v8761 = vshrl.u32 %v8760, 7
        %v8762 = vsub.s32 %v8296, %v8761
        %v8763 = vrot.slane %v8136, %v8762
        %v8764 = vsel %vm8301, %v8763, %v8759
        %v8765 = vlaneseq
        %v8766 = vshrl.u32 %v8765, 7
        %v8767 = vsub.s32 %v8303, %v8766
        %v8768 = vrot.slane %v8139, %v8767
        %v8769 = vsel %vm8308, %v8768, %v8764
        %v8770 = vlaneseq
        %v8771 = vshrl.u32 %v8770, 7
        %v8772 = vsub.s32 %v8310, %v8771
        %v8773 = vrot.slane %v8142, %v8772
        %v8774 = vsel %vm8315, %v8773, %v8769
        %v8775 = vlaneseq
        %v8776 = vshrl.u32 %v8775, 7
        %v8777 = vsub.s32 %v8317, %v8776
        %v8778 = vrot.slane %v8145, %v8777
        %v8779 = vsel %vm8322, %v8778, %v8774
        %v8780 = vlaneseq
        %v8781 = vshrl.u32 %v8780, 7
        %v8782 = vsub.s32 %v8324, %v8781
        %v8783 = vrot.slane %v8148, %v8782
        %v8784 = vsel %vm8329, %v8783, %v8779
        %v8785 = vlaneseq
        %v8786 = vshrl.u32 %v8785, 7
        %v8787 = vsub.s32 %v8331, %v8786
        %v8788 = vrot.slane %v8151, %v8787
        %v8789 = vsel %vm8336, %v8788, %v8784
        %v8790 = vlaneseq
        %v8791 = vshrl.u32 %v8790, 7
        %v8792 = vsub.s32 %v8338, %v8791
        %v8793 = vrot.slane %v8154, %v8792
        %v8794 = vsel %vm8343, %v8793, %v8789
        %v8795 = vlaneseq
        %v8796 = vshrl.u32 %v8795, 7
        %v8797 = vsub.s32 %v8345, %v8796
        %v8798 = vrot.slane %v8157, %v8797
        %v8799 = vsel %vm8350, %v8798, %v8794
        %vm8800 = vcmask 1041409
        %v8801 = vsel %vm8800, %v8415, %v8351
        %vm8802 = vcmask 1042434
        %v8803 = vsel %vm8802, %v8479, %v8801
        %vm8804 = vcmask 1043459
        %v8805 = vsel %vm8804, %v8543, %v8803
        %vm8806 = vcmask 1044484
        %v8807 = vsel %vm8806, %v8607, %v8805
        %vm8808 = vcmask 1045509
        %v8809 = vsel %vm8808, %v8671, %v8807
        %vm8810 = vcmask 1046534
        %v8811 = vsel %vm8810, %v8735, %v8809
        %vm8812 = vcmask 1047559
        %v8813 = vsel %vm8812, %v8799, %v8811
        %vm8815 = vcmask 850944
        %v8816 = vsel %vm8815, %v8813, 0.0
        %8817 = vadd.xlane.f32.xlu0 %v8816
        %v8818 = vpop.xlane.xlu0 %8817
        %vm8819 = vcmp.eq.s32.totalorder %v2605, 0
        %v8821 = vlaneseq
        %v8822 = vshrl.u32 %v8821, 7
        %v8823 = vsub.s32 %v8263, %v8822
        %v8824 = vrot.slane %v8818, %v8823
        %v8826 = vsel %vm8819, %v8824, 0.0
        %v8827 = vadd.f32 %v7555, %v8826
        %s8828 = scalar_lea.vmem [#allocation5], 224
        %v8829 = vld [vmem:[%s8828] ss:$2 sm:$0xff]
        %s8830 = scalar_lea.vmem [#allocation5], 240
        %v8831 = vld [vmem:[%s8830] ss:$2 sm:$0xff]
        %s8832 = scalar_lea.vmem [#allocation5], 256
        %v8833 = vld [vmem:[%s8832] ss:$2 sm:$0xff]
        %s8834 = scalar_lea.vmem [#allocation5], 272
        %v8835 = vld [vmem:[%s8834] ss:$2 sm:$0xff]
        %s8836 = scalar_lea.vmem [#allocation5], 288
        %v8837 = vld [vmem:[%s8836] ss:$2 sm:$0xff]
        %s8838 = scalar_lea.vmem [#allocation5], 304
        %v8839 = vld [vmem:[%s8838] ss:$2 sm:$0xff]
        %s8840 = scalar_lea.vmem [#allocation5], 320
        %v8841 = vld [vmem:[%s8840] ss:$2 sm:$0xff]
        %s8842 = scalar_lea.vmem [#allocation5], 336
        %v8843 = vld [vmem:[%s8842] ss:$2 sm:$0xff]
        %s8844 = scalar_lea.vmem [#allocation5], 352
        %v8845 = vld [vmem:[%s8844] ss:$2 sm:$0xff]
        %s8846 = scalar_lea.vmem [#allocation5], 368
        %v8847 = vld [vmem:[%s8846] ss:$2 sm:$0xff]
        %s8848 = scalar_lea.vmem [#allocation5], 384
        %v8849 = vld [vmem:[%s8848] ss:$2 sm:$0xff]
        %s8850 = scalar_lea.vmem [#allocation5], 400
        %v8851 = vld [vmem:[%s8850] ss:$2 sm:$0xff]
        %s8852 = scalar_lea.vmem [#allocation5], 416
        %v8853 = vld [vmem:[%s8852] ss:$2 sm:$0xff]
        %s8854 = scalar_lea.vmem [#allocation5], 432
        %v8855 = vld [vmem:[%s8854] ss:$2 sm:$0xff]
        %s8856 = scalar_lea.vmem [#allocation5], 225
        %v8857 = vld [vmem:[%s8856] ss:$2 sm:$0xff]
        %s8858 = scalar_lea.vmem [#allocation5], 241
        %v8859 = vld [vmem:[%s8858] ss:$2 sm:$0xff]
        %s8860 = scalar_lea.vmem [#allocation5], 257
        %v8861 = vld [vmem:[%s8860] ss:$2 sm:$0xff]
        %s8862 = scalar_lea.vmem [#allocation5], 273
        %v8863 = vld [vmem:[%s8862] ss:$2 sm:$0xff]
        %s8864 = scalar_lea.vmem [#allocation5], 289
        %v8865 = vld [vmem:[%s8864] ss:$2 sm:$0xff]
        %s8866 = scalar_lea.vmem [#allocation5], 305
        %v8867 = vld [vmem:[%s8866] ss:$2 sm:$0xff]
        %s8868 = scalar_lea.vmem [#allocation5], 321
        %v8869 = vld [vmem:[%s8868] ss:$2 sm:$0xff]
        %s8870 = scalar_lea.vmem [#allocation5], 337
        %v8871 = vld [vmem:[%s8870] ss:$2 sm:$0xff]
        %s8872 = scalar_lea.vmem [#allocation5], 353
        %v8873 = vld [vmem:[%s8872] ss:$2 sm:$0xff]
        %s8874 = scalar_lea.vmem [#allocation5], 369
        %v8875 = vld [vmem:[%s8874] ss:$2 sm:$0xff]
        %s8876 = scalar_lea.vmem [#allocation5], 385
        %v8877 = vld [vmem:[%s8876] ss:$2 sm:$0xff]
        %s8878 = scalar_lea.vmem [#allocation5], 401
        %v8879 = vld [vmem:[%s8878] ss:$2 sm:$0xff]
        %s8880 = scalar_lea.vmem [#allocation5], 417
        %v8881 = vld [vmem:[%s8880] ss:$2 sm:$0xff]
        %s8882 = scalar_lea.vmem [#allocation5], 433
        %v8883 = vld [vmem:[%s8882] ss:$2 sm:$0xff]
        %v8884 = vmax.f32 %v8829, %v8857
        %v8885 = vmax.f32 %v8831, %v8859
        %v8886 = vmax.f32 %v8833, %v8861
        %v8887 = vmax.f32 %v8835, %v8863
        %v8888 = vmax.f32 %v8837, %v8865
        %v8889 = vmax.f32 %v8839, %v8867
        %v8890 = vmax.f32 %v8841, %v8869
        %v8891 = vmax.f32 %v8843, %v8871
        %v8892 = vmax.f32 %v8845, %v8873
        %v8893 = vmax.f32 %v8847, %v8875
        %v8894 = vmax.f32 %v8849, %v8877
        %v8895 = vmax.f32 %v8851, %v8879
        %v8896 = vmax.f32 %v8853, %v8881
        %v8897 = vmax.f32 %v8855, %v8883
        %v8898 = vmax.f32 %v8884, %v8885
        %v8899 = vmax.f32 %v8885, %v8886
        %v8900 = vmax.f32 %v8886, %v8887
        %v8901 = vmax.f32 %v8887, %v8888
        %v8902 = vmax.f32 %v8888, %v8889
        %v8903 = vmax.f32 %v8889, %v8890
        %v8904 = vmax.f32 %v8890, %v8891
        %v8905 = vmax.f32 %v8891, %v8892
        %v8906 = vmax.f32 %v8892, %v8893
        %v8907 = vmax.f32 %v8893, %v8894
        %v8908 = vmax.f32 %v8894, %v8895
        %v8909 = vmax.f32 %v8895, %v8896
        %v8910 = vmax.f32 %v8896, %v8897
        %v8911 = vmul.f32 %v8898, %v7638
        %v8912 = vmul.f32 %v8899, %v7639
        %v8913 = vmul.f32 %v8900, %v7640
        %v8914 = vmul.f32 %v8901, %v7641
        %v8915 = vmul.f32 %v8902, %v7642
        %v8916 = vmul.f32 %v8903, %v7643
        %v8917 = vmul.f32 %v8904, %v7644
        %v8918 = vmul.f32 %v8905, %v7645
        %v8919 = vmul.f32 %v8906, %v7646
        %v8920 = vmul.f32 %v8907, %v7647
        %v8921 = vmul.f32 %v8908, %v7648
        %v8922 = vmul.f32 %v8909, %v7649
        %v8923 = vmul.f32 %v8910, %v7650
        %v8924 = vmul.f32 %v8898, %v7651
        %v8925 = vmul.f32 %v8899, %v7652
        %v8926 = vmul.f32 %v8900, %v7653
        %v8927 = vmul.f32 %v8901, %v7654
        %v8928 = vmul.f32 %v8902, %v7655
        %v8929 = vmul.f32 %v8903, %v7656
        %v8930 = vmul.f32 %v8904, %v7657
        %v8931 = vmul.f32 %v8905, %v7658
        %v8932 = vmul.f32 %v8906, %v7659
        %v8933 = vmul.f32 %v8907, %v7660
        %v8934 = vmul.f32 %v8908, %v7661
        %v8935 = vmul.f32 %v8909, %v7662
        %v8936 = vmul.f32 %v8910, %v7663
        %v8937 = vmul.f32 %v8898, %v7664
        %v8938 = vmul.f32 %v8899, %v7665
        %v8939 = vmul.f32 %v8900, %v7666
        %v8940 = vmul.f32 %v8901, %v7667
        %v8941 = vmul.f32 %v8902, %v7668
        %v8942 = vmul.f32 %v8903, %v7669
        %v8943 = vmul.f32 %v8904, %v7670
        %v8944 = vmul.f32 %v8905, %v7671
        %v8945 = vmul.f32 %v8906, %v7672
        %v8946 = vmul.f32 %v8907, %v7673
        %v8947 = vmul.f32 %v8908, %v7674
        %v8948 = vmul.f32 %v8909, %v7675
        %v8949 = vmul.f32 %v8910, %v7676
        %v8950 = vmul.f32 %v8898, %v7677
        %v8951 = vmul.f32 %v8899, %v7678
        %v8952 = vmul.f32 %v8900, %v7679
        %v8953 = vmul.f32 %v8901, %v7680
        %v8954 = vmul.f32 %v8902, %v7681
        %v8955 = vmul.f32 %v8903, %v7682
        %v8956 = vmul.f32 %v8904, %v7683
        %v8957 = vmul.f32 %v8905, %v7684
        %v8958 = vmul.f32 %v8906, %v7685
        %v8959 = vmul.f32 %v8907, %v7686
        %v8960 = vmul.f32 %v8908, %v7687
        %v8961 = vmul.f32 %v8909, %v7688
        %v8962 = vmul.f32 %v8910, %v7689
        %v8963 = vmul.f32 %v8898, %v7690
        %v8964 = vmul.f32 %v8899, %v7691
        %v8965 = vmul.f32 %v8900, %v7692
        %v8966 = vmul.f32 %v8901, %v7693
        %v8967 = vmul.f32 %v8902, %v7694
        %v8968 = vmul.f32 %v8903, %v7695
        %v8969 = vmul.f32 %v8904, %v7696
        %v8970 = vmul.f32 %v8905, %v7697
        %v8971 = vmul.f32 %v8906, %v7698
        %v8972 = vmul.f32 %v8907, %v7699
        %v8973 = vmul.f32 %v8908, %v7700
        %v8974 = vmul.f32 %v8909, %v7701
        %v8975 = vmul.f32 %v8910, %v7702
        %v8976 = vmul.f32 %v8898, %v7703
        %v8977 = vmul.f32 %v8899, %v7704
        %v8978 = vmul.f32 %v8900, %v7705
        %v8979 = vmul.f32 %v8901, %v7706
        %v8980 = vmul.f32 %v8902, %v7707
        %v8981 = vmul.f32 %v8903, %v7708
        %v8982 = vmul.f32 %v8904, %v7709
        %v8983 = vmul.f32 %v8905, %v7710
        %v8984 = vmul.f32 %v8906, %v7711
        %v8985 = vmul.f32 %v8907, %v7712
        %v8986 = vmul.f32 %v8908, %v7713
        %v8987 = vmul.f32 %v8909, %v7714
        %v8988 = vmul.f32 %v8910, %v7715
        %v8989 = vmul.f32 %v8898, %v7716
        %v8990 = vmul.f32 %v8899, %v7717
        %v8991 = vmul.f32 %v8900, %v7718
        %v8992 = vmul.f32 %v8901, %v7719
        %v8993 = vmul.f32 %v8902, %v7720
        %v8994 = vmul.f32 %v8903, %v7721
        %v8995 = vmul.f32 %v8904, %v7722
        %v8996 = vmul.f32 %v8905, %v7723
        %v8997 = vmul.f32 %v8906, %v7724
        %v8998 = vmul.f32 %v8907, %v7725
        %v8999 = vmul.f32 %v8908, %v7726
        %v9000 = vmul.f32 %v8909, %v7727
        %v9001 = vmul.f32 %v8910, %v7728
        %v9002 = vmul.f32 %v8898, %v7729
        %v9003 = vmul.f32 %v8899, %v7730
        %v9004 = vmul.f32 %v8900, %v7731
        %v9005 = vmul.f32 %v8901, %v7732
        %v9006 = vmul.f32 %v8902, %v7733
        %v9007 = vmul.f32 %v8903, %v7734
        %v9008 = vmul.f32 %v8904, %v7735
        %v9009 = vmul.f32 %v8905, %v7736
        %v9010 = vmul.f32 %v8906, %v7737
        %v9011 = vmul.f32 %v8907, %v7738
        %v9012 = vmul.f32 %v8908, %v7739
        %v9013 = vmul.f32 %v8909, %v7740
        %v9014 = vmul.f32 %v8910, %v7741
        %v9015 = vsel %vm2367, %v8911, 0.0
        %9016 = vadd.xlane.f32.xlu0 %v9015
        %v9017 = vpop.xlane.xlu0 %9016
        %v9018 = vsel %vm2367, %v8912, 0.0
        %9019 = vadd.xlane.f32.xlu0 %v9018
        %v9020 = vpop.xlane.xlu0 %9019
        %v9021 = vsel %vm2367, %v8913, 0.0
        %9022 = vadd.xlane.f32.xlu0 %v9021
        %v9023 = vpop.xlane.xlu0 %9022
        %v9024 = vsel %vm2367, %v8914, 0.0
        %9025 = vadd.xlane.f32.xlu0 %v9024
        %v9026 = vpop.xlane.xlu0 %9025
        %v9027 = vsel %vm2367, %v8915, 0.0
        %9028 = vadd.xlane.f32.xlu0 %v9027
        %v9029 = vpop.xlane.xlu0 %9028
        %v9030 = vsel %vm2367, %v8916, 0.0
        %9031 = vadd.xlane.f32.xlu0 %v9030
        %v9032 = vpop.xlane.xlu0 %9031
        %v9033 = vsel %vm2367, %v8917, 0.0
        %9034 = vadd.xlane.f32.xlu0 %v9033
        %v9035 = vpop.xlane.xlu0 %9034
        %v9036 = vsel %vm2367, %v8918, 0.0
        %9037 = vadd.xlane.f32.xlu0 %v9036
        %v9038 = vpop.xlane.xlu0 %9037
        %v9039 = vsel %vm2367, %v8919, 0.0
        %9040 = vadd.xlane.f32.xlu0 %v9039
        %v9041 = vpop.xlane.xlu0 %9040
        %v9042 = vsel %vm2367, %v8920, 0.0
        %9043 = vadd.xlane.f32.xlu0 %v9042
        %v9044 = vpop.xlane.xlu0 %9043
        %v9045 = vsel %vm2367, %v8921, 0.0
        %9046 = vadd.xlane.f32.xlu0 %v9045
        %v9047 = vpop.xlane.xlu0 %9046
        %v9048 = vsel %vm2367, %v8922, 0.0
        %9049 = vadd.xlane.f32.xlu0 %v9048
        %v9050 = vpop.xlane.xlu0 %9049
        %v9051 = vsel %vm2367, %v8923, 0.0
        %9052 = vadd.xlane.f32.xlu0 %v9051
        %v9053 = vpop.xlane.xlu0 %9052
        %v9054 = vsel %vm2367, %v8924, 0.0
        %9055 = vadd.xlane.f32.xlu0 %v9054
        %v9056 = vpop.xlane.xlu0 %9055
        %v9057 = vsel %vm2367, %v8925, 0.0
        %9058 = vadd.xlane.f32.xlu0 %v9057
        %v9059 = vpop.xlane.xlu0 %9058
        %v9060 = vsel %vm2367, %v8926, 0.0
        %9061 = vadd.xlane.f32.xlu0 %v9060
        %v9062 = vpop.xlane.xlu0 %9061
        %v9063 = vsel %vm2367, %v8927, 0.0
        %9064 = vadd.xlane.f32.xlu0 %v9063
        %v9065 = vpop.xlane.xlu0 %9064
        %v9066 = vsel %vm2367, %v8928, 0.0
        %9067 = vadd.xlane.f32.xlu0 %v9066
        %v9068 = vpop.xlane.xlu0 %9067
        %v9069 = vsel %vm2367, %v8929, 0.0
        %9070 = vadd.xlane.f32.xlu0 %v9069
        %v9071 = vpop.xlane.xlu0 %9070
        %v9072 = vsel %vm2367, %v8930, 0.0
        %9073 = vadd.xlane.f32.xlu0 %v9072
        %v9074 = vpop.xlane.xlu0 %9073
        %v9075 = vsel %vm2367, %v8931, 0.0
        %9076 = vadd.xlane.f32.xlu0 %v9075
        %v9077 = vpop.xlane.xlu0 %9076
        %v9078 = vsel %vm2367, %v8932, 0.0
        %9079 = vadd.xlane.f32.xlu0 %v9078
        %v9080 = vpop.xlane.xlu0 %9079
        %v9081 = vsel %vm2367, %v8933, 0.0
        %9082 = vadd.xlane.f32.xlu0 %v9081
        %v9083 = vpop.xlane.xlu0 %9082
        %v9084 = vsel %vm2367, %v8934, 0.0
        %9085 = vadd.xlane.f32.xlu0 %v9084
        %v9086 = vpop.xlane.xlu0 %9085
        %v9087 = vsel %vm2367, %v8935, 0.0
        %9088 = vadd.xlane.f32.xlu0 %v9087
        %v9089 = vpop.xlane.xlu0 %9088
        %v9090 = vsel %vm2367, %v8936, 0.0
        %9091 = vadd.xlane.f32.xlu0 %v9090
        %v9092 = vpop.xlane.xlu0 %9091
        %v9093 = vsel %vm2367, %v8937, 0.0
        %9094 = vadd.xlane.f32.xlu0 %v9093
        %v9095 = vpop.xlane.xlu0 %9094
        %v9096 = vsel %vm2367, %v8938, 0.0
        %9097 = vadd.xlane.f32.xlu0 %v9096
        %v9098 = vpop.xlane.xlu0 %9097
        %v9099 = vsel %vm2367, %v8939, 0.0
        %9100 = vadd.xlane.f32.xlu0 %v9099
        %v9101 = vpop.xlane.xlu0 %9100
        %v9102 = vsel %vm2367, %v8940, 0.0
        %9103 = vadd.xlane.f32.xlu0 %v9102
        %v9104 = vpop.xlane.xlu0 %9103
        %v9105 = vsel %vm2367, %v8941, 0.0
        %9106 = vadd.xlane.f32.xlu0 %v9105
        %v9107 = vpop.xlane.xlu0 %9106
        %v9108 = vsel %vm2367, %v8942, 0.0
        %9109 = vadd.xlane.f32.xlu0 %v9108
        %v9110 = vpop.xlane.xlu0 %9109
        %v9111 = vsel %vm2367, %v8943, 0.0
        %9112 = vadd.xlane.f32.xlu0 %v9111
        %v9113 = vpop.xlane.xlu0 %9112
        %v9114 = vsel %vm2367, %v8944, 0.0
        %9115 = vadd.xlane.f32.xlu0 %v9114
        %v9116 = vpop.xlane.xlu0 %9115
        %v9117 = vsel %vm2367, %v8945, 0.0
        %9118 = vadd.xlane.f32.xlu0 %v9117
        %v9119 = vpop.xlane.xlu0 %9118
        %v9120 = vsel %vm2367, %v8946, 0.0
        %9121 = vadd.xlane.f32.xlu0 %v9120
        %v9122 = vpop.xlane.xlu0 %9121
        %v9123 = vsel %vm2367, %v8947, 0.0
        %9124 = vadd.xlane.f32.xlu0 %v9123
        %v9125 = vpop.xlane.xlu0 %9124
        %v9126 = vsel %vm2367, %v8948, 0.0
        %9127 = vadd.xlane.f32.xlu0 %v9126
        %v9128 = vpop.xlane.xlu0 %9127
        %v9129 = vsel %vm2367, %v8949, 0.0
        %9130 = vadd.xlane.f32.xlu0 %v9129
        %v9131 = vpop.xlane.xlu0 %9130
        %v9132 = vsel %vm2367, %v8950, 0.0
        %9133 = vadd.xlane.f32.xlu0 %v9132
        %v9134 = vpop.xlane.xlu0 %9133
        %v9135 = vsel %vm2367, %v8951, 0.0
        %9136 = vadd.xlane.f32.xlu0 %v9135
        %v9137 = vpop.xlane.xlu0 %9136
        %v9138 = vsel %vm2367, %v8952, 0.0
        %9139 = vadd.xlane.f32.xlu0 %v9138
        %v9140 = vpop.xlane.xlu0 %9139
        %v9141 = vsel %vm2367, %v8953, 0.0
        %9142 = vadd.xlane.f32.xlu0 %v9141
        %v9143 = vpop.xlane.xlu0 %9142
        %v9144 = vsel %vm2367, %v8954, 0.0
        %9145 = vadd.xlane.f32.xlu0 %v9144
        %v9146 = vpop.xlane.xlu0 %9145
        %v9147 = vsel %vm2367, %v8955, 0.0
        %9148 = vadd.xlane.f32.xlu0 %v9147
        %v9149 = vpop.xlane.xlu0 %9148
        %v9150 = vsel %vm2367, %v8956, 0.0
        %9151 = vadd.xlane.f32.xlu0 %v9150
        %v9152 = vpop.xlane.xlu0 %9151
        %v9153 = vsel %vm2367, %v8957, 0.0
        %9154 = vadd.xlane.f32.xlu0 %v9153
        %v9155 = vpop.xlane.xlu0 %9154
        %v9156 = vsel %vm2367, %v8958, 0.0
        %9157 = vadd.xlane.f32.xlu0 %v9156
        %v9158 = vpop.xlane.xlu0 %9157
        %v9159 = vsel %vm2367, %v8959, 0.0
        %9160 = vadd.xlane.f32.xlu0 %v9159
        %v9161 = vpop.xlane.xlu0 %9160
        %v9162 = vsel %vm2367, %v8960, 0.0
        %9163 = vadd.xlane.f32.xlu0 %v9162
        %v9164 = vpop.xlane.xlu0 %9163
        %v9165 = vsel %vm2367, %v8961, 0.0
        %9166 = vadd.xlane.f32.xlu0 %v9165
        %v9167 = vpop.xlane.xlu0 %9166
        %v9168 = vsel %vm2367, %v8962, 0.0
        %9169 = vadd.xlane.f32.xlu0 %v9168
        %v9170 = vpop.xlane.xlu0 %9169
        %v9171 = vsel %vm2367, %v8963, 0.0
        %9172 = vadd.xlane.f32.xlu0 %v9171
        %v9173 = vpop.xlane.xlu0 %9172
        %v9174 = vsel %vm2367, %v8964, 0.0
        %9175 = vadd.xlane.f32.xlu0 %v9174
        %v9176 = vpop.xlane.xlu0 %9175
        %v9177 = vsel %vm2367, %v8965, 0.0
        %9178 = vadd.xlane.f32.xlu0 %v9177
        %v9179 = vpop.xlane.xlu0 %9178
        %v9180 = vsel %vm2367, %v8966, 0.0
        %9181 = vadd.xlane.f32.xlu0 %v9180
        %v9182 = vpop.xlane.xlu0 %9181
        %v9183 = vsel %vm2367, %v8967, 0.0
        %9184 = vadd.xlane.f32.xlu0 %v9183
        %v9185 = vpop.xlane.xlu0 %9184
        %v9186 = vsel %vm2367, %v8968, 0.0
        %9187 = vadd.xlane.f32.xlu0 %v9186
        %v9188 = vpop.xlane.xlu0 %9187
        %v9189 = vsel %vm2367, %v8969, 0.0
        %9190 = vadd.xlane.f32.xlu0 %v9189
        %v9191 = vpop.xlane.xlu0 %9190
        %v9192 = vsel %vm2367, %v8970, 0.0
        %9193 = vadd.xlane.f32.xlu0 %v9192
        %v9194 = vpop.xlane.xlu0 %9193
        %v9195 = vsel %vm2367, %v8971, 0.0
        %9196 = vadd.xlane.f32.xlu0 %v9195
        %v9197 = vpop.xlane.xlu0 %9196
        %v9198 = vsel %vm2367, %v8972, 0.0
        %9199 = vadd.xlane.f32.xlu0 %v9198
        %v9200 = vpop.xlane.xlu0 %9199
        %v9201 = vsel %vm2367, %v8973, 0.0
        %9202 = vadd.xlane.f32.xlu0 %v9201
        %v9203 = vpop.xlane.xlu0 %9202
        %v9204 = vsel %vm2367, %v8974, 0.0
        %9205 = vadd.xlane.f32.xlu0 %v9204
        %v9206 = vpop.xlane.xlu0 %9205
        %v9207 = vsel %vm2367, %v8975, 0.0
        %9208 = vadd.xlane.f32.xlu0 %v9207
        %v9209 = vpop.xlane.xlu0 %9208
        %v9210 = vsel %vm2367, %v8976, 0.0
        %9211 = vadd.xlane.f32.xlu0 %v9210
        %v9212 = vpop.xlane.xlu0 %9211
        %v9213 = vsel %vm2367, %v8977, 0.0
        %9214 = vadd.xlane.f32.xlu0 %v9213
        %v9215 = vpop.xlane.xlu0 %9214
        %v9216 = vsel %vm2367, %v8978, 0.0
        %9217 = vadd.xlane.f32.xlu0 %v9216
        %v9218 = vpop.xlane.xlu0 %9217
        %v9219 = vsel %vm2367, %v8979, 0.0
        %9220 = vadd.xlane.f32.xlu0 %v9219
        %v9221 = vpop.xlane.xlu0 %9220
        %v9222 = vsel %vm2367, %v8980, 0.0
        %9223 = vadd.xlane.f32.xlu0 %v9222
        %v9224 = vpop.xlane.xlu0 %9223
        %v9225 = vsel %vm2367, %v8981, 0.0
        %9226 = vadd.xlane.f32.xlu0 %v9225
        %v9227 = vpop.xlane.xlu0 %9226
        %v9228 = vsel %vm2367, %v8982, 0.0
        %9229 = vadd.xlane.f32.xlu0 %v9228
        %v9230 = vpop.xlane.xlu0 %9229
        %v9231 = vsel %vm2367, %v8983, 0.0
        %9232 = vadd.xlane.f32.xlu0 %v9231
        %v9233 = vpop.xlane.xlu0 %9232
        %v9234 = vsel %vm2367, %v8984, 0.0
        %9235 = vadd.xlane.f32.xlu0 %v9234
        %v9236 = vpop.xlane.xlu0 %9235
        %v9237 = vsel %vm2367, %v8985, 0.0
        %9238 = vadd.xlane.f32.xlu0 %v9237
        %v9239 = vpop.xlane.xlu0 %9238
        %v9240 = vsel %vm2367, %v8986, 0.0
        %9241 = vadd.xlane.f32.xlu0 %v9240
        %v9242 = vpop.xlane.xlu0 %9241
        %v9243 = vsel %vm2367, %v8987, 0.0
        %9244 = vadd.xlane.f32.xlu0 %v9243
        %v9245 = vpop.xlane.xlu0 %9244
        %v9246 = vsel %vm2367, %v8988, 0.0
        %9247 = vadd.xlane.f32.xlu0 %v9246
        %v9248 = vpop.xlane.xlu0 %9247
        %v9249 = vsel %vm2367, %v8989, 0.0
        %9250 = vadd.xlane.f32.xlu0 %v9249
        %v9251 = vpop.xlane.xlu0 %9250
        %v9252 = vsel %vm2367, %v8990, 0.0
        %9253 = vadd.xlane.f32.xlu0 %v9252
        %v9254 = vpop.xlane.xlu0 %9253
        %v9255 = vsel %vm2367, %v8991, 0.0
        %9256 = vadd.xlane.f32.xlu0 %v9255
        %v9257 = vpop.xlane.xlu0 %9256
        %v9258 = vsel %vm2367, %v8992, 0.0
        %9259 = vadd.xlane.f32.xlu0 %v9258
        %v9260 = vpop.xlane.xlu0 %9259
        %v9261 = vsel %vm2367, %v8993, 0.0
        %9262 = vadd.xlane.f32.xlu0 %v9261
        %v9263 = vpop.xlane.xlu0 %9262
        %v9264 = vsel %vm2367, %v8994, 0.0
        %9265 = vadd.xlane.f32.xlu0 %v9264
        %v9266 = vpop.xlane.xlu0 %9265
        %v9267 = vsel %vm2367, %v8995, 0.0
        %9268 = vadd.xlane.f32.xlu0 %v9267
        %v9269 = vpop.xlane.xlu0 %9268
        %v9270 = vsel %vm2367, %v8996, 0.0
        %9271 = vadd.xlane.f32.xlu0 %v9270
        %v9272 = vpop.xlane.xlu0 %9271
        %v9273 = vsel %vm2367, %v8997, 0.0
        %9274 = vadd.xlane.f32.xlu0 %v9273
        %v9275 = vpop.xlane.xlu0 %9274
        %v9276 = vsel %vm2367, %v8998, 0.0
        %9277 = vadd.xlane.f32.xlu0 %v9276
        %v9278 = vpop.xlane.xlu0 %9277
        %v9279 = vsel %vm2367, %v8999, 0.0
        %9280 = vadd.xlane.f32.xlu0 %v9279
        %v9281 = vpop.xlane.xlu0 %9280
        %v9282 = vsel %vm2367, %v9000, 0.0
        %9283 = vadd.xlane.f32.xlu0 %v9282
        %v9284 = vpop.xlane.xlu0 %9283
        %v9285 = vsel %vm2367, %v9001, 0.0
        %9286 = vadd.xlane.f32.xlu0 %v9285
        %v9287 = vpop.xlane.xlu0 %9286
        %v9288 = vsel %vm2367, %v9002, 0.0
        %9289 = vadd.xlane.f32.xlu0 %v9288
        %v9290 = vpop.xlane.xlu0 %9289
        %v9291 = vsel %vm2367, %v9003, 0.0
        %9292 = vadd.xlane.f32.xlu0 %v9291
        %v9293 = vpop.xlane.xlu0 %9292
        %v9294 = vsel %vm2367, %v9004, 0.0
        %9295 = vadd.xlane.f32.xlu0 %v9294
        %v9296 = vpop.xlane.xlu0 %9295
        %v9297 = vsel %vm2367, %v9005, 0.0
        %9298 = vadd.xlane.f32.xlu0 %v9297
        %v9299 = vpop.xlane.xlu0 %9298
        %v9300 = vsel %vm2367, %v9006, 0.0
        %9301 = vadd.xlane.f32.xlu0 %v9300
        %v9302 = vpop.xlane.xlu0 %9301
        %v9303 = vsel %vm2367, %v9007, 0.0
        %9304 = vadd.xlane.f32.xlu0 %v9303
        %v9305 = vpop.xlane.xlu0 %9304
        %v9306 = vsel %vm2367, %v9008, 0.0
        %9307 = vadd.xlane.f32.xlu0 %v9306
        %v9308 = vpop.xlane.xlu0 %9307
        %v9309 = vsel %vm2367, %v9009, 0.0
        %9310 = vadd.xlane.f32.xlu0 %v9309
        %v9311 = vpop.xlane.xlu0 %9310
        %v9312 = vsel %vm2367, %v9010, 0.0
        %9313 = vadd.xlane.f32.xlu0 %v9312
        %v9314 = vpop.xlane.xlu0 %9313
        %v9315 = vsel %vm2367, %v9011, 0.0
        %9316 = vadd.xlane.f32.xlu0 %v9315
        %v9317 = vpop.xlane.xlu0 %9316
        %v9318 = vsel %vm2367, %v9012, 0.0
        %9319 = vadd.xlane.f32.xlu0 %v9318
        %v9320 = vpop.xlane.xlu0 %9319
        %v9321 = vsel %vm2367, %v9013, 0.0
        %9322 = vadd.xlane.f32.xlu0 %v9321
        %v9323 = vpop.xlane.xlu0 %9322
        %v9324 = vsel %vm2367, %v9014, 0.0
        %9325 = vadd.xlane.f32.xlu0 %v9324
        %v9326 = vpop.xlane.xlu0 %9325
        %v9431 = vlaneseq
        %v9432 = vshrl.u32 %v9431, 7
        %v9433 = vsub.s32 %v8263, %v9432
        %v9434 = vrot.slane %v9017, %v9433
        %v9435 = vlaneseq
        %v9436 = vshrl.u32 %v9435, 7
        %v9437 = vsub.s32 %v8268, %v9436
        %v9438 = vrot.slane %v9020, %v9437
        %v9439 = vsel %vm8273, %v9438, %v9434
        %v9440 = vlaneseq
        %v9441 = vshrl.u32 %v9440, 7
        %v9442 = vsub.s32 %v8275, %v9441
        %v9443 = vrot.slane %v9023, %v9442
        %v9444 = vsel %vm8280, %v9443, %v9439
        %v9445 = vlaneseq
        %v9446 = vshrl.u32 %v9445, 7
        %v9447 = vsub.s32 %v8282, %v9446
        %v9448 = vrot.slane %v9026, %v9447
        %v9449 = vsel %vm8287, %v9448, %v9444
        %v9450 = vlaneseq
        %v9451 = vshrl.u32 %v9450, 7
        %v9452 = vsub.s32 %v8289, %v9451
        %v9453 = vrot.slane %v9029, %v9452
        %v9454 = vsel %vm8294, %v9453, %v9449
        %v9455 = vlaneseq
        %v9456 = vshrl.u32 %v9455, 7
        %v9457 = vsub.s32 %v8296, %v9456
        %v9458 = vrot.slane %v9032, %v9457
        %v9459 = vsel %vm8301, %v9458, %v9454
        %v9460 = vlaneseq
        %v9461 = vshrl.u32 %v9460, 7
        %v9462 = vsub.s32 %v8303, %v9461
        %v9463 = vrot.slane %v9035, %v9462
        %v9464 = vsel %vm8308, %v9463, %v9459
        %v9465 = vlaneseq
        %v9466 = vshrl.u32 %v9465, 7
        %v9467 = vsub.s32 %v8310, %v9466
        %v9468 = vrot.slane %v9038, %v9467
        %v9469 = vsel %vm8315, %v9468, %v9464
        %v9470 = vlaneseq
        %v9471 = vshrl.u32 %v9470, 7
        %v9472 = vsub.s32 %v8317, %v9471
        %v9473 = vrot.slane %v9041, %v9472
        %v9474 = vsel %vm8322, %v9473, %v9469
        %v9475 = vlaneseq
        %v9476 = vshrl.u32 %v9475, 7
        %v9477 = vsub.s32 %v8324, %v9476
        %v9478 = vrot.slane %v9044, %v9477
        %v9479 = vsel %vm8329, %v9478, %v9474
        %v9480 = vlaneseq
        %v9481 = vshrl.u32 %v9480, 7
        %v9482 = vsub.s32 %v8331, %v9481
        %v9483 = vrot.slane %v9047, %v9482
        %v9484 = vsel %vm8336, %v9483, %v9479
        %v9485 = vlaneseq
        %v9486 = vshrl.u32 %v9485, 7
        %v9487 = vsub.s32 %v8338, %v9486
        %v9488 = vrot.slane %v9050, %v9487
        %v9489 = vsel %vm8343, %v9488, %v9484
        %v9490 = vlaneseq
        %v9491 = vshrl.u32 %v9490, 7
        %v9492 = vsub.s32 %v8345, %v9491
        %v9493 = vrot.slane %v9053, %v9492
        %v9494 = vsel %vm8350, %v9493, %v9489
        %v9495 = vlaneseq
        %v9496 = vshrl.u32 %v9495, 7
        %v9497 = vsub.s32 %v8263, %v9496
        %v9498 = vrot.slane %v9056, %v9497
        %v9499 = vlaneseq
        %v9500 = vshrl.u32 %v9499, 7
        %v9501 = vsub.s32 %v8268, %v9500
        %v9502 = vrot.slane %v9059, %v9501
        %v9503 = vsel %vm8273, %v9502, %v9498
        %v9504 = vlaneseq
        %v9505 = vshrl.u32 %v9504, 7
        %v9506 = vsub.s32 %v8275, %v9505
        %v9507 = vrot.slane %v9062, %v9506
        %v9508 = vsel %vm8280, %v9507, %v9503
        %v9509 = vlaneseq
        %v9510 = vshrl.u32 %v9509, 7
        %v9511 = vsub.s32 %v8282, %v9510
        %v9512 = vrot.slane %v9065, %v9511
        %v9513 = vsel %vm8287, %v9512, %v9508
        %v9514 = vlaneseq
        %v9515 = vshrl.u32 %v9514, 7
        %v9516 = vsub.s32 %v8289, %v9515
        %v9517 = vrot.slane %v9068, %v9516
        %v9518 = vsel %vm8294, %v9517, %v9513
        %v9519 = vlaneseq
        %v9520 = vshrl.u32 %v9519, 7
        %v9521 = vsub.s32 %v8296, %v9520
        %v9522 = vrot.slane %v9071, %v9521
        %v9523 = vsel %vm8301, %v9522, %v9518
        %v9524 = vlaneseq
        %v9525 = vshrl.u32 %v9524, 7
        %v9526 = vsub.s32 %v8303, %v9525
        %v9527 = vrot.slane %v9074, %v9526
        %v9528 = vsel %vm8308, %v9527, %v9523
        %v9529 = vlaneseq
        %v9530 = vshrl.u32 %v9529, 7
        %v9531 = vsub.s32 %v8310, %v9530
        %v9532 = vrot.slane %v9077, %v9531
        %v9533 = vsel %vm8315, %v9532, %v9528
        %v9534 = vlaneseq
        %v9535 = vshrl.u32 %v9534, 7
        %v9536 = vsub.s32 %v8317, %v9535
        %v9537 = vrot.slane %v9080, %v9536
        %v9538 = vsel %vm8322, %v9537, %v9533
        %v9539 = vlaneseq
        %v9540 = vshrl.u32 %v9539, 7
        %v9541 = vsub.s32 %v8324, %v9540
        %v9542 = vrot.slane %v9083, %v9541
        %v9543 = vsel %vm8329, %v9542, %v9538
        %v9544 = vlaneseq
        %v9545 = vshrl.u32 %v9544, 7
        %v9546 = vsub.s32 %v8331, %v9545
        %v9547 = vrot.slane %v9086, %v9546
        %v9548 = vsel %vm8336, %v9547, %v9543
        %v9549 = vlaneseq
        %v9550 = vshrl.u32 %v9549, 7
        %v9551 = vsub.s32 %v8338, %v9550
        %v9552 = vrot.slane %v9089, %v9551
        %v9553 = vsel %vm8343, %v9552, %v9548
        %v9554 = vlaneseq
        %v9555 = vshrl.u32 %v9554, 7
        %v9556 = vsub.s32 %v8345, %v9555
        %v9557 = vrot.slane %v9092, %v9556
        %v9558 = vsel %vm8350, %v9557, %v9553
        %v9559 = vlaneseq
        %v9560 = vshrl.u32 %v9559, 7
        %v9561 = vsub.s32 %v8263, %v9560
        %v9562 = vrot.slane %v9095, %v9561
        %v9563 = vlaneseq
        %v9564 = vshrl.u32 %v9563, 7
        %v9565 = vsub.s32 %v8268, %v9564
        %v9566 = vrot.slane %v9098, %v9565
        %v9567 = vsel %vm8273, %v9566, %v9562
        %v9568 = vlaneseq
        %v9569 = vshrl.u32 %v9568, 7
        %v9570 = vsub.s32 %v8275, %v9569
        %v9571 = vrot.slane %v9101, %v9570
        %v9572 = vsel %vm8280, %v9571, %v9567
        %v9573 = vlaneseq
        %v9574 = vshrl.u32 %v9573, 7
        %v9575 = vsub.s32 %v8282, %v9574
        %v9576 = vrot.slane %v9104, %v9575
        %v9577 = vsel %vm8287, %v9576, %v9572
        %v9578 = vlaneseq
        %v9579 = vshrl.u32 %v9578, 7
        %v9580 = vsub.s32 %v8289, %v9579
        %v9581 = vrot.slane %v9107, %v9580
        %v9582 = vsel %vm8294, %v9581, %v9577
        %v9583 = vlaneseq
        %v9584 = vshrl.u32 %v9583, 7
        %v9585 = vsub.s32 %v8296, %v9584
        %v9586 = vrot.slane %v9110, %v9585
        %v9587 = vsel %vm8301, %v9586, %v9582
        %v9588 = vlaneseq
        %v9589 = vshrl.u32 %v9588, 7
        %v9590 = vsub.s32 %v8303, %v9589
        %v9591 = vrot.slane %v9113, %v9590
        %v9592 = vsel %vm8308, %v9591, %v9587
        %v9593 = vlaneseq
        %v9594 = vshrl.u32 %v9593, 7
        %v9595 = vsub.s32 %v8310, %v9594
        %v9596 = vrot.slane %v9116, %v9595
        %v9597 = vsel %vm8315, %v9596, %v9592
        %v9598 = vlaneseq
        %v9599 = vshrl.u32 %v9598, 7
        %v9600 = vsub.s32 %v8317, %v9599
        %v9601 = vrot.slane %v9119, %v9600
        %v9602 = vsel %vm8322, %v9601, %v9597
        %v9603 = vlaneseq
        %v9604 = vshrl.u32 %v9603, 7
        %v9605 = vsub.s32 %v8324, %v9604
        %v9606 = vrot.slane %v9122, %v9605
        %v9607 = vsel %vm8329, %v9606, %v9602
        %v9608 = vlaneseq
        %v9609 = vshrl.u32 %v9608, 7
        %v9610 = vsub.s32 %v8331, %v9609
        %v9611 = vrot.slane %v9125, %v9610
        %v9612 = vsel %vm8336, %v9611, %v9607
        %v9613 = vlaneseq
        %v9614 = vshrl.u32 %v9613, 7
        %v9615 = vsub.s32 %v8338, %v9614
        %v9616 = vrot.slane %v9128, %v9615
        %v9617 = vsel %vm8343, %v9616, %v9612
        %v9618 = vlaneseq
        %v9619 = vshrl.u32 %v9618, 7
        %v9620 = vsub.s32 %v8345, %v9619
        %v9621 = vrot.slane %v9131, %v9620
        %v9622 = vsel %vm8350, %v9621, %v9617
        %v9623 = vlaneseq
        %v9624 = vshrl.u32 %v9623, 7
        %v9625 = vsub.s32 %v8263, %v9624
        %v9626 = vrot.slane %v9134, %v9625
        %v9627 = vlaneseq
        %v9628 = vshrl.u32 %v9627, 7
        %v9629 = vsub.s32 %v8268, %v9628
        %v9630 = vrot.slane %v9137, %v9629
        %v9631 = vsel %vm8273, %v9630, %v9626
        %v9632 = vlaneseq
        %v9633 = vshrl.u32 %v9632, 7
        %v9634 = vsub.s32 %v8275, %v9633
        %v9635 = vrot.slane %v9140, %v9634
        %v9636 = vsel %vm8280, %v9635, %v9631
        %v9637 = vlaneseq
        %v9638 = vshrl.u32 %v9637, 7
        %v9639 = vsub.s32 %v8282, %v9638
        %v9640 = vrot.slane %v9143, %v9639
        %v9641 = vsel %vm8287, %v9640, %v9636
        %v9642 = vlaneseq
        %v9643 = vshrl.u32 %v9642, 7
        %v9644 = vsub.s32 %v8289, %v9643
        %v9645 = vrot.slane %v9146, %v9644
        %v9646 = vsel %vm8294, %v9645, %v9641
        %v9647 = vlaneseq
        %v9648 = vshrl.u32 %v9647, 7
        %v9649 = vsub.s32 %v8296, %v9648
        %v9650 = vrot.slane %v9149, %v9649
        %v9651 = vsel %vm8301, %v9650, %v9646
        %v9652 = vlaneseq
        %v9653 = vshrl.u32 %v9652, 7
        %v9654 = vsub.s32 %v8303, %v9653
        %v9655 = vrot.slane %v9152, %v9654
        %v9656 = vsel %vm8308, %v9655, %v9651
        %v9657 = vlaneseq
        %v9658 = vshrl.u32 %v9657, 7
        %v9659 = vsub.s32 %v8310, %v9658
        %v9660 = vrot.slane %v9155, %v9659
        %v9661 = vsel %vm8315, %v9660, %v9656
        %v9662 = vlaneseq
        %v9663 = vshrl.u32 %v9662, 7
        %v9664 = vsub.s32 %v8317, %v9663
        %v9665 = vrot.slane %v9158, %v9664
        %v9666 = vsel %vm8322, %v9665, %v9661
        %v9667 = vlaneseq
        %v9668 = vshrl.u32 %v9667, 7
        %v9669 = vsub.s32 %v8324, %v9668
        %v9670 = vrot.slane %v9161, %v9669
        %v9671 = vsel %vm8329, %v9670, %v9666
        %v9672 = vlaneseq
        %v9673 = vshrl.u32 %v9672, 7
        %v9674 = vsub.s32 %v8331, %v9673
        %v9675 = vrot.slane %v9164, %v9674
        %v9676 = vsel %vm8336, %v9675, %v9671
        %v9677 = vlaneseq
        %v9678 = vshrl.u32 %v9677, 7
        %v9679 = vsub.s32 %v8338, %v9678
        %v9680 = vrot.slane %v9167, %v9679
        %v9681 = vsel %vm8343, %v9680, %v9676
        %v9682 = vlaneseq
        %v9683 = vshrl.u32 %v9682, 7
        %v9684 = vsub.s32 %v8345, %v9683
        %v9685 = vrot.slane %v9170, %v9684
        %v9686 = vsel %vm8350, %v9685, %v9681
        %v9687 = vlaneseq
        %v9688 = vshrl.u32 %v9687, 7
        %v9689 = vsub.s32 %v8263, %v9688
        %v9690 = vrot.slane %v9173, %v9689
        %v9691 = vlaneseq
        %v9692 = vshrl.u32 %v9691, 7
        %v9693 = vsub.s32 %v8268, %v9692
        %v9694 = vrot.slane %v9176, %v9693
        %v9695 = vsel %vm8273, %v9694, %v9690
        %v9696 = vlaneseq
        %v9697 = vshrl.u32 %v9696, 7
        %v9698 = vsub.s32 %v8275, %v9697
        %v9699 = vrot.slane %v9179, %v9698
        %v9700 = vsel %vm8280, %v9699, %v9695
        %v9701 = vlaneseq
        %v9702 = vshrl.u32 %v9701, 7
        %v9703 = vsub.s32 %v8282, %v9702
        %v9704 = vrot.slane %v9182, %v9703
        %v9705 = vsel %vm8287, %v9704, %v9700
        %v9706 = vlaneseq
        %v9707 = vshrl.u32 %v9706, 7
        %v9708 = vsub.s32 %v8289, %v9707
        %v9709 = vrot.slane %v9185, %v9708
        %v9710 = vsel %vm8294, %v9709, %v9705
        %v9711 = vlaneseq
        %v9712 = vshrl.u32 %v9711, 7
        %v9713 = vsub.s32 %v8296, %v9712
        %v9714 = vrot.slane %v9188, %v9713
        %v9715 = vsel %vm8301, %v9714, %v9710
        %v9716 = vlaneseq
        %v9717 = vshrl.u32 %v9716, 7
        %v9718 = vsub.s32 %v8303, %v9717
        %v9719 = vrot.slane %v9191, %v9718
        %v9720 = vsel %vm8308, %v9719, %v9715
        %v9721 = vlaneseq
        %v9722 = vshrl.u32 %v9721, 7
        %v9723 = vsub.s32 %v8310, %v9722
        %v9724 = vrot.slane %v9194, %v9723
        %v9725 = vsel %vm8315, %v9724, %v9720
        %v9726 = vlaneseq
        %v9727 = vshrl.u32 %v9726, 7
        %v9728 = vsub.s32 %v8317, %v9727
        %v9729 = vrot.slane %v9197, %v9728
        %v9730 = vsel %vm8322, %v9729, %v9725
        %v9731 = vlaneseq
        %v9732 = vshrl.u32 %v9731, 7
        %v9733 = vsub.s32 %v8324, %v9732
        %v9734 = vrot.slane %v9200, %v9733
        %v9735 = vsel %vm8329, %v9734, %v9730
        %v9736 = vlaneseq
        %v9737 = vshrl.u32 %v9736, 7
        %v9738 = vsub.s32 %v8331, %v9737
        %v9739 = vrot.slane %v9203, %v9738
        %v9740 = vsel %vm8336, %v9739, %v9735
        %v9741 = vlaneseq
        %v9742 = vshrl.u32 %v9741, 7
        %v9743 = vsub.s32 %v8338, %v9742
        %v9744 = vrot.slane %v9206, %v9743
        %v9745 = vsel %vm8343, %v9744, %v9740
        %v9746 = vlaneseq
        %v9747 = vshrl.u32 %v9746, 7
        %v9748 = vsub.s32 %v8345, %v9747
        %v9749 = vrot.slane %v9209, %v9748
        %v9750 = vsel %vm8350, %v9749, %v9745
        %v9751 = vlaneseq
        %v9752 = vshrl.u32 %v9751, 7
        %v9753 = vsub.s32 %v8263, %v9752
        %v9754 = vrot.slane %v9212, %v9753
        %v9755 = vlaneseq
        %v9756 = vshrl.u32 %v9755, 7
        %v9757 = vsub.s32 %v8268, %v9756
        %v9758 = vrot.slane %v9215, %v9757
        %v9759 = vsel %vm8273, %v9758, %v9754
        %v9760 = vlaneseq
        %v9761 = vshrl.u32 %v9760, 7
        %v9762 = vsub.s32 %v8275, %v9761
        %v9763 = vrot.slane %v9218, %v9762
        %v9764 = vsel %vm8280, %v9763, %v9759
        %v9765 = vlaneseq
        %v9766 = vshrl.u32 %v9765, 7
        %v9767 = vsub.s32 %v8282, %v9766
        %v9768 = vrot.slane %v9221, %v9767
        %v9769 = vsel %vm8287, %v9768, %v9764
        %v9770 = vlaneseq
        %v9771 = vshrl.u32 %v9770, 7
        %v9772 = vsub.s32 %v8289, %v9771
        %v9773 = vrot.slane %v9224, %v9772
        %v9774 = vsel %vm8294, %v9773, %v9769
        %v9775 = vlaneseq
        %v9776 = vshrl.u32 %v9775, 7
        %v9777 = vsub.s32 %v8296, %v9776
        %v9778 = vrot.slane %v9227, %v9777
        %v9779 = vsel %vm8301, %v9778, %v9774
        %v9780 = vlaneseq
        %v9781 = vshrl.u32 %v9780, 7
        %v9782 = vsub.s32 %v8303, %v9781
        %v9783 = vrot.slane %v9230, %v9782
        %v9784 = vsel %vm8308, %v9783, %v9779
        %v9785 = vlaneseq
        %v9786 = vshrl.u32 %v9785, 7
        %v9787 = vsub.s32 %v8310, %v9786
        %v9788 = vrot.slane %v9233, %v9787
        %v9789 = vsel %vm8315, %v9788, %v9784
        %v9790 = vlaneseq
        %v9791 = vshrl.u32 %v9790, 7
        %v9792 = vsub.s32 %v8317, %v9791
        %v9793 = vrot.slane %v9236, %v9792
        %v9794 = vsel %vm8322, %v9793, %v9789
        %v9795 = vlaneseq
        %v9796 = vshrl.u32 %v9795, 7
        %v9797 = vsub.s32 %v8324, %v9796
        %v9798 = vrot.slane %v9239, %v9797
        %v9799 = vsel %vm8329, %v9798, %v9794
        %v9800 = vlaneseq
        %v9801 = vshrl.u32 %v9800, 7
        %v9802 = vsub.s32 %v8331, %v9801
        %v9803 = vrot.slane %v9242, %v9802
        %v9804 = vsel %vm8336, %v9803, %v9799
        %v9805 = vlaneseq
        %v9806 = vshrl.u32 %v9805, 7
        %v9807 = vsub.s32 %v8338, %v9806
        %v9808 = vrot.slane %v9245, %v9807
        %v9809 = vsel %vm8343, %v9808, %v9804
        %v9810 = vlaneseq
        %v9811 = vshrl.u32 %v9810, 7
        %v9812 = vsub.s32 %v8345, %v9811
        %v9813 = vrot.slane %v9248, %v9812
        %v9814 = vsel %vm8350, %v9813, %v9809
        %v9815 = vlaneseq
        %v9816 = vshrl.u32 %v9815, 7
        %v9817 = vsub.s32 %v8263, %v9816
        %v9818 = vrot.slane %v9251, %v9817
        %v9819 = vlaneseq
        %v9820 = vshrl.u32 %v9819, 7
        %v9821 = vsub.s32 %v8268, %v9820
        %v9822 = vrot.slane %v9254, %v9821
        %v9823 = vsel %vm8273, %v9822, %v9818
        %v9824 = vlaneseq
        %v9825 = vshrl.u32 %v9824, 7
        %v9826 = vsub.s32 %v8275, %v9825
        %v9827 = vrot.slane %v9257, %v9826
        %v9828 = vsel %vm8280, %v9827, %v9823
        %v9829 = vlaneseq
        %v9830 = vshrl.u32 %v9829, 7
        %v9831 = vsub.s32 %v8282, %v9830
        %v9832 = vrot.slane %v9260, %v9831
        %v9833 = vsel %vm8287, %v9832, %v9828
        %v9834 = vlaneseq
        %v9835 = vshrl.u32 %v9834, 7
        %v9836 = vsub.s32 %v8289, %v9835
        %v9837 = vrot.slane %v9263, %v9836
        %v9838 = vsel %vm8294, %v9837, %v9833
        %v9839 = vlaneseq
        %v9840 = vshrl.u32 %v9839, 7
        %v9841 = vsub.s32 %v8296, %v9840
        %v9842 = vrot.slane %v9266, %v9841
        %v9843 = vsel %vm8301, %v9842, %v9838
        %v9844 = vlaneseq
        %v9845 = vshrl.u32 %v9844, 7
        %v9846 = vsub.s32 %v8303, %v9845
        %v9847 = vrot.slane %v9269, %v9846
        %v9848 = vsel %vm8308, %v9847, %v9843
        %v9849 = vlaneseq
        %v9850 = vshrl.u32 %v9849, 7
        %v9851 = vsub.s32 %v8310, %v9850
        %v9852 = vrot.slane %v9272, %v9851
        %v9853 = vsel %vm8315, %v9852, %v9848
        %v9854 = vlaneseq
        %v9855 = vshrl.u32 %v9854, 7
        %v9856 = vsub.s32 %v8317, %v9855
        %v9857 = vrot.slane %v9275, %v9856
        %v9858 = vsel %vm8322, %v9857, %v9853
        %v9859 = vlaneseq
        %v9860 = vshrl.u32 %v9859, 7
        %v9861 = vsub.s32 %v8324, %v9860
        %v9862 = vrot.slane %v9278, %v9861
        %v9863 = vsel %vm8329, %v9862, %v9858
        %v9864 = vlaneseq
        %v9865 = vshrl.u32 %v9864, 7
        %v9866 = vsub.s32 %v8331, %v9865
        %v9867 = vrot.slane %v9281, %v9866
        %v9868 = vsel %vm8336, %v9867, %v9863
        %v9869 = vlaneseq
        %v9870 = vshrl.u32 %v9869, 7
        %v9871 = vsub.s32 %v8338, %v9870
        %v9872 = vrot.slane %v9284, %v9871
        %v9873 = vsel %vm8343, %v9872, %v9868
        %v9874 = vlaneseq
        %v9875 = vshrl.u32 %v9874, 7
        %v9876 = vsub.s32 %v8345, %v9875
        %v9877 = vrot.slane %v9287, %v9876
        %v9878 = vsel %vm8350, %v9877, %v9873
        %v9879 = vlaneseq
        %v9880 = vshrl.u32 %v9879, 7
        %v9881 = vsub.s32 %v8263, %v9880
        %v9882 = vrot.slane %v9290, %v9881
        %v9883 = vlaneseq
        %v9884 = vshrl.u32 %v9883, 7
        %v9885 = vsub.s32 %v8268, %v9884
        %v9886 = vrot.slane %v9293, %v9885
        %v9887 = vsel %vm8273, %v9886, %v9882
        %v9888 = vlaneseq
        %v9889 = vshrl.u32 %v9888, 7
        %v9890 = vsub.s32 %v8275, %v9889
        %v9891 = vrot.slane %v9296, %v9890
        %v9892 = vsel %vm8280, %v9891, %v9887
        %v9893 = vlaneseq
        %v9894 = vshrl.u32 %v9893, 7
        %v9895 = vsub.s32 %v8282, %v9894
        %v9896 = vrot.slane %v9299, %v9895
        %v9897 = vsel %vm8287, %v9896, %v9892
        %v9898 = vlaneseq
        %v9899 = vshrl.u32 %v9898, 7
        %v9900 = vsub.s32 %v8289, %v9899
        %v9901 = vrot.slane %v9302, %v9900
        %v9902 = vsel %vm8294, %v9901, %v9897
        %v9903 = vlaneseq
        %v9904 = vshrl.u32 %v9903, 7
        %v9905 = vsub.s32 %v8296, %v9904
        %v9906 = vrot.slane %v9305, %v9905
        %v9907 = vsel %vm8301, %v9906, %v9902
        %v9908 = vlaneseq
        %v9909 = vshrl.u32 %v9908, 7
        %v9910 = vsub.s32 %v8303, %v9909
        %v9911 = vrot.slane %v9308, %v9910
        %v9912 = vsel %vm8308, %v9911, %v9907
        %v9913 = vlaneseq
        %v9914 = vshrl.u32 %v9913, 7
        %v9915 = vsub.s32 %v8310, %v9914
        %v9916 = vrot.slane %v9311, %v9915
        %v9917 = vsel %vm8315, %v9916, %v9912
        %v9918 = vlaneseq
        %v9919 = vshrl.u32 %v9918, 7
        %v9920 = vsub.s32 %v8317, %v9919
        %v9921 = vrot.slane %v9314, %v9920
        %v9922 = vsel %vm8322, %v9921, %v9917
        %v9923 = vlaneseq
        %v9924 = vshrl.u32 %v9923, 7
        %v9925 = vsub.s32 %v8324, %v9924
        %v9926 = vrot.slane %v9317, %v9925
        %v9927 = vsel %vm8329, %v9926, %v9922
        %v9928 = vlaneseq
        %v9929 = vshrl.u32 %v9928, 7
        %v9930 = vsub.s32 %v8331, %v9929
        %v9931 = vrot.slane %v9320, %v9930
        %v9932 = vsel %vm8336, %v9931, %v9927
        %v9933 = vlaneseq
        %v9934 = vshrl.u32 %v9933, 7
        %v9935 = vsub.s32 %v8338, %v9934
        %v9936 = vrot.slane %v9323, %v9935
        %v9937 = vsel %vm8343, %v9936, %v9932
        %v9938 = vlaneseq
        %v9939 = vshrl.u32 %v9938, 7
        %v9940 = vsub.s32 %v8345, %v9939
        %v9941 = vrot.slane %v9326, %v9940
        %v9942 = vsel %vm8350, %v9941, %v9937
        %v9943 = vsel %vm8800, %v9558, %v9494
        %v9944 = vsel %vm8802, %v9622, %v9943
        %v9945 = vsel %vm8804, %v9686, %v9944
        %v9946 = vsel %vm8806, %v9750, %v9945
        %v9947 = vsel %vm8808, %v9814, %v9946
        %v9948 = vsel %vm8810, %v9878, %v9947
        %v9949 = vsel %vm8812, %v9942, %v9948
        %v9951 = vsel %vm8815, %v9949, 0.0
        %9952 = vadd.xlane.f32.xlu0 %v9951
        %v9953 = vpop.xlane.xlu0 %9952
        %vm9954 = vcmp.eq.s32.totalorder %v2605, 1
        %v9956 = vlaneseq
        %v9957 = vshrl.u32 %v9956, 7
        %v9958 = vsub.s32 %v8263, %v9957
        %v9959 = vrot.slane %v9953, %v9958
        %v9961 = vsel %vm9954, %v9959, 0.0
        %v9962 = vadd.f32 %v8827, %v9961
        %vm9963 = vcmask 58368
        %9964 = vst.msk [vmem:[%s271] sm:$0x3] %vm9963, %v9962
        %s9965 = sand.u32 %s181, 1
        %s9966 = scalar_lea.sflag [#allocation7], %s9965
        %s9967 = sand.u32 %s181, 1
        %s9968 = smul.addr %s9967, 2
        %s9969 = scalar_lea.vmem [#allocation6], %s9968
        // Predicated region
        $region49: #{hand_classifier_forward.1} parent=47 // pred_check
          %p9970 = pneg %p191
        $region50: #{hand_classifier_forward.1} parent=47 // pred_check_branch
          %9972 = sbr.rel (%p9970) target = $region52
        $region51: #{hand_classifier_forward.1} parent=47 // pred_region
          %s9974 = ssub.s32 32, 32
          %9975 = vsyncadd %s9966, %s9974
          %s9976 = smul.addr %s21, 32
          %s9977 = scalar_lea.hbm %s7, %s9976
          %s9979 = sshll.u32 %s9969, 4
          %s9980 = int_to_ptr.vmem [resolvable:$true] %s9979
          %9982 = dma.vmem_to_hbm [thread:$0]  %s9980, 32, %s9977, %s9966
        $region52: #{hand_classifier_forward.1} parent=47 // pred_fallthru
          _
      $region48: #{hand_classifier_forward.1} parent=5 // pred_fallthru
        _
      %p9983 = scmp.le.s32.totalorder 2, %s16
      // Predicated region
      $region53: #{hand_classifier_forward.1} parent=5 // pred_check
        %p9984 = pneg %p9983
      $region54: #{hand_classifier_forward.1} parent=5 // pred_check_branch
        %9986 = sbr.rel (%p9984) target = $region56
      $region55: #{hand_classifier_forward.1} parent=5 // pred_region
        %s9987 = ssub.s32 %s16, 2
        // Predicated region
        $region57: #{hand_classifier_forward.1} parent=55 // pred_check
          %p9988 = pneg %p197
        $region58: #{hand_classifier_forward.1} parent=55 // pred_check_branch
          %9990 = sbr.rel (%p9988) target = $region60
        $region59: #{hand_classifier_forward.1} parent=55 // pred_region
          %s9991 = sand.u32 %s182, 1
          %s9992 = scalar_lea.sflag [#allocation7], %s9991
          %s9993 = sand.u32 %s182, 1
          %s9994 = smul.addr %s9993, 2
          %s9995 = scalar_lea.vmem [#allocation6], %s9994
          %9996 = dma.done %s9992, 32
        $region60: #{hand_classifier_forward.1} parent=55 // pred_fallthru
          _
      $region56: #{hand_classifier_forward.1} parent=5 // pred_fallthru
        _
    $region6: #{hand_classifier_forward.1} parent=1 // loop_footer
      %s20 = sadd.s32 1, %s16
    $region7: #{hand_classifier_forward.1} parent=1 // loop_footer_branch
      %15 = sbr.rel target = $region3
    $region8: #{hand_classifier_forward.1} parent=1 // loop_exit
      _
    %9997 = vsyncpa [#allocation7], 1
    %s9998 = scalar_lea.sflag [#allocation7], 1
    %9999 = vsyncpa %s9998, 1

</llo_original>
